<compile_context>
chip_gen: v6e
topology: v6e:2x2x1
jax: 0.10.0
libtpu: 0.0.40
codegen_flags: <defaults>
</compile_context>

<pallas_src>
import math
import functools

import jax
import jax.numpy as jnp
from jax import lax
from jax.experimental import pallas as pl
from jax.experimental.pallas import tpu as pltpu


def _round_up(x, m):
    return -(-x // m) * m


# ----------------------------------------------------------------------------
# host-side slab packing: group 2-D arrays by padded lane width, concatenate
# along rows (sublane-aligned).  One DMA per slab instead of ~60 tiny ones.
# ----------------------------------------------------------------------------
def _pack_slabs(named_arrays, dtype, row_align):
    groups = {}
    for name, arr in named_arrays:
        a = jnp.asarray(arr, jnp.float32)
        w = max(128, _round_up(a.shape[1], 128))
        groups.setdefault(w, []).append((name, a))
    slabs, index = [], {}
    for pos, w in enumerate(sorted(groups)):
        pieces, r0 = [], 0
        for name, a in groups[w]:
            r, c = a.shape
            rp = _round_up(r, row_align)
            buf = jnp.zeros((rp, w), jnp.float32).at[:r, :c].set(a)
            index[name] = (pos, r0, r, c)
            pieces.append(buf)
            r0 += rp
        slabs.append(jnp.concatenate(pieces, axis=0).astype(dtype))
    return slabs, index


# ----------------------------------------------------------------------------
# fused forward kernel
# ----------------------------------------------------------------------------
def _fused_kernel(meta, *refs):
    f32 = jnp.float32
    bf16 = jnp.bfloat16
    nb, nf = meta["n_bf"], meta["n_f32"]
    bf_refs = refs[:nb]
    f_refs = refs[nb:nb + nf]
    out_ref, loc_ref = refs[nb + nf], refs[nb + nf + 1]

    def W(name):                       # bf16 matmul operand (weights / incidence)
        p, r0, r, c = meta["idx_bf"][name]
        return bf_refs[p][r0:r0 + r, 0:c]

    def C(name):                       # f32 constant / raw feature
        p, r0, r, c = meta["idx_f32"][name]
        return f_refs[p][r0:r0 + r, 0:c]

    def mm(a, b):                      # MXU matmul: bf16 operands, f32 accumulate
        return jnp.dot(a.astype(bf16), b.astype(bf16), preferred_element_type=f32)

    def mmT(a, b):                     # a @ b.T
        return lax.dot_general(a.astype(bf16), b.astype(bf16),
                               (((1,), (1,)), ((), ())),
                               preferred_element_type=f32)

    # --- small broadcast constants: load ONCE, before the unrolled layer loop
    B = {n: C(n) for n in (
        "node_proj_b", "edge_lin_b", "lin1_b", "lin2_b", "lin2a_b", "lin3_b",
        "c1_bias", "c2_bias", "cr_bias",
        "mha_q_b", "mha_k_b", "mha_v_b", "mha_bo",
        "reg_b1", "reg_b2", "reg_b3")}
    A = {n: W(n) for n in (
        "c1_attn_bd", "c1_expand", "c2_attn_bd", "c2_expand",
        "cr_attn_bd", "cr_expand")}
    head_mask = C("mha_head_mask")                          # (H_mha, D)

    def lin(x, wname, bname, act=False):
        y = mm(x, W(wname)) + B[bname]
        return jnp.maximum(y, 0.0) if act else y

    def egat(tag, nfeat, efeat, s_oh, d_oh, d_oh_t):
        # DGL EGATConv: f = leaky_relu(fc_ni(u) + fc_nj(v) + fc_fij(e) + bias)
        f_ni = mm(nfeat, W(tag + "_w_ni"))                  # (N, H*Fe)
        f_nj = mm(nfeat, W(tag + "_w_nj"))
        f_fij = mm(efeat, W(tag + "_w_fij"))                # (E, H*Fe)
        hproj = mm(nfeat, W(tag + "_w_node"))               # (N, H*Fn)
        f_tmp = mm(s_oh, f_ni) + mm(d_oh, f_nj) + f_fij + B[tag + "_bias"]
        f_out = jnp.where(f_tmp > 0, f_tmp, 0.01 * f_tmp)   # leaky_relu(0.01)

        # per-head attention logits for ALL heads via one block-diagonal matmul
        logits = mm(f_out, A[tag + "_attn_bd"])             # (E, H)
        # Edge softmax over incoming edges of each destination node.  A global
        # per-head max replaces the per-destination max (identical in exact
        # arithmetic); the denominator clamp guards exp-underflow and
        # zero-in-degree destinations against Inf/NaN.
        m = jnp.max(logits, axis=0, keepdims=True)          # (1, H)
        p = jnp.exp(logits - m)                             # (E, H)
        denom_n = mm(d_oh_t, p)                             # (N, H) per-dst sums
        inv_n = 1.0 / jnp.maximum(denom_n, 1e-30)           # exact reciprocal
        # broadcast to the lane-dense message width and gather back to edges
        inv_e = mm(d_oh, mm(inv_n, A[tag + "_expand"]))     # (E, H*Fn)
        p_e = mm(p, A[tag + "_expand"])                     # (E, H*Fn)
        h_src = mm(s_oh, hproj)                             # (E, H*Fn)
        hout = mm(d_oh_t, p_e * inv_e * h_src)              # (N, H*Fn) u_mul_e+sum
        return hout, f_out

    # graph incidence matrices stay VMEM-resident across both layers
    src_oh, dst_oh, dst_oh_t = W("src_oh"), W("dst_oh"), W("dst_oh_t")
    src2_oh, dst2_oh, dst2_oh_t = W("src2_oh"), W("dst2_oh"), W("dst2_oh_t")

    node_data = lin(C("node0"), "node_proj_w", "node_proj_b")
    edge_data = lin(C("edge_raw"), "edge_lin_w", "edge_lin_b")
    edge_link = lin(C("edge_link"), "edge_lin_w", "edge_lin_b")

    for _ in range(meta["n_layers"]):
        h, e = egat("c1", node_data, edge_data, src_oh, dst_oh, dst_oh_t)
        h = jnp.maximum(h, 0.0)
        e = jnp.maximum(e, 0.0)
        h, e = egat("c2", h, e, src_oh, dst_oh, dst_oh_t)
        edge_data = lin(e, "lin1_w", "lin1_b", act=True)
        node_data = lin(h, "lin2_w", "lin2_b", act=True)
        h, e3 = egat("cr", node_data, edge_link, src2_oh, dst2_oh, dst2_oh_t)
        edge_link = lin(e3, "lin3_w", "lin3_b", act=True)
        node_data = node_data + lin(h, "lin2a_w", "lin2a_b", act=True)

    # TODO(synk): only_query=True would slice node_data[n_r:] here.

    # ---- MultiheadAttention (4 heads): head-major Q/K/V + head-mask trick ----
    q = mm(node_data, W("mha_q_w")) + B["mha_q_b"]           # (S, D)
    k = mm(node_data, W("mha_k_w")) + B["mha_k_b"]
    v = mm(node_data, W("mha_v_w")) + B["mha_v_b"]
    D = meta["out_size"]
    scale = 1.0 / math.sqrt(D // meta["mha_heads"])
    values = jnp.zeros_like(q)
    for hh in range(meta["mha_heads"]):
        msk = head_mask[hh:hh + 1, :]                        # (1, D) exact 0/1
        lg = mmT(q * msk, k) * scale                         # (S, S) == q_h @ k_h.T
        lmax = jnp.max(lg, axis=-1, keepdims=True)
        pe = jnp.exp(lg - lmax)
        att = pe / jnp.sum(pe, axis=-1, keepdims=True)       # exact softmax
        values = values + mm(att, v * msk)                   # mask V, not output
    node_out = mm(values, W("mha_wo")) + B["mha_bo"]

    # ---- max over nodes + 3-layer regress MLP ----
    feat = jnp.max(node_out, axis=0, keepdims=True)          # (1, D)
    h1 = jnp.maximum(mm(feat, W("reg_w1")) + B["reg_b1"], 0.0)
    h2 = jnp.maximum(mm(h1, W("reg_w2")) + B["reg_b2"], 0.0)
    loc = mm(h2, W("reg_w3")) + B["reg_b3"]                  # (1, 3)

    # ---- lane-dense packed output stores (128-lane unmasked vst) ----
    E, N, R_out, W_out = meta["E"], meta["N"], meta["R_out"], meta["W_out"]
    pad = W_out - D

    def widen(x, rows):
        if pad == 0:
            return x
        return jnp.concatenate([x, jnp.zeros((rows, pad), f32)], axis=1)

    out_ref[0:E, :] = widen(edge_data, E)
    out_ref[E:E + N, :] = widen(node_out, N)
    if R_out > E + N:
        out_ref[E + N:R_out, :] = jnp.zeros((R_out - E - N, W_out), f32)
    loc_ref[...] = loc


# ----------------------------------------------------------------------------
# host-side input assembly (one-time, outside the hot path)
# ----------------------------------------------------------------------------
def _build_inputs(params, g, g2, node0, edge_raw, edge_link_raw, num_heads, mha_heads):
    f32 = jnp.float32
    src_oh, dst_oh = g
    src2_oh, dst2_oh = g2
    w_items, c_items = [], []           # bf16 matmul operands / f32 constants

    def addw(name, a):
        w_items.append((name, a))

    def addc(name, a):
        c_items.append((name, a))

    # raw features (projected inside the kernel)
    addc("node0", node0)
    addc("edge_raw", edge_raw)
    addc("edge_link", edge_link_raw)
    # one-hot incidence matrices (exactly representable in bf16)
    addw("src_oh", src_oh)
    addw("dst_oh", dst_oh)
    addw("dst_oh_t", dst_oh.T)
    addw("src2_oh", src2_oh)
    addw("dst2_oh", dst2_oh)
    addw("dst2_oh_t", dst2_oh.T)

    for nm in ("node_proj", "edge_lin", "lin1", "lin2", "lin2a", "lin3"):
        addw(nm + "_w", params[nm + "_w"])
        addc(nm + "_b", params[nm + "_b"])

    eye_h = jnp.eye(num_heads, dtype=f32)
    for tag, key in (("c1", "conv1"), ("c2", "conv2"), ("cr", "ref_query_conv")):
        cp = params[key]
        for wn in ("w_ni", "w_nj", "w_fij", "w_node"):
            addw(tag + "_" + wn, cp[wn])
        addc(tag + "_bias", cp["bias"])
        attn = jnp.asarray(cp["attn"], f32)                     # (H, Fe)
        Fe = attn.shape[1]
        Fn = cp["w_node"].shape[1] // num_heads
        blk = jnp.repeat(eye_h, Fe, axis=1)                     # (H, H*Fe)
        addw(tag + "_attn_bd", blk.T * attn.reshape(-1)[:, None])   # (H*Fe, H)
        addw(tag + "_expand", jnp.repeat(eye_h, Fn, axis=1))        # (H, H*Fn)

    # MultiheadAttention: split qkv_proj into head-major [all-Q | all-K | all-V]
    # column blocks (the only permutation needed to port real torch weights).
    wqkv = jnp.asarray(params["mha_wqkv"], f32)
    bqkv = jnp.asarray(params["mha_bqkv"], f32)
    D = params["mha_wo"].shape[0]
    hd = D // mha_heads
    cols = jnp.arange(3 * D).reshape(mha_heads, 3 * hd)
    for i, nm in enumerate(("mha_q", "mha_k", "mha_v")):
        sel = cols[:, i * hd:(i + 1) * hd].reshape(-1)
        addw(nm + "_w", wqkv[:, sel])
        addc(nm + "_b", bqkv[:, sel])
    addw("mha_wo", params["mha_wo"])
    addc("mha_bo", params["mha_bo"])
    addc("mha_head_mask", jnp.repeat(jnp.eye(mha_heads, dtype=f32), hd, axis=1))

    for nm in ("reg_w1", "reg_w2", "reg_w3"):
        addw(nm, params[nm])
    for nm in ("reg_b1", "reg_b2", "reg_b3"):
        addc(nm, params[nm])

    bf_slabs, bf_idx = _pack_slabs(w_items, jnp.bfloat16, 16)
    f_slabs, f_idx = _pack_slabs(c_items, jnp.float32, 8)
    return bf_slabs, bf_idx, f_slabs, f_idx


# ----------------------------------------------------------------------------
# forward wrapper: one pallas_call for the entire module
# ----------------------------------------------------------------------------
def gat_att_mlp_forward(params, g_all, all_node_data, all_edge_data, n_r,
                        num_heads=2, n_layers=2, mha_heads=4, only_query=False):
    del n_r, only_query  # TODO(synk): only_query=True path is not implemented
    (src_oh, dst_oh), (src2_oh, dst2_oh) = g_all
    E, N = src_oh.shape
    E2 = src2_oh.shape[0]
    out_size = params["node_proj_w"].shape[1]

    node0 = all_node_data[:N]
    edge_raw = all_edge_data[:E]
    edge_link_raw = all_edge_data[E:]

    bf_slabs, bf_idx, f_slabs, f_idx = _build_inputs(
        params, (src_oh, dst_oh), (src2_oh, dst2_oh),
        node0, edge_raw, edge_link_raw, num_heads, mha_heads)

    W_out = max(128, _round_up(out_size, 128))
    R_out = _round_up(E + N, 8)
    meta = dict(n_bf=len(bf_slabs), n_f32=len(f_slabs),
                idx_bf=bf_idx, idx_f32=f_idx,
                n_layers=n_layers, num_heads=num_heads, mha_heads=mha_heads,
                N=N, E=E, E2=E2, out_size=out_size, R_out=R_out, W_out=W_out)

    kernel = functools.partial(_fused_kernel, meta)
    # Single invocation (no grid): whole slabs are VMEM-resident, nothing is
    # pipelined/double-buffered.  vmem_limit is set explicitly (footprint ~4MB).
    out_slab, loc = pl.pallas_call(
        kernel,
        out_shape=(jax.ShapeDtypeStruct((R_out, W_out), jnp.float32),
                   jax.ShapeDtypeStruct((1, 3), jnp.float32)),
        compiler_params=pltpu.CompilerParams(vmem_limit_bytes=32 * 1024 * 1024),
    )(*bf_slabs, *f_slabs)

    edge_out = out_slab[:E, :out_size]
    node_out = out_slab[E:E + N, :out_size]
    return edge_out, node_out, loc


# ----------------------------------------------------------------------------
# deterministic parameter construction (matches module layer sizes)
# ----------------------------------------------------------------------------
def init_params(key, num_heads=2, n_classes=42, out_size=64, edge_dim_in=2):
    state = {"key": key}

    def nxt():
        state["key"], sub = jax.random.split(state["key"])
        return sub

    def lin_w(fin, fout):
        return jax.random.normal(nxt(), (fin, fout), jnp.float32) * (1.0 / math.sqrt(fin))

    def lin_b(fout):
        return jnp.zeros((1, fout), jnp.float32)

    def egat(in_n, in_e, out_n, out_e):
        return dict(
            w_ni=lin_w(in_n, num_heads * out_e),
            w_nj=lin_w(in_n, num_heads * out_e),
            w_fij=lin_w(in_e, num_heads * out_e),
            w_node=lin_w(in_n, num_heads * out_n),
            attn=jax.random.normal(nxt(), (num_heads, out_e), jnp.float32) * 0.1,
            bias=jnp.zeros((1, num_heads * out_e), jnp.float32),
        )

    node_in = n_classes + 2
    p = {}
    p["node_proj_w"], p["node_proj_b"] = lin_w(node_in, out_size), lin_b(out_size)
    p["edge_lin_w"], p["edge_lin_b"] = lin_w(edge_dim_in, out_size), lin_b(out_size)
    p["conv1"] = egat(out_size, out_size, 2 * out_size, 2 * out_size)
    p["conv2"] = egat(2 * out_size * num_heads, 2 * out_size * num_heads, 4 * out_size, out_size)
    p["ref_query_conv"] = egat(out_size, out_size, 2 * out_size, 2 * out_size)
    p["lin1_w"], p["lin1_b"] = lin_w(num_heads * out_size, out_size), lin_b(out_size)
    p["lin2_w"], p["lin2_b"] = lin_w(num_heads * 4 * out_size, out_size), lin_b(out_size)
    p["lin2a_w"], p["lin2a_b"] = lin_w(num_heads * 2 * out_size, out_size), lin_b(out_size)
    p["lin3_w"], p["lin3_b"] = lin_w(num_heads * 2 * out_size, out_size), lin_b(out_size)
    p["mha_wqkv"], p["mha_bqkv"] = lin_w(out_size, 3 * out_size), lin_b(3 * out_size)
    p["mha_wo"], p["mha_bo"] = lin_w(out_size, out_size), lin_b(out_size)
    p["reg_w1"], p["reg_b1"] = lin_w(out_size, out_size), lin_b(out_size)
    p["reg_w2"], p["reg_b2"] = lin_w(out_size, out_size), lin_b(out_size)
    p["reg_w3"], p["reg_b3"] = lin_w(out_size, 3), lin_b(3)
    return p


# ----------------------------------------------------------------------------
# main
# ----------------------------------------------------------------------------
if __name__ == "__main__":
    num_heads = 2
    n_classes = 42
    out_size = 64
    N, E, E2 = 16, 32, 24          # graph g: N nodes / E edges; ref_and_query: E2 edges

    key = jax.random.PRNGKey(0)
    key, kp, k1, k2, k3, k4, k5, k6 = jax.random.split(key, 8)
    params = init_params(kp, num_heads=num_heads, n_classes=n_classes, out_size=out_size)

    src = jax.random.randint(k1, (E,), 0, N)
    dst = jax.random.randint(k2, (E,), 0, N)
    src2 = jax.random.randint(k3, (E2,), 0, N)
    dst2 = jax.random.randint(k4, (E2,), 0, N)
    all_node_data = jax.random.normal(k5, (N, n_classes + 2), jnp.float32)
    all_edge_data = jax.random.normal(k6, (E + E2, 2), jnp.float32)
    n_r = 4  # unused when only_query=False (module default)

    def one_hot(idx, n):
        return jax.nn.one_hot(idx, n, dtype=jnp.float32)

    g = (one_hot(src, N), one_hot(dst, N))
    ref_and_query = (one_hot(src2, N), one_hot(dst2, N))

    edge_out, node_out, loc = gat_att_mlp_forward(
        params, (g, ref_and_query), all_node_data, all_edge_data, n_r,
        num_heads=num_heads, n_layers=2, only_query=False)

    jax.block_until_ready((edge_out, node_out, loc))
    assert edge_out.shape == (E, out_size)
    assert node_out.shape == (N, out_size)
    assert loc.shape == (1, 3)
    assert bool(jnp.all(jnp.isfinite(edge_out)))
    assert bool(jnp.all(jnp.isfinite(node_out)))
    assert bool(jnp.all(jnp.isfinite(loc)))
    print("KERNEL_OK")
</pallas_src>

<mosaic_0001>
module attributes {stable_mosaic.version = 11 : i64} {
  func.func @_fused_kernel(%arg0: memref<3232x128xbf16, #tpu.memory_space<vmem>>, %arg1: memref<544x256xbf16, #tpu.memory_space<vmem>>, %arg2: memref<272x512xbf16, #tpu.memory_space<vmem>>, %arg3: memref<192x128xf32, #tpu.memory_space<vmem>>, %arg4: memref<16x256xf32, #tpu.memory_space<vmem>>, %arg5: memref<48x128xf32, #tpu.memory_space<vmem>>, %arg6: memref<1x3xf32, #tpu.memory_space<vmem>>) attributes {dimension_semantics = [], scalar_prefetch = 0 : i64, scratch_operands = 0 : i64, tpu.core_type = #tpu.core_type<tc>} {
    %c72 = arith.constant 72 : index
    %c0 = arith.constant 0 : index
    %0 = vector.load %arg3[%c72, %c0] : memref<192x128xf32, #tpu.memory_space<vmem>>, vector<1x64xf32>
    %c80 = arith.constant 80 : index
    %c0_0 = arith.constant 0 : index
    %1 = vector.load %arg3[%c80, %c0_0] : memref<192x128xf32, #tpu.memory_space<vmem>>, vector<1x64xf32>
    %c88 = arith.constant 88 : index
    %c0_1 = arith.constant 0 : index
    %2 = vector.load %arg3[%c88, %c0_1] : memref<192x128xf32, #tpu.memory_space<vmem>>, vector<1x64xf32>
    %c96 = arith.constant 96 : index
    %c0_2 = arith.constant 0 : index
    %3 = vector.load %arg3[%c96, %c0_2] : memref<192x128xf32, #tpu.memory_space<vmem>>, vector<1x64xf32>
    %c104 = arith.constant 104 : index
    %c0_3 = arith.constant 0 : index
    %4 = vector.load %arg3[%c104, %c0_3] : memref<192x128xf32, #tpu.memory_space<vmem>>, vector<1x64xf32>
    %c112 = arith.constant 112 : index
    %c0_4 = arith.constant 0 : index
    %5 = vector.load %arg3[%c112, %c0_4] : memref<192x128xf32, #tpu.memory_space<vmem>>, vector<1x64xf32>
    %c0_5 = arith.constant 0 : index
    %c0_6 = arith.constant 0 : index
    %6 = vector.load %arg4[%c0_5, %c0_6] : memref<16x256xf32, #tpu.memory_space<vmem>>, vector<1x256xf32>
    %c120 = arith.constant 120 : index
    %c0_7 = arith.constant 0 : index
    %7 = vector.load %arg3[%c120, %c0_7] : memref<192x128xf32, #tpu.memory_space<vmem>>, vector<1x128xf32>
    %c8 = arith.constant 8 : index
    %c0_8 = arith.constant 0 : index
    %8 = vector.load %arg4[%c8, %c0_8] : memref<16x256xf32, #tpu.memory_space<vmem>>, vector<1x256xf32>
    %c128 = arith.constant 128 : index
    %c0_9 = arith.constant 0 : index
    %9 = vector.load %arg3[%c128, %c0_9] : memref<192x128xf32, #tpu.memory_space<vmem>>, vector<1x64xf32>
    %c136 = arith.constant 136 : index
    %c0_10 = arith.constant 0 : index
    %10 = vector.load %arg3[%c136, %c0_10] : memref<192x128xf32, #tpu.memory_space<vmem>>, vector<1x64xf32>
    %c144 = arith.constant 144 : index
    %c0_11 = arith.constant 0 : index
    %11 = vector.load %arg3[%c144, %c0_11] : memref<192x128xf32, #tpu.memory_space<vmem>>, vector<1x64xf32>
    %c152 = arith.constant 152 : index
    %c0_12 = arith.constant 0 : index
    %12 = vector.load %arg3[%c152, %c0_12] : memref<192x128xf32, #tpu.memory_space<vmem>>, vector<1x64xf32>
    %c168 = arith.constant 168 : index
    %c0_13 = arith.constant 0 : index
    %13 = vector.load %arg3[%c168, %c0_13] : memref<192x128xf32, #tpu.memory_space<vmem>>, vector<1x64xf32>
    %c176 = arith.constant 176 : index
    %c0_14 = arith.constant 0 : index
    %14 = vector.load %arg3[%c176, %c0_14] : memref<192x128xf32, #tpu.memory_space<vmem>>, vector<1x64xf32>
    %c184 = arith.constant 184 : index
    %c0_15 = arith.constant 0 : index
    %15 = vector.load %arg3[%c184, %c0_15] : memref<192x128xf32, #tpu.memory_space<vmem>>, vector<1x3xf32>
    %c1376 = arith.constant 1376 : index
    %c0_16 = arith.constant 0 : index
    %16 = vector.load %arg0[%c1376, %c0_16] : memref<3232x128xbf16, #tpu.memory_space<vmem>>, vector<256x2xbf16>
    %c256 = arith.constant 256 : index
    %c0_17 = arith.constant 0 : index
    %17 = vector.load %arg1[%c256, %c0_17] : memref<544x256xbf16, #tpu.memory_space<vmem>>, vector<2x256xbf16>
    %c2400 = arith.constant 2400 : index
    %c0_18 = arith.constant 0 : index
    %18 = vector.load %arg0[%c2400, %c0_18] : memref<3232x128xbf16, #tpu.memory_space<vmem>>, vector<128x2xbf16>
    %c256_19 = arith.constant 256 : index
    %c0_20 = arith.constant 0 : index
    %19 = vector.load %arg2[%c256_19, %c0_20] : memref<272x512xbf16, #tpu.memory_space<vmem>>, vector<2x512xbf16>
    %c2528 = arith.constant 2528 : index
    %c0_21 = arith.constant 0 : index
    %20 = vector.load %arg0[%c2528, %c0_21] : memref<3232x128xbf16, #tpu.memory_space<vmem>>, vector<256x2xbf16>
    %c528 = arith.constant 528 : index
    %c0_22 = arith.constant 0 : index
    %21 = vector.load %arg1[%c528, %c0_22] : memref<544x256xbf16, #tpu.memory_space<vmem>>, vector<2x256xbf16>
    %c160 = arith.constant 160 : index
    %c0_23 = arith.constant 0 : index
    %22 = vector.load %arg3[%c160, %c0_23] : memref<192x128xf32, #tpu.memory_space<vmem>>, vector<4x64xf32>
    %c0_24 = arith.constant 0 : index
    %c0_25 = arith.constant 0 : index
    %23 = vector.load %arg0[%c0_24, %c0_25] : memref<3232x128xbf16, #tpu.memory_space<vmem>>, vector<32x16xbf16>
    %c32 = arith.constant 32 : index
    %c0_26 = arith.constant 0 : index
    %24 = vector.load %arg0[%c32, %c0_26] : memref<3232x128xbf16, #tpu.memory_space<vmem>>, vector<32x16xbf16>
    %c64 = arith.constant 64 : index
    %c0_27 = arith.constant 0 : index
    %25 = vector.load %arg0[%c64, %c0_27] : memref<3232x128xbf16, #tpu.memory_space<vmem>>, vector<16x32xbf16>
    %c80_28 = arith.constant 80 : index
    %c0_29 = arith.constant 0 : index
    %26 = vector.load %arg0[%c80_28, %c0_29] : memref<3232x128xbf16, #tpu.memory_space<vmem>>, vector<24x16xbf16>
    %c112_30 = arith.constant 112 : index
    %c0_31 = arith.constant 0 : index
    %27 = vector.load %arg0[%c112_30, %c0_31] : memref<3232x128xbf16, #tpu.memory_space<vmem>>, vector<24x16xbf16>
    %c144_32 = arith.constant 144 : index
    %c0_33 = arith.constant 0 : index
    %28 = vector.load %arg0[%c144_32, %c0_33] : memref<3232x128xbf16, #tpu.memory_space<vmem>>, vector<16x24xbf16>
    %c0_34 = arith.constant 0 : index
    %c0_35 = arith.constant 0 : index
    %29 = vector.load %arg3[%c0_34, %c0_35] : memref<192x128xf32, #tpu.memory_space<vmem>>, vector<16x44xf32>
    %c160_36 = arith.constant 160 : index
    %c0_37 = arith.constant 0 : index
    %30 = vector.load %arg0[%c160_36, %c0_37] : memref<3232x128xbf16, #tpu.memory_space<vmem>>, vector<44x64xbf16>
    %31 = arith.truncf %29 : vector<16x44xf32> to vector<16x44xbf16>
    %cst = arith.constant dense<0.000000e+00> : vector<16x64xf32>
    %32 = tpu.matmul %31, %30, %cst {dimension_numbers = #tpu.dot_dimension_numbers<[1], [0], [0], [1], [0, 0, 1, 1], [], []>} : vector<16x44xbf16>, vector<44x64xbf16>, vector<16x64xf32> -> vector<16x64xf32>
    %33 = vector.broadcast %0 : vector<1x64xf32> to vector<16x64xf32>
    %34 = arith.addf %32, %33 : vector<16x64xf32>
    %c16 = arith.constant 16 : index
    %c0_38 = arith.constant 0 : index
    %35 = vector.load %arg3[%c16, %c0_38] : memref<192x128xf32, #tpu.memory_space<vmem>>, vector<32x2xf32>
    %c208 = arith.constant 208 : index
    %c0_39 = arith.constant 0 : index
    %36 = vector.load %arg0[%c208, %c0_39] : memref<3232x128xbf16, #tpu.memory_space<vmem>>, vector<2x64xbf16>
    %37 = arith.truncf %35 : vector<32x2xf32> to vector<32x2xbf16>
    %cst_40 = arith.constant dense<0.000000e+00> : vector<32x64xf32>
    %38 = tpu.matmul %37, %36, %cst_40 {dimension_numbers = #tpu.dot_dimension_numbers<[1], [0], [0], [1], [0, 0, 1, 1], [], []>} : vector<32x2xbf16>, vector<2x64xbf16>, vector<32x64xf32> -> vector<32x64xf32>
    %39 = vector.broadcast %1 : vector<1x64xf32> to vector<32x64xf32>
    %40 = arith.addf %38, %39 : vector<32x64xf32>
    %c48 = arith.constant 48 : index
    %c0_41 = arith.constant 0 : index
    %41 = vector.load %arg3[%c48, %c0_41] : memref<192x128xf32, #tpu.memory_space<vmem>>, vector<24x2xf32>
    %c208_42 = arith.constant 208 : index
    %c0_43 = arith.constant 0 : index
    %42 = vector.load %arg0[%c208_42, %c0_43] : memref<3232x128xbf16, #tpu.memory_space<vmem>>, vector<2x64xbf16>
    %43 = arith.truncf %41 : vector<24x2xf32> to vector<24x2xbf16>
    %cst_44 = arith.constant dense<0.000000e+00> : vector<24x64xf32>
    %44 = tpu.matmul %43, %42, %cst_44 {dimension_numbers = #tpu.dot_dimension_numbers<[1], [0], [0], [1], [0, 0, 1, 1], [], []>} : vector<24x2xbf16>, vector<2x64xbf16>, vector<24x64xf32> -> vector<24x64xf32>
    %45 = vector.broadcast %1 : vector<1x64xf32> to vector<24x64xf32>
    %46 = arith.addf %44, %45 : vector<24x64xf32>
    %c0_45 = arith.constant 0 : index
    %c0_46 = arith.constant 0 : index
    %47 = vector.load %arg1[%c0_45, %c0_46] : memref<544x256xbf16, #tpu.memory_space<vmem>>, vector<64x256xbf16>
    %48 = arith.truncf %34 : vector<16x64xf32> to vector<16x64xbf16>
    %cst_47 = arith.constant dense<0.000000e+00> : vector<16x256xf32>
    %49 = tpu.matmul %48, %47, %cst_47 {dimension_numbers = #tpu.dot_dimension_numbers<[1], [0], [0], [1], [0, 0, 1, 1], [], []>} : vector<16x64xbf16>, vector<64x256xbf16>, vector<16x256xf32> -> vector<16x256xf32>
    %c64_48 = arith.constant 64 : index
    %c0_49 = arith.constant 0 : index
    %50 = vector.load %arg1[%c64_48, %c0_49] : memref<544x256xbf16, #tpu.memory_space<vmem>>, vector<64x256xbf16>
    %51 = arith.truncf %34 : vector<16x64xf32> to vector<16x64xbf16>
    %cst_50 = arith.constant dense<0.000000e+00> : vector<16x256xf32>
    %52 = tpu.matmul %51, %50, %cst_50 {dimension_numbers = #tpu.dot_dimension_numbers<[1], [0], [0], [1], [0, 0, 1, 1], [], []>} : vector<16x64xbf16>, vector<64x256xbf16>, vector<16x256xf32> -> vector<16x256xf32>
    %c128_51 = arith.constant 128 : index
    %c0_52 = arith.constant 0 : index
    %53 = vector.load %arg1[%c128_51, %c0_52] : memref<544x256xbf16, #tpu.memory_space<vmem>>, vector<64x256xbf16>
    %54 = arith.truncf %40 : vector<32x64xf32> to vector<32x64xbf16>
    %cst_53 = arith.constant dense<0.000000e+00> : vector<32x256xf32>
    %55 = tpu.matmul %54, %53, %cst_53 {dimension_numbers = #tpu.dot_dimension_numbers<[1], [0], [0], [1], [0, 0, 1, 1], [], []>} : vector<32x64xbf16>, vector<64x256xbf16>, vector<32x256xf32> -> vector<32x256xf32>
    %c192 = arith.constant 192 : index
    %c0_54 = arith.constant 0 : index
    %56 = vector.load %arg1[%c192, %c0_54] : memref<544x256xbf16, #tpu.memory_space<vmem>>, vector<64x256xbf16>
    %57 = arith.truncf %34 : vector<16x64xf32> to vector<16x64xbf16>
    %cst_55 = arith.constant dense<0.000000e+00> : vector<16x256xf32>
    %58 = tpu.matmul %57, %56, %cst_55 {dimension_numbers = #tpu.dot_dimension_numbers<[1], [0], [0], [1], [0, 0, 1, 1], [], []>} : vector<16x64xbf16>, vector<64x256xbf16>, vector<16x256xf32> -> vector<16x256xf32>
    %59 = arith.truncf %49 : vector<16x256xf32> to vector<16x256xbf16>
    %cst_56 = arith.constant dense<0.000000e+00> : vector<32x256xf32>
    %60 = tpu.matmul %23, %59, %cst_56 {dimension_numbers = #tpu.dot_dimension_numbers<[1], [0], [0], [1], [0, 0, 1, 1], [], []>} : vector<32x16xbf16>, vector<16x256xbf16>, vector<32x256xf32> -> vector<32x256xf32>
    %61 = arith.truncf %52 : vector<16x256xf32> to vector<16x256xbf16>
    %cst_57 = arith.constant dense<0.000000e+00> : vector<32x256xf32>
    %62 = tpu.matmul %24, %61, %cst_57 {dimension_numbers = #tpu.dot_dimension_numbers<[1], [0], [0], [1], [0, 0, 1, 1], [], []>} : vector<32x16xbf16>, vector<16x256xbf16>, vector<32x256xf32> -> vector<32x256xf32>
    %63 = arith.addf %60, %62 : vector<32x256xf32>
    %64 = arith.addf %63, %55 : vector<32x256xf32>
    %65 = vector.broadcast %6 : vector<1x256xf32> to vector<32x256xf32>
    %66 = arith.addf %64, %65 : vector<32x256xf32>
    %cst_58 = arith.constant 0.000000e+00 : f32
    %67 = vector.broadcast %cst_58 : f32 to vector<32x256xf32>
    %68 = arith.cmpf ogt, %66, %67 : vector<32x256xf32>
    %cst_59 = arith.constant 0.00999999977 : f32
    %69 = vector.broadcast %cst_59 : f32 to vector<32x256xf32>
    %70 = arith.mulf %69, %66 : vector<32x256xf32>
    %71 = arith.select %68, %66, %70 : vector<32x256xi1>, vector<32x256xf32>
    %72 = arith.truncf %71 : vector<32x256xf32> to vector<32x256xbf16>
    %cst_60 = arith.constant dense<0.000000e+00> : vector<32x2xf32>
    %73 = tpu.matmul %72, %16, %cst_60 {dimension_numbers = #tpu.dot_dimension_numbers<[1], [0], [0], [1], [0, 0, 1, 1], [], []>} : vector<32x256xbf16>, vector<256x2xbf16>, vector<32x2xf32> -> vector<32x2xf32>
    %cst_61 = arith.constant dense<0xFF800000> : vector<2xf32>
    %74 = vector.multi_reduction <maximumf>, %73, %cst_61 [0] : vector<32x2xf32> to vector<2xf32>
    %75 = vector.shape_cast %74 : vector<2xf32> to vector<1x2xf32>
    %76 = vector.broadcast %75 : vector<1x2xf32> to vector<32x2xf32>
    %77 = arith.subf %73, %76 : vector<32x2xf32>
    %78 = math.exp %77 : vector<32x2xf32>
    %79 = arith.truncf %78 : vector<32x2xf32> to vector<32x2xbf16>
    %cst_62 = arith.constant dense<0.000000e+00> : vector<16x2xf32>
    %80 = tpu.matmul %25, %79, %cst_62 {dimension_numbers = #tpu.dot_dimension_numbers<[1], [0], [0], [1], [0, 0, 1, 1], [], []>} : vector<16x32xbf16>, vector<32x2xbf16>, vector<16x2xf32> -> vector<16x2xf32>
    %cst_63 = arith.constant 1.000000e-30 : f32
    %81 = vector.broadcast %cst_63 : f32 to vector<16x2xf32>
    %82 = arith.maximumf %80, %81 : vector<16x2xf32>
    %cst_64 = arith.constant 1.000000e+00 : f32
    %83 = vector.broadcast %cst_64 : f32 to vector<16x2xf32>
    %84 = arith.divf %83, %82 : vector<16x2xf32>
    %85 = arith.truncf %84 : vector<16x2xf32> to vector<16x2xbf16>
    %cst_65 = arith.constant dense<0.000000e+00> : vector<16x256xf32>
    %86 = tpu.matmul %85, %17, %cst_65 {dimension_numbers = #tpu.dot_dimension_numbers<[1], [0], [0], [1], [0, 0, 1, 1], [], []>} : vector<16x2xbf16>, vector<2x256xbf16>, vector<16x256xf32> -> vector<16x256xf32>
    %87 = arith.truncf %86 : vector<16x256xf32> to vector<16x256xbf16>
    %cst_66 = arith.constant dense<0.000000e+00> : vector<32x256xf32>
    %88 = tpu.matmul %24, %87, %cst_66 {dimension_numbers = #tpu.dot_dimension_numbers<[1], [0], [0], [1], [0, 0, 1, 1], [], []>} : vector<32x16xbf16>, vector<16x256xbf16>, vector<32x256xf32> -> vector<32x256xf32>
    %89 = arith.truncf %78 : vector<32x2xf32> to vector<32x2xbf16>
    %cst_67 = arith.constant dense<0.000000e+00> : vector<32x256xf32>
    %90 = tpu.matmul %89, %17, %cst_67 {dimension_numbers = #tpu.dot_dimension_numbers<[1], [0], [0], [1], [0, 0, 1, 1], [], []>} : vector<32x2xbf16>, vector<2x256xbf16>, vector<32x256xf32> -> vector<32x256xf32>
    %91 = arith.truncf %58 : vector<16x256xf32> to vector<16x256xbf16>
    %cst_68 = arith.constant dense<0.000000e+00> : vector<32x256xf32>
    %92 = tpu.matmul %23, %91, %cst_68 {dimension_numbers = #tpu.dot_dimension_numbers<[1], [0], [0], [1], [0, 0, 1, 1], [], []>} : vector<32x16xbf16>, vector<16x256xbf16>, vector<32x256xf32> -> vector<32x256xf32>
    %93 = arith.mulf %90, %88 : vector<32x256xf32>
    %94 = arith.mulf %93, %92 : vector<32x256xf32>
    %95 = arith.truncf %94 : vector<32x256xf32> to vector<32x256xbf16>
    %cst_69 = arith.constant dense<0.000000e+00> : vector<16x256xf32>
    %96 = tpu.matmul %25, %95, %cst_69 {dimension_numbers = #tpu.dot_dimension_numbers<[1], [0], [0], [1], [0, 0, 1, 1], [], []>} : vector<16x32xbf16>, vector<32x256xbf16>, vector<16x256xf32> -> vector<16x256xf32>
    %cst_70 = arith.constant 0.000000e+00 : f32
    %97 = vector.broadcast %cst_70 : f32 to vector<16x256xf32>
    %98 = arith.maximumf %96, %97 : vector<16x256xf32>
    %cst_71 = arith.constant 0.000000e+00 : f32
    %99 = vector.broadcast %cst_71 : f32 to vector<32x256xf32>
    %100 = arith.maximumf %71, %99 : vector<32x256xf32>
    %c1632 = arith.constant 1632 : index
    %c0_72 = arith.constant 0 : index
    %101 = vector.load %arg0[%c1632, %c0_72] : memref<3232x128xbf16, #tpu.memory_space<vmem>>, vector<256x128xbf16>
    %102 = arith.truncf %98 : vector<16x256xf32> to vector<16x256xbf16>
    %cst_73 = arith.constant dense<0.000000e+00> : vector<16x128xf32>
    %103 = tpu.matmul %102, %101, %cst_73 {dimension_numbers = #tpu.dot_dimension_numbers<[1], [0], [0], [1], [0, 0, 1, 1], [], []>} : vector<16x256xbf16>, vector<256x128xbf16>, vector<16x128xf32> -> vector<16x128xf32>
    %c1888 = arith.constant 1888 : index
    %c0_74 = arith.constant 0 : index
    %104 = vector.load %arg0[%c1888, %c0_74] : memref<3232x128xbf16, #tpu.memory_space<vmem>>, vector<256x128xbf16>
    %105 = arith.truncf %98 : vector<16x256xf32> to vector<16x256xbf16>
    %cst_75 = arith.constant dense<0.000000e+00> : vector<16x128xf32>
    %106 = tpu.matmul %105, %104, %cst_75 {dimension_numbers = #tpu.dot_dimension_numbers<[1], [0], [0], [1], [0, 0, 1, 1], [], []>} : vector<16x256xbf16>, vector<256x128xbf16>, vector<16x128xf32> -> vector<16x128xf32>
    %c2144 = arith.constant 2144 : index
    %c0_76 = arith.constant 0 : index
    %107 = vector.load %arg0[%c2144, %c0_76] : memref<3232x128xbf16, #tpu.memory_space<vmem>>, vector<256x128xbf16>
    %108 = arith.truncf %100 : vector<32x256xf32> to vector<32x256xbf16>
    %cst_77 = arith.constant dense<0.000000e+00> : vector<32x128xf32>
    %109 = tpu.matmul %108, %107, %cst_77 {dimension_numbers = #tpu.dot_dimension_numbers<[1], [0], [0], [1], [0, 0, 1, 1], [], []>} : vector<32x256xbf16>, vector<256x128xbf16>, vector<32x128xf32> -> vector<32x128xf32>
    %c0_78 = arith.constant 0 : index
    %c0_79 = arith.constant 0 : index
    %110 = vector.load %arg2[%c0_78, %c0_79] : memref<272x512xbf16, #tpu.memory_space<vmem>>, vector<256x512xbf16>
    %111 = arith.truncf %98 : vector<16x256xf32> to vector<16x256xbf16>
    %cst_80 = arith.constant dense<0.000000e+00> : vector<16x512xf32>
    %112 = tpu.matmul %111, %110, %cst_80 {dimension_numbers = #tpu.dot_dimension_numbers<[1], [0], [0], [1], [0, 0, 1, 1], [], []>} : vector<16x256xbf16>, vector<256x512xbf16>, vector<16x512xf32> -> vector<16x512xf32>
    %113 = arith.truncf %103 : vector<16x128xf32> to vector<16x128xbf16>
    %cst_81 = arith.constant dense<0.000000e+00> : vector<32x128xf32>
    %114 = tpu.matmul %23, %113, %cst_81 {dimension_numbers = #tpu.dot_dimension_numbers<[1], [0], [0], [1], [0, 0, 1, 1], [], []>} : vector<32x16xbf16>, vector<16x128xbf16>, vector<32x128xf32> -> vector<32x128xf32>
    %115 = arith.truncf %106 : vector<16x128xf32> to vector<16x128xbf16>
    %cst_82 = arith.constant dense<0.000000e+00> : vector<32x128xf32>
    %116 = tpu.matmul %24, %115, %cst_82 {dimension_numbers = #tpu.dot_dimension_numbers<[1], [0], [0], [1], [0, 0, 1, 1], [], []>} : vector<32x16xbf16>, vector<16x128xbf16>, vector<32x128xf32> -> vector<32x128xf32>
    %117 = arith.addf %114, %116 : vector<32x128xf32>
    %118 = arith.addf %117, %109 : vector<32x128xf32>
    %119 = vector.broadcast %7 : vector<1x128xf32> to vector<32x128xf32>
    %120 = arith.addf %118, %119 : vector<32x128xf32>
    %cst_83 = arith.constant 0.000000e+00 : f32
    %121 = vector.broadcast %cst_83 : f32 to vector<32x128xf32>
    %122 = arith.cmpf ogt, %120, %121 : vector<32x128xf32>
    %cst_84 = arith.constant 0.00999999977 : f32
    %123 = vector.broadcast %cst_84 : f32 to vector<32x128xf32>
    %124 = arith.mulf %123, %120 : vector<32x128xf32>
    %125 = arith.select %122, %120, %124 : vector<32x128xi1>, vector<32x128xf32>
    %126 = arith.truncf %125 : vector<32x128xf32> to vector<32x128xbf16>
    %cst_85 = arith.constant dense<0.000000e+00> : vector<32x2xf32>
    %127 = tpu.matmul %126, %18, %cst_85 {dimension_numbers = #tpu.dot_dimension_numbers<[1], [0], [0], [1], [0, 0, 1, 1], [], []>} : vector<32x128xbf16>, vector<128x2xbf16>, vector<32x2xf32> -> vector<32x2xf32>
    %cst_86 = arith.constant dense<0xFF800000> : vector<2xf32>
    %128 = vector.multi_reduction <maximumf>, %127, %cst_86 [0] : vector<32x2xf32> to vector<2xf32>
    %129 = vector.shape_cast %128 : vector<2xf32> to vector<1x2xf32>
    %130 = vector.broadcast %129 : vector<1x2xf32> to vector<32x2xf32>
    %131 = arith.subf %127, %130 : vector<32x2xf32>
    %132 = math.exp %131 : vector<32x2xf32>
    %133 = arith.truncf %132 : vector<32x2xf32> to vector<32x2xbf16>
    %cst_87 = arith.constant dense<0.000000e+00> : vector<16x2xf32>
    %134 = tpu.matmul %25, %133, %cst_87 {dimension_numbers = #tpu.dot_dimension_numbers<[1], [0], [0], [1], [0, 0, 1, 1], [], []>} : vector<16x32xbf16>, vector<32x2xbf16>, vector<16x2xf32> -> vector<16x2xf32>
    %cst_88 = arith.constant 1.000000e-30 : f32
    %135 = vector.broadcast %cst_88 : f32 to vector<16x2xf32>
    %136 = arith.maximumf %134, %135 : vector<16x2xf32>
    %cst_89 = arith.constant 1.000000e+00 : f32
    %137 = vector.broadcast %cst_89 : f32 to vector<16x2xf32>
    %138 = arith.divf %137, %136 : vector<16x2xf32>
    %139 = arith.truncf %138 : vector<16x2xf32> to vector<16x2xbf16>
    %cst_90 = arith.constant dense<0.000000e+00> : vector<16x512xf32>
    %140 = tpu.matmul %139, %19, %cst_90 {dimension_numbers = #tpu.dot_dimension_numbers<[1], [0], [0], [1], [0, 0, 1, 1], [], []>} : vector<16x2xbf16>, vector<2x512xbf16>, vector<16x512xf32> -> vector<16x512xf32>
    %141 = arith.truncf %140 : vector<16x512xf32> to vector<16x512xbf16>
    %cst_91 = arith.constant dense<0.000000e+00> : vector<32x512xf32>
    %142 = tpu.matmul %24, %141, %cst_91 {dimension_numbers = #tpu.dot_dimension_numbers<[1], [0], [0], [1], [0, 0, 1, 1], [], []>} : vector<32x16xbf16>, vector<16x512xbf16>, vector<32x512xf32> -> vector<32x512xf32>
    %143 = arith.truncf %132 : vector<32x2xf32> to vector<32x2xbf16>
    %cst_92 = arith.constant dense<0.000000e+00> : vector<32x512xf32>
    %144 = tpu.matmul %143, %19, %cst_92 {dimension_numbers = #tpu.dot_dimension_numbers<[1], [0], [0], [1], [0, 0, 1, 1], [], []>} : vector<32x2xbf16>, vector<2x512xbf16>, vector<32x512xf32> -> vector<32x512xf32>
    %145 = arith.truncf %112 : vector<16x512xf32> to vector<16x512xbf16>
    %cst_93 = arith.constant dense<0.000000e+00> : vector<32x512xf32>
    %146 = tpu.matmul %23, %145, %cst_93 {dimension_numbers = #tpu.dot_dimension_numbers<[1], [0], [0], [1], [0, 0, 1, 1], [], []>} : vector<32x16xbf16>, vector<16x512xbf16>, vector<32x512xf32> -> vector<32x512xf32>
    %147 = arith.mulf %144, %142 : vector<32x512xf32>
    %148 = arith.mulf %147, %146 : vector<32x512xf32>
    %149 = arith.truncf %148 : vector<32x512xf32> to vector<32x512xbf16>
    %cst_94 = arith.constant dense<0.000000e+00> : vector<16x512xf32>
    %150 = tpu.matmul %25, %149, %cst_94 {dimension_numbers = #tpu.dot_dimension_numbers<[1], [0], [0], [1], [0, 0, 1, 1], [], []>} : vector<16x32xbf16>, vector<32x512xbf16>, vector<16x512xf32> -> vector<16x512xf32>
    %c224 = arith.constant 224 : index
    %c0_95 = arith.constant 0 : index
    %151 = vector.load %arg0[%c224, %c0_95] : memref<3232x128xbf16, #tpu.memory_space<vmem>>, vector<128x64xbf16>
    %152 = arith.truncf %125 : vector<32x128xf32> to vector<32x128xbf16>
    %cst_96 = arith.constant dense<0.000000e+00> : vector<32x64xf32>
    %153 = tpu.matmul %152, %151, %cst_96 {dimension_numbers = #tpu.dot_dimension_numbers<[1], [0], [0], [1], [0, 0, 1, 1], [], []>} : vector<32x128xbf16>, vector<128x64xbf16>, vector<32x64xf32> -> vector<32x64xf32>
    %154 = vector.broadcast %2 : vector<1x64xf32> to vector<32x64xf32>
    %155 = arith.addf %153, %154 : vector<32x64xf32>
    %cst_97 = arith.constant 0.000000e+00 : f32
    %156 = vector.broadcast %cst_97 : f32 to vector<32x64xf32>
    %157 = arith.maximumf %155, %156 : vector<32x64xf32>
    %c352 = arith.constant 352 : index
    %c0_98 = arith.constant 0 : index
    %158 = vector.load %arg0[%c352, %c0_98] : memref<3232x128xbf16, #tpu.memory_space<vmem>>, vector<512x64xbf16>
    %159 = arith.truncf %150 : vector<16x512xf32> to vector<16x512xbf16>
    %cst_99 = arith.constant dense<0.000000e+00> : vector<16x64xf32>
    %160 = tpu.matmul %159, %158, %cst_99 {dimension_numbers = #tpu.dot_dimension_numbers<[1], [0], [0], [1], [0, 0, 1, 1], [], []>} : vector<16x512xbf16>, vector<512x64xbf16>, vector<16x64xf32> -> vector<16x64xf32>
    %161 = vector.broadcast %3 : vector<1x64xf32> to vector<16x64xf32>
    %162 = arith.addf %160, %161 : vector<16x64xf32>
    %cst_100 = arith.constant 0.000000e+00 : f32
    %163 = vector.broadcast %cst_100 : f32 to vector<16x64xf32>
    %164 = arith.maximumf %162, %163 : vector<16x64xf32>
    %c272 = arith.constant 272 : index
    %c0_101 = arith.constant 0 : index
    %165 = vector.load %arg1[%c272, %c0_101] : memref<544x256xbf16, #tpu.memory_space<vmem>>, vector<64x256xbf16>
    %166 = arith.truncf %164 : vector<16x64xf32> to vector<16x64xbf16>
    %cst_102 = arith.constant dense<0.000000e+00> : vector<16x256xf32>
    %167 = tpu.matmul %166, %165, %cst_102 {dimension_numbers = #tpu.dot_dimension_numbers<[1], [0], [0], [1], [0, 0, 1, 1], [], []>} : vector<16x64xbf16>, vector<64x256xbf16>, vector<16x256xf32> -> vector<16x256xf32>
    %c336 = arith.constant 336 : index
    %c0_103 = arith.constant 0 : index
    %168 = vector.load %arg1[%c336, %c0_103] : memref<544x256xbf16, #tpu.memory_space<vmem>>, vector<64x256xbf16>
    %169 = arith.truncf %164 : vector<16x64xf32> to vector<16x64xbf16>
    %cst_104 = arith.constant dense<0.000000e+00> : vector<16x256xf32>
    %170 = tpu.matmul %169, %168, %cst_104 {dimension_numbers = #tpu.dot_dimension_numbers<[1], [0], [0], [1], [0, 0, 1, 1], [], []>} : vector<16x64xbf16>, vector<64x256xbf16>, vector<16x256xf32> -> vector<16x256xf32>
    %c400 = arith.constant 400 : index
    %c0_105 = arith.constant 0 : index
    %171 = vector.load %arg1[%c400, %c0_105] : memref<544x256xbf16, #tpu.memory_space<vmem>>, vector<64x256xbf16>
    %172 = arith.truncf %46 : vector<24x64xf32> to vector<24x64xbf16>
    %cst_106 = arith.constant dense<0.000000e+00> : vector<24x256xf32>
    %173 = tpu.matmul %172, %171, %cst_106 {dimension_numbers = #tpu.dot_dimension_numbers<[1], [0], [0], [1], [0, 0, 1, 1], [], []>} : vector<24x64xbf16>, vector<64x256xbf16>, vector<24x256xf32> -> vector<24x256xf32>
    %c464 = arith.constant 464 : index
    %c0_107 = arith.constant 0 : index
    %174 = vector.load %arg1[%c464, %c0_107] : memref<544x256xbf16, #tpu.memory_space<vmem>>, vector<64x256xbf16>
    %175 = arith.truncf %164 : vector<16x64xf32> to vector<16x64xbf16>
    %cst_108 = arith.constant dense<0.000000e+00> : vector<16x256xf32>
    %176 = tpu.matmul %175, %174, %cst_108 {dimension_numbers = #tpu.dot_dimension_numbers<[1], [0], [0], [1], [0, 0, 1, 1], [], []>} : vector<16x64xbf16>, vector<64x256xbf16>, vector<16x256xf32> -> vector<16x256xf32>
    %177 = arith.truncf %167 : vector<16x256xf32> to vector<16x256xbf16>
    %cst_109 = arith.constant dense<0.000000e+00> : vector<24x256xf32>
    %178 = tpu.matmul %26, %177, %cst_109 {dimension_numbers = #tpu.dot_dimension_numbers<[1], [0], [0], [1], [0, 0, 1, 1], [], []>} : vector<24x16xbf16>, vector<16x256xbf16>, vector<24x256xf32> -> vector<24x256xf32>
    %179 = arith.truncf %170 : vector<16x256xf32> to vector<16x256xbf16>
    %cst_110 = arith.constant dense<0.000000e+00> : vector<24x256xf32>
    %180 = tpu.matmul %27, %179, %cst_110 {dimension_numbers = #tpu.dot_dimension_numbers<[1], [0], [0], [1], [0, 0, 1, 1], [], []>} : vector<24x16xbf16>, vector<16x256xbf16>, vector<24x256xf32> -> vector<24x256xf32>
    %181 = arith.addf %178, %180 : vector<24x256xf32>
    %182 = arith.addf %181, %173 : vector<24x256xf32>
    %183 = vector.broadcast %8 : vector<1x256xf32> to vector<24x256xf32>
    %184 = arith.addf %182, %183 : vector<24x256xf32>
    %cst_111 = arith.constant 0.000000e+00 : f32
    %185 = vector.broadcast %cst_111 : f32 to vector<24x256xf32>
    %186 = arith.cmpf ogt, %184, %185 : vector<24x256xf32>
    %cst_112 = arith.constant 0.00999999977 : f32
    %187 = vector.broadcast %cst_112 : f32 to vector<24x256xf32>
    %188 = arith.mulf %187, %184 : vector<24x256xf32>
    %189 = arith.select %186, %184, %188 : vector<24x256xi1>, vector<24x256xf32>
    %190 = arith.truncf %189 : vector<24x256xf32> to vector<24x256xbf16>
    %cst_113 = arith.constant dense<0.000000e+00> : vector<24x2xf32>
    %191 = tpu.matmul %190, %20, %cst_113 {dimension_numbers = #tpu.dot_dimension_numbers<[1], [0], [0], [1], [0, 0, 1, 1], [], []>} : vector<24x256xbf16>, vector<256x2xbf16>, vector<24x2xf32> -> vector<24x2xf32>
    %cst_114 = arith.constant dense<0xFF800000> : vector<2xf32>
    %192 = vector.multi_reduction <maximumf>, %191, %cst_114 [0] : vector<24x2xf32> to vector<2xf32>
    %193 = vector.shape_cast %192 : vector<2xf32> to vector<1x2xf32>
    %194 = vector.broadcast %193 : vector<1x2xf32> to vector<24x2xf32>
    %195 = arith.subf %191, %194 : vector<24x2xf32>
    %196 = math.exp %195 : vector<24x2xf32>
    %197 = arith.truncf %196 : vector<24x2xf32> to vector<24x2xbf16>
    %cst_115 = arith.constant dense<0.000000e+00> : vector<16x2xf32>
    %198 = tpu.matmul %28, %197, %cst_115 {dimension_numbers = #tpu.dot_dimension_numbers<[1], [0], [0], [1], [0, 0, 1, 1], [], []>} : vector<16x24xbf16>, vector<24x2xbf16>, vector<16x2xf32> -> vector<16x2xf32>
    %cst_116 = arith.constant 1.000000e-30 : f32
    %199 = vector.broadcast %cst_116 : f32 to vector<16x2xf32>
    %200 = arith.maximumf %198, %199 : vector<16x2xf32>
    %cst_117 = arith.constant 1.000000e+00 : f32
    %201 = vector.broadcast %cst_117 : f32 to vector<16x2xf32>
    %202 = arith.divf %201, %200 : vector<16x2xf32>
    %203 = arith.truncf %202 : vector<16x2xf32> to vector<16x2xbf16>
    %cst_118 = arith.constant dense<0.000000e+00> : vector<16x256xf32>
    %204 = tpu.matmul %203, %21, %cst_118 {dimension_numbers = #tpu.dot_dimension_numbers<[1], [0], [0], [1], [0, 0, 1, 1], [], []>} : vector<16x2xbf16>, vector<2x256xbf16>, vector<16x256xf32> -> vector<16x256xf32>
    %205 = arith.truncf %204 : vector<16x256xf32> to vector<16x256xbf16>
    %cst_119 = arith.constant dense<0.000000e+00> : vector<24x256xf32>
    %206 = tpu.matmul %27, %205, %cst_119 {dimension_numbers = #tpu.dot_dimension_numbers<[1], [0], [0], [1], [0, 0, 1, 1], [], []>} : vector<24x16xbf16>, vector<16x256xbf16>, vector<24x256xf32> -> vector<24x256xf32>
    %207 = arith.truncf %196 : vector<24x2xf32> to vector<24x2xbf16>
    %cst_120 = arith.constant dense<0.000000e+00> : vector<24x256xf32>
    %208 = tpu.matmul %207, %21, %cst_120 {dimension_numbers = #tpu.dot_dimension_numbers<[1], [0], [0], [1], [0, 0, 1, 1], [], []>} : vector<24x2xbf16>, vector<2x256xbf16>, vector<24x256xf32> -> vector<24x256xf32>
    %209 = arith.truncf %176 : vector<16x256xf32> to vector<16x256xbf16>
    %cst_121 = arith.constant dense<0.000000e+00> : vector<24x256xf32>
    %210 = tpu.matmul %26, %209, %cst_121 {dimension_numbers = #tpu.dot_dimension_numbers<[1], [0], [0], [1], [0, 0, 1, 1], [], []>} : vector<24x16xbf16>, vector<16x256xbf16>, vector<24x256xf32> -> vector<24x256xf32>
    %211 = arith.mulf %208, %206 : vector<24x256xf32>
    %212 = arith.mulf %211, %210 : vector<24x256xf32>
    %213 = arith.truncf %212 : vector<24x256xf32> to vector<24x256xbf16>
    %cst_122 = arith.constant dense<0.000000e+00> : vector<16x256xf32>
    %214 = tpu.matmul %28, %213, %cst_122 {dimension_numbers = #tpu.dot_dimension_numbers<[1], [0], [0], [1], [0, 0, 1, 1], [], []>} : vector<16x24xbf16>, vector<24x256xbf16>, vector<16x256xf32> -> vector<16x256xf32>
    %c1120 = arith.constant 1120 : index
    %c0_123 = arith.constant 0 : index
    %215 = vector.load %arg0[%c1120, %c0_123] : memref<3232x128xbf16, #tpu.memory_space<vmem>>, vector<256x64xbf16>
    %216 = arith.truncf %189 : vector<24x256xf32> to vector<24x256xbf16>
    %cst_124 = arith.constant dense<0.000000e+00> : vector<24x64xf32>
    %217 = tpu.matmul %216, %215, %cst_124 {dimension_numbers = #tpu.dot_dimension_numbers<[1], [0], [0], [1], [0, 0, 1, 1], [], []>} : vector<24x256xbf16>, vector<256x64xbf16>, vector<24x64xf32> -> vector<24x64xf32>
    %218 = vector.broadcast %5 : vector<1x64xf32> to vector<24x64xf32>
    %219 = arith.addf %217, %218 : vector<24x64xf32>
    %cst_125 = arith.constant 0.000000e+00 : f32
    %220 = vector.broadcast %cst_125 : f32 to vector<24x64xf32>
    %221 = arith.maximumf %219, %220 : vector<24x64xf32>
    %c864 = arith.constant 864 : index
    %c0_126 = arith.constant 0 : index
    %222 = vector.load %arg0[%c864, %c0_126] : memref<3232x128xbf16, #tpu.memory_space<vmem>>, vector<256x64xbf16>
    %223 = arith.truncf %214 : vector<16x256xf32> to vector<16x256xbf16>
    %cst_127 = arith.constant dense<0.000000e+00> : vector<16x64xf32>
    %224 = tpu.matmul %223, %222, %cst_127 {dimension_numbers = #tpu.dot_dimension_numbers<[1], [0], [0], [1], [0, 0, 1, 1], [], []>} : vector<16x256xbf16>, vector<256x64xbf16>, vector<16x64xf32> -> vector<16x64xf32>
    %225 = vector.broadcast %4 : vector<1x64xf32> to vector<16x64xf32>
    %226 = arith.addf %224, %225 : vector<16x64xf32>
    %cst_128 = arith.constant 0.000000e+00 : f32
    %227 = vector.broadcast %cst_128 : f32 to vector<16x64xf32>
    %228 = arith.maximumf %226, %227 : vector<16x64xf32>
    %229 = arith.addf %164, %228 : vector<16x64xf32>
    %c0_129 = arith.constant 0 : index
    %c0_130 = arith.constant 0 : index
    %230 = vector.load %arg1[%c0_129, %c0_130] : memref<544x256xbf16, #tpu.memory_space<vmem>>, vector<64x256xbf16>
    %231 = arith.truncf %229 : vector<16x64xf32> to vector<16x64xbf16>
    %cst_131 = arith.constant dense<0.000000e+00> : vector<16x256xf32>
    %232 = tpu.matmul %231, %230, %cst_131 {dimension_numbers = #tpu.dot_dimension_numbers<[1], [0], [0], [1], [0, 0, 1, 1], [], []>} : vector<16x64xbf16>, vector<64x256xbf16>, vector<16x256xf32> -> vector<16x256xf32>
    %c64_132 = arith.constant 64 : index
    %c0_133 = arith.constant 0 : index
    %233 = vector.load %arg1[%c64_132, %c0_133] : memref<544x256xbf16, #tpu.memory_space<vmem>>, vector<64x256xbf16>
    %234 = arith.truncf %229 : vector<16x64xf32> to vector<16x64xbf16>
    %cst_134 = arith.constant dense<0.000000e+00> : vector<16x256xf32>
    %235 = tpu.matmul %234, %233, %cst_134 {dimension_numbers = #tpu.dot_dimension_numbers<[1], [0], [0], [1], [0, 0, 1, 1], [], []>} : vector<16x64xbf16>, vector<64x256xbf16>, vector<16x256xf32> -> vector<16x256xf32>
    %c128_135 = arith.constant 128 : index
    %c0_136 = arith.constant 0 : index
    %236 = vector.load %arg1[%c128_135, %c0_136] : memref<544x256xbf16, #tpu.memory_space<vmem>>, vector<64x256xbf16>
    %237 = arith.truncf %157 : vector<32x64xf32> to vector<32x64xbf16>
    %cst_137 = arith.constant dense<0.000000e+00> : vector<32x256xf32>
    %238 = tpu.matmul %237, %236, %cst_137 {dimension_numbers = #tpu.dot_dimension_numbers<[1], [0], [0], [1], [0, 0, 1, 1], [], []>} : vector<32x64xbf16>, vector<64x256xbf16>, vector<32x256xf32> -> vector<32x256xf32>
    %c192_138 = arith.constant 192 : index
    %c0_139 = arith.constant 0 : index
    %239 = vector.load %arg1[%c192_138, %c0_139] : memref<544x256xbf16, #tpu.memory_space<vmem>>, vector<64x256xbf16>
    %240 = arith.truncf %229 : vector<16x64xf32> to vector<16x64xbf16>
    %cst_140 = arith.constant dense<0.000000e+00> : vector<16x256xf32>
    %241 = tpu.matmul %240, %239, %cst_140 {dimension_numbers = #tpu.dot_dimension_numbers<[1], [0], [0], [1], [0, 0, 1, 1], [], []>} : vector<16x64xbf16>, vector<64x256xbf16>, vector<16x256xf32> -> vector<16x256xf32>
    %242 = arith.truncf %232 : vector<16x256xf32> to vector<16x256xbf16>
    %cst_141 = arith.constant dense<0.000000e+00> : vector<32x256xf32>
    %243 = tpu.matmul %23, %242, %cst_141 {dimension_numbers = #tpu.dot_dimension_numbers<[1], [0], [0], [1], [0, 0, 1, 1], [], []>} : vector<32x16xbf16>, vector<16x256xbf16>, vector<32x256xf32> -> vector<32x256xf32>
    %244 = arith.truncf %235 : vector<16x256xf32> to vector<16x256xbf16>
    %cst_142 = arith.constant dense<0.000000e+00> : vector<32x256xf32>
    %245 = tpu.matmul %24, %244, %cst_142 {dimension_numbers = #tpu.dot_dimension_numbers<[1], [0], [0], [1], [0, 0, 1, 1], [], []>} : vector<32x16xbf16>, vector<16x256xbf16>, vector<32x256xf32> -> vector<32x256xf32>
    %246 = arith.addf %243, %245 : vector<32x256xf32>
    %247 = arith.addf %246, %238 : vector<32x256xf32>
    %248 = vector.broadcast %6 : vector<1x256xf32> to vector<32x256xf32>
    %249 = arith.addf %247, %248 : vector<32x256xf32>
    %cst_143 = arith.constant 0.000000e+00 : f32
    %250 = vector.broadcast %cst_143 : f32 to vector<32x256xf32>
    %251 = arith.cmpf ogt, %249, %250 : vector<32x256xf32>
    %cst_144 = arith.constant 0.00999999977 : f32
    %252 = vector.broadcast %cst_144 : f32 to vector<32x256xf32>
    %253 = arith.mulf %252, %249 : vector<32x256xf32>
    %254 = arith.select %251, %249, %253 : vector<32x256xi1>, vector<32x256xf32>
    %255 = arith.truncf %254 : vector<32x256xf32> to vector<32x256xbf16>
    %cst_145 = arith.constant dense<0.000000e+00> : vector<32x2xf32>
    %256 = tpu.matmul %255, %16, %cst_145 {dimension_numbers = #tpu.dot_dimension_numbers<[1], [0], [0], [1], [0, 0, 1, 1], [], []>} : vector<32x256xbf16>, vector<256x2xbf16>, vector<32x2xf32> -> vector<32x2xf32>
    %cst_146 = arith.constant dense<0xFF800000> : vector<2xf32>
    %257 = vector.multi_reduction <maximumf>, %256, %cst_146 [0] : vector<32x2xf32> to vector<2xf32>
    %258 = vector.shape_cast %257 : vector<2xf32> to vector<1x2xf32>
    %259 = vector.broadcast %258 : vector<1x2xf32> to vector<32x2xf32>
    %260 = arith.subf %256, %259 : vector<32x2xf32>
    %261 = math.exp %260 : vector<32x2xf32>
    %262 = arith.truncf %261 : vector<32x2xf32> to vector<32x2xbf16>
    %cst_147 = arith.constant dense<0.000000e+00> : vector<16x2xf32>
    %263 = tpu.matmul %25, %262, %cst_147 {dimension_numbers = #tpu.dot_dimension_numbers<[1], [0], [0], [1], [0, 0, 1, 1], [], []>} : vector<16x32xbf16>, vector<32x2xbf16>, vector<16x2xf32> -> vector<16x2xf32>
    %cst_148 = arith.constant 1.000000e-30 : f32
    %264 = vector.broadcast %cst_148 : f32 to vector<16x2xf32>
    %265 = arith.maximumf %263, %264 : vector<16x2xf32>
    %cst_149 = arith.constant 1.000000e+00 : f32
    %266 = vector.broadcast %cst_149 : f32 to vector<16x2xf32>
    %267 = arith.divf %266, %265 : vector<16x2xf32>
    %268 = arith.truncf %267 : vector<16x2xf32> to vector<16x2xbf16>
    %cst_150 = arith.constant dense<0.000000e+00> : vector<16x256xf32>
    %269 = tpu.matmul %268, %17, %cst_150 {dimension_numbers = #tpu.dot_dimension_numbers<[1], [0], [0], [1], [0, 0, 1, 1], [], []>} : vector<16x2xbf16>, vector<2x256xbf16>, vector<16x256xf32> -> vector<16x256xf32>
    %270 = arith.truncf %269 : vector<16x256xf32> to vector<16x256xbf16>
    %cst_151 = arith.constant dense<0.000000e+00> : vector<32x256xf32>
    %271 = tpu.matmul %24, %270, %cst_151 {dimension_numbers = #tpu.dot_dimension_numbers<[1], [0], [0], [1], [0, 0, 1, 1], [], []>} : vector<32x16xbf16>, vector<16x256xbf16>, vector<32x256xf32> -> vector<32x256xf32>
    %272 = arith.truncf %261 : vector<32x2xf32> to vector<32x2xbf16>
    %cst_152 = arith.constant dense<0.000000e+00> : vector<32x256xf32>
    %273 = tpu.matmul %272, %17, %cst_152 {dimension_numbers = #tpu.dot_dimension_numbers<[1], [0], [0], [1], [0, 0, 1, 1], [], []>} : vector<32x2xbf16>, vector<2x256xbf16>, vector<32x256xf32> -> vector<32x256xf32>
    %274 = arith.truncf %241 : vector<16x256xf32> to vector<16x256xbf16>
    %cst_153 = arith.constant dense<0.000000e+00> : vector<32x256xf32>
    %275 = tpu.matmul %23, %274, %cst_153 {dimension_numbers = #tpu.dot_dimension_numbers<[1], [0], [0], [1], [0, 0, 1, 1], [], []>} : vector<32x16xbf16>, vector<16x256xbf16>, vector<32x256xf32> -> vector<32x256xf32>
    %276 = arith.mulf %273, %271 : vector<32x256xf32>
    %277 = arith.mulf %276, %275 : vector<32x256xf32>
    %278 = arith.truncf %277 : vector<32x256xf32> to vector<32x256xbf16>
    %cst_154 = arith.constant dense<0.000000e+00> : vector<16x256xf32>
    %279 = tpu.matmul %25, %278, %cst_154 {dimension_numbers = #tpu.dot_dimension_numbers<[1], [0], [0], [1], [0, 0, 1, 1], [], []>} : vector<16x32xbf16>, vector<32x256xbf16>, vector<16x256xf32> -> vector<16x256xf32>
    %cst_155 = arith.constant 0.000000e+00 : f32
    %280 = vector.broadcast %cst_155 : f32 to vector<16x256xf32>
    %281 = arith.maximumf %279, %280 : vector<16x256xf32>
    %cst_156 = arith.constant 0.000000e+00 : f32
    %282 = vector.broadcast %cst_156 : f32 to vector<32x256xf32>
    %283 = arith.maximumf %254, %282 : vector<32x256xf32>
    %c1632_157 = arith.constant 1632 : index
    %c0_158 = arith.constant 0 : index
    %284 = vector.load %arg0[%c1632_157, %c0_158] : memref<3232x128xbf16, #tpu.memory_space<vmem>>, vector<256x128xbf16>
    %285 = arith.truncf %281 : vector<16x256xf32> to vector<16x256xbf16>
    %cst_159 = arith.constant dense<0.000000e+00> : vector<16x128xf32>
    %286 = tpu.matmul %285, %284, %cst_159 {dimension_numbers = #tpu.dot_dimension_numbers<[1], [0], [0], [1], [0, 0, 1, 1], [], []>} : vector<16x256xbf16>, vector<256x128xbf16>, vector<16x128xf32> -> vector<16x128xf32>
    %c1888_160 = arith.constant 1888 : index
    %c0_161 = arith.constant 0 : index
    %287 = vector.load %arg0[%c1888_160, %c0_161] : memref<3232x128xbf16, #tpu.memory_space<vmem>>, vector<256x128xbf16>
    %288 = arith.truncf %281 : vector<16x256xf32> to vector<16x256xbf16>
    %cst_162 = arith.constant dense<0.000000e+00> : vector<16x128xf32>
    %289 = tpu.matmul %288, %287, %cst_162 {dimension_numbers = #tpu.dot_dimension_numbers<[1], [0], [0], [1], [0, 0, 1, 1], [], []>} : vector<16x256xbf16>, vector<256x128xbf16>, vector<16x128xf32> -> vector<16x128xf32>
    %c2144_163 = arith.constant 2144 : index
    %c0_164 = arith.constant 0 : index
    %290 = vector.load %arg0[%c2144_163, %c0_164] : memref<3232x128xbf16, #tpu.memory_space<vmem>>, vector<256x128xbf16>
    %291 = arith.truncf %283 : vector<32x256xf32> to vector<32x256xbf16>
    %cst_165 = arith.constant dense<0.000000e+00> : vector<32x128xf32>
    %292 = tpu.matmul %291, %290, %cst_165 {dimension_numbers = #tpu.dot_dimension_numbers<[1], [0], [0], [1], [0, 0, 1, 1], [], []>} : vector<32x256xbf16>, vector<256x128xbf16>, vector<32x128xf32> -> vector<32x128xf32>
    %c0_166 = arith.constant 0 : index
    %c0_167 = arith.constant 0 : index
    %293 = vector.load %arg2[%c0_166, %c0_167] : memref<272x512xbf16, #tpu.memory_space<vmem>>, vector<256x512xbf16>
    %294 = arith.truncf %281 : vector<16x256xf32> to vector<16x256xbf16>
    %cst_168 = arith.constant dense<0.000000e+00> : vector<16x512xf32>
    %295 = tpu.matmul %294, %293, %cst_168 {dimension_numbers = #tpu.dot_dimension_numbers<[1], [0], [0], [1], [0, 0, 1, 1], [], []>} : vector<16x256xbf16>, vector<256x512xbf16>, vector<16x512xf32> -> vector<16x512xf32>
    %296 = arith.truncf %286 : vector<16x128xf32> to vector<16x128xbf16>
    %cst_169 = arith.constant dense<0.000000e+00> : vector<32x128xf32>
    %297 = tpu.matmul %23, %296, %cst_169 {dimension_numbers = #tpu.dot_dimension_numbers<[1], [0], [0], [1], [0, 0, 1, 1], [], []>} : vector<32x16xbf16>, vector<16x128xbf16>, vector<32x128xf32> -> vector<32x128xf32>
    %298 = arith.truncf %289 : vector<16x128xf32> to vector<16x128xbf16>
    %cst_170 = arith.constant dense<0.000000e+00> : vector<32x128xf32>
    %299 = tpu.matmul %24, %298, %cst_170 {dimension_numbers = #tpu.dot_dimension_numbers<[1], [0], [0], [1], [0, 0, 1, 1], [], []>} : vector<32x16xbf16>, vector<16x128xbf16>, vector<32x128xf32> -> vector<32x128xf32>
    %300 = arith.addf %297, %299 : vector<32x128xf32>
    %301 = arith.addf %300, %292 : vector<32x128xf32>
    %302 = vector.broadcast %7 : vector<1x128xf32> to vector<32x128xf32>
    %303 = arith.addf %301, %302 : vector<32x128xf32>
    %cst_171 = arith.constant 0.000000e+00 : f32
    %304 = vector.broadcast %cst_171 : f32 to vector<32x128xf32>
    %305 = arith.cmpf ogt, %303, %304 : vector<32x128xf32>
    %cst_172 = arith.constant 0.00999999977 : f32
    %306 = vector.broadcast %cst_172 : f32 to vector<32x128xf32>
    %307 = arith.mulf %306, %303 : vector<32x128xf32>
    %308 = arith.select %305, %303, %307 : vector<32x128xi1>, vector<32x128xf32>
    %309 = arith.truncf %308 : vector<32x128xf32> to vector<32x128xbf16>
    %cst_173 = arith.constant dense<0.000000e+00> : vector<32x2xf32>
    %310 = tpu.matmul %309, %18, %cst_173 {dimension_numbers = #tpu.dot_dimension_numbers<[1], [0], [0], [1], [0, 0, 1, 1], [], []>} : vector<32x128xbf16>, vector<128x2xbf16>, vector<32x2xf32> -> vector<32x2xf32>
    %cst_174 = arith.constant dense<0xFF800000> : vector<2xf32>
    %311 = vector.multi_reduction <maximumf>, %310, %cst_174 [0] : vector<32x2xf32> to vector<2xf32>
    %312 = vector.shape_cast %311 : vector<2xf32> to vector<1x2xf32>
    %313 = vector.broadcast %312 : vector<1x2xf32> to vector<32x2xf32>
    %314 = arith.subf %310, %313 : vector<32x2xf32>
    %315 = math.exp %314 : vector<32x2xf32>
    %316 = arith.truncf %315 : vector<32x2xf32> to vector<32x2xbf16>
    %cst_175 = arith.constant dense<0.000000e+00> : vector<16x2xf32>
    %317 = tpu.matmul %25, %316, %cst_175 {dimension_numbers = #tpu.dot_dimension_numbers<[1], [0], [0], [1], [0, 0, 1, 1], [], []>} : vector<16x32xbf16>, vector<32x2xbf16>, vector<16x2xf32> -> vector<16x2xf32>
    %cst_176 = arith.constant 1.000000e-30 : f32
    %318 = vector.broadcast %cst_176 : f32 to vector<16x2xf32>
    %319 = arith.maximumf %317, %318 : vector<16x2xf32>
    %cst_177 = arith.constant 1.000000e+00 : f32
    %320 = vector.broadcast %cst_177 : f32 to vector<16x2xf32>
    %321 = arith.divf %320, %319 : vector<16x2xf32>
    %322 = arith.truncf %321 : vector<16x2xf32> to vector<16x2xbf16>
    %cst_178 = arith.constant dense<0.000000e+00> : vector<16x512xf32>
    %323 = tpu.matmul %322, %19, %cst_178 {dimension_numbers = #tpu.dot_dimension_numbers<[1], [0], [0], [1], [0, 0, 1, 1], [], []>} : vector<16x2xbf16>, vector<2x512xbf16>, vector<16x512xf32> -> vector<16x512xf32>
    %324 = arith.truncf %323 : vector<16x512xf32> to vector<16x512xbf16>
    %cst_179 = arith.constant dense<0.000000e+00> : vector<32x512xf32>
    %325 = tpu.matmul %24, %324, %cst_179 {dimension_numbers = #tpu.dot_dimension_numbers<[1], [0], [0], [1], [0, 0, 1, 1], [], []>} : vector<32x16xbf16>, vector<16x512xbf16>, vector<32x512xf32> -> vector<32x512xf32>
    %326 = arith.truncf %315 : vector<32x2xf32> to vector<32x2xbf16>
    %cst_180 = arith.constant dense<0.000000e+00> : vector<32x512xf32>
    %327 = tpu.matmul %326, %19, %cst_180 {dimension_numbers = #tpu.dot_dimension_numbers<[1], [0], [0], [1], [0, 0, 1, 1], [], []>} : vector<32x2xbf16>, vector<2x512xbf16>, vector<32x512xf32> -> vector<32x512xf32>
    %328 = arith.truncf %295 : vector<16x512xf32> to vector<16x512xbf16>
    %cst_181 = arith.constant dense<0.000000e+00> : vector<32x512xf32>
    %329 = tpu.matmul %23, %328, %cst_181 {dimension_numbers = #tpu.dot_dimension_numbers<[1], [0], [0], [1], [0, 0, 1, 1], [], []>} : vector<32x16xbf16>, vector<16x512xbf16>, vector<32x512xf32> -> vector<32x512xf32>
    %330 = arith.mulf %327, %325 : vector<32x512xf32>
    %331 = arith.mulf %330, %329 : vector<32x512xf32>
    %332 = arith.truncf %331 : vector<32x512xf32> to vector<32x512xbf16>
    %cst_182 = arith.constant dense<0.000000e+00> : vector<16x512xf32>
    %333 = tpu.matmul %25, %332, %cst_182 {dimension_numbers = #tpu.dot_dimension_numbers<[1], [0], [0], [1], [0, 0, 1, 1], [], []>} : vector<16x32xbf16>, vector<32x512xbf16>, vector<16x512xf32> -> vector<16x512xf32>
    %c224_183 = arith.constant 224 : index
    %c0_184 = arith.constant 0 : index
    %334 = vector.load %arg0[%c224_183, %c0_184] : memref<3232x128xbf16, #tpu.memory_space<vmem>>, vector<128x64xbf16>
    %335 = arith.truncf %308 : vector<32x128xf32> to vector<32x128xbf16>
    %cst_185 = arith.constant dense<0.000000e+00> : vector<32x64xf32>
    %336 = tpu.matmul %335, %334, %cst_185 {dimension_numbers = #tpu.dot_dimension_numbers<[1], [0], [0], [1], [0, 0, 1, 1], [], []>} : vector<32x128xbf16>, vector<128x64xbf16>, vector<32x64xf32> -> vector<32x64xf32>
    %337 = vector.broadcast %2 : vector<1x64xf32> to vector<32x64xf32>
    %338 = arith.addf %336, %337 : vector<32x64xf32>
    %cst_186 = arith.constant 0.000000e+00 : f32
    %339 = vector.broadcast %cst_186 : f32 to vector<32x64xf32>
    %340 = arith.maximumf %338, %339 : vector<32x64xf32>
    %c352_187 = arith.constant 352 : index
    %c0_188 = arith.constant 0 : index
    %341 = vector.load %arg0[%c352_187, %c0_188] : memref<3232x128xbf16, #tpu.memory_space<vmem>>, vector<512x64xbf16>
    %342 = arith.truncf %333 : vector<16x512xf32> to vector<16x512xbf16>
    %cst_189 = arith.constant dense<0.000000e+00> : vector<16x64xf32>
    %343 = tpu.matmul %342, %341, %cst_189 {dimension_numbers = #tpu.dot_dimension_numbers<[1], [0], [0], [1], [0, 0, 1, 1], [], []>} : vector<16x512xbf16>, vector<512x64xbf16>, vector<16x64xf32> -> vector<16x64xf32>
    %344 = vector.broadcast %3 : vector<1x64xf32> to vector<16x64xf32>
    %345 = arith.addf %343, %344 : vector<16x64xf32>
    %cst_190 = arith.constant 0.000000e+00 : f32
    %346 = vector.broadcast %cst_190 : f32 to vector<16x64xf32>
    %347 = arith.maximumf %345, %346 : vector<16x64xf32>
    %c272_191 = arith.constant 272 : index
    %c0_192 = arith.constant 0 : index
    %348 = vector.load %arg1[%c272_191, %c0_192] : memref<544x256xbf16, #tpu.memory_space<vmem>>, vector<64x256xbf16>
    %349 = arith.truncf %347 : vector<16x64xf32> to vector<16x64xbf16>
    %cst_193 = arith.constant dense<0.000000e+00> : vector<16x256xf32>
    %350 = tpu.matmul %349, %348, %cst_193 {dimension_numbers = #tpu.dot_dimension_numbers<[1], [0], [0], [1], [0, 0, 1, 1], [], []>} : vector<16x64xbf16>, vector<64x256xbf16>, vector<16x256xf32> -> vector<16x256xf32>
    %c336_194 = arith.constant 336 : index
    %c0_195 = arith.constant 0 : index
    %351 = vector.load %arg1[%c336_194, %c0_195] : memref<544x256xbf16, #tpu.memory_space<vmem>>, vector<64x256xbf16>
    %352 = arith.truncf %347 : vector<16x64xf32> to vector<16x64xbf16>
    %cst_196 = arith.constant dense<0.000000e+00> : vector<16x256xf32>
    %353 = tpu.matmul %352, %351, %cst_196 {dimension_numbers = #tpu.dot_dimension_numbers<[1], [0], [0], [1], [0, 0, 1, 1], [], []>} : vector<16x64xbf16>, vector<64x256xbf16>, vector<16x256xf32> -> vector<16x256xf32>
    %c400_197 = arith.constant 400 : index
    %c0_198 = arith.constant 0 : index
    %354 = vector.load %arg1[%c400_197, %c0_198] : memref<544x256xbf16, #tpu.memory_space<vmem>>, vector<64x256xbf16>
    %355 = arith.truncf %221 : vector<24x64xf32> to vector<24x64xbf16>
    %cst_199 = arith.constant dense<0.000000e+00> : vector<24x256xf32>
    %356 = tpu.matmul %355, %354, %cst_199 {dimension_numbers = #tpu.dot_dimension_numbers<[1], [0], [0], [1], [0, 0, 1, 1], [], []>} : vector<24x64xbf16>, vector<64x256xbf16>, vector<24x256xf32> -> vector<24x256xf32>
    %c464_200 = arith.constant 464 : index
    %c0_201 = arith.constant 0 : index
    %357 = vector.load %arg1[%c464_200, %c0_201] : memref<544x256xbf16, #tpu.memory_space<vmem>>, vector<64x256xbf16>
    %358 = arith.truncf %347 : vector<16x64xf32> to vector<16x64xbf16>
    %cst_202 = arith.constant dense<0.000000e+00> : vector<16x256xf32>
    %359 = tpu.matmul %358, %357, %cst_202 {dimension_numbers = #tpu.dot_dimension_numbers<[1], [0], [0], [1], [0, 0, 1, 1], [], []>} : vector<16x64xbf16>, vector<64x256xbf16>, vector<16x256xf32> -> vector<16x256xf32>
    %360 = arith.truncf %350 : vector<16x256xf32> to vector<16x256xbf16>
    %cst_203 = arith.constant dense<0.000000e+00> : vector<24x256xf32>
    %361 = tpu.matmul %26, %360, %cst_203 {dimension_numbers = #tpu.dot_dimension_numbers<[1], [0], [0], [1], [0, 0, 1, 1], [], []>} : vector<24x16xbf16>, vector<16x256xbf16>, vector<24x256xf32> -> vector<24x256xf32>
    %362 = arith.truncf %353 : vector<16x256xf32> to vector<16x256xbf16>
    %cst_204 = arith.constant dense<0.000000e+00> : vector<24x256xf32>
    %363 = tpu.matmul %27, %362, %cst_204 {dimension_numbers = #tpu.dot_dimension_numbers<[1], [0], [0], [1], [0, 0, 1, 1], [], []>} : vector<24x16xbf16>, vector<16x256xbf16>, vector<24x256xf32> -> vector<24x256xf32>
    %364 = arith.addf %361, %363 : vector<24x256xf32>
    %365 = arith.addf %364, %356 : vector<24x256xf32>
    %366 = vector.broadcast %8 : vector<1x256xf32> to vector<24x256xf32>
    %367 = arith.addf %365, %366 : vector<24x256xf32>
    %cst_205 = arith.constant 0.000000e+00 : f32
    %368 = vector.broadcast %cst_205 : f32 to vector<24x256xf32>
    %369 = arith.cmpf ogt, %367, %368 : vector<24x256xf32>
    %cst_206 = arith.constant 0.00999999977 : f32
    %370 = vector.broadcast %cst_206 : f32 to vector<24x256xf32>
    %371 = arith.mulf %370, %367 : vector<24x256xf32>
    %372 = arith.select %369, %367, %371 : vector<24x256xi1>, vector<24x256xf32>
    %373 = arith.truncf %372 : vector<24x256xf32> to vector<24x256xbf16>
    %cst_207 = arith.constant dense<0.000000e+00> : vector<24x2xf32>
    %374 = tpu.matmul %373, %20, %cst_207 {dimension_numbers = #tpu.dot_dimension_numbers<[1], [0], [0], [1], [0, 0, 1, 1], [], []>} : vector<24x256xbf16>, vector<256x2xbf16>, vector<24x2xf32> -> vector<24x2xf32>
    %cst_208 = arith.constant dense<0xFF800000> : vector<2xf32>
    %375 = vector.multi_reduction <maximumf>, %374, %cst_208 [0] : vector<24x2xf32> to vector<2xf32>
    %376 = vector.shape_cast %375 : vector<2xf32> to vector<1x2xf32>
    %377 = vector.broadcast %376 : vector<1x2xf32> to vector<24x2xf32>
    %378 = arith.subf %374, %377 : vector<24x2xf32>
    %379 = math.exp %378 : vector<24x2xf32>
    %380 = arith.truncf %379 : vector<24x2xf32> to vector<24x2xbf16>
    %cst_209 = arith.constant dense<0.000000e+00> : vector<16x2xf32>
    %381 = tpu.matmul %28, %380, %cst_209 {dimension_numbers = #tpu.dot_dimension_numbers<[1], [0], [0], [1], [0, 0, 1, 1], [], []>} : vector<16x24xbf16>, vector<24x2xbf16>, vector<16x2xf32> -> vector<16x2xf32>
    %cst_210 = arith.constant 1.000000e-30 : f32
    %382 = vector.broadcast %cst_210 : f32 to vector<16x2xf32>
    %383 = arith.maximumf %381, %382 : vector<16x2xf32>
    %cst_211 = arith.constant 1.000000e+00 : f32
    %384 = vector.broadcast %cst_211 : f32 to vector<16x2xf32>
    %385 = arith.divf %384, %383 : vector<16x2xf32>
    %386 = arith.truncf %385 : vector<16x2xf32> to vector<16x2xbf16>
    %cst_212 = arith.constant dense<0.000000e+00> : vector<16x256xf32>
    %387 = tpu.matmul %386, %21, %cst_212 {dimension_numbers = #tpu.dot_dimension_numbers<[1], [0], [0], [1], [0, 0, 1, 1], [], []>} : vector<16x2xbf16>, vector<2x256xbf16>, vector<16x256xf32> -> vector<16x256xf32>
    %388 = arith.truncf %387 : vector<16x256xf32> to vector<16x256xbf16>
    %cst_213 = arith.constant dense<0.000000e+00> : vector<24x256xf32>
    %389 = tpu.matmul %27, %388, %cst_213 {dimension_numbers = #tpu.dot_dimension_numbers<[1], [0], [0], [1], [0, 0, 1, 1], [], []>} : vector<24x16xbf16>, vector<16x256xbf16>, vector<24x256xf32> -> vector<24x256xf32>
    %390 = arith.truncf %379 : vector<24x2xf32> to vector<24x2xbf16>
    %cst_214 = arith.constant dense<0.000000e+00> : vector<24x256xf32>
    %391 = tpu.matmul %390, %21, %cst_214 {dimension_numbers = #tpu.dot_dimension_numbers<[1], [0], [0], [1], [0, 0, 1, 1], [], []>} : vector<24x2xbf16>, vector<2x256xbf16>, vector<24x256xf32> -> vector<24x256xf32>
    %392 = arith.truncf %359 : vector<16x256xf32> to vector<16x256xbf16>
    %cst_215 = arith.constant dense<0.000000e+00> : vector<24x256xf32>
    %393 = tpu.matmul %26, %392, %cst_215 {dimension_numbers = #tpu.dot_dimension_numbers<[1], [0], [0], [1], [0, 0, 1, 1], [], []>} : vector<24x16xbf16>, vector<16x256xbf16>, vector<24x256xf32> -> vector<24x256xf32>
    %394 = arith.mulf %391, %389 : vector<24x256xf32>
    %395 = arith.mulf %394, %393 : vector<24x256xf32>
    %396 = arith.truncf %395 : vector<24x256xf32> to vector<24x256xbf16>
    %cst_216 = arith.constant dense<0.000000e+00> : vector<16x256xf32>
    %397 = tpu.matmul %28, %396, %cst_216 {dimension_numbers = #tpu.dot_dimension_numbers<[1], [0], [0], [1], [0, 0, 1, 1], [], []>} : vector<16x24xbf16>, vector<24x256xbf16>, vector<16x256xf32> -> vector<16x256xf32>
    %c864_217 = arith.constant 864 : index
    %c0_218 = arith.constant 0 : index
    %398 = vector.load %arg0[%c864_217, %c0_218] : memref<3232x128xbf16, #tpu.memory_space<vmem>>, vector<256x64xbf16>
    %399 = arith.truncf %397 : vector<16x256xf32> to vector<16x256xbf16>
    %cst_219 = arith.constant dense<0.000000e+00> : vector<16x64xf32>
    %400 = tpu.matmul %399, %398, %cst_219 {dimension_numbers = #tpu.dot_dimension_numbers<[1], [0], [0], [1], [0, 0, 1, 1], [], []>} : vector<16x256xbf16>, vector<256x64xbf16>, vector<16x64xf32> -> vector<16x64xf32>
    %401 = vector.broadcast %4 : vector<1x64xf32> to vector<16x64xf32>
    %402 = arith.addf %400, %401 : vector<16x64xf32>
    %cst_220 = arith.constant 0.000000e+00 : f32
    %403 = vector.broadcast %cst_220 : f32 to vector<16x64xf32>
    %404 = arith.maximumf %402, %403 : vector<16x64xf32>
    %405 = arith.addf %347, %404 : vector<16x64xf32>
    %c2784 = arith.constant 2784 : index
    %c0_221 = arith.constant 0 : index
    %406 = vector.load %arg0[%c2784, %c0_221] : memref<3232x128xbf16, #tpu.memory_space<vmem>>, vector<64x64xbf16>
    %407 = arith.truncf %405 : vector<16x64xf32> to vector<16x64xbf16>
    %cst_222 = arith.constant dense<0.000000e+00> : vector<16x64xf32>
    %408 = tpu.matmul %407, %406, %cst_222 {dimension_numbers = #tpu.dot_dimension_numbers<[1], [0], [0], [1], [0, 0, 1, 1], [], []>} : vector<16x64xbf16>, vector<64x64xbf16>, vector<16x64xf32> -> vector<16x64xf32>
    %409 = vector.broadcast %9 : vector<1x64xf32> to vector<16x64xf32>
    %410 = arith.addf %408, %409 : vector<16x64xf32>
    %c2848 = arith.constant 2848 : index
    %c0_223 = arith.constant 0 : index
    %411 = vector.load %arg0[%c2848, %c0_223] : memref<3232x128xbf16, #tpu.memory_space<vmem>>, vector<64x64xbf16>
    %412 = arith.truncf %405 : vector<16x64xf32> to vector<16x64xbf16>
    %cst_224 = arith.constant dense<0.000000e+00> : vector<16x64xf32>
    %413 = tpu.matmul %412, %411, %cst_224 {dimension_numbers = #tpu.dot_dimension_numbers<[1], [0], [0], [1], [0, 0, 1, 1], [], []>} : vector<16x64xbf16>, vector<64x64xbf16>, vector<16x64xf32> -> vector<16x64xf32>
    %414 = vector.broadcast %10 : vector<1x64xf32> to vector<16x64xf32>
    %415 = arith.addf %413, %414 : vector<16x64xf32>
    %c2912 = arith.constant 2912 : index
    %c0_225 = arith.constant 0 : index
    %416 = vector.load %arg0[%c2912, %c0_225] : memref<3232x128xbf16, #tpu.memory_space<vmem>>, vector<64x64xbf16>
    %417 = arith.truncf %405 : vector<16x64xf32> to vector<16x64xbf16>
    %cst_226 = arith.constant dense<0.000000e+00> : vector<16x64xf32>
    %418 = tpu.matmul %417, %416, %cst_226 {dimension_numbers = #tpu.dot_dimension_numbers<[1], [0], [0], [1], [0, 0, 1, 1], [], []>} : vector<16x64xbf16>, vector<64x64xbf16>, vector<16x64xf32> -> vector<16x64xf32>
    %419 = vector.broadcast %11 : vector<1x64xf32> to vector<16x64xf32>
    %420 = arith.addf %418, %419 : vector<16x64xf32>
    %cst_227 = arith.constant 0.000000e+00 : f32
    %421 = vector.broadcast %cst_227 : f32 to vector<16x64xf32>
    %422 = vector.extract_strided_slice %22 {offsets = [0, 0], sizes = [1, 64], strides = [1, 1]} : vector<4x64xf32> to vector<1x64xf32>
    %423 = vector.broadcast %422 : vector<1x64xf32> to vector<16x64xf32>
    %424 = arith.mulf %410, %423 : vector<16x64xf32>
    %425 = arith.truncf %424 : vector<16x64xf32> to vector<16x64xbf16>
    %426 = arith.truncf %415 : vector<16x64xf32> to vector<16x64xbf16>
    %cst_228 = arith.constant dense<0.000000e+00> : vector<16x16xf32>
    %427 = tpu.matmul %425, %426, %cst_228 {dimension_numbers = #tpu.dot_dimension_numbers<[1], [1], [0], [0], [0, 0, 1, 0], [], []>} : vector<16x64xbf16>, vector<16x64xbf16>, vector<16x16xf32> -> vector<16x16xf32>
    %cst_229 = arith.constant 2.500000e-01 : f32
    %428 = vector.broadcast %cst_229 : f32 to vector<16x16xf32>
    %429 = arith.mulf %427, %428 : vector<16x16xf32>
    %cst_230 = arith.constant dense<0xFF800000> : vector<16xf32>
    %430 = vector.multi_reduction <maximumf>, %429, %cst_230 [1] : vector<16x16xf32> to vector<16xf32>
    %431 = vector.shape_cast %430 : vector<16xf32> to vector<16x1xf32>
    %432 = vector.broadcast %431 : vector<16x1xf32> to vector<16x16xf32>
    %433 = arith.subf %429, %432 : vector<16x16xf32>
    %434 = math.exp %433 : vector<16x16xf32>
    %cst_231 = arith.constant dense<0.000000e+00> : vector<16xf32>
    %435 = vector.multi_reduction <add>, %434, %cst_231 [1] : vector<16x16xf32> to vector<16xf32>
    %436 = vector.shape_cast %435 : vector<16xf32> to vector<16x1xf32>
    %437 = vector.broadcast %436 : vector<16x1xf32> to vector<16x16xf32>
    %438 = arith.divf %434, %437 : vector<16x16xf32>
    %439 = vector.broadcast %422 : vector<1x64xf32> to vector<16x64xf32>
    %440 = arith.mulf %420, %439 : vector<16x64xf32>
    %441 = arith.truncf %438 : vector<16x16xf32> to vector<16x16xbf16>
    %442 = arith.truncf %440 : vector<16x64xf32> to vector<16x64xbf16>
    %cst_232 = arith.constant dense<0.000000e+00> : vector<16x64xf32>
    %443 = tpu.matmul %441, %442, %cst_232 {dimension_numbers = #tpu.dot_dimension_numbers<[1], [0], [0], [1], [0, 0, 1, 1], [], []>} : vector<16x16xbf16>, vector<16x64xbf16>, vector<16x64xf32> -> vector<16x64xf32>
    %444 = arith.addf %421, %443 : vector<16x64xf32>
    %445 = vector.extract_strided_slice %22 {offsets = [1, 0], sizes = [1, 64], strides = [1, 1]} : vector<4x64xf32> to vector<1x64xf32>
    %446 = vector.broadcast %445 : vector<1x64xf32> to vector<16x64xf32>
    %447 = arith.mulf %410, %446 : vector<16x64xf32>
    %448 = arith.truncf %447 : vector<16x64xf32> to vector<16x64xbf16>
    %449 = arith.truncf %415 : vector<16x64xf32> to vector<16x64xbf16>
    %cst_233 = arith.constant dense<0.000000e+00> : vector<16x16xf32>
    %450 = tpu.matmul %448, %449, %cst_233 {dimension_numbers = #tpu.dot_dimension_numbers<[1], [1], [0], [0], [0, 0, 1, 0], [], []>} : vector<16x64xbf16>, vector<16x64xbf16>, vector<16x16xf32> -> vector<16x16xf32>
    %cst_234 = arith.constant 2.500000e-01 : f32
    %451 = vector.broadcast %cst_234 : f32 to vector<16x16xf32>
    %452 = arith.mulf %450, %451 : vector<16x16xf32>
    %cst_235 = arith.constant dense<0xFF800000> : vector<16xf32>
    %453 = vector.multi_reduction <maximumf>, %452, %cst_235 [1] : vector<16x16xf32> to vector<16xf32>
    %454 = vector.shape_cast %453 : vector<16xf32> to vector<16x1xf32>
    %455 = vector.broadcast %454 : vector<16x1xf32> to vector<16x16xf32>
    %456 = arith.subf %452, %455 : vector<16x16xf32>
    %457 = math.exp %456 : vector<16x16xf32>
    %cst_236 = arith.constant dense<0.000000e+00> : vector<16xf32>
    %458 = vector.multi_reduction <add>, %457, %cst_236 [1] : vector<16x16xf32> to vector<16xf32>
    %459 = vector.shape_cast %458 : vector<16xf32> to vector<16x1xf32>
    %460 = vector.broadcast %459 : vector<16x1xf32> to vector<16x16xf32>
    %461 = arith.divf %457, %460 : vector<16x16xf32>
    %462 = vector.broadcast %445 : vector<1x64xf32> to vector<16x64xf32>
    %463 = arith.mulf %420, %462 : vector<16x64xf32>
    %464 = arith.truncf %461 : vector<16x16xf32> to vector<16x16xbf16>
    %465 = arith.truncf %463 : vector<16x64xf32> to vector<16x64xbf16>
    %cst_237 = arith.constant dense<0.000000e+00> : vector<16x64xf32>
    %466 = tpu.matmul %464, %465, %cst_237 {dimension_numbers = #tpu.dot_dimension_numbers<[1], [0], [0], [1], [0, 0, 1, 1], [], []>} : vector<16x16xbf16>, vector<16x64xbf16>, vector<16x64xf32> -> vector<16x64xf32>
    %467 = arith.addf %444, %466 : vector<16x64xf32>
    %468 = vector.extract_strided_slice %22 {offsets = [2, 0], sizes = [1, 64], strides = [1, 1]} : vector<4x64xf32> to vector<1x64xf32>
    %469 = vector.broadcast %468 : vector<1x64xf32> to vector<16x64xf32>
    %470 = arith.mulf %410, %469 : vector<16x64xf32>
    %471 = arith.truncf %470 : vector<16x64xf32> to vector<16x64xbf16>
    %472 = arith.truncf %415 : vector<16x64xf32> to vector<16x64xbf16>
    %cst_238 = arith.constant dense<0.000000e+00> : vector<16x16xf32>
    %473 = tpu.matmul %471, %472, %cst_238 {dimension_numbers = #tpu.dot_dimension_numbers<[1], [1], [0], [0], [0, 0, 1, 0], [], []>} : vector<16x64xbf16>, vector<16x64xbf16>, vector<16x16xf32> -> vector<16x16xf32>
    %cst_239 = arith.constant 2.500000e-01 : f32
    %474 = vector.broadcast %cst_239 : f32 to vector<16x16xf32>
    %475 = arith.mulf %473, %474 : vector<16x16xf32>
    %cst_240 = arith.constant dense<0xFF800000> : vector<16xf32>
    %476 = vector.multi_reduction <maximumf>, %475, %cst_240 [1] : vector<16x16xf32> to vector<16xf32>
    %477 = vector.shape_cast %476 : vector<16xf32> to vector<16x1xf32>
    %478 = vector.broadcast %477 : vector<16x1xf32> to vector<16x16xf32>
    %479 = arith.subf %475, %478 : vector<16x16xf32>
    %480 = math.exp %479 : vector<16x16xf32>
    %cst_241 = arith.constant dense<0.000000e+00> : vector<16xf32>
    %481 = vector.multi_reduction <add>, %480, %cst_241 [1] : vector<16x16xf32> to vector<16xf32>
    %482 = vector.shape_cast %481 : vector<16xf32> to vector<16x1xf32>
    %483 = vector.broadcast %482 : vector<16x1xf32> to vector<16x16xf32>
    %484 = arith.divf %480, %483 : vector<16x16xf32>
    %485 = vector.broadcast %468 : vector<1x64xf32> to vector<16x64xf32>
    %486 = arith.mulf %420, %485 : vector<16x64xf32>
    %487 = arith.truncf %484 : vector<16x16xf32> to vector<16x16xbf16>
    %488 = arith.truncf %486 : vector<16x64xf32> to vector<16x64xbf16>
    %cst_242 = arith.constant dense<0.000000e+00> : vector<16x64xf32>
    %489 = tpu.matmul %487, %488, %cst_242 {dimension_numbers = #tpu.dot_dimension_numbers<[1], [0], [0], [1], [0, 0, 1, 1], [], []>} : vector<16x16xbf16>, vector<16x64xbf16>, vector<16x64xf32> -> vector<16x64xf32>
    %490 = arith.addf %467, %489 : vector<16x64xf32>
    %491 = vector.extract_strided_slice %22 {offsets = [3, 0], sizes = [1, 64], strides = [1, 1]} : vector<4x64xf32> to vector<1x64xf32>
    %492 = vector.broadcast %491 : vector<1x64xf32> to vector<16x64xf32>
    %493 = arith.mulf %410, %492 : vector<16x64xf32>
    %494 = arith.truncf %493 : vector<16x64xf32> to vector<16x64xbf16>
    %495 = arith.truncf %415 : vector<16x64xf32> to vector<16x64xbf16>
    %cst_243 = arith.constant dense<0.000000e+00> : vector<16x16xf32>
    %496 = tpu.matmul %494, %495, %cst_243 {dimension_numbers = #tpu.dot_dimension_numbers<[1], [1], [0], [0], [0, 0, 1, 0], [], []>} : vector<16x64xbf16>, vector<16x64xbf16>, vector<16x16xf32> -> vector<16x16xf32>
    %cst_244 = arith.constant 2.500000e-01 : f32
    %497 = vector.broadcast %cst_244 : f32 to vector<16x16xf32>
    %498 = arith.mulf %496, %497 : vector<16x16xf32>
    %cst_245 = arith.constant dense<0xFF800000> : vector<16xf32>
    %499 = vector.multi_reduction <maximumf>, %498, %cst_245 [1] : vector<16x16xf32> to vector<16xf32>
    %500 = vector.shape_cast %499 : vector<16xf32> to vector<16x1xf32>
    %501 = vector.broadcast %500 : vector<16x1xf32> to vector<16x16xf32>
    %502 = arith.subf %498, %501 : vector<16x16xf32>
    %503 = math.exp %502 : vector<16x16xf32>
    %cst_246 = arith.constant dense<0.000000e+00> : vector<16xf32>
    %504 = vector.multi_reduction <add>, %503, %cst_246 [1] : vector<16x16xf32> to vector<16xf32>
    %505 = vector.shape_cast %504 : vector<16xf32> to vector<16x1xf32>
    %506 = vector.broadcast %505 : vector<16x1xf32> to vector<16x16xf32>
    %507 = arith.divf %503, %506 : vector<16x16xf32>
    %508 = vector.broadcast %491 : vector<1x64xf32> to vector<16x64xf32>
    %509 = arith.mulf %420, %508 : vector<16x64xf32>
    %510 = arith.truncf %507 : vector<16x16xf32> to vector<16x16xbf16>
    %511 = arith.truncf %509 : vector<16x64xf32> to vector<16x64xbf16>
    %cst_247 = arith.constant dense<0.000000e+00> : vector<16x64xf32>
    %512 = tpu.matmul %510, %511, %cst_247 {dimension_numbers = #tpu.dot_dimension_numbers<[1], [0], [0], [1], [0, 0, 1, 1], [], []>} : vector<16x16xbf16>, vector<16x64xbf16>, vector<16x64xf32> -> vector<16x64xf32>
    %513 = arith.addf %490, %512 : vector<16x64xf32>
    %c2976 = arith.constant 2976 : index
    %c0_248 = arith.constant 0 : index
    %514 = vector.load %arg0[%c2976, %c0_248] : memref<3232x128xbf16, #tpu.memory_space<vmem>>, vector<64x64xbf16>
    %515 = arith.truncf %513 : vector<16x64xf32> to vector<16x64xbf16>
    %cst_249 = arith.constant dense<0.000000e+00> : vector<16x64xf32>
    %516 = tpu.matmul %515, %514, %cst_249 {dimension_numbers = #tpu.dot_dimension_numbers<[1], [0], [0], [1], [0, 0, 1, 1], [], []>} : vector<16x64xbf16>, vector<64x64xbf16>, vector<16x64xf32> -> vector<16x64xf32>
    %517 = vector.broadcast %12 : vector<1x64xf32> to vector<16x64xf32>
    %518 = arith.addf %516, %517 : vector<16x64xf32>
    %cst_250 = arith.constant dense<0xFF800000> : vector<64xf32>
    %519 = vector.multi_reduction <maximumf>, %518, %cst_250 [0] : vector<16x64xf32> to vector<64xf32>
    %520 = vector.shape_cast %519 : vector<64xf32> to vector<1x64xf32>
    %c3040 = arith.constant 3040 : index
    %c0_251 = arith.constant 0 : index
    %521 = vector.load %arg0[%c3040, %c0_251] : memref<3232x128xbf16, #tpu.memory_space<vmem>>, vector<64x64xbf16>
    %522 = arith.truncf %520 : vector<1x64xf32> to vector<1x64xbf16>
    %cst_252 = arith.constant dense<0.000000e+00> : vector<1x64xf32>
    %523 = tpu.matmul %522, %521, %cst_252 {dimension_numbers = #tpu.dot_dimension_numbers<[1], [0], [0], [1], [0, 0, 1, 1], [], []>} : vector<1x64xbf16>, vector<64x64xbf16>, vector<1x64xf32> -> vector<1x64xf32>
    %524 = arith.addf %523, %13 : vector<1x64xf32>
    %cst_253 = arith.constant 0.000000e+00 : f32
    %525 = vector.broadcast %cst_253 : f32 to vector<1x64xf32>
    %526 = arith.maximumf %524, %525 : vector<1x64xf32>
    %c3104 = arith.constant 3104 : index
    %c0_254 = arith.constant 0 : index
    %527 = vector.load %arg0[%c3104, %c0_254] : memref<3232x128xbf16, #tpu.memory_space<vmem>>, vector<64x64xbf16>
    %528 = arith.truncf %526 : vector<1x64xf32> to vector<1x64xbf16>
    %cst_255 = arith.constant dense<0.000000e+00> : vector<1x64xf32>
    %529 = tpu.matmul %528, %527, %cst_255 {dimension_numbers = #tpu.dot_dimension_numbers<[1], [0], [0], [1], [0, 0, 1, 1], [], []>} : vector<1x64xbf16>, vector<64x64xbf16>, vector<1x64xf32> -> vector<1x64xf32>
    %530 = arith.addf %529, %14 : vector<1x64xf32>
    %cst_256 = arith.constant 0.000000e+00 : f32
    %531 = vector.broadcast %cst_256 : f32 to vector<1x64xf32>
    %532 = arith.maximumf %530, %531 : vector<1x64xf32>
    %c3168 = arith.constant 3168 : index
    %c0_257 = arith.constant 0 : index
    %533 = vector.load %arg0[%c3168, %c0_257] : memref<3232x128xbf16, #tpu.memory_space<vmem>>, vector<64x3xbf16>
    %534 = arith.truncf %532 : vector<1x64xf32> to vector<1x64xbf16>
    %cst_258 = arith.constant dense<0.000000e+00> : vector<1x3xf32>
    %535 = tpu.matmul %534, %533, %cst_258 {dimension_numbers = #tpu.dot_dimension_numbers<[1], [0], [0], [1], [0, 0, 1, 1], [], []>} : vector<1x64xbf16>, vector<64x3xbf16>, vector<1x3xf32> -> vector<1x3xf32>
    %536 = arith.addf %535, %15 : vector<1x3xf32>
    %cst_259 = arith.constant 0.000000e+00 : f32
    %537 = vector.broadcast %cst_259 : f32 to vector<32x64xf32>
    %538 = tpu.concatenate %340, %537 in 1 : vector<32x64xf32>, vector<32x64xf32> -> vector<32x128xf32>
    %c0_260 = arith.constant 0 : index
    %c0_261 = arith.constant 0 : index
    %539 = vector.load %arg5[%c0_260, %c0_261] : memref<48x128xf32, #tpu.memory_space<vmem>>, vector<32x128xf32>
    tpu.vector_store %arg5[%c0_260, %c0_261], %538 {strides = array<i32>} : memref<48x128xf32, #tpu.memory_space<vmem>>, vector<32x128xf32>,
    %cst_262 = arith.constant 0.000000e+00 : f32
    %540 = vector.broadcast %cst_262 : f32 to vector<16x64xf32>
    %541 = tpu.concatenate %518, %540 in 1 : vector<16x64xf32>, vector<16x64xf32> -> vector<16x128xf32>
    %c32_263 = arith.constant 32 : index
    %c0_264 = arith.constant 0 : index
    %542 = vector.load %arg5[%c32_263, %c0_264] : memref<48x128xf32, #tpu.memory_space<vmem>>, vector<16x128xf32>
    tpu.vector_store %arg5[%c32_263, %c0_264], %541 {strides = array<i32>} : memref<48x128xf32, #tpu.memory_space<vmem>>, vector<16x128xf32>,
    %c0_265 = arith.constant 0 : index
    %c0_266 = arith.constant 0 : index
    %543 = vector.load %arg6[%c0_265, %c0_266] : memref<1x3xf32, #tpu.memory_space<vmem>>, vector<1x3xf32>
    tpu.vector_store %arg6[%c0_265, %c0_266], %536 {strides = array<i32>} : memref<1x3xf32, #tpu.memory_space<vmem>>, vector<1x3xf32>,
    return
  }
}

</mosaic_0001>

<llo_original>
// kernel: tpu_custom_call.1
$region0: #{tpu_custom_call.1}
  #allocation0 [shape = 'u32[]', space=smem, size = 0x4, offset = 0x4, fixed_abs, tag = 'smem constant byte address 0x4 - core index']
  #allocation1 [shape = 'u32[144,128]{1,0:T(1,128)}', space=vmem, size = 0x12000, scoped, tag = 'internal scratch']
  %s0 = inlined_call_operand.hbm [shape: bf16[3232,128], index: 0, kind: input, shape index: {}]
  %s1 = inlined_call_operand.hbm [shape: bf16[544,256], index: 1, kind: input, shape index: {}]
  %s2 = inlined_call_operand.hbm [shape: bf16[272,512], index: 2, kind: input, shape index: {}]
  %s3 = inlined_call_operand.hbm [shape: f32[192,128], index: 3, kind: input, shape index: {}]
  %s4 = inlined_call_operand.hbm [shape: f32[16,256], index: 4, kind: input, shape index: {}]
  %s5 = inlined_call_operand.hbm [shape: f32[48,128], index: 5, kind: output, shape index: {0}]
  %s6 = inlined_call_operand.hbm [shape: f32[1,3], index: 6, kind: output, shape index: {1}]
  %7 = xla_tuple %s5, %s6
  %s8 = sld [smem:[#allocation0]]
  $region58: #{tpu_custom_call.1} parent=0
    _
  %s10 = ssub.s32 1, %s8
  %s11 = scalar_select 0, %s10, %s8
  $region1: #{tpu_custom_call.1} parent=0
    #allocation2 [shape = 'u8[827392]{0}', space=vmem, size = 0xca000, scoped, tag = 'input window, operand 0, single buffered']
    #allocation3 [shape = 's32[1]{0}', space=sflag, size = 0x4, scoped, tag = 'scoped memory for tpu_custom_call.1']
    #allocation4 [shape = 's32[1]{0}', space=sflag, size = 0x4, scoped, tag = 'scoped memory for tpu_custom_call.1']
    #allocation5 [shape = 'u8[278528]{0}', space=vmem, size = 0x44000, scoped, tag = 'input window, operand 1, single buffered']
    #allocation6 [shape = 's32[1]{0}', space=sflag, size = 0x4, scoped, tag = 'scoped memory for tpu_custom_call.1']
    #allocation7 [shape = 'u8[278528]{0}', space=vmem, size = 0x44000, scoped, tag = 'input window, operand 2, single buffered']
    #allocation8 [shape = 'u8[98304]{0}', space=vmem, size = 0x18000, scoped, tag = 'input window, operand 3, single buffered']
    #allocation9 [shape = 's32[1]{0}', space=sflag, size = 0x4, scoped, tag = 'scoped memory for tpu_custom_call.1']
    #allocation10 [shape = 'u8[16384]{0}', space=vmem, size = 0x4000, scoped, tag = 'input window, operand 4, single buffered']
    #allocation11 [shape = 'u8[24576]{0}', space=vmem, size = 0x6000, scoped, tag = 'output window, operand 0, single buffered']
    #allocation12 [shape = 'u8[512]{0}', space=vmem, size = 0x400, scoped, tag = 'output window, operand 1, single buffered']
    #allocation13 [shape = 's32[1]{0}', space=sflag, size = 0x4, scoped, tag = 'scoped memory for tpu_custom_call.1']
    %12 = vsyncpa [#allocation3], 0
    %13 = vsyncpa [#allocation6], 0
    %14 = vsyncpa [#allocation9], 0
    %15 = vsyncpa [#allocation4], 0
    %16 = vsyncpa [#allocation13], 0
    // Predicated region
    $region2: #{tpu_custom_call.1} parent=1 // pred_check
      _
    $region3: #{tpu_custom_call.1} parent=1 // pred_check_branch
      %18 = sbr.rel (0) target = $region5
    $region4: #{tpu_custom_call.1} parent=1 // pred_region
      %s20 = ssub.s32 25856, 25856
      %21 = vsyncadd [#allocation3], %s20
      %s22 = sshll.u32 [#allocation2], 4
      %s23 = int_to_ptr.vmem [resolvable:$true] %s22
      %28 = dma.hbm_to_vmem [thread:$0]  %s0, 25856, %s23, [#allocation3], 64, 64, 4
    $region5: #{tpu_custom_call.1} parent=1 // pred_fallthru
      _
    // Predicated region
    $region6: #{tpu_custom_call.1} parent=1 // pred_check
      _
    $region7: #{tpu_custom_call.1} parent=1 // pred_check_branch
      %30 = sbr.rel (0) target = $region9
    $region8: #{tpu_custom_call.1} parent=1 // pred_region
      %s32 = ssub.s32 8704, 8704
      %33 = vsyncadd [#allocation6], %s32
      %s34 = sshll.u32 [#allocation5], 4
      %s35 = int_to_ptr.vmem [resolvable:$true] %s34
      %40 = dma.hbm_to_vmem [thread:$0]  %s1, 8704, %s35, [#allocation6], 128, 128, 8
    $region9: #{tpu_custom_call.1} parent=1 // pred_fallthru
      _
    // Predicated region
    $region10: #{tpu_custom_call.1} parent=1 // pred_check
      _
    $region11: #{tpu_custom_call.1} parent=1 // pred_check_branch
      %42 = sbr.rel (0) target = $region13
    $region12: #{tpu_custom_call.1} parent=1 // pred_region
      %s44 = ssub.s32 8704, 8704
      %45 = vsyncadd [#allocation6], %s44
      %s46 = sshll.u32 [#allocation7], 4
      %s47 = int_to_ptr.vmem [resolvable:$true] %s46
      %52 = dma.hbm_to_vmem [thread:$0]  %s2, 8704, %s47, [#allocation6], 256, 256, 16
    $region13: #{tpu_custom_call.1} parent=1 // pred_fallthru
      _
    // Predicated region
    $region14: #{tpu_custom_call.1} parent=1 // pred_check
      _
    $region15: #{tpu_custom_call.1} parent=1 // pred_check_branch
      %54 = sbr.rel (0) target = $region17
    $region16: #{tpu_custom_call.1} parent=1 // pred_region
      %s56 = ssub.s32 3072, 3072
      %57 = vsyncadd [#allocation9], %s56
      %s58 = sshll.u32 [#allocation8], 4
      %s59 = int_to_ptr.vmem [resolvable:$true] %s58
      %64 = dma.hbm_to_vmem [thread:$0]  %s3, 3072, %s59, [#allocation9], 128, 128, 8
    $region17: #{tpu_custom_call.1} parent=1 // pred_fallthru
      _
    // Predicated region
    $region18: #{tpu_custom_call.1} parent=1 // pred_check
      _
    $region19: #{tpu_custom_call.1} parent=1 // pred_check_branch
      %66 = sbr.rel (0) target = $region21
    $region20: #{tpu_custom_call.1} parent=1 // pred_region
      %s68 = ssub.s32 512, 512
      %69 = vsyncadd [#allocation9], %s68
      %s70 = sshll.u32 [#allocation10], 4
      %s71 = int_to_ptr.vmem [resolvable:$true] %s70
      %76 = dma.hbm_to_vmem [thread:$0]  %s4, 512, %s71, [#allocation9], 256, 256, 16
    $region21: #{tpu_custom_call.1} parent=1 // pred_fallthru
      _
    // Predicated region
    $region22: #{tpu_custom_call.1} parent=1 // pred_check
      _
    $region23: #{tpu_custom_call.1} parent=1 // pred_check_branch
      %78 = sbr.rel (0) target = $region25
    $region24: #{tpu_custom_call.1} parent=1 // pred_region
      %79 = dma.done [#allocation3], 25856
    $region25: #{tpu_custom_call.1} parent=1 // pred_fallthru
      _
    // Predicated region
    $region26: #{tpu_custom_call.1} parent=1 // pred_check
      _
    $region27: #{tpu_custom_call.1} parent=1 // pred_check_branch
      %81 = sbr.rel (0) target = $region29
    $region28: #{tpu_custom_call.1} parent=1 // pred_region
      %82 = dma.done [#allocation6], 8704
    $region29: #{tpu_custom_call.1} parent=1 // pred_fallthru
      _
    // Predicated region
    $region30: #{tpu_custom_call.1} parent=1 // pred_check
      _
    $region31: #{tpu_custom_call.1} parent=1 // pred_check_branch
      %84 = sbr.rel (0) target = $region33
    $region32: #{tpu_custom_call.1} parent=1 // pred_region
      %85 = dma.done [#allocation6], 8704
    $region33: #{tpu_custom_call.1} parent=1 // pred_fallthru
      _
    // Predicated region
    $region34: #{tpu_custom_call.1} parent=1 // pred_check
      _
    $region35: #{tpu_custom_call.1} parent=1 // pred_check_branch
      %87 = sbr.rel (0) target = $region37
    $region36: #{tpu_custom_call.1} parent=1 // pred_region
      %88 = dma.done [#allocation9], 3072
    $region37: #{tpu_custom_call.1} parent=1 // pred_fallthru
      _
    // Predicated region
    $region38: #{tpu_custom_call.1} parent=1 // pred_check
      _
    $region39: #{tpu_custom_call.1} parent=1 // pred_check_branch
      %90 = sbr.rel (0) target = $region41
    $region40: #{tpu_custom_call.1} parent=1 // pred_region
      %91 = dma.done [#allocation9], 512
    $region41: #{tpu_custom_call.1} parent=1 // pred_fallthru
      _
    %v93 = vld [vmem:[#allocation8 + $0x48] sm:$0x1]
    %v94 = vld [vmem:[#allocation8 + $0x50] sm:$0x1]
    %v95 = vld [vmem:[#allocation8 + $0x58] sm:$0x1]
    %v96 = vld [vmem:[#allocation8 + $0x60] sm:$0x1]
    %v97 = vld [vmem:[#allocation8 + $0x68] sm:$0x1]
    %v98 = vld [vmem:[#allocation8 + $0x70] sm:$0x1]
    %v99 = vld [vmem:[#allocation10] ss:$8 sm:$0x3]
    %v100 = vld [vmem:[#allocation8 + $0x78] sm:$0x1]
    %s101 = scalar_lea.vmem [#allocation10], 16
    %v102 = vld [vmem:[%s101] ss:$8 sm:$0x3]
    %v103 = vld [vmem:[#allocation8 + $0x80] sm:$0x1]
    %v104 = vld [vmem:[#allocation8 + $0x88] sm:$0x1]
    %v105 = vld [vmem:[#allocation8 + $0x90] sm:$0x1]
    %v106 = vld [vmem:[#allocation8 + $0x98] sm:$0x1]
    %v107 = vld [vmem:[#allocation8 + $0xa8] sm:$0x1]
    %v108 = vld [vmem:[#allocation8 + $0xb0] sm:$0x1]
    %v109 = vld [vmem:[#allocation8 + $0xb8] sm:$0x1]
    %v110 = vld [vmem:[#allocation2 + $0x2b0] sm:$0xf]
    %v111 = vld [vmem:[#allocation2 + $0x2b4] sm:$0xf]
    %v112 = vld [vmem:[#allocation2 + $0x2b8] sm:$0xf]
    %v113 = vld [vmem:[#allocation2 + $0x2bc] sm:$0xf]
    %v114 = vld [vmem:[#allocation2 + $0x2c0] sm:$0xf]
    %v115 = vld [vmem:[#allocation2 + $0x2c4] sm:$0xf]
    %v116 = vld [vmem:[#allocation2 + $0x2c8] sm:$0xf]
    %v117 = vld [vmem:[#allocation2 + $0x2cc] sm:$0xf]
    %v118 = vld [vmem:[#allocation2 + $0x2d0] sm:$0xf]
    %v119 = vld [vmem:[#allocation2 + $0x2d4] sm:$0xf]
    %v120 = vld [vmem:[#allocation2 + $0x2d8] sm:$0xf]
    %v121 = vld [vmem:[#allocation2 + $0x2dc] sm:$0xf]
    %v122 = vld [vmem:[#allocation2 + $0x2e0] sm:$0xf]
    %v123 = vld [vmem:[#allocation2 + $0x2e4] sm:$0xf]
    %v124 = vld [vmem:[#allocation2 + $0x2e8] sm:$0xf]
    %v125 = vld [vmem:[#allocation2 + $0x2ec] sm:$0xf]
    %v126 = vld [vmem:[#allocation2 + $0x2f0] sm:$0xf]
    %v127 = vld [vmem:[#allocation2 + $0x2f4] sm:$0xf]
    %v128 = vld [vmem:[#allocation2 + $0x2f8] sm:$0xf]
    %v129 = vld [vmem:[#allocation2 + $0x2fc] sm:$0xf]
    %v130 = vld [vmem:[#allocation2 + $0x300] sm:$0xf]
    %v131 = vld [vmem:[#allocation2 + $0x304] sm:$0xf]
    %v132 = vld [vmem:[#allocation2 + $0x308] sm:$0xf]
    %v133 = vld [vmem:[#allocation2 + $0x30c] sm:$0xf]
    %v134 = vld [vmem:[#allocation2 + $0x310] sm:$0xf]
    %v135 = vld [vmem:[#allocation2 + $0x314] sm:$0xf]
    %v136 = vld [vmem:[#allocation2 + $0x318] sm:$0xf]
    %v137 = vld [vmem:[#allocation2 + $0x31c] sm:$0xf]
    %v138 = vld [vmem:[#allocation2 + $0x320] sm:$0xf]
    %v139 = vld [vmem:[#allocation2 + $0x324] sm:$0xf]
    %v140 = vld [vmem:[#allocation2 + $0x328] sm:$0xf]
    %v141 = vld [vmem:[#allocation2 + $0x32c] sm:$0xf]
    %v142 = vld [vmem:[#allocation5 + $0x100] sm:$0x11]
    %v143 = vld [vmem:[#allocation2 + $0x4b0] sm:$0xf]
    %v144 = vld [vmem:[#allocation2 + $0x4b4] sm:$0xf]
    %v145 = vld [vmem:[#allocation2 + $0x4b8] sm:$0xf]
    %v146 = vld [vmem:[#allocation2 + $0x4bc] sm:$0xf]
    %v147 = vld [vmem:[#allocation2 + $0x4c0] sm:$0xf]
    %v148 = vld [vmem:[#allocation2 + $0x4c4] sm:$0xf]
    %v149 = vld [vmem:[#allocation2 + $0x4c8] sm:$0xf]
    %v150 = vld [vmem:[#allocation2 + $0x4cc] sm:$0xf]
    %v151 = vld [vmem:[#allocation2 + $0x4d0] sm:$0xf]
    %v152 = vld [vmem:[#allocation2 + $0x4d4] sm:$0xf]
    %v153 = vld [vmem:[#allocation2 + $0x4d8] sm:$0xf]
    %v154 = vld [vmem:[#allocation2 + $0x4dc] sm:$0xf]
    %v155 = vld [vmem:[#allocation2 + $0x4e0] sm:$0xf]
    %v156 = vld [vmem:[#allocation2 + $0x4e4] sm:$0xf]
    %v157 = vld [vmem:[#allocation2 + $0x4e8] sm:$0xf]
    %v158 = vld [vmem:[#allocation2 + $0x4ec] sm:$0xf]
    %v159 = vld [vmem:[#allocation7 + $0x200] sm:$0x11]
    %v160 = vld [vmem:[#allocation7 + $0x208] sm:$0x11]
    %v161 = vld [vmem:[#allocation2 + $0x4f0] sm:$0xf]
    %v162 = vld [vmem:[#allocation2 + $0x4f4] sm:$0xf]
    %v163 = vld [vmem:[#allocation2 + $0x4f8] sm:$0xf]
    %v164 = vld [vmem:[#allocation2 + $0x4fc] sm:$0xf]
    %v165 = vld [vmem:[#allocation2 + $0x500] sm:$0xf]
    %v166 = vld [vmem:[#allocation2 + $0x504] sm:$0xf]
    %v167 = vld [vmem:[#allocation2 + $0x508] sm:$0xf]
    %v168 = vld [vmem:[#allocation2 + $0x50c] sm:$0xf]
    %v169 = vld [vmem:[#allocation2 + $0x510] sm:$0xf]
    %v170 = vld [vmem:[#allocation2 + $0x514] sm:$0xf]
    %v171 = vld [vmem:[#allocation2 + $0x518] sm:$0xf]
    %v172 = vld [vmem:[#allocation2 + $0x51c] sm:$0xf]
    %v173 = vld [vmem:[#allocation2 + $0x520] sm:$0xf]
    %v174 = vld [vmem:[#allocation2 + $0x524] sm:$0xf]
    %v175 = vld [vmem:[#allocation2 + $0x528] sm:$0xf]
    %v176 = vld [vmem:[#allocation2 + $0x52c] sm:$0xf]
    %v177 = vld [vmem:[#allocation2 + $0x530] sm:$0xf]
    %v178 = vld [vmem:[#allocation2 + $0x534] sm:$0xf]
    %v179 = vld [vmem:[#allocation2 + $0x538] sm:$0xf]
    %v180 = vld [vmem:[#allocation2 + $0x53c] sm:$0xf]
    %v181 = vld [vmem:[#allocation2 + $0x540] sm:$0xf]
    %v182 = vld [vmem:[#allocation2 + $0x544] sm:$0xf]
    %v183 = vld [vmem:[#allocation2 + $0x548] sm:$0xf]
    %v184 = vld [vmem:[#allocation2 + $0x54c] sm:$0xf]
    %v185 = vld [vmem:[#allocation2 + $0x550] sm:$0xf]
    %v186 = vld [vmem:[#allocation2 + $0x554] sm:$0xf]
    %v187 = vld [vmem:[#allocation2 + $0x558] sm:$0xf]
    %v188 = vld [vmem:[#allocation2 + $0x55c] sm:$0xf]
    %v189 = vld [vmem:[#allocation2 + $0x560] sm:$0xf]
    %v190 = vld [vmem:[#allocation2 + $0x564] sm:$0xf]
    %v191 = vld [vmem:[#allocation2 + $0x568] sm:$0xf]
    %v192 = vld [vmem:[#allocation2 + $0x56c] sm:$0xf]
    %v193 = vld [vmem:[#allocation5 + $0x210] sm:$0x11]
    %v194 = vld [vmem:[#allocation8 + $0xa0] sm:$0xf]
    %v195 = vld [vmem:[#allocation2] sm:$0xf]
    %v196 = vld [vmem:[#allocation2 + $0x4] sm:$0xf]
    %v197 = vld [vmem:[#allocation2 + $0x8] sm:$0xf]
    %v198 = vld [vmem:[#allocation2 + $0xc] sm:$0xf]
    %v199 = vld [vmem:[#allocation2 + $0x10] sm:$0xf]
    %v200 = vld [vmem:[#allocation2 + $0x14] sm:$0xf]
    %v201 = vld [vmem:[#allocation2 + $0x18] sm:$0xf]
    %v202 = vld [vmem:[#allocation2 + $0x1c] sm:$0xf]
    %v203 = vld [vmem:[#allocation2 + $0x20] sm:$0xf]
    %v204 = vld [vmem:[#allocation2 + $0x24] sm:$0xf]
    %v205 = vld [vmem:[#allocation2 + $0x28] sm:$0xf]
    %v206 = vld [vmem:[#allocation2 + $0x2c] sm:$0xf]
    %v207 = vld [vmem:[#allocation2 + $0x30] sm:$0xf]
    %v208 = vld [vmem:[#allocation2 + $0x38] sm:$0xf]
    %v209 = vld [vmem:[#allocation2 + $0x3c] sm:$0xf]
    %v210 = vld [vmem:[#allocation2 + $0x40] sm:$0xf]
    %v211 = vld [vmem:[#allocation2 + $0x48] sm:$0xf]
    %v212 = vld [vmem:[#allocation2 + $0x4c] sm:$0xf]
    %v213 = vld [vmem:[#allocation8] sm:$0xff]
    %v214 = vld [vmem:[#allocation8 + $0x8] sm:$0xff]
    %v215 = vld [vmem:[#allocation2 + $0x50] sm:$0xf]
    %v216 = vld [vmem:[#allocation2 + $0x54] sm:$0xf]
    %v217 = vld [vmem:[#allocation2 + $0x58] sm:$0xf]
    %v218 = vld [vmem:[#allocation2 + $0x5c] sm:$0xf]
    %v219 = vld [vmem:[#allocation2 + $0x60] sm:$0xf]
    %v220 = vld [vmem:[#allocation2 + $0x64] sm:$0x3]
    %v221 = vpack.c.bf16 %v214, %v213
    %v222 = vlaneseq
    %v223 = vshrl.u32 %v222, 7
    %v224 = vsub.s32 0, %v223
    %v225 = vrot.slane %v93, %v224
    %v232 = vunpack.c.l.b16 %v215
    %v233 = vunpack.c.l.b16 %v216
    %v234 = vunpack.c.l.b16 %v217
    %v235 = vunpack.c.l.b16 %v218
    %v236 = vunpack.c.l.b16 %v219
    %v237 = vunpack.c.l.b16 %v220
    %v238 = vpack.c.b16 %v233, %v232
    %v239 = vpack.c.b16 %v235, %v234
    %v240 = vpack.c.b16 %v237, %v236
    %vm243 = vcmask 359424
    %v245 = vsel %vm243, %v221, 0
    %vm247 = vcmask 1045504
    %v249 = vsel %vm247, %v240, 0
    %251 = vmatprep.subr.bf16.mxu0 0
    %252 = vmatpush1.bf16.msra.mxu0 0
    %253 = vmatprep.subr.bf16.mxu0 0
    %254 = vmatpush1.bf16.msra.mxu0 0
    %255 = vmatprep.subr.bf16.mxu0 0
    %256 = vmatpush1.bf16.msra.mxu0 0
    %257 = vmatprep.subr.bf16.mxu0 0
    %258 = vmatpush1.bf16.msra.mxu0 0
    %259 = vmatprep.subr.bf16.mxu0 0
    %260 = vmatpush1.bf16.msra.mxu0 0
    %261 = vmatprep.subr.bf16.mxu0 0
    %262 = vmatpush1.bf16.msra.mxu0 %v249
    %263 = vmatprep.subr.bf16.mxu0 0
    %264 = vmatpush1.bf16.msra.mxu0 %v239
    %265 = vmatprep.subr.bf16.mxu0 0
    %266 = vmatpush1.bf16.msra.mxu0 %v238
    %267 = vmatprep.subr.bf16.mxu0 0
    %268 = vmatpush2.bf16.msra.mxu0 0
    %269 = vmatprep.subr.bf16.mxu0 0
    %270 = vmatpush2.bf16.msra.mxu0 0
    %271 = vmatprep.subr.bf16.mxu0 0
    %272 = vmatpush2.bf16.msra.mxu0 0
    %273 = vmatprep.subr.bf16.mxu0 0
    %274 = vmatpush2.bf16.msra.mxu0 0
    %275 = vmatprep.subr.bf16.mxu0 0
    %276 = vmatpush2.bf16.msra.mxu0 0
    %277 = vmatprep.subr.bf16.mxu0 0
    %278 = vmatpush2.bf16.msra.mxu0 0
    %279 = vmatprep.subr.bf16.mxu0 0
    %280 = vmatpush2.bf16.msra.mxu0 0
    %281 = vmatprep.subr.bf16.mxu0 0
    %282 = vmatpush2.bf16.msra.mxu0 0
    %283 = vmatprep.mubr.bf16.mxu0 0
    %284 = vmatmul.mubr.bf16.gmra.mxu0 %v245
    %v285 = vpop.f32.mrf.mxu0
    %v286 = vadd.f32 %v225, %v285
    %v287 = vpop.f32.mrf.mxu0
    %v288 = vpop.f32.mrf.mxu0
    %v289 = vadd.f32 %v225, %v288
    %v290 = vpop.f32.mrf.mxu0
    %291 = vdwg.mxu0
    %v292 = vld [vmem:[#allocation8 + $0x10] sm:$0xff]
    %v293 = vld [vmem:[#allocation8 + $0x18] sm:$0xff]
    %v294 = vld [vmem:[#allocation8 + $0x20] sm:$0xff]
    %v295 = vld [vmem:[#allocation8 + $0x28] sm:$0xff]
    %v296 = vld [vmem:[#allocation2 + $0x68] sm:$0x1]
    %v297 = vpack.c.bf16 %v293, %v292
    %v298 = vpack.c.bf16 %v295, %v294
    %v299 = vlaneseq
    %v300 = vshrl.u32 %v299, 7
    %v301 = vsub.s32 0, %v300
    %v302 = vrot.slane %v94, %v301
    %vm303 = vcmask 15360
    %v305 = vsel %vm303, %v297, 0
    %v308 = vsel %vm303, %v298, 0
    %vm310 = vcmask 1040384
    %v312 = vsel %vm310, %v296, 0
    %314 = vmatprep.subr.bf16.mxu0 0
    %315 = vmatpush1.bf16.msra.mxu0 0
    %316 = vmatprep.subr.bf16.mxu0 0
    %317 = vmatpush1.bf16.msra.mxu0 0
    %318 = vmatprep.subr.bf16.mxu0 0
    %319 = vmatpush1.bf16.msra.mxu0 0
    %320 = vmatprep.subr.bf16.mxu0 0
    %321 = vmatpush1.bf16.msra.mxu0 0
    %322 = vmatprep.subr.bf16.mxu0 0
    %323 = vmatpush1.bf16.msra.mxu0 0
    %324 = vmatprep.subr.bf16.mxu0 0
    %325 = vmatpush1.bf16.msra.mxu0 0
    %326 = vmatprep.subr.bf16.mxu0 0
    %327 = vmatpush1.bf16.msra.mxu0 0
    %328 = vmatprep.subr.bf16.mxu0 0
    %329 = vmatpush1.bf16.msra.mxu0 %v312
    %330 = vmatprep.subr.bf16.mxu0 0
    %331 = vmatpush2.bf16.msra.mxu0 0
    %332 = vmatprep.subr.bf16.mxu0 0
    %333 = vmatpush2.bf16.msra.mxu0 0
    %334 = vmatprep.subr.bf16.mxu0 0
    %335 = vmatpush2.bf16.msra.mxu0 0
    %336 = vmatprep.subr.bf16.mxu0 0
    %337 = vmatpush2.bf16.msra.mxu0 0
    %338 = vmatprep.subr.bf16.mxu0 0
    %339 = vmatpush2.bf16.msra.mxu0 0
    %340 = vmatprep.subr.bf16.mxu0 0
    %341 = vmatpush2.bf16.msra.mxu0 0
    %342 = vmatprep.subr.bf16.mxu0 0
    %343 = vmatpush2.bf16.msra.mxu0 0
    %344 = vmatprep.subr.bf16.mxu0 0
    %345 = vmatpush2.bf16.msra.mxu0 0
    %346 = vmatprep.mubr.bf16.mxu0 0
    %347 = vmatmul.mubr.bf16.gmra.mxu0 %v305
    %v348 = vpop.f32.mrf.mxu0
    %v349 = vadd.f32 %v302, %v348
    %v350 = vpop.f32.mrf.mxu0
    %v351 = vpop.f32.mrf.mxu0
    %v352 = vadd.f32 %v302, %v351
    %v353 = vpop.f32.mrf.mxu0
    %354 = vmatprep.mubr.bf16.mxu0 0
    %355 = vmatmul.mubr.bf16.gmra.mxu0 %v308
    %v356 = vpop.f32.mrf.mxu0
    %v357 = vadd.f32 %v302, %v356
    %v358 = vpop.f32.mrf.mxu0
    %v359 = vpop.f32.mrf.mxu0
    %v360 = vadd.f32 %v302, %v359
    %v361 = vpop.f32.mrf.mxu0
    %362 = vdwg.mxu0
    %v363 = vld [vmem:[#allocation8 + $0x30] sm:$0xff]
    %v364 = vld [vmem:[#allocation8 + $0x38] sm:$0xff]
    %v365 = vld [vmem:[#allocation8 + $0x40] sm:$0xff]
    %v366 = vpack.c.bf16 %v364, %v363
    %v367 = vpack.c.bf16 %v365, %v365
    %v369 = vsel %vm303, %v366, 0
    %v372 = vsel %vm303, %v367, 0
    %374 = vmatprep.subr.bf16.mxu0 0
    %375 = vmatpush1.bf16.msra.mxu0 0
    %376 = vmatprep.subr.bf16.mxu0 0
    %377 = vmatpush1.bf16.msra.mxu0 0
    %378 = vmatprep.subr.bf16.mxu0 0
    %379 = vmatpush1.bf16.msra.mxu0 0
    %380 = vmatprep.subr.bf16.mxu0 0
    %381 = vmatpush1.bf16.msra.mxu0 0
    %382 = vmatprep.subr.bf16.mxu0 0
    %383 = vmatpush1.bf16.msra.mxu0 0
    %384 = vmatprep.subr.bf16.mxu0 0
    %385 = vmatpush1.bf16.msra.mxu0 0
    %386 = vmatprep.subr.bf16.mxu0 0
    %387 = vmatpush1.bf16.msra.mxu0 0
    %388 = vmatprep.subr.bf16.mxu0 0
    %389 = vmatpush1.bf16.msra.mxu0 %v312
    %390 = vmatprep.subr.bf16.mxu0 0
    %391 = vmatpush2.bf16.msra.mxu0 0
    %392 = vmatprep.subr.bf16.mxu0 0
    %393 = vmatpush2.bf16.msra.mxu0 0
    %394 = vmatprep.subr.bf16.mxu0 0
    %395 = vmatpush2.bf16.msra.mxu0 0
    %396 = vmatprep.subr.bf16.mxu0 0
    %397 = vmatpush2.bf16.msra.mxu0 0
    %398 = vmatprep.subr.bf16.mxu0 0
    %399 = vmatpush2.bf16.msra.mxu0 0
    %400 = vmatprep.subr.bf16.mxu0 0
    %401 = vmatpush2.bf16.msra.mxu0 0
    %402 = vmatprep.subr.bf16.mxu0 0
    %403 = vmatpush2.bf16.msra.mxu0 0
    %404 = vmatprep.subr.bf16.mxu0 0
    %405 = vmatpush2.bf16.msra.mxu0 0
    %406 = vmatprep.mubr.bf16.mxu0 0
    %407 = vmatmul.mubr.bf16.gmra.mxu0 %v369
    %v408 = vpop.f32.mrf.mxu0
    %v409 = vadd.f32 %v302, %v408
    %v410 = vpop.f32.mrf.mxu0
    %v411 = vpop.f32.mrf.mxu0
    %v412 = vadd.f32 %v302, %v411
    %v413 = vpop.f32.mrf.mxu0
    %414 = vmatprep.mubr.bf16.mxu0 0
    %415 = vmatmul.mubr.bf16.gmra.mxu0 %v372
    %v416 = vpop.f32.mrf.mxu0
    %v417 = vadd.f32 %v302, %v416
    %v418 = vpop.f32.mrf.mxu0
    %v419 = vpop.f32.mrf.mxu0
    %v420 = vpop.f32.mrf.mxu0
    %421 = vdwg.mxu0
    %v422 = vld [vmem:[#allocation5] sm:$0xff]
    %v423 = vld [vmem:[#allocation5 + $0x8] sm:$0xff]
    %v424 = vld [vmem:[#allocation5 + $0x10] sm:$0xff]
    %v425 = vld [vmem:[#allocation5 + $0x18] sm:$0xff]
    %v426 = vld [vmem:[#allocation5 + $0x20] sm:$0xff]
    %v427 = vld [vmem:[#allocation5 + $0x28] sm:$0xff]
    %v428 = vld [vmem:[#allocation5 + $0x30] sm:$0xff]
    %v429 = vld [vmem:[#allocation5 + $0x38] sm:$0xff]
    %v430 = vpack.c.bf16 %v289, %v286
    %v439 = vunpack.c.l.b16 %v422
    %v440 = vunpack.c.h.b16 %v422
    %v441 = vunpack.c.l.b16 %v423
    %v442 = vunpack.c.h.b16 %v423
    %v443 = vunpack.c.l.b16 %v424
    %v444 = vunpack.c.h.b16 %v424
    %v445 = vunpack.c.l.b16 %v425
    %v446 = vunpack.c.h.b16 %v425
    %v447 = vunpack.c.l.b16 %v426
    %v448 = vunpack.c.h.b16 %v426
    %v449 = vunpack.c.l.b16 %v427
    %v450 = vunpack.c.h.b16 %v427
    %v451 = vunpack.c.l.b16 %v428
    %v452 = vunpack.c.h.b16 %v428
    %v453 = vunpack.c.l.b16 %v429
    %v454 = vunpack.c.h.b16 %v429
    %v455 = vpack.c.b16 %v441, %v439
    %v456 = vpack.c.b16 %v442, %v440
    %v457 = vpack.c.b16 %v445, %v443
    %v458 = vpack.c.b16 %v446, %v444
    %v459 = vpack.c.b16 %v449, %v447
    %v460 = vpack.c.b16 %v450, %v448
    %v461 = vpack.c.b16 %v453, %v451
    %v462 = vpack.c.b16 %v454, %v452
    %vm471 = vcmask 523264
    %v473 = vsel %vm471, %v430, 0
    %475 = vmatprep.subr.bf16.mxu0 0
    %476 = vmatpush1.bf16.msra.mxu0 0
    %477 = vmatprep.subr.bf16.mxu0 0
    %478 = vmatpush1.bf16.msra.mxu0 0
    %479 = vmatprep.subr.bf16.mxu0 0
    %480 = vmatpush1.bf16.msra.mxu0 0
    %481 = vmatprep.subr.bf16.mxu0 0
    %482 = vmatpush1.bf16.msra.mxu0 0
    %483 = vmatprep.subr.bf16.mxu0 %v462
    %484 = vmatpush1.bf16.msra.mxu0 %v461
    %485 = vmatprep.subr.bf16.mxu0 %v460
    %486 = vmatpush1.bf16.msra.mxu0 %v459
    %487 = vmatprep.subr.bf16.mxu0 %v458
    %488 = vmatpush1.bf16.msra.mxu0 %v457
    %489 = vmatprep.subr.bf16.mxu0 %v456
    %490 = vmatpush1.bf16.msra.mxu0 %v455
    %491 = vmatprep.subr.bf16.mxu0 0
    %492 = vmatpush2.bf16.msra.mxu0 0
    %493 = vmatprep.subr.bf16.mxu0 0
    %494 = vmatpush2.bf16.msra.mxu0 0
    %495 = vmatprep.subr.bf16.mxu0 0
    %496 = vmatpush2.bf16.msra.mxu0 0
    %497 = vmatprep.subr.bf16.mxu0 0
    %498 = vmatpush2.bf16.msra.mxu0 0
    %499 = vmatprep.subr.bf16.mxu0 0
    %500 = vmatpush2.bf16.msra.mxu0 0
    %501 = vmatprep.subr.bf16.mxu0 0
    %502 = vmatpush2.bf16.msra.mxu0 0
    %503 = vmatprep.subr.bf16.mxu0 0
    %504 = vmatpush2.bf16.msra.mxu0 0
    %505 = vmatprep.subr.bf16.mxu0 0
    %506 = vmatpush2.bf16.msra.mxu0 0
    %507 = vmatprep.mubr.bf16.mxu0 0
    %508 = vmatmul.mubr.bf16.gmra.mxu0 %v473
    %v509 = vpop.f32.mrf.mxu0
    %v510 = vadd.f32 0.0, %v509
    %v511 = vpop.f32.mrf.mxu0
    %v512 = vadd.f32 0.0, %v511
    %v513 = vpop.f32.mrf.mxu0
    %v514 = vadd.f32 0.0, %v513
    %v515 = vpop.f32.mrf.mxu0
    %v516 = vadd.f32 0.0, %v515
    %517 = vdwg.mxu0
    %v518 = vld [vmem:[#allocation5 + $0x40] sm:$0xff]
    %v519 = vld [vmem:[#allocation5 + $0x48] sm:$0xff]
    %v520 = vld [vmem:[#allocation5 + $0x50] sm:$0xff]
    %v521 = vld [vmem:[#allocation5 + $0x58] sm:$0xff]
    %v522 = vld [vmem:[#allocation5 + $0x60] sm:$0xff]
    %v523 = vld [vmem:[#allocation5 + $0x68] sm:$0xff]
    %v524 = vld [vmem:[#allocation5 + $0x70] sm:$0xff]
    %v525 = vld [vmem:[#allocation5 + $0x78] sm:$0xff]
    %v534 = vunpack.c.l.b16 %v518
    %v535 = vunpack.c.h.b16 %v518
    %v536 = vunpack.c.l.b16 %v519
    %v537 = vunpack.c.h.b16 %v519
    %v538 = vunpack.c.l.b16 %v520
    %v539 = vunpack.c.h.b16 %v520
    %v540 = vunpack.c.l.b16 %v521
    %v541 = vunpack.c.h.b16 %v521
    %v542 = vunpack.c.l.b16 %v522
    %v543 = vunpack.c.h.b16 %v522
    %v544 = vunpack.c.l.b16 %v523
    %v545 = vunpack.c.h.b16 %v523
    %v546 = vunpack.c.l.b16 %v524
    %v547 = vunpack.c.h.b16 %v524
    %v548 = vunpack.c.l.b16 %v525
    %v549 = vunpack.c.h.b16 %v525
    %v550 = vpack.c.b16 %v536, %v534
    %v551 = vpack.c.b16 %v537, %v535
    %v552 = vpack.c.b16 %v540, %v538
    %v553 = vpack.c.b16 %v541, %v539
    %v554 = vpack.c.b16 %v544, %v542
    %v555 = vpack.c.b16 %v545, %v543
    %v556 = vpack.c.b16 %v548, %v546
    %v557 = vpack.c.b16 %v549, %v547
    %566 = vmatprep.subr.bf16.mxu0 0
    %567 = vmatpush1.bf16.msra.mxu0 0
    %568 = vmatprep.subr.bf16.mxu0 0
    %569 = vmatpush1.bf16.msra.mxu0 0
    %570 = vmatprep.subr.bf16.mxu0 0
    %571 = vmatpush1.bf16.msra.mxu0 0
    %572 = vmatprep.subr.bf16.mxu0 0
    %573 = vmatpush1.bf16.msra.mxu0 0
    %574 = vmatprep.subr.bf16.mxu0 %v557
    %575 = vmatpush1.bf16.msra.mxu0 %v556
    %576 = vmatprep.subr.bf16.mxu0 %v555
    %577 = vmatpush1.bf16.msra.mxu0 %v554
    %578 = vmatprep.subr.bf16.mxu0 %v553
    %579 = vmatpush1.bf16.msra.mxu0 %v552
    %580 = vmatprep.subr.bf16.mxu0 %v551
    %581 = vmatpush1.bf16.msra.mxu0 %v550
    %582 = vmatprep.subr.bf16.mxu0 0
    %583 = vmatpush2.bf16.msra.mxu0 0
    %584 = vmatprep.subr.bf16.mxu0 0
    %585 = vmatpush2.bf16.msra.mxu0 0
    %586 = vmatprep.subr.bf16.mxu0 0
    %587 = vmatpush2.bf16.msra.mxu0 0
    %588 = vmatprep.subr.bf16.mxu0 0
    %589 = vmatpush2.bf16.msra.mxu0 0
    %590 = vmatprep.subr.bf16.mxu0 0
    %591 = vmatpush2.bf16.msra.mxu0 0
    %592 = vmatprep.subr.bf16.mxu0 0
    %593 = vmatpush2.bf16.msra.mxu0 0
    %594 = vmatprep.subr.bf16.mxu0 0
    %595 = vmatpush2.bf16.msra.mxu0 0
    %596 = vmatprep.subr.bf16.mxu0 0
    %597 = vmatpush2.bf16.msra.mxu0 0
    %598 = vmatprep.mubr.bf16.mxu0 0
    %599 = vmatmul.mubr.bf16.gmra.mxu0 %v473
    %v600 = vpop.f32.mrf.mxu0
    %v601 = vadd.f32 0.0, %v600
    %v602 = vpop.f32.mrf.mxu0
    %v603 = vadd.f32 0.0, %v602
    %v604 = vpop.f32.mrf.mxu0
    %v605 = vadd.f32 0.0, %v604
    %v606 = vpop.f32.mrf.mxu0
    %v607 = vadd.f32 0.0, %v606
    %608 = vdwg.mxu0
    %v609 = vld [vmem:[#allocation5 + $0x80] sm:$0xff]
    %v610 = vld [vmem:[#allocation5 + $0x88] sm:$0xff]
    %v611 = vld [vmem:[#allocation5 + $0x90] sm:$0xff]
    %v612 = vld [vmem:[#allocation5 + $0x98] sm:$0xff]
    %v613 = vld [vmem:[#allocation5 + $0xa0] sm:$0xff]
    %v614 = vld [vmem:[#allocation5 + $0xa8] sm:$0xff]
    %v615 = vld [vmem:[#allocation5 + $0xb0] sm:$0xff]
    %v616 = vld [vmem:[#allocation5 + $0xb8] sm:$0xff]
    %v617 = vpack.c.bf16 %v352, %v349
    %v618 = vpack.c.bf16 %v360, %v357
    %v627 = vunpack.c.l.b16 %v609
    %v628 = vunpack.c.h.b16 %v609
    %v629 = vunpack.c.l.b16 %v610
    %v630 = vunpack.c.h.b16 %v610
    %v631 = vunpack.c.l.b16 %v611
    %v632 = vunpack.c.h.b16 %v611
    %v633 = vunpack.c.l.b16 %v612
    %v634 = vunpack.c.h.b16 %v612
    %v635 = vunpack.c.l.b16 %v613
    %v636 = vunpack.c.h.b16 %v613
    %v637 = vunpack.c.l.b16 %v614
    %v638 = vunpack.c.h.b16 %v614
    %v639 = vunpack.c.l.b16 %v615
    %v640 = vunpack.c.h.b16 %v615
    %v641 = vunpack.c.l.b16 %v616
    %v642 = vunpack.c.h.b16 %v616
    %v643 = vpack.c.b16 %v629, %v627
    %v644 = vpack.c.b16 %v630, %v628
    %v645 = vpack.c.b16 %v633, %v631
    %v646 = vpack.c.b16 %v634, %v632
    %v647 = vpack.c.b16 %v637, %v635
    %v648 = vpack.c.b16 %v638, %v636
    %v649 = vpack.c.b16 %v641, %v639
    %v650 = vpack.c.b16 %v642, %v640
    %v660 = vsel %vm471, %v617, 0
    %v663 = vsel %vm471, %v618, 0
    %665 = vmatprep.subr.bf16.mxu0 0
    %666 = vmatpush1.bf16.msra.mxu0 0
    %667 = vmatprep.subr.bf16.mxu0 0
    %668 = vmatpush1.bf16.msra.mxu0 0
    %669 = vmatprep.subr.bf16.mxu0 0
    %670 = vmatpush1.bf16.msra.mxu0 0
    %671 = vmatprep.subr.bf16.mxu0 0
    %672 = vmatpush1.bf16.msra.mxu0 0
    %673 = vmatprep.subr.bf16.mxu0 %v650
    %674 = vmatpush1.bf16.msra.mxu0 %v649
    %675 = vmatprep.subr.bf16.mxu0 %v648
    %676 = vmatpush1.bf16.msra.mxu0 %v647
    %677 = vmatprep.subr.bf16.mxu0 %v646
    %678 = vmatpush1.bf16.msra.mxu0 %v645
    %679 = vmatprep.subr.bf16.mxu0 %v644
    %680 = vmatpush1.bf16.msra.mxu0 %v643
    %681 = vmatprep.subr.bf16.mxu0 0
    %682 = vmatpush2.bf16.msra.mxu0 0
    %683 = vmatprep.subr.bf16.mxu0 0
    %684 = vmatpush2.bf16.msra.mxu0 0
    %685 = vmatprep.subr.bf16.mxu0 0
    %686 = vmatpush2.bf16.msra.mxu0 0
    %687 = vmatprep.subr.bf16.mxu0 0
    %688 = vmatpush2.bf16.msra.mxu0 0
    %689 = vmatprep.subr.bf16.mxu0 0
    %690 = vmatpush2.bf16.msra.mxu0 0
    %691 = vmatprep.subr.bf16.mxu0 0
    %692 = vmatpush2.bf16.msra.mxu0 0
    %693 = vmatprep.subr.bf16.mxu0 0
    %694 = vmatpush2.bf16.msra.mxu0 0
    %695 = vmatprep.subr.bf16.mxu0 0
    %696 = vmatpush2.bf16.msra.mxu0 0
    %697 = vmatprep.mubr.bf16.mxu0 0
    %698 = vmatmul.mubr.bf16.gmra.mxu0 %v660
    %v699 = vpop.f32.mrf.mxu0
    %v700 = vadd.f32 0.0, %v699
    %v701 = vpop.f32.mrf.mxu0
    %v702 = vadd.f32 0.0, %v701
    %v703 = vpop.f32.mrf.mxu0
    %v704 = vadd.f32 0.0, %v703
    %v705 = vpop.f32.mrf.mxu0
    %v706 = vadd.f32 0.0, %v705
    %707 = vmatprep.mubr.bf16.mxu0 0
    %708 = vmatmul.mubr.bf16.gmra.mxu0 %v663
    %v709 = vpop.f32.mrf.mxu0
    %v710 = vadd.f32 0.0, %v709
    %v711 = vpop.f32.mrf.mxu0
    %v712 = vadd.f32 0.0, %v711
    %v713 = vpop.f32.mrf.mxu0
    %v714 = vadd.f32 0.0, %v713
    %v715 = vpop.f32.mrf.mxu0
    %v716 = vadd.f32 0.0, %v715
    %717 = vdwg.mxu0
    %v718 = vld [vmem:[#allocation5 + $0xc0] sm:$0xff]
    %v719 = vld [vmem:[#allocation5 + $0xc8] sm:$0xff]
    %v720 = vld [vmem:[#allocation5 + $0xd0] sm:$0xff]
    %v721 = vld [vmem:[#allocation5 + $0xd8] sm:$0xff]
    %v722 = vld [vmem:[#allocation5 + $0xe0] sm:$0xff]
    %v723 = vld [vmem:[#allocation5 + $0xe8] sm:$0xff]
    %v724 = vld [vmem:[#allocation5 + $0xf0] sm:$0xff]
    %v725 = vld [vmem:[#allocation5 + $0xf8] sm:$0xff]
    %v734 = vunpack.c.l.b16 %v718
    %v735 = vunpack.c.h.b16 %v718
    %v736 = vunpack.c.l.b16 %v719
    %v737 = vunpack.c.h.b16 %v719
    %v738 = vunpack.c.l.b16 %v720
    %v739 = vunpack.c.h.b16 %v720
    %v740 = vunpack.c.l.b16 %v721
    %v741 = vunpack.c.h.b16 %v721
    %v742 = vunpack.c.l.b16 %v722
    %v743 = vunpack.c.h.b16 %v722
    %v744 = vunpack.c.l.b16 %v723
    %v745 = vunpack.c.h.b16 %v723
    %v746 = vunpack.c.l.b16 %v724
    %v747 = vunpack.c.h.b16 %v724
    %v748 = vunpack.c.l.b16 %v725
    %v749 = vunpack.c.h.b16 %v725
    %v750 = vpack.c.b16 %v736, %v734
    %v751 = vpack.c.b16 %v737, %v735
    %v752 = vpack.c.b16 %v740, %v738
    %v753 = vpack.c.b16 %v741, %v739
    %v754 = vpack.c.b16 %v744, %v742
    %v755 = vpack.c.b16 %v745, %v743
    %v756 = vpack.c.b16 %v748, %v746
    %v757 = vpack.c.b16 %v749, %v747
    %766 = vmatprep.subr.bf16.mxu0 0
    %767 = vmatpush1.bf16.msra.mxu0 0
    %768 = vmatprep.subr.bf16.mxu0 0
    %769 = vmatpush1.bf16.msra.mxu0 0
    %770 = vmatprep.subr.bf16.mxu0 0
    %771 = vmatpush1.bf16.msra.mxu0 0
    %772 = vmatprep.subr.bf16.mxu0 0
    %773 = vmatpush1.bf16.msra.mxu0 0
    %774 = vmatprep.subr.bf16.mxu0 %v757
    %775 = vmatpush1.bf16.msra.mxu0 %v756
    %776 = vmatprep.subr.bf16.mxu0 %v755
    %777 = vmatpush1.bf16.msra.mxu0 %v754
    %778 = vmatprep.subr.bf16.mxu0 %v753
    %779 = vmatpush1.bf16.msra.mxu0 %v752
    %780 = vmatprep.subr.bf16.mxu0 %v751
    %781 = vmatpush1.bf16.msra.mxu0 %v750
    %782 = vmatprep.subr.bf16.mxu0 0
    %783 = vmatpush2.bf16.msra.mxu0 0
    %784 = vmatprep.subr.bf16.mxu0 0
    %785 = vmatpush2.bf16.msra.mxu0 0
    %786 = vmatprep.subr.bf16.mxu0 0
    %787 = vmatpush2.bf16.msra.mxu0 0
    %788 = vmatprep.subr.bf16.mxu0 0
    %789 = vmatpush2.bf16.msra.mxu0 0
    %790 = vmatprep.subr.bf16.mxu0 0
    %791 = vmatpush2.bf16.msra.mxu0 0
    %792 = vmatprep.subr.bf16.mxu0 0
    %793 = vmatpush2.bf16.msra.mxu0 0
    %794 = vmatprep.subr.bf16.mxu0 0
    %795 = vmatpush2.bf16.msra.mxu0 0
    %796 = vmatprep.subr.bf16.mxu0 0
    %797 = vmatpush2.bf16.msra.mxu0 0
    %798 = vmatprep.mubr.bf16.mxu0 0
    %799 = vmatmul.mubr.bf16.gmra.mxu0 %v473
    %v800 = vpop.f32.mrf.mxu0
    %v801 = vadd.f32 0.0, %v800
    %v802 = vpop.f32.mrf.mxu0
    %v803 = vadd.f32 0.0, %v802
    %v804 = vpop.f32.mrf.mxu0
    %v805 = vadd.f32 0.0, %v804
    %v806 = vpop.f32.mrf.mxu0
    %v807 = vadd.f32 0.0, %v806
    %808 = vdwg.mxu0
    %v809 = vpack.c.bf16 %v514, %v510
    %v810 = vpack.c.bf16 %v516, %v512
    %v811 = vpack.c.bf16 %v605, %v601
    %v812 = vpack.c.bf16 %v607, %v603
    %v817 = vunpack.c.l.b16 %v199
    %v818 = vunpack.c.l.b16 %v200
    %v819 = vunpack.c.l.b16 %v201
    %v820 = vunpack.c.l.b16 %v202
    %v821 = vpack.c.b16 %v818, %v817
    %v822 = vpack.c.b16 %v820, %v819
    %vm823 = vcmask 130048
    %v825 = vsel %vm823, %v821, 0
    %v828 = vsel %vm823, %v822, 0
    %830 = vmatprep.subr.bf16.mxu0 0
    %831 = vmatpush1.bf16.msra.mxu0 0
    %832 = vmatprep.subr.bf16.mxu0 0
    %833 = vmatpush1.bf16.msra.mxu0 0
    %834 = vmatprep.subr.bf16.mxu0 0
    %835 = vmatpush1.bf16.msra.mxu0 0
    %836 = vmatprep.subr.bf16.mxu0 0
    %837 = vmatpush1.bf16.msra.mxu0 0
    %838 = vmatprep.subr.bf16.mxu0 0
    %839 = vmatpush1.bf16.msra.mxu0 0
    %840 = vmatprep.subr.bf16.mxu0 0
    %841 = vmatpush1.bf16.msra.mxu0 0
    %842 = vmatprep.subr.bf16.mxu0 0
    %843 = vmatpush1.bf16.msra.mxu0 0
    %844 = vmatprep.subr.bf16.mxu0 %v812
    %845 = vmatpush1.bf16.msra.mxu0 %v811
    %846 = vmatprep.subr.bf16.mxu0 0
    %847 = vmatpush2.bf16.msra.mxu0 0
    %848 = vmatprep.subr.bf16.mxu0 0
    %849 = vmatpush2.bf16.msra.mxu0 0
    %850 = vmatprep.subr.bf16.mxu0 0
    %851 = vmatpush2.bf16.msra.mxu0 0
    %852 = vmatprep.subr.bf16.mxu0 0
    %853 = vmatpush2.bf16.msra.mxu0 0
    %854 = vmatprep.subr.bf16.mxu0 0
    %855 = vmatpush2.bf16.msra.mxu0 0
    %856 = vmatprep.subr.bf16.mxu0 0
    %857 = vmatpush2.bf16.msra.mxu0 0
    %858 = vmatprep.subr.bf16.mxu0 0
    %859 = vmatpush2.bf16.msra.mxu0 0
    %860 = vmatprep.subr.bf16.mxu0 0
    %861 = vmatpush2.bf16.msra.mxu0 0
    %862 = vmatprep.mubr.bf16.mxu0 0
    %863 = vmatmul.mubr.bf16.gmra.mxu0 %v825
    %v864 = vpop.f32.mrf.mxu0
    %v865 = vadd.f32 0.0, %v864
    %v866 = vpop.f32.mrf.mxu0
    %v867 = vadd.f32 0.0, %v866
    %v868 = vpop.f32.mrf.mxu0
    %v869 = vadd.f32 0.0, %v868
    %v870 = vpop.f32.mrf.mxu0
    %v871 = vadd.f32 0.0, %v870
    %872 = vmatprep.mubr.bf16.mxu0 0
    %873 = vmatmul.mubr.bf16.gmra.mxu0 %v828
    %v874 = vpop.f32.mrf.mxu0
    %v875 = vadd.f32 0.0, %v874
    %v876 = vpop.f32.mrf.mxu0
    %v877 = vadd.f32 0.0, %v876
    %v878 = vpop.f32.mrf.mxu0
    %v879 = vadd.f32 0.0, %v878
    %v880 = vpop.f32.mrf.mxu0
    %v881 = vadd.f32 0.0, %v880
    %882 = vdwg.mxu0
    %v887 = vunpack.c.l.b16 %v195
    %v888 = vunpack.c.l.b16 %v196
    %v889 = vunpack.c.l.b16 %v197
    %v890 = vunpack.c.l.b16 %v198
    %v891 = vpack.c.b16 %v888, %v887
    %v892 = vpack.c.b16 %v890, %v889
    %v894 = vsel %vm823, %v891, 0
    %v897 = vsel %vm823, %v892, 0
    %899 = vmatprep.subr.bf16.mxu0 0
    %900 = vmatpush1.bf16.msra.mxu0 0
    %901 = vmatprep.subr.bf16.mxu0 0
    %902 = vmatpush1.bf16.msra.mxu0 0
    %903 = vmatprep.subr.bf16.mxu0 0
    %904 = vmatpush1.bf16.msra.mxu0 0
    %905 = vmatprep.subr.bf16.mxu0 0
    %906 = vmatpush1.bf16.msra.mxu0 0
    %907 = vmatprep.subr.bf16.mxu0 0
    %908 = vmatpush1.bf16.msra.mxu0 0
    %909 = vmatprep.subr.bf16.mxu0 0
    %910 = vmatpush1.bf16.msra.mxu0 0
    %911 = vmatprep.subr.bf16.mxu0 0
    %912 = vmatpush1.bf16.msra.mxu0 0
    %913 = vmatprep.subr.bf16.mxu0 %v810
    %914 = vmatpush1.bf16.msra.mxu0 %v809
    %915 = vmatprep.subr.bf16.mxu0 0
    %916 = vmatpush2.bf16.msra.mxu0 0
    %917 = vmatprep.subr.bf16.mxu0 0
    %918 = vmatpush2.bf16.msra.mxu0 0
    %919 = vmatprep.subr.bf16.mxu0 0
    %920 = vmatpush2.bf16.msra.mxu0 0
    %921 = vmatprep.subr.bf16.mxu0 0
    %922 = vmatpush2.bf16.msra.mxu0 0
    %923 = vmatprep.subr.bf16.mxu0 0
    %924 = vmatpush2.bf16.msra.mxu0 0
    %925 = vmatprep.subr.bf16.mxu0 0
    %926 = vmatpush2.bf16.msra.mxu0 0
    %927 = vmatprep.subr.bf16.mxu0 0
    %928 = vmatpush2.bf16.msra.mxu0 0
    %929 = vmatprep.subr.bf16.mxu0 0
    %930 = vmatpush2.bf16.msra.mxu0 0
    %931 = vmatprep.mubr.bf16.mxu0 0
    %932 = vmatmul.mubr.bf16.gmra.mxu0 %v894
    %v933 = vpop.f32.mrf.mxu0
    %v934 = vadd.f32 %v865, %v933
    %v935 = vpop.f32.mrf.mxu0
    %v936 = vadd.f32 %v867, %v935
    %v937 = vpop.f32.mrf.mxu0
    %v938 = vadd.f32 %v869, %v937
    %v939 = vpop.f32.mrf.mxu0
    %v940 = vadd.f32 %v871, %v939
    %941 = vmatprep.mubr.bf16.mxu0 0
    %942 = vmatmul.mubr.bf16.gmra.mxu0 %v897
    %v943 = vpop.f32.mrf.mxu0
    %v944 = vadd.f32 %v875, %v943
    %v945 = vpop.f32.mrf.mxu0
    %v946 = vadd.f32 %v877, %v945
    %v947 = vpop.f32.mrf.mxu0
    %v948 = vadd.f32 %v879, %v947
    %v949 = vpop.f32.mrf.mxu0
    %v950 = vadd.f32 %v881, %v949
    %951 = vdwg.mxu0
    %v952 = vadd.f32 %v934, %v700
    %v953 = vadd.f32 %v936, %v702
    %v954 = vadd.f32 %v938, %v704
    %v955 = vadd.f32 %v940, %v706
    %v956 = vadd.f32 %v944, %v710
    %v957 = vadd.f32 %v946, %v712
    %v958 = vadd.f32 %v948, %v714
    %v959 = vadd.f32 %v950, %v716
    %v961 = vlaneseq
    %v962 = vshrl.u32 %v961, 7
    %v963 = vsub.s32 0, %v962
    %v964 = vrot.slane %v99, %v963
    %v965 = vlaneseq
    %v966 = vshrl.u32 %v965, 7
    %v967 = vsub.s32 1, %v966
    %v968 = vrot.slane %v99, %v967
    %v971 = vadd.f32 %v952, %v964
    %v972 = vadd.f32 %v953, %v968
    %v973 = vadd.f32 %v954, %v964
    %v974 = vadd.f32 %v955, %v968
    %v975 = vadd.f32 %v956, %v964
    %v976 = vadd.f32 %v957, %v968
    %v977 = vadd.f32 %v958, %v964
    %v978 = vadd.f32 %v959, %v968
    %vm979 = vcmp.gt.f32.partialorder %v971, 0.0
    %vm980 = vcmp.gt.f32.partialorder %v972, 0.0
    %vm981 = vcmp.gt.f32.partialorder %v973, 0.0
    %vm982 = vcmp.gt.f32.partialorder %v974, 0.0
    %vm983 = vcmp.gt.f32.partialorder %v975, 0.0
    %vm984 = vcmp.gt.f32.partialorder %v976, 0.0
    %vm985 = vcmp.gt.f32.partialorder %v977, 0.0
    %vm986 = vcmp.gt.f32.partialorder %v978, 0.0
    %v987 = vmul.f32 %v971, 0.01
    %v988 = vmul.f32 %v972, 0.01
    %v989 = vmul.f32 %v973, 0.01
    %v990 = vmul.f32 %v974, 0.01
    %v991 = vmul.f32 %v975, 0.01
    %v992 = vmul.f32 %v976, 0.01
    %v993 = vmul.f32 %v977, 0.01
    %v994 = vmul.f32 %v978, 0.01
    %v995 = vsel %vm979, %v971, %v987
    %v996 = vsel %vm980, %v972, %v988
    %v997 = vsel %vm981, %v973, %v989
    %v998 = vsel %vm982, %v974, %v990
    %v999 = vsel %vm983, %v975, %v991
    %v1000 = vsel %vm984, %v976, %v992
    %v1001 = vsel %vm985, %v977, %v993
    %v1002 = vsel %vm986, %v978, %v994
    %v1003 = vpack.c.bf16 %v997, %v995
    %v1004 = vpack.c.bf16 %v998, %v996
    %v1005 = vpack.c.bf16 %v1001, %v999
    %v1006 = vpack.c.bf16 %v1002, %v1000
    %v1039 = vunpack.c.l.b16 %v110
    %v1040 = vunpack.c.l.b16 %v111
    %v1041 = vunpack.c.l.b16 %v112
    %v1042 = vunpack.c.l.b16 %v113
    %v1043 = vunpack.c.l.b16 %v114
    %v1044 = vunpack.c.l.b16 %v115
    %v1045 = vunpack.c.l.b16 %v116
    %v1046 = vunpack.c.l.b16 %v117
    %v1047 = vunpack.c.l.b16 %v118
    %v1048 = vunpack.c.l.b16 %v119
    %v1049 = vunpack.c.l.b16 %v120
    %v1050 = vunpack.c.l.b16 %v121
    %v1051 = vunpack.c.l.b16 %v122
    %v1052 = vunpack.c.l.b16 %v123
    %v1053 = vunpack.c.l.b16 %v124
    %v1054 = vunpack.c.l.b16 %v125
    %v1055 = vunpack.c.l.b16 %v126
    %v1056 = vunpack.c.l.b16 %v127
    %v1057 = vunpack.c.l.b16 %v128
    %v1058 = vunpack.c.l.b16 %v129
    %v1059 = vunpack.c.l.b16 %v130
    %v1060 = vunpack.c.l.b16 %v131
    %v1061 = vunpack.c.l.b16 %v132
    %v1062 = vunpack.c.l.b16 %v133
    %v1063 = vunpack.c.l.b16 %v134
    %v1064 = vunpack.c.l.b16 %v135
    %v1065 = vunpack.c.l.b16 %v136
    %v1066 = vunpack.c.l.b16 %v137
    %v1067 = vunpack.c.l.b16 %v138
    %v1068 = vunpack.c.l.b16 %v139
    %v1069 = vunpack.c.l.b16 %v140
    %v1070 = vunpack.c.l.b16 %v141
    %v1071 = vpack.c.b16 %v1040, %v1039
    %v1072 = vpack.c.b16 %v1042, %v1041
    %v1073 = vpack.c.b16 %v1044, %v1043
    %v1074 = vpack.c.b16 %v1046, %v1045
    %v1075 = vpack.c.b16 %v1048, %v1047
    %v1076 = vpack.c.b16 %v1050, %v1049
    %v1077 = vpack.c.b16 %v1052, %v1051
    %v1078 = vpack.c.b16 %v1054, %v1053
    %v1079 = vpack.c.b16 %v1056, %v1055
    %v1080 = vpack.c.b16 %v1058, %v1057
    %v1081 = vpack.c.b16 %v1060, %v1059
    %v1082 = vpack.c.b16 %v1062, %v1061
    %v1083 = vpack.c.b16 %v1064, %v1063
    %v1084 = vpack.c.b16 %v1066, %v1065
    %v1085 = vpack.c.b16 %v1068, %v1067
    %v1086 = vpack.c.b16 %v1070, %v1069
    %1103 = vmatprep.subr.bf16.mxu0 0
    %1104 = vmatpush1.bf16.msra.mxu0 %v1078
    %1105 = vmatprep.subr.bf16.mxu0 0
    %1106 = vmatpush1.bf16.msra.mxu0 %v1077
    %1107 = vmatprep.subr.bf16.mxu0 0
    %1108 = vmatpush1.bf16.msra.mxu0 %v1076
    %1109 = vmatprep.subr.bf16.mxu0 0
    %1110 = vmatpush1.bf16.msra.mxu0 %v1075
    %1111 = vmatprep.subr.bf16.mxu0 0
    %1112 = vmatpush1.bf16.msra.mxu0 %v1074
    %1113 = vmatprep.subr.bf16.mxu0 0
    %1114 = vmatpush1.bf16.msra.mxu0 %v1073
    %1115 = vmatprep.subr.bf16.mxu0 0
    %1116 = vmatpush1.bf16.msra.mxu0 %v1072
    %1117 = vmatprep.subr.bf16.mxu0 0
    %1118 = vmatpush1.bf16.msra.mxu0 %v1071
    %1119 = vmatprep.subr.bf16.mxu0 0
    %1120 = vmatpush2.bf16.msra.mxu0 %v1086
    %1121 = vmatprep.subr.bf16.mxu0 0
    %1122 = vmatpush2.bf16.msra.mxu0 %v1085
    %1123 = vmatprep.subr.bf16.mxu0 0
    %1124 = vmatpush2.bf16.msra.mxu0 %v1084
    %1125 = vmatprep.subr.bf16.mxu0 0
    %1126 = vmatpush2.bf16.msra.mxu0 %v1083
    %1127 = vmatprep.subr.bf16.mxu0 0
    %1128 = vmatpush2.bf16.msra.mxu0 %v1082
    %1129 = vmatprep.subr.bf16.mxu0 0
    %1130 = vmatpush2.bf16.msra.mxu0 %v1081
    %1131 = vmatprep.subr.bf16.mxu0 0
    %1132 = vmatpush2.bf16.msra.mxu0 %v1080
    %1133 = vmatprep.subr.bf16.mxu0 0
    %1134 = vmatpush2.bf16.msra.mxu0 %v1079
    %1135 = vmatprep.mubr.bf16.mxu0 %v1004
    %1136 = vmatmul.mubr.bf16.gmra.mxu0 %v1003
    %v1137 = vpop.f32.mrf.mxu0
    %v1138 = vadd.f32 0.0, %v1137
    %v1139 = vpop.f32.mrf.mxu0
    %v1140 = vpop.f32.mrf.mxu0
    %v1141 = vadd.f32 0.0, %v1140
    %v1142 = vpop.f32.mrf.mxu0
    %1143 = vmatprep.mubr.bf16.mxu0 %v1006
    %1144 = vmatmul.mubr.bf16.gmra.mxu0 %v1005
    %v1145 = vpop.f32.mrf.mxu0
    %v1146 = vadd.f32 0.0, %v1145
    %v1147 = vpop.f32.mrf.mxu0
    %v1148 = vpop.f32.mrf.mxu0
    %v1149 = vadd.f32 0.0, %v1148
    %v1150 = vpop.f32.mrf.mxu0
    %1151 = vdwg.mxu0
    %v1152 = vsel %vm303, %v1138, -inf
    %v1153 = vsel %vm303, %v1141, -inf
    %v1154 = vsel %vm303, %v1146, -inf
    %v1155 = vsel %vm303, %v1149, -inf
    %v1156 = vmax.f32 %v1152, %v1153
    %v1157 = vmax.f32 %v1154, %v1155
    %v1158 = vmax.f32 %v1156, %v1157
    %v1159 = vrot.slane %v1158, 4
    %v1160 = vmax.f32 %v1158, %v1159
    %v1161 = vrot.slane %v1160, 2
    %v1162 = vmax.f32 %v1160, %v1161
    %v1163 = vrot.slane %v1162, 1
    %v1164 = vmax.f32 %v1162, %v1163
    %v1165 = vsub.f32 %v1138, %v1164
    %v1166 = vsub.f32 %v1141, %v1164
    %v1167 = vsub.f32 %v1146, %v1164
    %v1168 = vsub.f32 %v1149, %v1164
    %v1169 = vmul.f32 %v1165, 1.442695
    %v1170 = vpow.pop %v1169
    %v1171 = vmul.f32 %v1166, 1.442695
    %v1172 = vpow.pop %v1171
    %v1173 = vmul.f32 %v1167, 1.442695
    %v1174 = vpow.pop %v1173
    %v1175 = vmul.f32 %v1168, 1.442695
    %v1176 = vpow.pop %v1175
    %v1177 = vpack.c.bf16 %v1172, %v1170
    %v1178 = vpack.c.bf16 %v1176, %v1174
    %v1181 = vunpack.c.l.b16 %v203
    %v1182 = vunpack.c.l.b16 %v204
    %v1183 = vpack.c.b16 %v1182, %v1181
    %vm1184 = vcmask 261120
    %v1186 = vsel %vm1184, %v1183, 0
    %1188 = vmatprep.subr.bf16.mxu0 0
    %1189 = vmatpush1.bf16.msra.mxu0 0
    %1190 = vmatprep.subr.bf16.mxu0 0
    %1191 = vmatpush1.bf16.msra.mxu0 0
    %1192 = vmatprep.subr.bf16.mxu0 0
    %1193 = vmatpush1.bf16.msra.mxu0 0
    %1194 = vmatprep.subr.bf16.mxu0 0
    %1195 = vmatpush1.bf16.msra.mxu0 0
    %1196 = vmatprep.subr.bf16.mxu0 0
    %1197 = vmatpush1.bf16.msra.mxu0 0
    %1198 = vmatprep.subr.bf16.mxu0 0
    %1199 = vmatpush1.bf16.msra.mxu0 0
    %1200 = vmatprep.subr.bf16.mxu0 0
    %1201 = vmatpush1.bf16.msra.mxu0 %v1178
    %1202 = vmatprep.subr.bf16.mxu0 0
    %1203 = vmatpush1.bf16.msra.mxu0 %v1177
    %1204 = vmatprep.subr.bf16.mxu0 0
    %1205 = vmatpush2.bf16.msra.mxu0 0
    %1206 = vmatprep.subr.bf16.mxu0 0
    %1207 = vmatpush2.bf16.msra.mxu0 0
    %1208 = vmatprep.subr.bf16.mxu0 0
    %1209 = vmatpush2.bf16.msra.mxu0 0
    %1210 = vmatprep.subr.bf16.mxu0 0
    %1211 = vmatpush2.bf16.msra.mxu0 0
    %1212 = vmatprep.subr.bf16.mxu0 0
    %1213 = vmatpush2.bf16.msra.mxu0 0
    %1214 = vmatprep.subr.bf16.mxu0 0
    %1215 = vmatpush2.bf16.msra.mxu0 0
    %1216 = vmatprep.subr.bf16.mxu0 0
    %1217 = vmatpush2.bf16.msra.mxu0 0
    %1218 = vmatprep.subr.bf16.mxu0 0
    %1219 = vmatpush2.bf16.msra.mxu0 0
    %1220 = vmatprep.mubr.bf16.mxu0 0
    %1221 = vmatmul.mubr.bf16.gmra.mxu0 %v1186
    %v1222 = vpop.f32.mrf.mxu0
    %v1223 = vadd.f32 0.0, %v1222
    %v1224 = vpop.f32.mrf.mxu0
    %v1225 = vpop.f32.mrf.mxu0
    %v1226 = vadd.f32 0.0, %v1225
    %v1227 = vpop.f32.mrf.mxu0
    %1228 = vdwg.mxu0
    %v1229 = vmax.f32 %v1223, 1e-30
    %v1230 = vmax.f32 %v1226, 1e-30
    %v1231 = vrcp.pop %v1229
    %v1232 = vmul.f32 1.0, %v1231
    %v1233 = vrcp.pop %v1230
    %v1234 = vmul.f32 1.0, %v1233
    %v1235 = vpack.c.bf16 %v1234, %v1232
    %v1237 = vunpack.c.l.b16 %v142
    %v1238 = vunpack.c.h.b16 %v142
    %v1239 = vpack.c.b16 %v1237, %v1237
    %v1240 = vpack.c.b16 %v1238, %v1238
    %v1242 = vsel %vm303, %v1235, 0
    %v1245 = vsel %vm310, %v1239, 0
    %v1248 = vsel %vm310, %v1240, 0
    %1250 = vmatprep.subr.bf16.mxu0 0
    %1251 = vmatpush1.bf16.msra.mxu0 0
    %1252 = vmatprep.subr.bf16.mxu0 0
    %1253 = vmatpush1.bf16.msra.mxu0 0
    %1254 = vmatprep.subr.bf16.mxu0 0
    %1255 = vmatpush1.bf16.msra.mxu0 0
    %1256 = vmatprep.subr.bf16.mxu0 0
    %1257 = vmatpush1.bf16.msra.mxu0 0
    %1258 = vmatprep.subr.bf16.mxu0 0
    %1259 = vmatpush1.bf16.msra.mxu0 0
    %1260 = vmatprep.subr.bf16.mxu0 0
    %1261 = vmatpush1.bf16.msra.mxu0 0
    %1262 = vmatprep.subr.bf16.mxu0 0
    %1263 = vmatpush1.bf16.msra.mxu0 0
    %1264 = vmatprep.subr.bf16.mxu0 %v1248
    %1265 = vmatpush1.bf16.msra.mxu0 %v1245
    %1266 = vmatprep.subr.bf16.mxu0 0
    %1267 = vmatpush2.bf16.msra.mxu0 0
    %1268 = vmatprep.subr.bf16.mxu0 0
    %1269 = vmatpush2.bf16.msra.mxu0 0
    %1270 = vmatprep.subr.bf16.mxu0 0
    %1271 = vmatpush2.bf16.msra.mxu0 0
    %1272 = vmatprep.subr.bf16.mxu0 0
    %1273 = vmatpush2.bf16.msra.mxu0 0
    %1274 = vmatprep.subr.bf16.mxu0 0
    %1275 = vmatpush2.bf16.msra.mxu0 0
    %1276 = vmatprep.subr.bf16.mxu0 0
    %1277 = vmatpush2.bf16.msra.mxu0 0
    %1278 = vmatprep.subr.bf16.mxu0 0
    %1279 = vmatpush2.bf16.msra.mxu0 0
    %1280 = vmatprep.subr.bf16.mxu0 0
    %1281 = vmatpush2.bf16.msra.mxu0 0
    %1282 = vmatprep.mubr.bf16.mxu0 0
    %1283 = vmatmul.mubr.bf16.gmra.mxu0 %v1242
    %v1284 = vpop.f32.mrf.mxu0
    %v1285 = vadd.f32 0.0, %v1284
    %v1286 = vpop.f32.mrf.mxu0
    %v1287 = vadd.f32 0.0, %v1286
    %v1288 = vpop.f32.mrf.mxu0
    %v1289 = vadd.f32 0.0, %v1288
    %v1290 = vpop.f32.mrf.mxu0
    %v1291 = vadd.f32 0.0, %v1290
    %1292 = vdwg.mxu0
    %v1293 = vpack.c.bf16 %v1289, %v1285
    %v1294 = vpack.c.bf16 %v1291, %v1287
    %1295 = vmatprep.subr.bf16.mxu0 0
    %1296 = vmatpush1.bf16.msra.mxu0 0
    %1297 = vmatprep.subr.bf16.mxu0 0
    %1298 = vmatpush1.bf16.msra.mxu0 0
    %1299 = vmatprep.subr.bf16.mxu0 0
    %1300 = vmatpush1.bf16.msra.mxu0 0
    %1301 = vmatprep.subr.bf16.mxu0 0
    %1302 = vmatpush1.bf16.msra.mxu0 0
    %1303 = vmatprep.subr.bf16.mxu0 0
    %1304 = vmatpush1.bf16.msra.mxu0 0
    %1305 = vmatprep.subr.bf16.mxu0 0
    %1306 = vmatpush1.bf16.msra.mxu0 0
    %1307 = vmatprep.subr.bf16.mxu0 0
    %1308 = vmatpush1.bf16.msra.mxu0 0
    %1309 = vmatprep.subr.bf16.mxu0 %v1294
    %1310 = vmatpush1.bf16.msra.mxu0 %v1293
    %1311 = vmatprep.subr.bf16.mxu0 0
    %1312 = vmatpush2.bf16.msra.mxu0 0
    %1313 = vmatprep.subr.bf16.mxu0 0
    %1314 = vmatpush2.bf16.msra.mxu0 0
    %1315 = vmatprep.subr.bf16.mxu0 0
    %1316 = vmatpush2.bf16.msra.mxu0 0
    %1317 = vmatprep.subr.bf16.mxu0 0
    %1318 = vmatpush2.bf16.msra.mxu0 0
    %1319 = vmatprep.subr.bf16.mxu0 0
    %1320 = vmatpush2.bf16.msra.mxu0 0
    %1321 = vmatprep.subr.bf16.mxu0 0
    %1322 = vmatpush2.bf16.msra.mxu0 0
    %1323 = vmatprep.subr.bf16.mxu0 0
    %1324 = vmatpush2.bf16.msra.mxu0 0
    %1325 = vmatprep.subr.bf16.mxu0 0
    %1326 = vmatpush2.bf16.msra.mxu0 0
    %1327 = vmatprep.mubr.bf16.mxu0 0
    %1328 = vmatmul.mubr.bf16.gmra.mxu0 %v825
    %v1329 = vpop.f32.mrf.mxu0
    %v1330 = vadd.f32 0.0, %v1329
    %v1331 = vpop.f32.mrf.mxu0
    %v1332 = vadd.f32 0.0, %v1331
    %v1333 = vpop.f32.mrf.mxu0
    %v1334 = vadd.f32 0.0, %v1333
    %v1335 = vpop.f32.mrf.mxu0
    %v1336 = vadd.f32 0.0, %v1335
    %1337 = vmatprep.mubr.bf16.mxu0 0
    %1338 = vmatmul.mubr.bf16.gmra.mxu0 %v828
    %v1339 = vpop.f32.mrf.mxu0
    %v1340 = vadd.f32 0.0, %v1339
    %v1341 = vpop.f32.mrf.mxu0
    %v1342 = vadd.f32 0.0, %v1341
    %v1343 = vpop.f32.mrf.mxu0
    %v1344 = vadd.f32 0.0, %v1343
    %v1345 = vpop.f32.mrf.mxu0
    %v1346 = vadd.f32 0.0, %v1345
    %1347 = vdwg.mxu0
    %v1349 = vsel %vm303, %v1177, 0
    %v1352 = vsel %vm303, %v1178, 0
    %1354 = vmatprep.subr.bf16.mxu0 0
    %1355 = vmatpush1.bf16.msra.mxu0 0
    %1356 = vmatprep.subr.bf16.mxu0 0
    %1357 = vmatpush1.bf16.msra.mxu0 0
    %1358 = vmatprep.subr.bf16.mxu0 0
    %1359 = vmatpush1.bf16.msra.mxu0 0
    %1360 = vmatprep.subr.bf16.mxu0 0
    %1361 = vmatpush1.bf16.msra.mxu0 0
    %1362 = vmatprep.subr.bf16.mxu0 0
    %1363 = vmatpush1.bf16.msra.mxu0 0
    %1364 = vmatprep.subr.bf16.mxu0 0
    %1365 = vmatpush1.bf16.msra.mxu0 0
    %1366 = vmatprep.subr.bf16.mxu0 0
    %1367 = vmatpush1.bf16.msra.mxu0 0
    %1368 = vmatprep.subr.bf16.mxu0 %v1248
    %1369 = vmatpush1.bf16.msra.mxu0 %v1245
    %1370 = vmatprep.subr.bf16.mxu0 0
    %1371 = vmatpush2.bf16.msra.mxu0 0
    %1372 = vmatprep.subr.bf16.mxu0 0
    %1373 = vmatpush2.bf16.msra.mxu0 0
    %1374 = vmatprep.subr.bf16.mxu0 0
    %1375 = vmatpush2.bf16.msra.mxu0 0
    %1376 = vmatprep.subr.bf16.mxu0 0
    %1377 = vmatpush2.bf16.msra.mxu0 0
    %1378 = vmatprep.subr.bf16.mxu0 0
    %1379 = vmatpush2.bf16.msra.mxu0 0
    %1380 = vmatprep.subr.bf16.mxu0 0
    %1381 = vmatpush2.bf16.msra.mxu0 0
    %1382 = vmatprep.subr.bf16.mxu0 0
    %1383 = vmatpush2.bf16.msra.mxu0 0
    %1384 = vmatprep.subr.bf16.mxu0 0
    %1385 = vmatpush2.bf16.msra.mxu0 0
    %1386 = vmatprep.mubr.bf16.mxu0 0
    %1387 = vmatmul.mubr.bf16.gmra.mxu0 %v1349
    %v1388 = vpop.f32.mrf.mxu0
    %v1389 = vadd.f32 0.0, %v1388
    %v1390 = vpop.f32.mrf.mxu0
    %v1391 = vadd.f32 0.0, %v1390
    %v1392 = vpop.f32.mrf.mxu0
    %v1393 = vadd.f32 0.0, %v1392
    %v1394 = vpop.f32.mrf.mxu0
    %v1395 = vadd.f32 0.0, %v1394
    %1396 = vmatprep.mubr.bf16.mxu0 0
    %1397 = vmatmul.mubr.bf16.gmra.mxu0 %v1352
    %v1398 = vpop.f32.mrf.mxu0
    %v1399 = vadd.f32 0.0, %v1398
    %v1400 = vpop.f32.mrf.mxu0
    %v1401 = vadd.f32 0.0, %v1400
    %v1402 = vpop.f32.mrf.mxu0
    %v1403 = vadd.f32 0.0, %v1402
    %v1404 = vpop.f32.mrf.mxu0
    %v1405 = vadd.f32 0.0, %v1404
    %1406 = vdwg.mxu0
    %v1407 = vpack.c.bf16 %v805, %v801
    %v1408 = vpack.c.bf16 %v807, %v803
    %1409 = vmatprep.subr.bf16.mxu0 0
    %1410 = vmatpush1.bf16.msra.mxu0 0
    %1411 = vmatprep.subr.bf16.mxu0 0
    %1412 = vmatpush1.bf16.msra.mxu0 0
    %1413 = vmatprep.subr.bf16.mxu0 0
    %1414 = vmatpush1.bf16.msra.mxu0 0
    %1415 = vmatprep.subr.bf16.mxu0 0
    %1416 = vmatpush1.bf16.msra.mxu0 0
    %1417 = vmatprep.subr.bf16.mxu0 0
    %1418 = vmatpush1.bf16.msra.mxu0 0
    %1419 = vmatprep.subr.bf16.mxu0 0
    %1420 = vmatpush1.bf16.msra.mxu0 0
    %1421 = vmatprep.subr.bf16.mxu0 0
    %1422 = vmatpush1.bf16.msra.mxu0 0
    %1423 = vmatprep.subr.bf16.mxu0 %v1408
    %1424 = vmatpush1.bf16.msra.mxu0 %v1407
    %1425 = vmatprep.subr.bf16.mxu0 0
    %1426 = vmatpush2.bf16.msra.mxu0 0
    %1427 = vmatprep.subr.bf16.mxu0 0
    %1428 = vmatpush2.bf16.msra.mxu0 0
    %1429 = vmatprep.subr.bf16.mxu0 0
    %1430 = vmatpush2.bf16.msra.mxu0 0
    %1431 = vmatprep.subr.bf16.mxu0 0
    %1432 = vmatpush2.bf16.msra.mxu0 0
    %1433 = vmatprep.subr.bf16.mxu0 0
    %1434 = vmatpush2.bf16.msra.mxu0 0
    %1435 = vmatprep.subr.bf16.mxu0 0
    %1436 = vmatpush2.bf16.msra.mxu0 0
    %1437 = vmatprep.subr.bf16.mxu0 0
    %1438 = vmatpush2.bf16.msra.mxu0 0
    %1439 = vmatprep.subr.bf16.mxu0 0
    %1440 = vmatpush2.bf16.msra.mxu0 0
    %1441 = vmatprep.mubr.bf16.mxu0 0
    %1442 = vmatmul.mubr.bf16.gmra.mxu0 %v894
    %v1443 = vpop.f32.mrf.mxu0
    %v1444 = vadd.f32 0.0, %v1443
    %v1445 = vpop.f32.mrf.mxu0
    %v1446 = vadd.f32 0.0, %v1445
    %v1447 = vpop.f32.mrf.mxu0
    %v1448 = vadd.f32 0.0, %v1447
    %v1449 = vpop.f32.mrf.mxu0
    %v1450 = vadd.f32 0.0, %v1449
    %1451 = vmatprep.mubr.bf16.mxu0 0
    %1452 = vmatmul.mubr.bf16.gmra.mxu0 %v897
    %v1453 = vpop.f32.mrf.mxu0
    %v1454 = vadd.f32 0.0, %v1453
    %v1455 = vpop.f32.mrf.mxu0
    %v1456 = vadd.f32 0.0, %v1455
    %v1457 = vpop.f32.mrf.mxu0
    %v1458 = vadd.f32 0.0, %v1457
    %v1459 = vpop.f32.mrf.mxu0
    %v1460 = vadd.f32 0.0, %v1459
    %1461 = vdwg.mxu0
    %v1462 = vmul.f32 %v1389, %v1330
    %v1463 = vmul.f32 %v1391, %v1332
    %v1464 = vmul.f32 %v1393, %v1334
    %v1465 = vmul.f32 %v1395, %v1336
    %v1466 = vmul.f32 %v1399, %v1340
    %v1467 = vmul.f32 %v1401, %v1342
    %v1468 = vmul.f32 %v1403, %v1344
    %v1469 = vmul.f32 %v1405, %v1346
    %v1470 = vmul.f32 %v1462, %v1444
    %v1471 = vmul.f32 %v1463, %v1446
    %v1472 = vmul.f32 %v1464, %v1448
    %v1473 = vmul.f32 %v1465, %v1450
    %v1474 = vmul.f32 %v1466, %v1454
    %v1475 = vmul.f32 %v1467, %v1456
    %v1476 = vmul.f32 %v1468, %v1458
    %v1477 = vmul.f32 %v1469, %v1460
    %v1478 = vpack.c.bf16 %v1472, %v1470
    %v1479 = vpack.c.bf16 %v1473, %v1471
    %v1480 = vpack.c.bf16 %v1476, %v1474
    %v1481 = vpack.c.bf16 %v1477, %v1475
    %1482 = vmatprep.subr.bf16.mxu0 0
    %1483 = vmatpush1.bf16.msra.mxu0 0
    %1484 = vmatprep.subr.bf16.mxu0 0
    %1485 = vmatpush1.bf16.msra.mxu0 0
    %1486 = vmatprep.subr.bf16.mxu0 0
    %1487 = vmatpush1.bf16.msra.mxu0 0
    %1488 = vmatprep.subr.bf16.mxu0 0
    %1489 = vmatpush1.bf16.msra.mxu0 0
    %1490 = vmatprep.subr.bf16.mxu0 0
    %1491 = vmatpush1.bf16.msra.mxu0 0
    %1492 = vmatprep.subr.bf16.mxu0 0
    %1493 = vmatpush1.bf16.msra.mxu0 0
    %1494 = vmatprep.subr.bf16.mxu0 %v1481
    %1495 = vmatpush1.bf16.msra.mxu0 %v1480
    %1496 = vmatprep.subr.bf16.mxu0 %v1479
    %1497 = vmatpush1.bf16.msra.mxu0 %v1478
    %1498 = vmatprep.subr.bf16.mxu0 0
    %1499 = vmatpush2.bf16.msra.mxu0 0
    %1500 = vmatprep.subr.bf16.mxu0 0
    %1501 = vmatpush2.bf16.msra.mxu0 0
    %1502 = vmatprep.subr.bf16.mxu0 0
    %1503 = vmatpush2.bf16.msra.mxu0 0
    %1504 = vmatprep.subr.bf16.mxu0 0
    %1505 = vmatpush2.bf16.msra.mxu0 0
    %1506 = vmatprep.subr.bf16.mxu0 0
    %1507 = vmatpush2.bf16.msra.mxu0 0
    %1508 = vmatprep.subr.bf16.mxu0 0
    %1509 = vmatpush2.bf16.msra.mxu0 0
    %1510 = vmatprep.subr.bf16.mxu0 0
    %1511 = vmatpush2.bf16.msra.mxu0 0
    %1512 = vmatprep.subr.bf16.mxu0 0
    %1513 = vmatpush2.bf16.msra.mxu0 0
    %1514 = vmatprep.mubr.bf16.mxu0 0
    %1515 = vmatmul.mubr.bf16.gmra.mxu0 %v1186
    %v1516 = vpop.f32.mrf.mxu0
    %v1517 = vadd.f32 0.0, %v1516
    %v1518 = vpop.f32.mrf.mxu0
    %v1519 = vadd.f32 0.0, %v1518
    %v1520 = vpop.f32.mrf.mxu0
    %v1521 = vadd.f32 0.0, %v1520
    %v1522 = vpop.f32.mrf.mxu0
    %v1523 = vadd.f32 0.0, %v1522
    %1524 = vdwg.mxu0
    %v1525 = vmax.f32 %v1517, 0.0
    %v1526 = vmax.f32 %v1519, 0.0
    %v1527 = vmax.f32 %v1521, 0.0
    %v1528 = vmax.f32 %v1523, 0.0
    %v1529 = vmax.f32 %v995, 0.0
    %v1530 = vmax.f32 %v996, 0.0
    %v1531 = vmax.f32 %v997, 0.0
    %v1532 = vmax.f32 %v998, 0.0
    %v1533 = vmax.f32 %v999, 0.0
    %v1534 = vmax.f32 %v1000, 0.0
    %v1535 = vmax.f32 %v1001, 0.0
    %v1536 = vmax.f32 %v1002, 0.0
    %v1537 = vld [vmem:[#allocation2 + $0x330] sm:$0xf]
    %v1538 = vld [vmem:[#allocation2 + $0x334] sm:$0xf]
    %v1539 = vld [vmem:[#allocation2 + $0x338] sm:$0xf]
    %v1540 = vld [vmem:[#allocation2 + $0x33c] sm:$0xf]
    %v1541 = vld [vmem:[#allocation2 + $0x340] sm:$0xf]
    %v1542 = vld [vmem:[#allocation2 + $0x344] sm:$0xf]
    %v1543 = vld [vmem:[#allocation2 + $0x348] sm:$0xf]
    %v1544 = vld [vmem:[#allocation2 + $0x34c] sm:$0xf]
    %v1545 = vld [vmem:[#allocation2 + $0x350] sm:$0xf]
    %v1546 = vld [vmem:[#allocation2 + $0x354] sm:$0xf]
    %v1547 = vld [vmem:[#allocation2 + $0x358] sm:$0xf]
    %v1548 = vld [vmem:[#allocation2 + $0x35c] sm:$0xf]
    %v1549 = vld [vmem:[#allocation2 + $0x360] sm:$0xf]
    %v1550 = vld [vmem:[#allocation2 + $0x364] sm:$0xf]
    %v1551 = vld [vmem:[#allocation2 + $0x368] sm:$0xf]
    %v1552 = vld [vmem:[#allocation2 + $0x36c] sm:$0xf]
    %v1553 = vld [vmem:[#allocation2 + $0x370] sm:$0xf]
    %v1554 = vld [vmem:[#allocation2 + $0x374] sm:$0xf]
    %v1555 = vld [vmem:[#allocation2 + $0x378] sm:$0xf]
    %v1556 = vld [vmem:[#allocation2 + $0x37c] sm:$0xf]
    %v1557 = vld [vmem:[#allocation2 + $0x380] sm:$0xf]
    %v1558 = vld [vmem:[#allocation2 + $0x384] sm:$0xf]
    %v1559 = vld [vmem:[#allocation2 + $0x388] sm:$0xf]
    %v1560 = vld [vmem:[#allocation2 + $0x38c] sm:$0xf]
    %v1561 = vld [vmem:[#allocation2 + $0x390] sm:$0xf]
    %v1562 = vld [vmem:[#allocation2 + $0x394] sm:$0xf]
    %v1563 = vld [vmem:[#allocation2 + $0x398] sm:$0xf]
    %v1564 = vld [vmem:[#allocation2 + $0x39c] sm:$0xf]
    %v1565 = vld [vmem:[#allocation2 + $0x3a0] sm:$0xf]
    %v1566 = vld [vmem:[#allocation2 + $0x3a4] sm:$0xf]
    %v1567 = vld [vmem:[#allocation2 + $0x3a8] sm:$0xf]
    %v1568 = vld [vmem:[#allocation2 + $0x3ac] sm:$0xf]
    %v1569 = vpack.c.bf16 %v1527, %v1525
    %v1570 = vpack.c.bf16 %v1528, %v1526
    %v1603 = vunpack.c.l.b16 %v1537
    %v1604 = vunpack.c.l.b16 %v1538
    %v1605 = vunpack.c.l.b16 %v1539
    %v1606 = vunpack.c.l.b16 %v1540
    %v1607 = vunpack.c.l.b16 %v1541
    %v1608 = vunpack.c.l.b16 %v1542
    %v1609 = vunpack.c.l.b16 %v1543
    %v1610 = vunpack.c.l.b16 %v1544
    %v1611 = vunpack.c.l.b16 %v1545
    %v1612 = vunpack.c.l.b16 %v1546
    %v1613 = vunpack.c.l.b16 %v1547
    %v1614 = vunpack.c.l.b16 %v1548
    %v1615 = vunpack.c.l.b16 %v1549
    %v1616 = vunpack.c.l.b16 %v1550
    %v1617 = vunpack.c.l.b16 %v1551
    %v1618 = vunpack.c.l.b16 %v1552
    %v1619 = vunpack.c.l.b16 %v1553
    %v1620 = vunpack.c.l.b16 %v1554
    %v1621 = vunpack.c.l.b16 %v1555
    %v1622 = vunpack.c.l.b16 %v1556
    %v1623 = vunpack.c.l.b16 %v1557
    %v1624 = vunpack.c.l.b16 %v1558
    %v1625 = vunpack.c.l.b16 %v1559
    %v1626 = vunpack.c.l.b16 %v1560
    %v1627 = vunpack.c.l.b16 %v1561
    %v1628 = vunpack.c.l.b16 %v1562
    %v1629 = vunpack.c.l.b16 %v1563
    %v1630 = vunpack.c.l.b16 %v1564
    %v1631 = vunpack.c.l.b16 %v1565
    %v1632 = vunpack.c.l.b16 %v1566
    %v1633 = vunpack.c.l.b16 %v1567
    %v1634 = vunpack.c.l.b16 %v1568
    %v1635 = vpack.c.b16 %v1604, %v1603
    %v1636 = vpack.c.b16 %v1606, %v1605
    %v1637 = vpack.c.b16 %v1608, %v1607
    %v1638 = vpack.c.b16 %v1610, %v1609
    %v1639 = vpack.c.b16 %v1612, %v1611
    %v1640 = vpack.c.b16 %v1614, %v1613
    %v1641 = vpack.c.b16 %v1616, %v1615
    %v1642 = vpack.c.b16 %v1618, %v1617
    %v1643 = vpack.c.b16 %v1620, %v1619
    %v1644 = vpack.c.b16 %v1622, %v1621
    %v1645 = vpack.c.b16 %v1624, %v1623
    %v1646 = vpack.c.b16 %v1626, %v1625
    %v1647 = vpack.c.b16 %v1628, %v1627
    %v1648 = vpack.c.b16 %v1630, %v1629
    %v1649 = vpack.c.b16 %v1632, %v1631
    %v1650 = vpack.c.b16 %v1634, %v1633
    %1667 = vmatprep.subr.bf16.mxu0 0
    %1668 = vmatpush1.bf16.msra.mxu0 %v1642
    %1669 = vmatprep.subr.bf16.mxu0 0
    %1670 = vmatpush1.bf16.msra.mxu0 %v1641
    %1671 = vmatprep.subr.bf16.mxu0 0
    %1672 = vmatpush1.bf16.msra.mxu0 %v1640
    %1673 = vmatprep.subr.bf16.mxu0 0
    %1674 = vmatpush1.bf16.msra.mxu0 %v1639
    %1675 = vmatprep.subr.bf16.mxu0 0
    %1676 = vmatpush1.bf16.msra.mxu0 %v1638
    %1677 = vmatprep.subr.bf16.mxu0 0
    %1678 = vmatpush1.bf16.msra.mxu0 %v1637
    %1679 = vmatprep.subr.bf16.mxu0 0
    %1680 = vmatpush1.bf16.msra.mxu0 %v1636
    %1681 = vmatprep.subr.bf16.mxu0 0
    %1682 = vmatpush1.bf16.msra.mxu0 %v1635
    %1683 = vmatprep.subr.bf16.mxu0 0
    %1684 = vmatpush2.bf16.msra.mxu0 %v1650
    %1685 = vmatprep.subr.bf16.mxu0 0
    %1686 = vmatpush2.bf16.msra.mxu0 %v1649
    %1687 = vmatprep.subr.bf16.mxu0 0
    %1688 = vmatpush2.bf16.msra.mxu0 %v1648
    %1689 = vmatprep.subr.bf16.mxu0 0
    %1690 = vmatpush2.bf16.msra.mxu0 %v1647
    %1691 = vmatprep.subr.bf16.mxu0 0
    %1692 = vmatpush2.bf16.msra.mxu0 %v1646
    %1693 = vmatprep.subr.bf16.mxu0 0
    %1694 = vmatpush2.bf16.msra.mxu0 %v1645
    %1695 = vmatprep.subr.bf16.mxu0 0
    %1696 = vmatpush2.bf16.msra.mxu0 %v1644
    %1697 = vmatprep.subr.bf16.mxu0 0
    %1698 = vmatpush2.bf16.msra.mxu0 %v1643
    %1699 = vmatprep.mubr.bf16.mxu0 %v1570
    %1700 = vmatmul.mubr.bf16.gmra.mxu0 %v1569
    %v1701 = vpop.f32.mrf.mxu0
    %v1702 = vadd.f32 0.0, %v1701
    %v1703 = vpop.f32.mrf.mxu0
    %v1704 = vpop.f32.mrf.mxu0
    %v1705 = vadd.f32 0.0, %v1704
    %v1706 = vpop.f32.mrf.mxu0
    %1707 = vdwg.mxu0
    %v1708 = vld [vmem:[#allocation2 + $0x3b0] sm:$0xf]
    %v1709 = vld [vmem:[#allocation2 + $0x3b4] sm:$0xf]
    %v1710 = vld [vmem:[#allocation2 + $0x3b8] sm:$0xf]
    %v1711 = vld [vmem:[#allocation2 + $0x3bc] sm:$0xf]
    %v1712 = vld [vmem:[#allocation2 + $0x3c0] sm:$0xf]
    %v1713 = vld [vmem:[#allocation2 + $0x3c4] sm:$0xf]
    %v1714 = vld [vmem:[#allocation2 + $0x3c8] sm:$0xf]
    %v1715 = vld [vmem:[#allocation2 + $0x3cc] sm:$0xf]
    %v1716 = vld [vmem:[#allocation2 + $0x3d0] sm:$0xf]
    %v1717 = vld [vmem:[#allocation2 + $0x3d4] sm:$0xf]
    %v1718 = vld [vmem:[#allocation2 + $0x3d8] sm:$0xf]
    %v1719 = vld [vmem:[#allocation2 + $0x3dc] sm:$0xf]
    %v1720 = vld [vmem:[#allocation2 + $0x3e0] sm:$0xf]
    %v1721 = vld [vmem:[#allocation2 + $0x3e4] sm:$0xf]
    %v1722 = vld [vmem:[#allocation2 + $0x3e8] sm:$0xf]
    %v1723 = vld [vmem:[#allocation2 + $0x3ec] sm:$0xf]
    %v1724 = vld [vmem:[#allocation2 + $0x3f0] sm:$0xf]
    %v1725 = vld [vmem:[#allocation2 + $0x3f4] sm:$0xf]
    %v1726 = vld [vmem:[#allocation2 + $0x3f8] sm:$0xf]
    %v1727 = vld [vmem:[#allocation2 + $0x3fc] sm:$0xf]
    %v1728 = vld [vmem:[#allocation2 + $0x400] sm:$0xf]
    %v1729 = vld [vmem:[#allocation2 + $0x404] sm:$0xf]
    %v1730 = vld [vmem:[#allocation2 + $0x408] sm:$0xf]
    %v1731 = vld [vmem:[#allocation2 + $0x40c] sm:$0xf]
    %v1732 = vld [vmem:[#allocation2 + $0x410] sm:$0xf]
    %v1733 = vld [vmem:[#allocation2 + $0x414] sm:$0xf]
    %v1734 = vld [vmem:[#allocation2 + $0x418] sm:$0xf]
    %v1735 = vld [vmem:[#allocation2 + $0x41c] sm:$0xf]
    %v1736 = vld [vmem:[#allocation2 + $0x420] sm:$0xf]
    %v1737 = vld [vmem:[#allocation2 + $0x424] sm:$0xf]
    %v1738 = vld [vmem:[#allocation2 + $0x428] sm:$0xf]
    %v1739 = vld [vmem:[#allocation2 + $0x42c] sm:$0xf]
    %v1772 = vunpack.c.l.b16 %v1708
    %v1773 = vunpack.c.l.b16 %v1709
    %v1774 = vunpack.c.l.b16 %v1710
    %v1775 = vunpack.c.l.b16 %v1711
    %v1776 = vunpack.c.l.b16 %v1712
    %v1777 = vunpack.c.l.b16 %v1713
    %v1778 = vunpack.c.l.b16 %v1714
    %v1779 = vunpack.c.l.b16 %v1715
    %v1780 = vunpack.c.l.b16 %v1716
    %v1781 = vunpack.c.l.b16 %v1717
    %v1782 = vunpack.c.l.b16 %v1718
    %v1783 = vunpack.c.l.b16 %v1719
    %v1784 = vunpack.c.l.b16 %v1720
    %v1785 = vunpack.c.l.b16 %v1721
    %v1786 = vunpack.c.l.b16 %v1722
    %v1787 = vunpack.c.l.b16 %v1723
    %v1788 = vunpack.c.l.b16 %v1724
    %v1789 = vunpack.c.l.b16 %v1725
    %v1790 = vunpack.c.l.b16 %v1726
    %v1791 = vunpack.c.l.b16 %v1727
    %v1792 = vunpack.c.l.b16 %v1728
    %v1793 = vunpack.c.l.b16 %v1729
    %v1794 = vunpack.c.l.b16 %v1730
    %v1795 = vunpack.c.l.b16 %v1731
    %v1796 = vunpack.c.l.b16 %v1732
    %v1797 = vunpack.c.l.b16 %v1733
    %v1798 = vunpack.c.l.b16 %v1734
    %v1799 = vunpack.c.l.b16 %v1735
    %v1800 = vunpack.c.l.b16 %v1736
    %v1801 = vunpack.c.l.b16 %v1737
    %v1802 = vunpack.c.l.b16 %v1738
    %v1803 = vunpack.c.l.b16 %v1739
    %v1804 = vpack.c.b16 %v1773, %v1772
    %v1805 = vpack.c.b16 %v1775, %v1774
    %v1806 = vpack.c.b16 %v1777, %v1776
    %v1807 = vpack.c.b16 %v1779, %v1778
    %v1808 = vpack.c.b16 %v1781, %v1780
    %v1809 = vpack.c.b16 %v1783, %v1782
    %v1810 = vpack.c.b16 %v1785, %v1784
    %v1811 = vpack.c.b16 %v1787, %v1786
    %v1812 = vpack.c.b16 %v1789, %v1788
    %v1813 = vpack.c.b16 %v1791, %v1790
    %v1814 = vpack.c.b16 %v1793, %v1792
    %v1815 = vpack.c.b16 %v1795, %v1794
    %v1816 = vpack.c.b16 %v1797, %v1796
    %v1817 = vpack.c.b16 %v1799, %v1798
    %v1818 = vpack.c.b16 %v1801, %v1800
    %v1819 = vpack.c.b16 %v1803, %v1802
    %1836 = vmatprep.subr.bf16.mxu0 0
    %1837 = vmatpush1.bf16.msra.mxu0 %v1811
    %1838 = vmatprep.subr.bf16.mxu0 0
    %1839 = vmatpush1.bf16.msra.mxu0 %v1810
    %1840 = vmatprep.subr.bf16.mxu0 0
    %1841 = vmatpush1.bf16.msra.mxu0 %v1809
    %1842 = vmatprep.subr.bf16.mxu0 0
    %1843 = vmatpush1.bf16.msra.mxu0 %v1808
    %1844 = vmatprep.subr.bf16.mxu0 0
    %1845 = vmatpush1.bf16.msra.mxu0 %v1807
    %1846 = vmatprep.subr.bf16.mxu0 0
    %1847 = vmatpush1.bf16.msra.mxu0 %v1806
    %1848 = vmatprep.subr.bf16.mxu0 0
    %1849 = vmatpush1.bf16.msra.mxu0 %v1805
    %1850 = vmatprep.subr.bf16.mxu0 0
    %1851 = vmatpush1.bf16.msra.mxu0 %v1804
    %1852 = vmatprep.subr.bf16.mxu0 0
    %1853 = vmatpush2.bf16.msra.mxu0 %v1819
    %1854 = vmatprep.subr.bf16.mxu0 0
    %1855 = vmatpush2.bf16.msra.mxu0 %v1818
    %1856 = vmatprep.subr.bf16.mxu0 0
    %1857 = vmatpush2.bf16.msra.mxu0 %v1817
    %1858 = vmatprep.subr.bf16.mxu0 0
    %1859 = vmatpush2.bf16.msra.mxu0 %v1816
    %1860 = vmatprep.subr.bf16.mxu0 0
    %1861 = vmatpush2.bf16.msra.mxu0 %v1815
    %1862 = vmatprep.subr.bf16.mxu0 0
    %1863 = vmatpush2.bf16.msra.mxu0 %v1814
    %1864 = vmatprep.subr.bf16.mxu0 0
    %1865 = vmatpush2.bf16.msra.mxu0 %v1813
    %1866 = vmatprep.subr.bf16.mxu0 0
    %1867 = vmatpush2.bf16.msra.mxu0 %v1812
    %1868 = vmatprep.mubr.bf16.mxu0 %v1570
    %1869 = vmatmul.mubr.bf16.gmra.mxu0 %v1569
    %v1870 = vpop.f32.mrf.mxu0
    %v1871 = vadd.f32 0.0, %v1870
    %v1872 = vpop.f32.mrf.mxu0
    %v1873 = vpop.f32.mrf.mxu0
    %v1874 = vadd.f32 0.0, %v1873
    %v1875 = vpop.f32.mrf.mxu0
    %1876 = vdwg.mxu0
    %v1877 = vld [vmem:[#allocation2 + $0x430] sm:$0xf]
    %v1878 = vld [vmem:[#allocation2 + $0x434] sm:$0xf]
    %v1879 = vld [vmem:[#allocation2 + $0x438] sm:$0xf]
    %v1880 = vld [vmem:[#allocation2 + $0x43c] sm:$0xf]
    %v1881 = vld [vmem:[#allocation2 + $0x440] sm:$0xf]
    %v1882 = vld [vmem:[#allocation2 + $0x444] sm:$0xf]
    %v1883 = vld [vmem:[#allocation2 + $0x448] sm:$0xf]
    %v1884 = vld [vmem:[#allocation2 + $0x44c] sm:$0xf]
    %v1885 = vld [vmem:[#allocation2 + $0x450] sm:$0xf]
    %v1886 = vld [vmem:[#allocation2 + $0x454] sm:$0xf]
    %v1887 = vld [vmem:[#allocation2 + $0x458] sm:$0xf]
    %v1888 = vld [vmem:[#allocation2 + $0x45c] sm:$0xf]
    %v1889 = vld [vmem:[#allocation2 + $0x460] sm:$0xf]
    %v1890 = vld [vmem:[#allocation2 + $0x464] sm:$0xf]
    %v1891 = vld [vmem:[#allocation2 + $0x468] sm:$0xf]
    %v1892 = vld [vmem:[#allocation2 + $0x46c] sm:$0xf]
    %v1893 = vld [vmem:[#allocation2 + $0x470] sm:$0xf]
    %v1894 = vld [vmem:[#allocation2 + $0x474] sm:$0xf]
    %v1895 = vld [vmem:[#allocation2 + $0x478] sm:$0xf]
    %v1896 = vld [vmem:[#allocation2 + $0x47c] sm:$0xf]
    %v1897 = vld [vmem:[#allocation2 + $0x480] sm:$0xf]
    %v1898 = vld [vmem:[#allocation2 + $0x484] sm:$0xf]
    %v1899 = vld [vmem:[#allocation2 + $0x488] sm:$0xf]
    %v1900 = vld [vmem:[#allocation2 + $0x48c] sm:$0xf]
    %v1901 = vld [vmem:[#allocation2 + $0x490] sm:$0xf]
    %v1902 = vld [vmem:[#allocation2 + $0x494] sm:$0xf]
    %v1903 = vld [vmem:[#allocation2 + $0x498] sm:$0xf]
    %v1904 = vld [vmem:[#allocation2 + $0x49c] sm:$0xf]
    %v1905 = vld [vmem:[#allocation2 + $0x4a0] sm:$0xf]
    %v1906 = vld [vmem:[#allocation2 + $0x4a4] sm:$0xf]
    %v1907 = vld [vmem:[#allocation2 + $0x4a8] sm:$0xf]
    %v1908 = vld [vmem:[#allocation2 + $0x4ac] sm:$0xf]
    %v1909 = vpack.c.bf16 %v1531, %v1529
    %v1910 = vpack.c.bf16 %v1532, %v1530
    %v1911 = vpack.c.bf16 %v1535, %v1533
    %v1912 = vpack.c.bf16 %v1536, %v1534
    %v1945 = vunpack.c.l.b16 %v1877
    %v1946 = vunpack.c.l.b16 %v1878
    %v1947 = vunpack.c.l.b16 %v1879
    %v1948 = vunpack.c.l.b16 %v1880
    %v1949 = vunpack.c.l.b16 %v1881
    %v1950 = vunpack.c.l.b16 %v1882
    %v1951 = vunpack.c.l.b16 %v1883
    %v1952 = vunpack.c.l.b16 %v1884
    %v1953 = vunpack.c.l.b16 %v1885
    %v1954 = vunpack.c.l.b16 %v1886
    %v1955 = vunpack.c.l.b16 %v1887
    %v1956 = vunpack.c.l.b16 %v1888
    %v1957 = vunpack.c.l.b16 %v1889
    %v1958 = vunpack.c.l.b16 %v1890
    %v1959 = vunpack.c.l.b16 %v1891
    %v1960 = vunpack.c.l.b16 %v1892
    %v1961 = vunpack.c.l.b16 %v1893
    %v1962 = vunpack.c.l.b16 %v1894
    %v1963 = vunpack.c.l.b16 %v1895
    %v1964 = vunpack.c.l.b16 %v1896
    %v1965 = vunpack.c.l.b16 %v1897
    %v1966 = vunpack.c.l.b16 %v1898
    %v1967 = vunpack.c.l.b16 %v1899
    %v1968 = vunpack.c.l.b16 %v1900
    %v1969 = vunpack.c.l.b16 %v1901
    %v1970 = vunpack.c.l.b16 %v1902
    %v1971 = vunpack.c.l.b16 %v1903
    %v1972 = vunpack.c.l.b16 %v1904
    %v1973 = vunpack.c.l.b16 %v1905
    %v1974 = vunpack.c.l.b16 %v1906
    %v1975 = vunpack.c.l.b16 %v1907
    %v1976 = vunpack.c.l.b16 %v1908
    %v1977 = vpack.c.b16 %v1946, %v1945
    %v1978 = vpack.c.b16 %v1948, %v1947
    %v1979 = vpack.c.b16 %v1950, %v1949
    %v1980 = vpack.c.b16 %v1952, %v1951
    %v1981 = vpack.c.b16 %v1954, %v1953
    %v1982 = vpack.c.b16 %v1956, %v1955
    %v1983 = vpack.c.b16 %v1958, %v1957
    %v1984 = vpack.c.b16 %v1960, %v1959
    %v1985 = vpack.c.b16 %v1962, %v1961
    %v1986 = vpack.c.b16 %v1964, %v1963
    %v1987 = vpack.c.b16 %v1966, %v1965
    %v1988 = vpack.c.b16 %v1968, %v1967
    %v1989 = vpack.c.b16 %v1970, %v1969
    %v1990 = vpack.c.b16 %v1972, %v1971
    %v1991 = vpack.c.b16 %v1974, %v1973
    %v1992 = vpack.c.b16 %v1976, %v1975
    %2009 = vmatprep.subr.bf16.mxu0 0
    %2010 = vmatpush1.bf16.msra.mxu0 %v1984
    %2011 = vmatprep.subr.bf16.mxu0 0
    %2012 = vmatpush1.bf16.msra.mxu0 %v1983
    %2013 = vmatprep.subr.bf16.mxu0 0
    %2014 = vmatpush1.bf16.msra.mxu0 %v1982
    %2015 = vmatprep.subr.bf16.mxu0 0
    %2016 = vmatpush1.bf16.msra.mxu0 %v1981
    %2017 = vmatprep.subr.bf16.mxu0 0
    %2018 = vmatpush1.bf16.msra.mxu0 %v1980
    %2019 = vmatprep.subr.bf16.mxu0 0
    %2020 = vmatpush1.bf16.msra.mxu0 %v1979
    %2021 = vmatprep.subr.bf16.mxu0 0
    %2022 = vmatpush1.bf16.msra.mxu0 %v1978
    %2023 = vmatprep.subr.bf16.mxu0 0
    %2024 = vmatpush1.bf16.msra.mxu0 %v1977
    %2025 = vmatprep.subr.bf16.mxu0 0
    %2026 = vmatpush2.bf16.msra.mxu0 %v1992
    %2027 = vmatprep.subr.bf16.mxu0 0
    %2028 = vmatpush2.bf16.msra.mxu0 %v1991
    %2029 = vmatprep.subr.bf16.mxu0 0
    %2030 = vmatpush2.bf16.msra.mxu0 %v1990
    %2031 = vmatprep.subr.bf16.mxu0 0
    %2032 = vmatpush2.bf16.msra.mxu0 %v1989
    %2033 = vmatprep.subr.bf16.mxu0 0
    %2034 = vmatpush2.bf16.msra.mxu0 %v1988
    %2035 = vmatprep.subr.bf16.mxu0 0
    %2036 = vmatpush2.bf16.msra.mxu0 %v1987
    %2037 = vmatprep.subr.bf16.mxu0 0
    %2038 = vmatpush2.bf16.msra.mxu0 %v1986
    %2039 = vmatprep.subr.bf16.mxu0 0
    %2040 = vmatpush2.bf16.msra.mxu0 %v1985
    %2041 = vmatprep.mubr.bf16.mxu0 %v1910
    %2042 = vmatmul.mubr.bf16.gmra.mxu0 %v1909
    %v2043 = vpop.f32.mrf.mxu0
    %v2044 = vadd.f32 0.0, %v2043
    %v2045 = vpop.f32.mrf.mxu0
    %v2046 = vpop.f32.mrf.mxu0
    %v2047 = vadd.f32 0.0, %v2046
    %v2048 = vpop.f32.mrf.mxu0
    %2049 = vmatprep.mubr.bf16.mxu0 %v1912
    %2050 = vmatmul.mubr.bf16.gmra.mxu0 %v1911
    %v2051 = vpop.f32.mrf.mxu0
    %v2052 = vadd.f32 0.0, %v2051
    %v2053 = vpop.f32.mrf.mxu0
    %v2054 = vpop.f32.mrf.mxu0
    %v2055 = vadd.f32 0.0, %v2054
    %v2056 = vpop.f32.mrf.mxu0
    %2057 = vdwg.mxu0
    %v2058 = vld [vmem:[#allocation7] sm:$0xff]
    %v2059 = vld [vmem:[#allocation7 + $0x8] sm:$0xff]
    %v2060 = vld [vmem:[#allocation7 + $0x10] sm:$0xff]
    %v2061 = vld [vmem:[#allocation7 + $0x18] sm:$0xff]
    %v2062 = vld [vmem:[#allocation7 + $0x20] sm:$0xff]
    %v2063 = vld [vmem:[#allocation7 + $0x28] sm:$0xff]
    %v2064 = vld [vmem:[#allocation7 + $0x30] sm:$0xff]
    %v2065 = vld [vmem:[#allocation7 + $0x38] sm:$0xff]
    %v2066 = vld [vmem:[#allocation7 + $0x40] sm:$0xff]
    %v2067 = vld [vmem:[#allocation7 + $0x48] sm:$0xff]
    %v2068 = vld [vmem:[#allocation7 + $0x50] sm:$0xff]
    %v2069 = vld [vmem:[#allocation7 + $0x58] sm:$0xff]
    %v2070 = vld [vmem:[#allocation7 + $0x60] sm:$0xff]
    %v2071 = vld [vmem:[#allocation7 + $0x68] sm:$0xff]
    %v2072 = vld [vmem:[#allocation7 + $0x70] sm:$0xff]
    %v2073 = vld [vmem:[#allocation7 + $0x78] sm:$0xff]
    %v2074 = vld [vmem:[#allocation7 + $0x80] sm:$0xff]
    %v2075 = vld [vmem:[#allocation7 + $0x88] sm:$0xff]
    %v2076 = vld [vmem:[#allocation7 + $0x90] sm:$0xff]
    %v2077 = vld [vmem:[#allocation7 + $0x98] sm:$0xff]
    %v2078 = vld [vmem:[#allocation7 + $0xa0] sm:$0xff]
    %v2079 = vld [vmem:[#allocation7 + $0xa8] sm:$0xff]
    %v2080 = vld [vmem:[#allocation7 + $0xb0] sm:$0xff]
    %v2081 = vld [vmem:[#allocation7 + $0xb8] sm:$0xff]
    %v2082 = vld [vmem:[#allocation7 + $0xc0] sm:$0xff]
    %v2083 = vld [vmem:[#allocation7 + $0xc8] sm:$0xff]
    %v2084 = vld [vmem:[#allocation7 + $0xd0] sm:$0xff]
    %v2085 = vld [vmem:[#allocation7 + $0xd8] sm:$0xff]
    %v2086 = vld [vmem:[#allocation7 + $0xe0] sm:$0xff]
    %v2087 = vld [vmem:[#allocation7 + $0xe8] sm:$0xff]
    %v2088 = vld [vmem:[#allocation7 + $0xf0] sm:$0xff]
    %v2089 = vld [vmem:[#allocation7 + $0xf8] sm:$0xff]
    %v2090 = vld [vmem:[#allocation7 + $0x100] sm:$0xff]
    %v2091 = vld [vmem:[#allocation7 + $0x108] sm:$0xff]
    %v2092 = vld [vmem:[#allocation7 + $0x110] sm:$0xff]
    %v2093 = vld [vmem:[#allocation7 + $0x118] sm:$0xff]
    %v2094 = vld [vmem:[#allocation7 + $0x120] sm:$0xff]
    %v2095 = vld [vmem:[#allocation7 + $0x128] sm:$0xff]
    %v2096 = vld [vmem:[#allocation7 + $0x130] sm:$0xff]
    %v2097 = vld [vmem:[#allocation7 + $0x138] sm:$0xff]
    %v2098 = vld [vmem:[#allocation7 + $0x140] sm:$0xff]
    %v2099 = vld [vmem:[#allocation7 + $0x148] sm:$0xff]
    %v2100 = vld [vmem:[#allocation7 + $0x150] sm:$0xff]
    %v2101 = vld [vmem:[#allocation7 + $0x158] sm:$0xff]
    %v2102 = vld [vmem:[#allocation7 + $0x160] sm:$0xff]
    %v2103 = vld [vmem:[#allocation7 + $0x168] sm:$0xff]
    %v2104 = vld [vmem:[#allocation7 + $0x170] sm:$0xff]
    %v2105 = vld [vmem:[#allocation7 + $0x178] sm:$0xff]
    %v2106 = vld [vmem:[#allocation7 + $0x180] sm:$0xff]
    %v2107 = vld [vmem:[#allocation7 + $0x188] sm:$0xff]
    %v2108 = vld [vmem:[#allocation7 + $0x190] sm:$0xff]
    %v2109 = vld [vmem:[#allocation7 + $0x198] sm:$0xff]
    %v2110 = vld [vmem:[#allocation7 + $0x1a0] sm:$0xff]
    %v2111 = vld [vmem:[#allocation7 + $0x1a8] sm:$0xff]
    %v2112 = vld [vmem:[#allocation7 + $0x1b0] sm:$0xff]
    %v2113 = vld [vmem:[#allocation7 + $0x1b8] sm:$0xff]
    %v2114 = vld [vmem:[#allocation7 + $0x1c0] sm:$0xff]
    %v2115 = vld [vmem:[#allocation7 + $0x1c8] sm:$0xff]
    %v2116 = vld [vmem:[#allocation7 + $0x1d0] sm:$0xff]
    %v2117 = vld [vmem:[#allocation7 + $0x1d8] sm:$0xff]
    %v2118 = vld [vmem:[#allocation7 + $0x1e0] sm:$0xff]
    %v2119 = vld [vmem:[#allocation7 + $0x1e8] sm:$0xff]
    %v2120 = vld [vmem:[#allocation7 + $0x1f0] sm:$0xff]
    %v2121 = vld [vmem:[#allocation7 + $0x1f8] sm:$0xff]
    %v2186 = vunpack.c.l.b16 %v2058
    %v2187 = vunpack.c.h.b16 %v2058
    %v2188 = vunpack.c.l.b16 %v2059
    %v2189 = vunpack.c.h.b16 %v2059
    %v2190 = vunpack.c.l.b16 %v2060
    %v2191 = vunpack.c.h.b16 %v2060
    %v2192 = vunpack.c.l.b16 %v2061
    %v2193 = vunpack.c.h.b16 %v2061
    %v2194 = vunpack.c.l.b16 %v2062
    %v2195 = vunpack.c.h.b16 %v2062
    %v2196 = vunpack.c.l.b16 %v2063
    %v2197 = vunpack.c.h.b16 %v2063
    %v2198 = vunpack.c.l.b16 %v2064
    %v2199 = vunpack.c.h.b16 %v2064
    %v2200 = vunpack.c.l.b16 %v2065
    %v2201 = vunpack.c.h.b16 %v2065
    %v2202 = vunpack.c.l.b16 %v2066
    %v2203 = vunpack.c.h.b16 %v2066
    %v2204 = vunpack.c.l.b16 %v2067
    %v2205 = vunpack.c.h.b16 %v2067
    %v2206 = vunpack.c.l.b16 %v2068
    %v2207 = vunpack.c.h.b16 %v2068
    %v2208 = vunpack.c.l.b16 %v2069
    %v2209 = vunpack.c.h.b16 %v2069
    %v2210 = vunpack.c.l.b16 %v2070
    %v2211 = vunpack.c.h.b16 %v2070
    %v2212 = vunpack.c.l.b16 %v2071
    %v2213 = vunpack.c.h.b16 %v2071
    %v2214 = vunpack.c.l.b16 %v2072
    %v2215 = vunpack.c.h.b16 %v2072
    %v2216 = vunpack.c.l.b16 %v2073
    %v2217 = vunpack.c.h.b16 %v2073
    %v2218 = vunpack.c.l.b16 %v2074
    %v2219 = vunpack.c.h.b16 %v2074
    %v2220 = vunpack.c.l.b16 %v2075
    %v2221 = vunpack.c.h.b16 %v2075
    %v2222 = vunpack.c.l.b16 %v2076
    %v2223 = vunpack.c.h.b16 %v2076
    %v2224 = vunpack.c.l.b16 %v2077
    %v2225 = vunpack.c.h.b16 %v2077
    %v2226 = vunpack.c.l.b16 %v2078
    %v2227 = vunpack.c.h.b16 %v2078
    %v2228 = vunpack.c.l.b16 %v2079
    %v2229 = vunpack.c.h.b16 %v2079
    %v2230 = vunpack.c.l.b16 %v2080
    %v2231 = vunpack.c.h.b16 %v2080
    %v2232 = vunpack.c.l.b16 %v2081
    %v2233 = vunpack.c.h.b16 %v2081
    %v2234 = vunpack.c.l.b16 %v2082
    %v2235 = vunpack.c.h.b16 %v2082
    %v2236 = vunpack.c.l.b16 %v2083
    %v2237 = vunpack.c.h.b16 %v2083
    %v2238 = vunpack.c.l.b16 %v2084
    %v2239 = vunpack.c.h.b16 %v2084
    %v2240 = vunpack.c.l.b16 %v2085
    %v2241 = vunpack.c.h.b16 %v2085
    %v2242 = vunpack.c.l.b16 %v2086
    %v2243 = vunpack.c.h.b16 %v2086
    %v2244 = vunpack.c.l.b16 %v2087
    %v2245 = vunpack.c.h.b16 %v2087
    %v2246 = vunpack.c.l.b16 %v2088
    %v2247 = vunpack.c.h.b16 %v2088
    %v2248 = vunpack.c.l.b16 %v2089
    %v2249 = vunpack.c.h.b16 %v2089
    %v2250 = vunpack.c.l.b16 %v2090
    %v2251 = vunpack.c.h.b16 %v2090
    %v2252 = vunpack.c.l.b16 %v2091
    %v2253 = vunpack.c.h.b16 %v2091
    %v2254 = vunpack.c.l.b16 %v2092
    %v2255 = vunpack.c.h.b16 %v2092
    %v2256 = vunpack.c.l.b16 %v2093
    %v2257 = vunpack.c.h.b16 %v2093
    %v2258 = vunpack.c.l.b16 %v2094
    %v2259 = vunpack.c.h.b16 %v2094
    %v2260 = vunpack.c.l.b16 %v2095
    %v2261 = vunpack.c.h.b16 %v2095
    %v2262 = vunpack.c.l.b16 %v2096
    %v2263 = vunpack.c.h.b16 %v2096
    %v2264 = vunpack.c.l.b16 %v2097
    %v2265 = vunpack.c.h.b16 %v2097
    %v2266 = vunpack.c.l.b16 %v2098
    %v2267 = vunpack.c.h.b16 %v2098
    %v2268 = vunpack.c.l.b16 %v2099
    %v2269 = vunpack.c.h.b16 %v2099
    %v2270 = vunpack.c.l.b16 %v2100
    %v2271 = vunpack.c.h.b16 %v2100
    %v2272 = vunpack.c.l.b16 %v2101
    %v2273 = vunpack.c.h.b16 %v2101
    %v2274 = vunpack.c.l.b16 %v2102
    %v2275 = vunpack.c.h.b16 %v2102
    %v2276 = vunpack.c.l.b16 %v2103
    %v2277 = vunpack.c.h.b16 %v2103
    %v2278 = vunpack.c.l.b16 %v2104
    %v2279 = vunpack.c.h.b16 %v2104
    %v2280 = vunpack.c.l.b16 %v2105
    %v2281 = vunpack.c.h.b16 %v2105
    %v2282 = vunpack.c.l.b16 %v2106
    %v2283 = vunpack.c.h.b16 %v2106
    %v2284 = vunpack.c.l.b16 %v2107
    %v2285 = vunpack.c.h.b16 %v2107
    %v2286 = vunpack.c.l.b16 %v2108
    %v2287 = vunpack.c.h.b16 %v2108
    %v2288 = vunpack.c.l.b16 %v2109
    %v2289 = vunpack.c.h.b16 %v2109
    %v2290 = vunpack.c.l.b16 %v2110
    %v2291 = vunpack.c.h.b16 %v2110
    %v2292 = vunpack.c.l.b16 %v2111
    %v2293 = vunpack.c.h.b16 %v2111
    %v2294 = vunpack.c.l.b16 %v2112
    %v2295 = vunpack.c.h.b16 %v2112
    %v2296 = vunpack.c.l.b16 %v2113
    %v2297 = vunpack.c.h.b16 %v2113
    %v2298 = vunpack.c.l.b16 %v2114
    %v2299 = vunpack.c.h.b16 %v2114
    %v2300 = vunpack.c.l.b16 %v2115
    %v2301 = vunpack.c.h.b16 %v2115
    %v2302 = vunpack.c.l.b16 %v2116
    %v2303 = vunpack.c.h.b16 %v2116
    %v2304 = vunpack.c.l.b16 %v2117
    %v2305 = vunpack.c.h.b16 %v2117
    %v2306 = vunpack.c.l.b16 %v2118
    %v2307 = vunpack.c.h.b16 %v2118
    %v2308 = vunpack.c.l.b16 %v2119
    %v2309 = vunpack.c.h.b16 %v2119
    %v2310 = vunpack.c.l.b16 %v2120
    %v2311 = vunpack.c.h.b16 %v2120
    %v2312 = vunpack.c.l.b16 %v2121
    %v2313 = vunpack.c.h.b16 %v2121
    %v2314 = vpack.c.b16 %v2190, %v2186
    %v2315 = vpack.c.b16 %v2191, %v2187
    %v2316 = vpack.c.b16 %v2192, %v2188
    %v2317 = vpack.c.b16 %v2193, %v2189
    %v2318 = vpack.c.b16 %v2198, %v2194
    %v2319 = vpack.c.b16 %v2199, %v2195
    %v2320 = vpack.c.b16 %v2200, %v2196
    %v2321 = vpack.c.b16 %v2201, %v2197
    %v2322 = vpack.c.b16 %v2206, %v2202
    %v2323 = vpack.c.b16 %v2207, %v2203
    %v2324 = vpack.c.b16 %v2208, %v2204
    %v2325 = vpack.c.b16 %v2209, %v2205
    %v2326 = vpack.c.b16 %v2214, %v2210
    %v2327 = vpack.c.b16 %v2215, %v2211
    %v2328 = vpack.c.b16 %v2216, %v2212
    %v2329 = vpack.c.b16 %v2217, %v2213
    %v2330 = vpack.c.b16 %v2222, %v2218
    %v2331 = vpack.c.b16 %v2223, %v2219
    %v2332 = vpack.c.b16 %v2224, %v2220
    %v2333 = vpack.c.b16 %v2225, %v2221
    %v2334 = vpack.c.b16 %v2230, %v2226
    %v2335 = vpack.c.b16 %v2231, %v2227
    %v2336 = vpack.c.b16 %v2232, %v2228
    %v2337 = vpack.c.b16 %v2233, %v2229
    %v2338 = vpack.c.b16 %v2238, %v2234
    %v2339 = vpack.c.b16 %v2239, %v2235
    %v2340 = vpack.c.b16 %v2240, %v2236
    %v2341 = vpack.c.b16 %v2241, %v2237
    %v2342 = vpack.c.b16 %v2246, %v2242
    %v2343 = vpack.c.b16 %v2247, %v2243
    %v2344 = vpack.c.b16 %v2248, %v2244
    %v2345 = vpack.c.b16 %v2249, %v2245
    %v2346 = vpack.c.b16 %v2254, %v2250
    %v2347 = vpack.c.b16 %v2255, %v2251
    %v2348 = vpack.c.b16 %v2256, %v2252
    %v2349 = vpack.c.b16 %v2257, %v2253
    %v2350 = vpack.c.b16 %v2262, %v2258
    %v2351 = vpack.c.b16 %v2263, %v2259
    %v2352 = vpack.c.b16 %v2264, %v2260
    %v2353 = vpack.c.b16 %v2265, %v2261
    %v2354 = vpack.c.b16 %v2270, %v2266
    %v2355 = vpack.c.b16 %v2271, %v2267
    %v2356 = vpack.c.b16 %v2272, %v2268
    %v2357 = vpack.c.b16 %v2273, %v2269
    %v2358 = vpack.c.b16 %v2278, %v2274
    %v2359 = vpack.c.b16 %v2279, %v2275
    %v2360 = vpack.c.b16 %v2280, %v2276
    %v2361 = vpack.c.b16 %v2281, %v2277
    %v2362 = vpack.c.b16 %v2286, %v2282
    %v2363 = vpack.c.b16 %v2287, %v2283
    %v2364 = vpack.c.b16 %v2288, %v2284
    %v2365 = vpack.c.b16 %v2289, %v2285
    %v2366 = vpack.c.b16 %v2294, %v2290
    %v2367 = vpack.c.b16 %v2295, %v2291
    %v2368 = vpack.c.b16 %v2296, %v2292
    %v2369 = vpack.c.b16 %v2297, %v2293
    %v2370 = vpack.c.b16 %v2302, %v2298
    %v2371 = vpack.c.b16 %v2303, %v2299
    %v2372 = vpack.c.b16 %v2304, %v2300
    %v2373 = vpack.c.b16 %v2305, %v2301
    %v2374 = vpack.c.b16 %v2310, %v2306
    %v2375 = vpack.c.b16 %v2311, %v2307
    %v2376 = vpack.c.b16 %v2312, %v2308
    %v2377 = vpack.c.b16 %v2313, %v2309
    %2442 = vmatprep.subr.bf16.mxu0 %v2343
    %2443 = vmatpush1.bf16.msra.mxu0 %v2342
    %2444 = vmatprep.subr.bf16.mxu0 %v2339
    %2445 = vmatpush1.bf16.msra.mxu0 %v2338
    %2446 = vmatprep.subr.bf16.mxu0 %v2335
    %2447 = vmatpush1.bf16.msra.mxu0 %v2334
    %2448 = vmatprep.subr.bf16.mxu0 %v2331
    %2449 = vmatpush1.bf16.msra.mxu0 %v2330
    %2450 = vmatprep.subr.bf16.mxu0 %v2327
    %2451 = vmatpush1.bf16.msra.mxu0 %v2326
    %2452 = vmatprep.subr.bf16.mxu0 %v2323
    %2453 = vmatpush1.bf16.msra.mxu0 %v2322
    %2454 = vmatprep.subr.bf16.mxu0 %v2319
    %2455 = vmatpush1.bf16.msra.mxu0 %v2318
    %2456 = vmatprep.subr.bf16.mxu0 %v2315
    %2457 = vmatpush1.bf16.msra.mxu0 %v2314
    %2458 = vmatprep.subr.bf16.mxu0 %v2375
    %2459 = vmatpush2.bf16.msra.mxu0 %v2374
    %2460 = vmatprep.subr.bf16.mxu0 %v2371
    %2461 = vmatpush2.bf16.msra.mxu0 %v2370
    %2462 = vmatprep.subr.bf16.mxu0 %v2367
    %2463 = vmatpush2.bf16.msra.mxu0 %v2366
    %2464 = vmatprep.subr.bf16.mxu0 %v2363
    %2465 = vmatpush2.bf16.msra.mxu0 %v2362
    %2466 = vmatprep.subr.bf16.mxu0 %v2359
    %2467 = vmatpush2.bf16.msra.mxu0 %v2358
    %2468 = vmatprep.subr.bf16.mxu0 %v2355
    %2469 = vmatpush2.bf16.msra.mxu0 %v2354
    %2470 = vmatprep.subr.bf16.mxu0 %v2351
    %2471 = vmatpush2.bf16.msra.mxu0 %v2350
    %2472 = vmatprep.subr.bf16.mxu0 %v2347
    %2473 = vmatpush2.bf16.msra.mxu0 %v2346
    %2474 = vmatprep.mubr.bf16.mxu0 %v1570
    %2475 = vmatmul.mubr.bf16.gmra.mxu0 %v1569
    %v2476 = vpop.f32.mrf.mxu0
    %v2477 = vadd.f32 0.0, %v2476
    %v2478 = vpop.f32.mrf.mxu0
    %v2479 = vadd.f32 0.0, %v2478
    %v2480 = vpop.f32.mrf.mxu0
    %v2481 = vadd.f32 0.0, %v2480
    %v2482 = vpop.f32.mrf.mxu0
    %v2483 = vadd.f32 0.0, %v2482
    %2484 = vdwg.mxu0
    %2485 = vmatprep.subr.bf16.mxu0 %v2345
    %2486 = vmatpush1.bf16.msra.mxu0 %v2344
    %2487 = vmatprep.subr.bf16.mxu0 %v2341
    %2488 = vmatpush1.bf16.msra.mxu0 %v2340
    %2489 = vmatprep.subr.bf16.mxu0 %v2337
    %2490 = vmatpush1.bf16.msra.mxu0 %v2336
    %2491 = vmatprep.subr.bf16.mxu0 %v2333
    %2492 = vmatpush1.bf16.msra.mxu0 %v2332
    %2493 = vmatprep.subr.bf16.mxu0 %v2329
    %2494 = vmatpush1.bf16.msra.mxu0 %v2328
    %2495 = vmatprep.subr.bf16.mxu0 %v2325
    %2496 = vmatpush1.bf16.msra.mxu0 %v2324
    %2497 = vmatprep.subr.bf16.mxu0 %v2321
    %2498 = vmatpush1.bf16.msra.mxu0 %v2320
    %2499 = vmatprep.subr.bf16.mxu0 %v2317
    %2500 = vmatpush1.bf16.msra.mxu0 %v2316
    %2501 = vmatprep.subr.bf16.mxu0 %v2377
    %2502 = vmatpush2.bf16.msra.mxu0 %v2376
    %2503 = vmatprep.subr.bf16.mxu0 %v2373
    %2504 = vmatpush2.bf16.msra.mxu0 %v2372
    %2505 = vmatprep.subr.bf16.mxu0 %v2369
    %2506 = vmatpush2.bf16.msra.mxu0 %v2368
    %2507 = vmatprep.subr.bf16.mxu0 %v2365
    %2508 = vmatpush2.bf16.msra.mxu0 %v2364
    %2509 = vmatprep.subr.bf16.mxu0 %v2361
    %2510 = vmatpush2.bf16.msra.mxu0 %v2360
    %2511 = vmatprep.subr.bf16.mxu0 %v2357
    %2512 = vmatpush2.bf16.msra.mxu0 %v2356
    %2513 = vmatprep.subr.bf16.mxu0 %v2353
    %2514 = vmatpush2.bf16.msra.mxu0 %v2352
    %2515 = vmatprep.subr.bf16.mxu0 %v2349
    %2516 = vmatpush2.bf16.msra.mxu0 %v2348
    %2517 = vmatprep.mubr.bf16.mxu0 %v1570
    %2518 = vmatmul.mubr.bf16.gmra.mxu0 %v1569
    %v2519 = vpop.f32.mrf.mxu0
    %v2520 = vadd.f32 0.0, %v2519
    %v2521 = vpop.f32.mrf.mxu0
    %v2522 = vadd.f32 0.0, %v2521
    %v2523 = vpop.f32.mrf.mxu0
    %v2524 = vadd.f32 0.0, %v2523
    %v2525 = vpop.f32.mrf.mxu0
    %v2526 = vadd.f32 0.0, %v2525
    %2527 = vdwg.mxu0
    %v2528 = vpack.c.bf16 %v1705, %v1702
    %v2529 = vpack.c.bf16 %v1874, %v1871
    %2530 = vmatprep.subr.bf16.mxu0 0
    %2531 = vmatpush1.bf16.msra.mxu0 0
    %2532 = vmatprep.subr.bf16.mxu0 0
    %2533 = vmatpush1.bf16.msra.mxu0 0
    %2534 = vmatprep.subr.bf16.mxu0 0
    %2535 = vmatpush1.bf16.msra.mxu0 0
    %2536 = vmatprep.subr.bf16.mxu0 0
    %2537 = vmatpush1.bf16.msra.mxu0 0
    %2538 = vmatprep.subr.bf16.mxu0 0
    %2539 = vmatpush1.bf16.msra.mxu0 0
    %2540 = vmatprep.subr.bf16.mxu0 0
    %2541 = vmatpush1.bf16.msra.mxu0 0
    %2542 = vmatprep.subr.bf16.mxu0 0
    %2543 = vmatpush1.bf16.msra.mxu0 0
    %2544 = vmatprep.subr.bf16.mxu0 0
    %2545 = vmatpush1.bf16.msra.mxu0 %v2529
    %2546 = vmatprep.subr.bf16.mxu0 0
    %2547 = vmatpush2.bf16.msra.mxu0 0
    %2548 = vmatprep.subr.bf16.mxu0 0
    %2549 = vmatpush2.bf16.msra.mxu0 0
    %2550 = vmatprep.subr.bf16.mxu0 0
    %2551 = vmatpush2.bf16.msra.mxu0 0
    %2552 = vmatprep.subr.bf16.mxu0 0
    %2553 = vmatpush2.bf16.msra.mxu0 0
    %2554 = vmatprep.subr.bf16.mxu0 0
    %2555 = vmatpush2.bf16.msra.mxu0 0
    %2556 = vmatprep.subr.bf16.mxu0 0
    %2557 = vmatpush2.bf16.msra.mxu0 0
    %2558 = vmatprep.subr.bf16.mxu0 0
    %2559 = vmatpush2.bf16.msra.mxu0 0
    %2560 = vmatprep.subr.bf16.mxu0 0
    %2561 = vmatpush2.bf16.msra.mxu0 0
    %2562 = vmatprep.mubr.bf16.mxu0 0
    %2563 = vmatmul.mubr.bf16.gmra.mxu0 %v825
    %v2564 = vpop.f32.mrf.mxu0
    %v2565 = vadd.f32 0.0, %v2564
    %v2566 = vpop.f32.mrf.mxu0
    %v2567 = vpop.f32.mrf.mxu0
    %v2568 = vadd.f32 0.0, %v2567
    %v2569 = vpop.f32.mrf.mxu0
    %2570 = vmatprep.mubr.bf16.mxu0 0
    %2571 = vmatmul.mubr.bf16.gmra.mxu0 %v828
    %v2572 = vpop.f32.mrf.mxu0
    %v2573 = vadd.f32 0.0, %v2572
    %v2574 = vpop.f32.mrf.mxu0
    %v2575 = vpop.f32.mrf.mxu0
    %v2576 = vadd.f32 0.0, %v2575
    %v2577 = vpop.f32.mrf.mxu0
    %2578 = vdwg.mxu0
    %2579 = vmatprep.subr.bf16.mxu0 0
    %2580 = vmatpush1.bf16.msra.mxu0 0
    %2581 = vmatprep.subr.bf16.mxu0 0
    %2582 = vmatpush1.bf16.msra.mxu0 0
    %2583 = vmatprep.subr.bf16.mxu0 0
    %2584 = vmatpush1.bf16.msra.mxu0 0
    %2585 = vmatprep.subr.bf16.mxu0 0
    %2586 = vmatpush1.bf16.msra.mxu0 0
    %2587 = vmatprep.subr.bf16.mxu0 0
    %2588 = vmatpush1.bf16.msra.mxu0 0
    %2589 = vmatprep.subr.bf16.mxu0 0
    %2590 = vmatpush1.bf16.msra.mxu0 0
    %2591 = vmatprep.subr.bf16.mxu0 0
    %2592 = vmatpush1.bf16.msra.mxu0 0
    %2593 = vmatprep.subr.bf16.mxu0 0
    %2594 = vmatpush1.bf16.msra.mxu0 %v2528
    %2595 = vmatprep.subr.bf16.mxu0 0
    %2596 = vmatpush2.bf16.msra.mxu0 0
    %2597 = vmatprep.subr.bf16.mxu0 0
    %2598 = vmatpush2.bf16.msra.mxu0 0
    %2599 = vmatprep.subr.bf16.mxu0 0
    %2600 = vmatpush2.bf16.msra.mxu0 0
    %2601 = vmatprep.subr.bf16.mxu0 0
    %2602 = vmatpush2.bf16.msra.mxu0 0
    %2603 = vmatprep.subr.bf16.mxu0 0
    %2604 = vmatpush2.bf16.msra.mxu0 0
    %2605 = vmatprep.subr.bf16.mxu0 0
    %2606 = vmatpush2.bf16.msra.mxu0 0
    %2607 = vmatprep.subr.bf16.mxu0 0
    %2608 = vmatpush2.bf16.msra.mxu0 0
    %2609 = vmatprep.subr.bf16.mxu0 0
    %2610 = vmatpush2.bf16.msra.mxu0 0
    %2611 = vmatprep.mubr.bf16.mxu0 0
    %2612 = vmatmul.mubr.bf16.gmra.mxu0 %v894
    %v2613 = vpop.f32.mrf.mxu0
    %v2614 = vadd.f32 %v2565, %v2613
    %v2615 = vpop.f32.mrf.mxu0
    %v2616 = vpop.f32.mrf.mxu0
    %v2617 = vadd.f32 %v2568, %v2616
    %v2618 = vpop.f32.mrf.mxu0
    %2619 = vmatprep.mubr.bf16.mxu0 0
    %2620 = vmatmul.mubr.bf16.gmra.mxu0 %v897
    %v2621 = vpop.f32.mrf.mxu0
    %v2622 = vadd.f32 %v2573, %v2621
    %v2623 = vpop.f32.mrf.mxu0
    %v2624 = vpop.f32.mrf.mxu0
    %v2625 = vadd.f32 %v2576, %v2624
    %v2626 = vpop.f32.mrf.mxu0
    %2627 = vdwg.mxu0
    %v2628 = vadd.f32 %v2614, %v2044
    %v2629 = vadd.f32 %v2617, %v2047
    %v2630 = vadd.f32 %v2622, %v2052
    %v2631 = vadd.f32 %v2625, %v2055
    %v2632 = vlaneseq
    %v2633 = vshrl.u32 %v2632, 7
    %v2634 = vsub.s32 0, %v2633
    %v2635 = vrot.slane %v100, %v2634
    %v2636 = vadd.f32 %v2628, %v2635
    %v2637 = vadd.f32 %v2629, %v2635
    %v2638 = vadd.f32 %v2630, %v2635
    %v2639 = vadd.f32 %v2631, %v2635
    %vm2640 = vcmp.gt.f32.partialorder %v2636, 0.0
    %vm2641 = vcmp.gt.f32.partialorder %v2637, 0.0
    %vm2642 = vcmp.gt.f32.partialorder %v2638, 0.0
    %vm2643 = vcmp.gt.f32.partialorder %v2639, 0.0
    %v2644 = vmul.f32 %v2636, 0.01
    %v2645 = vmul.f32 %v2637, 0.01
    %v2646 = vmul.f32 %v2638, 0.01
    %v2647 = vmul.f32 %v2639, 0.01
    %v2648 = vsel %vm2640, %v2636, %v2644
    %v2649 = vsel %vm2641, %v2637, %v2645
    %v2650 = vsel %vm2642, %v2638, %v2646
    %v2651 = vsel %vm2643, %v2639, %v2647
    %v2652 = vpack.c.bf16 %v2649, %v2648
    %v2653 = vpack.c.bf16 %v2651, %v2650
    %v2670 = vunpack.c.l.b16 %v143
    %v2671 = vunpack.c.l.b16 %v144
    %v2672 = vunpack.c.l.b16 %v145
    %v2673 = vunpack.c.l.b16 %v146
    %v2674 = vunpack.c.l.b16 %v147
    %v2675 = vunpack.c.l.b16 %v148
    %v2676 = vunpack.c.l.b16 %v149
    %v2677 = vunpack.c.l.b16 %v150
    %v2678 = vunpack.c.l.b16 %v151
    %v2679 = vunpack.c.l.b16 %v152
    %v2680 = vunpack.c.l.b16 %v153
    %v2681 = vunpack.c.l.b16 %v154
    %v2682 = vunpack.c.l.b16 %v155
    %v2683 = vunpack.c.l.b16 %v156
    %v2684 = vunpack.c.l.b16 %v157
    %v2685 = vunpack.c.l.b16 %v158
    %v2686 = vpack.c.b16 %v2671, %v2670
    %v2687 = vpack.c.b16 %v2673, %v2672
    %v2688 = vpack.c.b16 %v2675, %v2674
    %v2689 = vpack.c.b16 %v2677, %v2676
    %v2690 = vpack.c.b16 %v2679, %v2678
    %v2691 = vpack.c.b16 %v2681, %v2680
    %v2692 = vpack.c.b16 %v2683, %v2682
    %v2693 = vpack.c.b16 %v2685, %v2684
    %2702 = vmatprep.subr.bf16.mxu0 0
    %2703 = vmatpush1.bf16.msra.mxu0 %v2693
    %2704 = vmatprep.subr.bf16.mxu0 0
    %2705 = vmatpush1.bf16.msra.mxu0 %v2692
    %2706 = vmatprep.subr.bf16.mxu0 0
    %2707 = vmatpush1.bf16.msra.mxu0 %v2691
    %2708 = vmatprep.subr.bf16.mxu0 0
    %2709 = vmatpush1.bf16.msra.mxu0 %v2690
    %2710 = vmatprep.subr.bf16.mxu0 0
    %2711 = vmatpush1.bf16.msra.mxu0 %v2689
    %2712 = vmatprep.subr.bf16.mxu0 0
    %2713 = vmatpush1.bf16.msra.mxu0 %v2688
    %2714 = vmatprep.subr.bf16.mxu0 0
    %2715 = vmatpush1.bf16.msra.mxu0 %v2687
    %2716 = vmatprep.subr.bf16.mxu0 0
    %2717 = vmatpush1.bf16.msra.mxu0 %v2686
    %2718 = vmatprep.subr.bf16.mxu0 0
    %2719 = vmatpush2.bf16.msra.mxu0 0
    %2720 = vmatprep.subr.bf16.mxu0 0
    %2721 = vmatpush2.bf16.msra.mxu0 0
    %2722 = vmatprep.subr.bf16.mxu0 0
    %2723 = vmatpush2.bf16.msra.mxu0 0
    %2724 = vmatprep.subr.bf16.mxu0 0
    %2725 = vmatpush2.bf16.msra.mxu0 0
    %2726 = vmatprep.subr.bf16.mxu0 0
    %2727 = vmatpush2.bf16.msra.mxu0 0
    %2728 = vmatprep.subr.bf16.mxu0 0
    %2729 = vmatpush2.bf16.msra.mxu0 0
    %2730 = vmatprep.subr.bf16.mxu0 0
    %2731 = vmatpush2.bf16.msra.mxu0 0
    %2732 = vmatprep.subr.bf16.mxu0 0
    %2733 = vmatpush2.bf16.msra.mxu0 0
    %2734 = vmatprep.mubr.bf16.mxu0 0
    %2735 = vmatmul.mubr.bf16.gmra.mxu0 %v2652
    %v2736 = vpop.f32.mrf.mxu0
    %v2737 = vadd.f32 0.0, %v2736
    %v2738 = vpop.f32.mrf.mxu0
    %v2739 = vpop.f32.mrf.mxu0
    %v2740 = vadd.f32 0.0, %v2739
    %v2741 = vpop.f32.mrf.mxu0
    %2742 = vmatprep.mubr.bf16.mxu0 0
    %2743 = vmatmul.mubr.bf16.gmra.mxu0 %v2653
    %v2744 = vpop.f32.mrf.mxu0
    %v2745 = vadd.f32 0.0, %v2744
    %v2746 = vpop.f32.mrf.mxu0
    %v2747 = vpop.f32.mrf.mxu0
    %v2748 = vadd.f32 0.0, %v2747
    %v2749 = vpop.f32.mrf.mxu0
    %2750 = vdwg.mxu0
    %v2751 = vsel %vm303, %v2737, -inf
    %v2752 = vsel %vm303, %v2740, -inf
    %v2753 = vsel %vm303, %v2745, -inf
    %v2754 = vsel %vm303, %v2748, -inf
    %v2755 = vmax.f32 %v2751, %v2752
    %v2756 = vmax.f32 %v2753, %v2754
    %v2757 = vmax.f32 %v2755, %v2756
    %v2758 = vrot.slane %v2757, 4
    %v2759 = vmax.f32 %v2757, %v2758
    %v2760 = vrot.slane %v2759, 2
    %v2761 = vmax.f32 %v2759, %v2760
    %v2762 = vrot.slane %v2761, 1
    %v2763 = vmax.f32 %v2761, %v2762
    %v2764 = vsub.f32 %v2737, %v2763
    %v2765 = vsub.f32 %v2740, %v2763
    %v2766 = vsub.f32 %v2745, %v2763
    %v2767 = vsub.f32 %v2748, %v2763
    %v2768 = vmul.f32 %v2764, 1.442695
    %v2769 = vpow.pop %v2768
    %v2770 = vmul.f32 %v2765, 1.442695
    %v2771 = vpow.pop %v2770
    %v2772 = vmul.f32 %v2766, 1.442695
    %v2773 = vpow.pop %v2772
    %v2774 = vmul.f32 %v2767, 1.442695
    %v2775 = vpow.pop %v2774
    %v2776 = vpack.c.bf16 %v2771, %v2769
    %v2777 = vpack.c.bf16 %v2775, %v2773
    %2778 = vmatprep.subr.bf16.mxu0 0
    %2779 = vmatpush1.bf16.msra.mxu0 0
    %2780 = vmatprep.subr.bf16.mxu0 0
    %2781 = vmatpush1.bf16.msra.mxu0 0
    %2782 = vmatprep.subr.bf16.mxu0 0
    %2783 = vmatpush1.bf16.msra.mxu0 0
    %2784 = vmatprep.subr.bf16.mxu0 0
    %2785 = vmatpush1.bf16.msra.mxu0 0
    %2786 = vmatprep.subr.bf16.mxu0 0
    %2787 = vmatpush1.bf16.msra.mxu0 0
    %2788 = vmatprep.subr.bf16.mxu0 0
    %2789 = vmatpush1.bf16.msra.mxu0 0
    %2790 = vmatprep.subr.bf16.mxu0 0
    %2791 = vmatpush1.bf16.msra.mxu0 %v2777
    %2792 = vmatprep.subr.bf16.mxu0 0
    %2793 = vmatpush1.bf16.msra.mxu0 %v2776
    %2794 = vmatprep.subr.bf16.mxu0 0
    %2795 = vmatpush2.bf16.msra.mxu0 0
    %2796 = vmatprep.subr.bf16.mxu0 0
    %2797 = vmatpush2.bf16.msra.mxu0 0
    %2798 = vmatprep.subr.bf16.mxu0 0
    %2799 = vmatpush2.bf16.msra.mxu0 0
    %2800 = vmatprep.subr.bf16.mxu0 0
    %2801 = vmatpush2.bf16.msra.mxu0 0
    %2802 = vmatprep.subr.bf16.mxu0 0
    %2803 = vmatpush2.bf16.msra.mxu0 0
    %2804 = vmatprep.subr.bf16.mxu0 0
    %2805 = vmatpush2.bf16.msra.mxu0 0
    %2806 = vmatprep.subr.bf16.mxu0 0
    %2807 = vmatpush2.bf16.msra.mxu0 0
    %2808 = vmatprep.subr.bf16.mxu0 0
    %2809 = vmatpush2.bf16.msra.mxu0 0
    %2810 = vmatprep.mubr.bf16.mxu0 0
    %2811 = vmatmul.mubr.bf16.gmra.mxu0 %v1186
    %v2812 = vpop.f32.mrf.mxu0
    %v2813 = vadd.f32 0.0, %v2812
    %v2814 = vpop.f32.mrf.mxu0
    %v2815 = vpop.f32.mrf.mxu0
    %v2816 = vadd.f32 0.0, %v2815
    %v2817 = vpop.f32.mrf.mxu0
    %2818 = vdwg.mxu0
    %v2819 = vmax.f32 %v2813, 1e-30
    %v2820 = vmax.f32 %v2816, 1e-30
    %v2821 = vrcp.pop %v2819
    %v2822 = vmul.f32 1.0, %v2821
    %v2823 = vrcp.pop %v2820
    %v2824 = vmul.f32 1.0, %v2823
    %v2825 = vpack.c.bf16 %v2824, %v2822
    %v2828 = vunpack.c.l.b16 %v159
    %v2829 = vunpack.c.h.b16 %v159
    %v2830 = vunpack.c.l.b16 %v160
    %v2831 = vunpack.c.h.b16 %v160
    %v2832 = vpack.c.b16 %v2828, %v2828
    %v2833 = vpack.c.b16 %v2829, %v2829
    %v2834 = vpack.c.b16 %v2830, %v2830
    %v2835 = vpack.c.b16 %v2831, %v2831
    %v2837 = vsel %vm303, %v2825, 0
    %v2840 = vsel %vm310, %v2832, 0
    %v2843 = vsel %vm310, %v2833, 0
    %v2846 = vsel %vm310, %v2834, 0
    %v2849 = vsel %vm310, %v2835, 0
    %2851 = vmatprep.subr.bf16.mxu0 0
    %2852 = vmatpush1.bf16.msra.mxu0 0
    %2853 = vmatprep.subr.bf16.mxu0 0
    %2854 = vmatpush1.bf16.msra.mxu0 0
    %2855 = vmatprep.subr.bf16.mxu0 0
    %2856 = vmatpush1.bf16.msra.mxu0 0
    %2857 = vmatprep.subr.bf16.mxu0 0
    %2858 = vmatpush1.bf16.msra.mxu0 0
    %2859 = vmatprep.subr.bf16.mxu0 0
    %2860 = vmatpush1.bf16.msra.mxu0 0
    %2861 = vmatprep.subr.bf16.mxu0 0
    %2862 = vmatpush1.bf16.msra.mxu0 0
    %2863 = vmatprep.subr.bf16.mxu0 0
    %2864 = vmatpush1.bf16.msra.mxu0 0
    %2865 = vmatprep.subr.bf16.mxu0 %v2843
    %2866 = vmatpush1.bf16.msra.mxu0 %v2840
    %2867 = vmatprep.subr.bf16.mxu0 0
    %2868 = vmatpush2.bf16.msra.mxu0 0
    %2869 = vmatprep.subr.bf16.mxu0 0
    %2870 = vmatpush2.bf16.msra.mxu0 0
    %2871 = vmatprep.subr.bf16.mxu0 0
    %2872 = vmatpush2.bf16.msra.mxu0 0
    %2873 = vmatprep.subr.bf16.mxu0 0
    %2874 = vmatpush2.bf16.msra.mxu0 0
    %2875 = vmatprep.subr.bf16.mxu0 0
    %2876 = vmatpush2.bf16.msra.mxu0 0
    %2877 = vmatprep.subr.bf16.mxu0 0
    %2878 = vmatpush2.bf16.msra.mxu0 0
    %2879 = vmatprep.subr.bf16.mxu0 0
    %2880 = vmatpush2.bf16.msra.mxu0 0
    %2881 = vmatprep.subr.bf16.mxu0 0
    %2882 = vmatpush2.bf16.msra.mxu0 0
    %2883 = vmatprep.mubr.bf16.mxu0 0
    %2884 = vmatmul.mubr.bf16.gmra.mxu0 %v2837
    %v2885 = vpop.f32.mrf.mxu0
    %v2886 = vadd.f32 0.0, %v2885
    %v2887 = vpop.f32.mrf.mxu0
    %v2888 = vadd.f32 0.0, %v2887
    %v2889 = vpop.f32.mrf.mxu0
    %v2890 = vadd.f32 0.0, %v2889
    %v2891 = vpop.f32.mrf.mxu0
    %v2892 = vadd.f32 0.0, %v2891
    %2893 = vdwg.mxu0
    %2894 = vmatprep.subr.bf16.mxu0 0
    %2895 = vmatpush1.bf16.msra.mxu0 0
    %2896 = vmatprep.subr.bf16.mxu0 0
    %2897 = vmatpush1.bf16.msra.mxu0 0
    %2898 = vmatprep.subr.bf16.mxu0 0
    %2899 = vmatpush1.bf16.msra.mxu0 0
    %2900 = vmatprep.subr.bf16.mxu0 0
    %2901 = vmatpush1.bf16.msra.mxu0 0
    %2902 = vmatprep.subr.bf16.mxu0 0
    %2903 = vmatpush1.bf16.msra.mxu0 0
    %2904 = vmatprep.subr.bf16.mxu0 0
    %2905 = vmatpush1.bf16.msra.mxu0 0
    %2906 = vmatprep.subr.bf16.mxu0 0
    %2907 = vmatpush1.bf16.msra.mxu0 0
    %2908 = vmatprep.subr.bf16.mxu0 %v2849
    %2909 = vmatpush1.bf16.msra.mxu0 %v2846
    %2910 = vmatprep.subr.bf16.mxu0 0
    %2911 = vmatpush2.bf16.msra.mxu0 0
    %2912 = vmatprep.subr.bf16.mxu0 0
    %2913 = vmatpush2.bf16.msra.mxu0 0
    %2914 = vmatprep.subr.bf16.mxu0 0
    %2915 = vmatpush2.bf16.msra.mxu0 0
    %2916 = vmatprep.subr.bf16.mxu0 0
    %2917 = vmatpush2.bf16.msra.mxu0 0
    %2918 = vmatprep.subr.bf16.mxu0 0
    %2919 = vmatpush2.bf16.msra.mxu0 0
    %2920 = vmatprep.subr.bf16.mxu0 0
    %2921 = vmatpush2.bf16.msra.mxu0 0
    %2922 = vmatprep.subr.bf16.mxu0 0
    %2923 = vmatpush2.bf16.msra.mxu0 0
    %2924 = vmatprep.subr.bf16.mxu0 0
    %2925 = vmatpush2.bf16.msra.mxu0 0
    %2926 = vmatprep.mubr.bf16.mxu0 0
    %2927 = vmatmul.mubr.bf16.gmra.mxu0 %v2837
    %v2928 = vpop.f32.mrf.mxu0
    %v2929 = vadd.f32 0.0, %v2928
    %v2930 = vpop.f32.mrf.mxu0
    %v2931 = vadd.f32 0.0, %v2930
    %v2932 = vpop.f32.mrf.mxu0
    %v2933 = vadd.f32 0.0, %v2932
    %v2934 = vpop.f32.mrf.mxu0
    %v2935 = vadd.f32 0.0, %v2934
    %2936 = vdwg.mxu0
    %v2937 = vpack.c.bf16 %v2890, %v2886
    %v2938 = vpack.c.bf16 %v2892, %v2888
    %v2939 = vpack.c.bf16 %v2933, %v2929
    %v2940 = vpack.c.bf16 %v2935, %v2931
    %2941 = vmatprep.subr.bf16.mxu0 0
    %2942 = vmatpush1.bf16.msra.mxu0 0
    %2943 = vmatprep.subr.bf16.mxu0 0
    %2944 = vmatpush1.bf16.msra.mxu0 0
    %2945 = vmatprep.subr.bf16.mxu0 0
    %2946 = vmatpush1.bf16.msra.mxu0 0
    %2947 = vmatprep.subr.bf16.mxu0 0
    %2948 = vmatpush1.bf16.msra.mxu0 0
    %2949 = vmatprep.subr.bf16.mxu0 0
    %2950 = vmatpush1.bf16.msra.mxu0 0
    %2951 = vmatprep.subr.bf16.mxu0 0
    %2952 = vmatpush1.bf16.msra.mxu0 0
    %2953 = vmatprep.subr.bf16.mxu0 0
    %2954 = vmatpush1.bf16.msra.mxu0 0
    %2955 = vmatprep.subr.bf16.mxu0 %v2938
    %2956 = vmatpush1.bf16.msra.mxu0 %v2937
    %2957 = vmatprep.subr.bf16.mxu0 0
    %2958 = vmatpush2.bf16.msra.mxu0 0
    %2959 = vmatprep.subr.bf16.mxu0 0
    %2960 = vmatpush2.bf16.msra.mxu0 0
    %2961 = vmatprep.subr.bf16.mxu0 0
    %2962 = vmatpush2.bf16.msra.mxu0 0
    %2963 = vmatprep.subr.bf16.mxu0 0
    %2964 = vmatpush2.bf16.msra.mxu0 0
    %2965 = vmatprep.subr.bf16.mxu0 0
    %2966 = vmatpush2.bf16.msra.mxu0 0
    %2967 = vmatprep.subr.bf16.mxu0 0
    %2968 = vmatpush2.bf16.msra.mxu0 0
    %2969 = vmatprep.subr.bf16.mxu0 0
    %2970 = vmatpush2.bf16.msra.mxu0 0
    %2971 = vmatprep.subr.bf16.mxu0 0
    %2972 = vmatpush2.bf16.msra.mxu0 0
    %2973 = vmatprep.mubr.bf16.mxu0 0
    %2974 = vmatmul.mubr.bf16.gmra.mxu0 %v825
    %v2975 = vpop.f32.mrf.mxu0
    %v2976 = vadd.f32 0.0, %v2975
    %v2977 = vpop.f32.mrf.mxu0
    %v2978 = vadd.f32 0.0, %v2977
    %v2979 = vpop.f32.mrf.mxu0
    %v2980 = vadd.f32 0.0, %v2979
    %v2981 = vpop.f32.mrf.mxu0
    %v2982 = vadd.f32 0.0, %v2981
    %2983 = vmatprep.mubr.bf16.mxu0 0
    %2984 = vmatmul.mubr.bf16.gmra.mxu0 %v828
    %v2985 = vpop.f32.mrf.mxu0
    %v2986 = vadd.f32 0.0, %v2985
    %v2987 = vpop.f32.mrf.mxu0
    %v2988 = vadd.f32 0.0, %v2987
    %v2989 = vpop.f32.mrf.mxu0
    %v2990 = vadd.f32 0.0, %v2989
    %v2991 = vpop.f32.mrf.mxu0
    %v2992 = vadd.f32 0.0, %v2991
    %2993 = vdwg.mxu0
    %2994 = vmatprep.subr.bf16.mxu0 0
    %2995 = vmatpush1.bf16.msra.mxu0 0
    %2996 = vmatprep.subr.bf16.mxu0 0
    %2997 = vmatpush1.bf16.msra.mxu0 0
    %2998 = vmatprep.subr.bf16.mxu0 0
    %2999 = vmatpush1.bf16.msra.mxu0 0
    %3000 = vmatprep.subr.bf16.mxu0 0
    %3001 = vmatpush1.bf16.msra.mxu0 0
    %3002 = vmatprep.subr.bf16.mxu0 0
    %3003 = vmatpush1.bf16.msra.mxu0 0
    %3004 = vmatprep.subr.bf16.mxu0 0
    %3005 = vmatpush1.bf16.msra.mxu0 0
    %3006 = vmatprep.subr.bf16.mxu0 0
    %3007 = vmatpush1.bf16.msra.mxu0 0
    %3008 = vmatprep.subr.bf16.mxu0 %v2940
    %3009 = vmatpush1.bf16.msra.mxu0 %v2939
    %3010 = vmatprep.subr.bf16.mxu0 0
    %3011 = vmatpush2.bf16.msra.mxu0 0
    %3012 = vmatprep.subr.bf16.mxu0 0
    %3013 = vmatpush2.bf16.msra.mxu0 0
    %3014 = vmatprep.subr.bf16.mxu0 0
    %3015 = vmatpush2.bf16.msra.mxu0 0
    %3016 = vmatprep.subr.bf16.mxu0 0
    %3017 = vmatpush2.bf16.msra.mxu0 0
    %3018 = vmatprep.subr.bf16.mxu0 0
    %3019 = vmatpush2.bf16.msra.mxu0 0
    %3020 = vmatprep.subr.bf16.mxu0 0
    %3021 = vmatpush2.bf16.msra.mxu0 0
    %3022 = vmatprep.subr.bf16.mxu0 0
    %3023 = vmatpush2.bf16.msra.mxu0 0
    %3024 = vmatprep.subr.bf16.mxu0 0
    %3025 = vmatpush2.bf16.msra.mxu0 0
    %3026 = vmatprep.mubr.bf16.mxu0 0
    %3027 = vmatmul.mubr.bf16.gmra.mxu0 %v825
    %v3028 = vpop.f32.mrf.mxu0
    %v3029 = vadd.f32 0.0, %v3028
    %v3030 = vpop.f32.mrf.mxu0
    %v3031 = vadd.f32 0.0, %v3030
    %v3032 = vpop.f32.mrf.mxu0
    %v3033 = vadd.f32 0.0, %v3032
    %v3034 = vpop.f32.mrf.mxu0
    %v3035 = vadd.f32 0.0, %v3034
    %3036 = vmatprep.mubr.bf16.mxu0 0
    %3037 = vmatmul.mubr.bf16.gmra.mxu0 %v828
    %v3038 = vpop.f32.mrf.mxu0
    %v3039 = vadd.f32 0.0, %v3038
    %v3040 = vpop.f32.mrf.mxu0
    %v3041 = vadd.f32 0.0, %v3040
    %v3042 = vpop.f32.mrf.mxu0
    %v3043 = vadd.f32 0.0, %v3042
    %v3044 = vpop.f32.mrf.mxu0
    %v3045 = vadd.f32 0.0, %v3044
    %3046 = vdwg.mxu0
    %v3048 = vsel %vm303, %v2776, 0
    %v3051 = vsel %vm303, %v2777, 0
    %3053 = vmatprep.subr.bf16.mxu0 0
    %3054 = vmatpush1.bf16.msra.mxu0 0
    %3055 = vmatprep.subr.bf16.mxu0 0
    %3056 = vmatpush1.bf16.msra.mxu0 0
    %3057 = vmatprep.subr.bf16.mxu0 0
    %3058 = vmatpush1.bf16.msra.mxu0 0
    %3059 = vmatprep.subr.bf16.mxu0 0
    %3060 = vmatpush1.bf16.msra.mxu0 0
    %3061 = vmatprep.subr.bf16.mxu0 0
    %3062 = vmatpush1.bf16.msra.mxu0 0
    %3063 = vmatprep.subr.bf16.mxu0 0
    %3064 = vmatpush1.bf16.msra.mxu0 0
    %3065 = vmatprep.subr.bf16.mxu0 0
    %3066 = vmatpush1.bf16.msra.mxu0 0
    %3067 = vmatprep.subr.bf16.mxu0 %v2843
    %3068 = vmatpush1.bf16.msra.mxu0 %v2840
    %3069 = vmatprep.subr.bf16.mxu0 0
    %3070 = vmatpush2.bf16.msra.mxu0 0
    %3071 = vmatprep.subr.bf16.mxu0 0
    %3072 = vmatpush2.bf16.msra.mxu0 0
    %3073 = vmatprep.subr.bf16.mxu0 0
    %3074 = vmatpush2.bf16.msra.mxu0 0
    %3075 = vmatprep.subr.bf16.mxu0 0
    %3076 = vmatpush2.bf16.msra.mxu0 0
    %3077 = vmatprep.subr.bf16.mxu0 0
    %3078 = vmatpush2.bf16.msra.mxu0 0
    %3079 = vmatprep.subr.bf16.mxu0 0
    %3080 = vmatpush2.bf16.msra.mxu0 0
    %3081 = vmatprep.subr.bf16.mxu0 0
    %3082 = vmatpush2.bf16.msra.mxu0 0
    %3083 = vmatprep.subr.bf16.mxu0 0
    %3084 = vmatpush2.bf16.msra.mxu0 0
    %3085 = vmatprep.mubr.bf16.mxu0 0
    %3086 = vmatmul.mubr.bf16.gmra.mxu0 %v3048
    %v3087 = vpop.f32.mrf.mxu0
    %v3088 = vadd.f32 0.0, %v3087
    %v3089 = vpop.f32.mrf.mxu0
    %v3090 = vadd.f32 0.0, %v3089
    %v3091 = vpop.f32.mrf.mxu0
    %v3092 = vadd.f32 0.0, %v3091
    %v3093 = vpop.f32.mrf.mxu0
    %v3094 = vadd.f32 0.0, %v3093
    %3095 = vmatprep.mubr.bf16.mxu0 0
    %3096 = vmatmul.mubr.bf16.gmra.mxu0 %v3051
    %v3097 = vpop.f32.mrf.mxu0
    %v3098 = vadd.f32 0.0, %v3097
    %v3099 = vpop.f32.mrf.mxu0
    %v3100 = vadd.f32 0.0, %v3099
    %v3101 = vpop.f32.mrf.mxu0
    %v3102 = vadd.f32 0.0, %v3101
    %v3103 = vpop.f32.mrf.mxu0
    %v3104 = vadd.f32 0.0, %v3103
    %3105 = vdwg.mxu0
    %3106 = vmatprep.subr.bf16.mxu0 0
    %3107 = vmatpush1.bf16.msra.mxu0 0
    %3108 = vmatprep.subr.bf16.mxu0 0
    %3109 = vmatpush1.bf16.msra.mxu0 0
    %3110 = vmatprep.subr.bf16.mxu0 0
    %3111 = vmatpush1.bf16.msra.mxu0 0
    %3112 = vmatprep.subr.bf16.mxu0 0
    %3113 = vmatpush1.bf16.msra.mxu0 0
    %3114 = vmatprep.subr.bf16.mxu0 0
    %3115 = vmatpush1.bf16.msra.mxu0 0
    %3116 = vmatprep.subr.bf16.mxu0 0
    %3117 = vmatpush1.bf16.msra.mxu0 0
    %3118 = vmatprep.subr.bf16.mxu0 0
    %3119 = vmatpush1.bf16.msra.mxu0 0
    %3120 = vmatprep.subr.bf16.mxu0 %v2849
    %3121 = vmatpush1.bf16.msra.mxu0 %v2846
    %3122 = vmatprep.subr.bf16.mxu0 0
    %3123 = vmatpush2.bf16.msra.mxu0 0
    %3124 = vmatprep.subr.bf16.mxu0 0
    %3125 = vmatpush2.bf16.msra.mxu0 0
    %3126 = vmatprep.subr.bf16.mxu0 0
    %3127 = vmatpush2.bf16.msra.mxu0 0
    %3128 = vmatprep.subr.bf16.mxu0 0
    %3129 = vmatpush2.bf16.msra.mxu0 0
    %3130 = vmatprep.subr.bf16.mxu0 0
    %3131 = vmatpush2.bf16.msra.mxu0 0
    %3132 = vmatprep.subr.bf16.mxu0 0
    %3133 = vmatpush2.bf16.msra.mxu0 0
    %3134 = vmatprep.subr.bf16.mxu0 0
    %3135 = vmatpush2.bf16.msra.mxu0 0
    %3136 = vmatprep.subr.bf16.mxu0 0
    %3137 = vmatpush2.bf16.msra.mxu0 0
    %3138 = vmatprep.mubr.bf16.mxu0 0
    %3139 = vmatmul.mubr.bf16.gmra.mxu0 %v3048
    %v3140 = vpop.f32.mrf.mxu0
    %v3141 = vadd.f32 0.0, %v3140
    %v3142 = vpop.f32.mrf.mxu0
    %v3143 = vadd.f32 0.0, %v3142
    %v3144 = vpop.f32.mrf.mxu0
    %v3145 = vadd.f32 0.0, %v3144
    %v3146 = vpop.f32.mrf.mxu0
    %v3147 = vadd.f32 0.0, %v3146
    %3148 = vmatprep.mubr.bf16.mxu0 0
    %3149 = vmatmul.mubr.bf16.gmra.mxu0 %v3051
    %v3150 = vpop.f32.mrf.mxu0
    %v3151 = vadd.f32 0.0, %v3150
    %v3152 = vpop.f32.mrf.mxu0
    %v3153 = vadd.f32 0.0, %v3152
    %v3154 = vpop.f32.mrf.mxu0
    %v3155 = vadd.f32 0.0, %v3154
    %v3156 = vpop.f32.mrf.mxu0
    %v3157 = vadd.f32 0.0, %v3156
    %3158 = vdwg.mxu0
    %v3159 = vpack.c.bf16 %v2481, %v2477
    %v3160 = vpack.c.bf16 %v2483, %v2479
    %v3161 = vpack.c.bf16 %v2524, %v2520
    %v3162 = vpack.c.bf16 %v2526, %v2522
    %3163 = vmatprep.subr.bf16.mxu0 0
    %3164 = vmatpush1.bf16.msra.mxu0 0
    %3165 = vmatprep.subr.bf16.mxu0 0
    %3166 = vmatpush1.bf16.msra.mxu0 0
    %3167 = vmatprep.subr.bf16.mxu0 0
    %3168 = vmatpush1.bf16.msra.mxu0 0
    %3169 = vmatprep.subr.bf16.mxu0 0
    %3170 = vmatpush1.bf16.msra.mxu0 0
    %3171 = vmatprep.subr.bf16.mxu0 0
    %3172 = vmatpush1.bf16.msra.mxu0 0
    %3173 = vmatprep.subr.bf16.mxu0 0
    %3174 = vmatpush1.bf16.msra.mxu0 0
    %3175 = vmatprep.subr.bf16.mxu0 0
    %3176 = vmatpush1.bf16.msra.mxu0 0
    %3177 = vmatprep.subr.bf16.mxu0 %v3160
    %3178 = vmatpush1.bf16.msra.mxu0 %v3159
    %3179 = vmatprep.subr.bf16.mxu0 0
    %3180 = vmatpush2.bf16.msra.mxu0 0
    %3181 = vmatprep.subr.bf16.mxu0 0
    %3182 = vmatpush2.bf16.msra.mxu0 0
    %3183 = vmatprep.subr.bf16.mxu0 0
    %3184 = vmatpush2.bf16.msra.mxu0 0
    %3185 = vmatprep.subr.bf16.mxu0 0
    %3186 = vmatpush2.bf16.msra.mxu0 0
    %3187 = vmatprep.subr.bf16.mxu0 0
    %3188 = vmatpush2.bf16.msra.mxu0 0
    %3189 = vmatprep.subr.bf16.mxu0 0
    %3190 = vmatpush2.bf16.msra.mxu0 0
    %3191 = vmatprep.subr.bf16.mxu0 0
    %3192 = vmatpush2.bf16.msra.mxu0 0
    %3193 = vmatprep.subr.bf16.mxu0 0
    %3194 = vmatpush2.bf16.msra.mxu0 0
    %3195 = vmatprep.mubr.bf16.mxu0 0
    %3196 = vmatmul.mubr.bf16.gmra.mxu0 %v894
    %v3197 = vpop.f32.mrf.mxu0
    %v3198 = vadd.f32 0.0, %v3197
    %v3199 = vpop.f32.mrf.mxu0
    %v3200 = vadd.f32 0.0, %v3199
    %v3201 = vpop.f32.mrf.mxu0
    %v3202 = vadd.f32 0.0, %v3201
    %v3203 = vpop.f32.mrf.mxu0
    %v3204 = vadd.f32 0.0, %v3203
    %3205 = vmatprep.mubr.bf16.mxu0 0
    %3206 = vmatmul.mubr.bf16.gmra.mxu0 %v897
    %v3207 = vpop.f32.mrf.mxu0
    %v3208 = vadd.f32 0.0, %v3207
    %v3209 = vpop.f32.mrf.mxu0
    %v3210 = vadd.f32 0.0, %v3209
    %v3211 = vpop.f32.mrf.mxu0
    %v3212 = vadd.f32 0.0, %v3211
    %v3213 = vpop.f32.mrf.mxu0
    %v3214 = vadd.f32 0.0, %v3213
    %3215 = vdwg.mxu0
    %3216 = vmatprep.subr.bf16.mxu0 0
    %3217 = vmatpush1.bf16.msra.mxu0 0
    %3218 = vmatprep.subr.bf16.mxu0 0
    %3219 = vmatpush1.bf16.msra.mxu0 0
    %3220 = vmatprep.subr.bf16.mxu0 0
    %3221 = vmatpush1.bf16.msra.mxu0 0
    %3222 = vmatprep.subr.bf16.mxu0 0
    %3223 = vmatpush1.bf16.msra.mxu0 0
    %3224 = vmatprep.subr.bf16.mxu0 0
    %3225 = vmatpush1.bf16.msra.mxu0 0
    %3226 = vmatprep.subr.bf16.mxu0 0
    %3227 = vmatpush1.bf16.msra.mxu0 0
    %3228 = vmatprep.subr.bf16.mxu0 0
    %3229 = vmatpush1.bf16.msra.mxu0 0
    %3230 = vmatprep.subr.bf16.mxu0 %v3162
    %3231 = vmatpush1.bf16.msra.mxu0 %v3161
    %3232 = vmatprep.subr.bf16.mxu0 0
    %3233 = vmatpush2.bf16.msra.mxu0 0
    %3234 = vmatprep.subr.bf16.mxu0 0
    %3235 = vmatpush2.bf16.msra.mxu0 0
    %3236 = vmatprep.subr.bf16.mxu0 0
    %3237 = vmatpush2.bf16.msra.mxu0 0
    %3238 = vmatprep.subr.bf16.mxu0 0
    %3239 = vmatpush2.bf16.msra.mxu0 0
    %3240 = vmatprep.subr.bf16.mxu0 0
    %3241 = vmatpush2.bf16.msra.mxu0 0
    %3242 = vmatprep.subr.bf16.mxu0 0
    %3243 = vmatpush2.bf16.msra.mxu0 0
    %3244 = vmatprep.subr.bf16.mxu0 0
    %3245 = vmatpush2.bf16.msra.mxu0 0
    %3246 = vmatprep.subr.bf16.mxu0 0
    %3247 = vmatpush2.bf16.msra.mxu0 0
    %3248 = vmatprep.mubr.bf16.mxu0 0
    %3249 = vmatmul.mubr.bf16.gmra.mxu0 %v894
    %v3250 = vpop.f32.mrf.mxu0
    %v3251 = vadd.f32 0.0, %v3250
    %v3252 = vpop.f32.mrf.mxu0
    %v3253 = vadd.f32 0.0, %v3252
    %v3254 = vpop.f32.mrf.mxu0
    %v3255 = vadd.f32 0.0, %v3254
    %v3256 = vpop.f32.mrf.mxu0
    %v3257 = vadd.f32 0.0, %v3256
    %3258 = vmatprep.mubr.bf16.mxu0 0
    %3259 = vmatmul.mubr.bf16.gmra.mxu0 %v897
    %v3260 = vpop.f32.mrf.mxu0
    %v3261 = vadd.f32 0.0, %v3260
    %v3262 = vpop.f32.mrf.mxu0
    %v3263 = vadd.f32 0.0, %v3262
    %v3264 = vpop.f32.mrf.mxu0
    %v3265 = vadd.f32 0.0, %v3264
    %v3266 = vpop.f32.mrf.mxu0
    %v3267 = vadd.f32 0.0, %v3266
    %3268 = vdwg.mxu0
    %v3269 = vmul.f32 %v3088, %v2976
    %v3270 = vmul.f32 %v3090, %v2978
    %v3271 = vmul.f32 %v3141, %v3029
    %v3272 = vmul.f32 %v3143, %v3031
    %v3273 = vmul.f32 %v3092, %v2980
    %v3274 = vmul.f32 %v3094, %v2982
    %v3275 = vmul.f32 %v3145, %v3033
    %v3276 = vmul.f32 %v3147, %v3035
    %v3277 = vmul.f32 %v3098, %v2986
    %v3278 = vmul.f32 %v3100, %v2988
    %v3279 = vmul.f32 %v3151, %v3039
    %v3280 = vmul.f32 %v3153, %v3041
    %v3281 = vmul.f32 %v3102, %v2990
    %v3282 = vmul.f32 %v3104, %v2992
    %v3283 = vmul.f32 %v3155, %v3043
    %v3284 = vmul.f32 %v3157, %v3045
    %v3285 = vmul.f32 %v3269, %v3198
    %v3286 = vmul.f32 %v3270, %v3200
    %v3287 = vmul.f32 %v3271, %v3251
    %v3288 = vmul.f32 %v3272, %v3253
    %v3289 = vmul.f32 %v3273, %v3202
    %v3290 = vmul.f32 %v3274, %v3204
    %v3291 = vmul.f32 %v3275, %v3255
    %v3292 = vmul.f32 %v3276, %v3257
    %v3293 = vmul.f32 %v3277, %v3208
    %v3294 = vmul.f32 %v3278, %v3210
    %v3295 = vmul.f32 %v3279, %v3261
    %v3296 = vmul.f32 %v3280, %v3263
    %v3297 = vmul.f32 %v3281, %v3212
    %v3298 = vmul.f32 %v3282, %v3214
    %v3299 = vmul.f32 %v3283, %v3265
    %v3300 = vmul.f32 %v3284, %v3267
    %v3301 = vpack.c.bf16 %v3289, %v3285
    %v3302 = vpack.c.bf16 %v3290, %v3286
    %v3303 = vpack.c.bf16 %v3291, %v3287
    %v3304 = vpack.c.bf16 %v3292, %v3288
    %v3305 = vpack.c.bf16 %v3297, %v3293
    %v3306 = vpack.c.bf16 %v3298, %v3294
    %v3307 = vpack.c.bf16 %v3299, %v3295
    %v3308 = vpack.c.bf16 %v3300, %v3296
    %3309 = vmatprep.subr.bf16.mxu0 0
    %3310 = vmatpush1.bf16.msra.mxu0 0
    %3311 = vmatprep.subr.bf16.mxu0 0
    %3312 = vmatpush1.bf16.msra.mxu0 0
    %3313 = vmatprep.subr.bf16.mxu0 0
    %3314 = vmatpush1.bf16.msra.mxu0 0
    %3315 = vmatprep.subr.bf16.mxu0 0
    %3316 = vmatpush1.bf16.msra.mxu0 0
    %3317 = vmatprep.subr.bf16.mxu0 0
    %3318 = vmatpush1.bf16.msra.mxu0 0
    %3319 = vmatprep.subr.bf16.mxu0 0
    %3320 = vmatpush1.bf16.msra.mxu0 0
    %3321 = vmatprep.subr.bf16.mxu0 %v3306
    %3322 = vmatpush1.bf16.msra.mxu0 %v3305
    %3323 = vmatprep.subr.bf16.mxu0 %v3302
    %3324 = vmatpush1.bf16.msra.mxu0 %v3301
    %3325 = vmatprep.subr.bf16.mxu0 0
    %3326 = vmatpush2.bf16.msra.mxu0 0
    %3327 = vmatprep.subr.bf16.mxu0 0
    %3328 = vmatpush2.bf16.msra.mxu0 0
    %3329 = vmatprep.subr.bf16.mxu0 0
    %3330 = vmatpush2.bf16.msra.mxu0 0
    %3331 = vmatprep.subr.bf16.mxu0 0
    %3332 = vmatpush2.bf16.msra.mxu0 0
    %3333 = vmatprep.subr.bf16.mxu0 0
    %3334 = vmatpush2.bf16.msra.mxu0 0
    %3335 = vmatprep.subr.bf16.mxu0 0
    %3336 = vmatpush2.bf16.msra.mxu0 0
    %3337 = vmatprep.subr.bf16.mxu0 0
    %3338 = vmatpush2.bf16.msra.mxu0 0
    %3339 = vmatprep.subr.bf16.mxu0 0
    %3340 = vmatpush2.bf16.msra.mxu0 0
    %3341 = vmatprep.mubr.bf16.mxu0 0
    %3342 = vmatmul.mubr.bf16.gmra.mxu0 %v1186
    %v3343 = vpop.f32.mrf.mxu0
    %v3344 = vadd.f32 0.0, %v3343
    %v3345 = vpop.f32.mrf.mxu0
    %v3346 = vadd.f32 0.0, %v3345
    %v3347 = vpop.f32.mrf.mxu0
    %v3348 = vadd.f32 0.0, %v3347
    %v3349 = vpop.f32.mrf.mxu0
    %v3350 = vadd.f32 0.0, %v3349
    %3351 = vdwg.mxu0
    %3352 = vmatprep.subr.bf16.mxu0 0
    %3353 = vmatpush1.bf16.msra.mxu0 0
    %3354 = vmatprep.subr.bf16.mxu0 0
    %3355 = vmatpush1.bf16.msra.mxu0 0
    %3356 = vmatprep.subr.bf16.mxu0 0
    %3357 = vmatpush1.bf16.msra.mxu0 0
    %3358 = vmatprep.subr.bf16.mxu0 0
    %3359 = vmatpush1.bf16.msra.mxu0 0
    %3360 = vmatprep.subr.bf16.mxu0 0
    %3361 = vmatpush1.bf16.msra.mxu0 0
    %3362 = vmatprep.subr.bf16.mxu0 0
    %3363 = vmatpush1.bf16.msra.mxu0 0
    %3364 = vmatprep.subr.bf16.mxu0 %v3308
    %3365 = vmatpush1.bf16.msra.mxu0 %v3307
    %3366 = vmatprep.subr.bf16.mxu0 %v3304
    %3367 = vmatpush1.bf16.msra.mxu0 %v3303
    %3368 = vmatprep.subr.bf16.mxu0 0
    %3369 = vmatpush2.bf16.msra.mxu0 0
    %3370 = vmatprep.subr.bf16.mxu0 0
    %3371 = vmatpush2.bf16.msra.mxu0 0
    %3372 = vmatprep.subr.bf16.mxu0 0
    %3373 = vmatpush2.bf16.msra.mxu0 0
    %3374 = vmatprep.subr.bf16.mxu0 0
    %3375 = vmatpush2.bf16.msra.mxu0 0
    %3376 = vmatprep.subr.bf16.mxu0 0
    %3377 = vmatpush2.bf16.msra.mxu0 0
    %3378 = vmatprep.subr.bf16.mxu0 0
    %3379 = vmatpush2.bf16.msra.mxu0 0
    %3380 = vmatprep.subr.bf16.mxu0 0
    %3381 = vmatpush2.bf16.msra.mxu0 0
    %3382 = vmatprep.subr.bf16.mxu0 0
    %3383 = vmatpush2.bf16.msra.mxu0 0
    %3384 = vmatprep.mubr.bf16.mxu0 0
    %3385 = vmatmul.mubr.bf16.gmra.mxu0 %v1186
    %v3386 = vpop.f32.mrf.mxu0
    %v3387 = vadd.f32 0.0, %v3386
    %v3388 = vpop.f32.mrf.mxu0
    %v3389 = vadd.f32 0.0, %v3388
    %v3390 = vpop.f32.mrf.mxu0
    %v3391 = vadd.f32 0.0, %v3390
    %v3392 = vpop.f32.mrf.mxu0
    %v3393 = vadd.f32 0.0, %v3392
    %3394 = vdwg.mxu0
    %v3395 = vld [vmem:[#allocation2 + $0x70] sm:$0xf]
    %v3396 = vld [vmem:[#allocation2 + $0x74] sm:$0xf]
    %v3397 = vld [vmem:[#allocation2 + $0x78] sm:$0xf]
    %v3398 = vld [vmem:[#allocation2 + $0x7c] sm:$0xf]
    %v3399 = vld [vmem:[#allocation2 + $0x80] sm:$0xf]
    %v3400 = vld [vmem:[#allocation2 + $0x84] sm:$0xf]
    %v3401 = vld [vmem:[#allocation2 + $0x88] sm:$0xf]
    %v3402 = vld [vmem:[#allocation2 + $0x8c] sm:$0xf]
    %v3403 = vld [vmem:[#allocation2 + $0x90] sm:$0xf]
    %v3404 = vld [vmem:[#allocation2 + $0x94] sm:$0xf]
    %v3405 = vld [vmem:[#allocation2 + $0x98] sm:$0xf]
    %v3406 = vld [vmem:[#allocation2 + $0x9c] sm:$0xf]
    %v3407 = vld [vmem:[#allocation2 + $0xa0] sm:$0xf]
    %v3408 = vld [vmem:[#allocation2 + $0xa4] sm:$0xf]
    %v3409 = vld [vmem:[#allocation2 + $0xa8] sm:$0xf]
    %v3410 = vld [vmem:[#allocation2 + $0xac] sm:$0xf]
    %v3411 = vlaneseq
    %v3412 = vshrl.u32 %v3411, 7
    %v3413 = vsub.s32 0, %v3412
    %v3414 = vrot.slane %v95, %v3413
    %v3431 = vunpack.c.l.b16 %v3395
    %v3432 = vunpack.c.l.b16 %v3396
    %v3433 = vunpack.c.l.b16 %v3397
    %v3434 = vunpack.c.l.b16 %v3398
    %v3435 = vunpack.c.l.b16 %v3399
    %v3436 = vunpack.c.l.b16 %v3400
    %v3437 = vunpack.c.l.b16 %v3401
    %v3438 = vunpack.c.l.b16 %v3402
    %v3439 = vunpack.c.l.b16 %v3403
    %v3440 = vunpack.c.l.b16 %v3404
    %v3441 = vunpack.c.l.b16 %v3405
    %v3442 = vunpack.c.l.b16 %v3406
    %v3443 = vunpack.c.l.b16 %v3407
    %v3444 = vunpack.c.l.b16 %v3408
    %v3445 = vunpack.c.l.b16 %v3409
    %v3446 = vunpack.c.l.b16 %v3410
    %v3447 = vpack.c.b16 %v3432, %v3431
    %v3448 = vpack.c.b16 %v3434, %v3433
    %v3449 = vpack.c.b16 %v3436, %v3435
    %v3450 = vpack.c.b16 %v3438, %v3437
    %v3451 = vpack.c.b16 %v3440, %v3439
    %v3452 = vpack.c.b16 %v3442, %v3441
    %v3453 = vpack.c.b16 %v3444, %v3443
    %v3454 = vpack.c.b16 %v3446, %v3445
    %3463 = vmatprep.subr.bf16.mxu0 0
    %3464 = vmatpush1.bf16.msra.mxu0 %v3454
    %3465 = vmatprep.subr.bf16.mxu0 0
    %3466 = vmatpush1.bf16.msra.mxu0 %v3453
    %3467 = vmatprep.subr.bf16.mxu0 0
    %3468 = vmatpush1.bf16.msra.mxu0 %v3452
    %3469 = vmatprep.subr.bf16.mxu0 0
    %3470 = vmatpush1.bf16.msra.mxu0 %v3451
    %3471 = vmatprep.subr.bf16.mxu0 0
    %3472 = vmatpush1.bf16.msra.mxu0 %v3450
    %3473 = vmatprep.subr.bf16.mxu0 0
    %3474 = vmatpush1.bf16.msra.mxu0 %v3449
    %3475 = vmatprep.subr.bf16.mxu0 0
    %3476 = vmatpush1.bf16.msra.mxu0 %v3448
    %3477 = vmatprep.subr.bf16.mxu0 0
    %3478 = vmatpush1.bf16.msra.mxu0 %v3447
    %3479 = vmatprep.subr.bf16.mxu0 0
    %3480 = vmatpush2.bf16.msra.mxu0 0
    %3481 = vmatprep.subr.bf16.mxu0 0
    %3482 = vmatpush2.bf16.msra.mxu0 0
    %3483 = vmatprep.subr.bf16.mxu0 0
    %3484 = vmatpush2.bf16.msra.mxu0 0
    %3485 = vmatprep.subr.bf16.mxu0 0
    %3486 = vmatpush2.bf16.msra.mxu0 0
    %3487 = vmatprep.subr.bf16.mxu0 0
    %3488 = vmatpush2.bf16.msra.mxu0 0
    %3489 = vmatprep.subr.bf16.mxu0 0
    %3490 = vmatpush2.bf16.msra.mxu0 0
    %3491 = vmatprep.subr.bf16.mxu0 0
    %3492 = vmatpush2.bf16.msra.mxu0 0
    %3493 = vmatprep.subr.bf16.mxu0 0
    %3494 = vmatpush2.bf16.msra.mxu0 0
    %3495 = vmatprep.mubr.bf16.mxu0 0
    %3496 = vmatmul.mubr.bf16.gmra.mxu0 %v2652
    %v3497 = vpop.f32.mrf.mxu0
    %v3498 = vadd.f32 %v3414, %v3497
    %v3499 = vpop.f32.mrf.mxu0
    %v3500 = vpop.f32.mrf.mxu0
    %v3501 = vadd.f32 %v3414, %v3500
    %v3502 = vpop.f32.mrf.mxu0
    %3503 = vmatprep.mubr.bf16.mxu0 0
    %3504 = vmatmul.mubr.bf16.gmra.mxu0 %v2653
    %v3505 = vpop.f32.mrf.mxu0
    %v3506 = vadd.f32 %v3414, %v3505
    %v3507 = vpop.f32.mrf.mxu0
    %v3508 = vpop.f32.mrf.mxu0
    %v3509 = vadd.f32 %v3414, %v3508
    %v3510 = vpop.f32.mrf.mxu0
    %3511 = vdwg.mxu0
    %v3512 = vmax.f32 %v3498, 0.0
    %v3513 = vmax.f32 %v3501, 0.0
    %v3514 = vmax.f32 %v3506, 0.0
    %v3515 = vmax.f32 %v3509, 0.0
    %v3516 = vld [vmem:[#allocation2 + $0xb0] sm:$0xf]
    %v3517 = vld [vmem:[#allocation2 + $0xb4] sm:$0xf]
    %v3518 = vld [vmem:[#allocation2 + $0xb8] sm:$0xf]
    %v3519 = vld [vmem:[#allocation2 + $0xbc] sm:$0xf]
    %v3520 = vld [vmem:[#allocation2 + $0xc0] sm:$0xf]
    %v3521 = vld [vmem:[#allocation2 + $0xc4] sm:$0xf]
    %v3522 = vld [vmem:[#allocation2 + $0xc8] sm:$0xf]
    %v3523 = vld [vmem:[#allocation2 + $0xcc] sm:$0xf]
    %v3524 = vld [vmem:[#allocation2 + $0xd0] sm:$0xf]
    %v3525 = vld [vmem:[#allocation2 + $0xd4] sm:$0xf]
    %v3526 = vld [vmem:[#allocation2 + $0xd8] sm:$0xf]
    %v3527 = vld [vmem:[#allocation2 + $0xdc] sm:$0xf]
    %v3528 = vld [vmem:[#allocation2 + $0xe0] sm:$0xf]
    %v3529 = vld [vmem:[#allocation2 + $0xe4] sm:$0xf]
    %v3530 = vld [vmem:[#allocation2 + $0xe8] sm:$0xf]
    %v3531 = vld [vmem:[#allocation2 + $0xec] sm:$0xf]
    %v3532 = vld [vmem:[#allocation2 + $0xf0] sm:$0xf]
    %v3533 = vld [vmem:[#allocation2 + $0xf4] sm:$0xf]
    %v3534 = vld [vmem:[#allocation2 + $0xf8] sm:$0xf]
    %v3535 = vld [vmem:[#allocation2 + $0xfc] sm:$0xf]
    %v3536 = vld [vmem:[#allocation2 + $0x100] sm:$0xf]
    %v3537 = vld [vmem:[#allocation2 + $0x104] sm:$0xf]
    %v3538 = vld [vmem:[#allocation2 + $0x108] sm:$0xf]
    %v3539 = vld [vmem:[#allocation2 + $0x10c] sm:$0xf]
    %v3540 = vld [vmem:[#allocation2 + $0x110] sm:$0xf]
    %v3541 = vld [vmem:[#allocation2 + $0x114] sm:$0xf]
    %v3542 = vld [vmem:[#allocation2 + $0x118] sm:$0xf]
    %v3543 = vld [vmem:[#allocation2 + $0x11c] sm:$0xf]
    %v3544 = vld [vmem:[#allocation2 + $0x120] sm:$0xf]
    %v3545 = vld [vmem:[#allocation2 + $0x124] sm:$0xf]
    %v3546 = vld [vmem:[#allocation2 + $0x128] sm:$0xf]
    %v3547 = vld [vmem:[#allocation2 + $0x12c] sm:$0xf]
    %v3548 = vld [vmem:[#allocation2 + $0x130] sm:$0xf]
    %v3549 = vld [vmem:[#allocation2 + $0x134] sm:$0xf]
    %v3550 = vld [vmem:[#allocation2 + $0x138] sm:$0xf]
    %v3551 = vld [vmem:[#allocation2 + $0x13c] sm:$0xf]
    %v3552 = vld [vmem:[#allocation2 + $0x140] sm:$0xf]
    %v3553 = vld [vmem:[#allocation2 + $0x144] sm:$0xf]
    %v3554 = vld [vmem:[#allocation2 + $0x148] sm:$0xf]
    %v3555 = vld [vmem:[#allocation2 + $0x14c] sm:$0xf]
    %v3556 = vld [vmem:[#allocation2 + $0x150] sm:$0xf]
    %v3557 = vld [vmem:[#allocation2 + $0x154] sm:$0xf]
    %v3558 = vld [vmem:[#allocation2 + $0x158] sm:$0xf]
    %v3559 = vld [vmem:[#allocation2 + $0x15c] sm:$0xf]
    %v3560 = vld [vmem:[#allocation2 + $0x160] sm:$0xf]
    %v3561 = vld [vmem:[#allocation2 + $0x164] sm:$0xf]
    %v3562 = vld [vmem:[#allocation2 + $0x168] sm:$0xf]
    %v3563 = vld [vmem:[#allocation2 + $0x16c] sm:$0xf]
    %v3564 = vld [vmem:[#allocation2 + $0x170] sm:$0xf]
    %v3565 = vld [vmem:[#allocation2 + $0x174] sm:$0xf]
    %v3566 = vld [vmem:[#allocation2 + $0x178] sm:$0xf]
    %v3567 = vld [vmem:[#allocation2 + $0x17c] sm:$0xf]
    %v3568 = vld [vmem:[#allocation2 + $0x180] sm:$0xf]
    %v3569 = vld [vmem:[#allocation2 + $0x184] sm:$0xf]
    %v3570 = vld [vmem:[#allocation2 + $0x188] sm:$0xf]
    %v3571 = vld [vmem:[#allocation2 + $0x18c] sm:$0xf]
    %v3572 = vld [vmem:[#allocation2 + $0x190] sm:$0xf]
    %v3573 = vld [vmem:[#allocation2 + $0x194] sm:$0xf]
    %v3574 = vld [vmem:[#allocation2 + $0x198] sm:$0xf]
    %v3575 = vld [vmem:[#allocation2 + $0x19c] sm:$0xf]
    %v3576 = vld [vmem:[#allocation2 + $0x1a0] sm:$0xf]
    %v3577 = vld [vmem:[#allocation2 + $0x1a4] sm:$0xf]
    %v3578 = vld [vmem:[#allocation2 + $0x1a8] sm:$0xf]
    %v3579 = vld [vmem:[#allocation2 + $0x1ac] sm:$0xf]
    %v3580 = vpack.c.bf16 %v3348, %v3344
    %v3581 = vpack.c.bf16 %v3350, %v3346
    %v3582 = vpack.c.bf16 %v3391, %v3387
    %v3583 = vpack.c.bf16 %v3393, %v3389
    %v3584 = vlaneseq
    %v3585 = vshrl.u32 %v3584, 7
    %v3586 = vsub.s32 0, %v3585
    %v3587 = vrot.slane %v96, %v3586
    %v3652 = vunpack.c.l.b16 %v3516
    %v3653 = vunpack.c.l.b16 %v3517
    %v3654 = vunpack.c.l.b16 %v3518
    %v3655 = vunpack.c.l.b16 %v3519
    %v3656 = vunpack.c.l.b16 %v3520
    %v3657 = vunpack.c.l.b16 %v3521
    %v3658 = vunpack.c.l.b16 %v3522
    %v3659 = vunpack.c.l.b16 %v3523
    %v3660 = vunpack.c.l.b16 %v3524
    %v3661 = vunpack.c.l.b16 %v3525
    %v3662 = vunpack.c.l.b16 %v3526
    %v3663 = vunpack.c.l.b16 %v3527
    %v3664 = vunpack.c.l.b16 %v3528
    %v3665 = vunpack.c.l.b16 %v3529
    %v3666 = vunpack.c.l.b16 %v3530
    %v3667 = vunpack.c.l.b16 %v3531
    %v3668 = vunpack.c.l.b16 %v3532
    %v3669 = vunpack.c.l.b16 %v3533
    %v3670 = vunpack.c.l.b16 %v3534
    %v3671 = vunpack.c.l.b16 %v3535
    %v3672 = vunpack.c.l.b16 %v3536
    %v3673 = vunpack.c.l.b16 %v3537
    %v3674 = vunpack.c.l.b16 %v3538
    %v3675 = vunpack.c.l.b16 %v3539
    %v3676 = vunpack.c.l.b16 %v3540
    %v3677 = vunpack.c.l.b16 %v3541
    %v3678 = vunpack.c.l.b16 %v3542
    %v3679 = vunpack.c.l.b16 %v3543
    %v3680 = vunpack.c.l.b16 %v3544
    %v3681 = vunpack.c.l.b16 %v3545
    %v3682 = vunpack.c.l.b16 %v3546
    %v3683 = vunpack.c.l.b16 %v3547
    %v3684 = vunpack.c.l.b16 %v3548
    %v3685 = vunpack.c.l.b16 %v3549
    %v3686 = vunpack.c.l.b16 %v3550
    %v3687 = vunpack.c.l.b16 %v3551
    %v3688 = vunpack.c.l.b16 %v3552
    %v3689 = vunpack.c.l.b16 %v3553
    %v3690 = vunpack.c.l.b16 %v3554
    %v3691 = vunpack.c.l.b16 %v3555
    %v3692 = vunpack.c.l.b16 %v3556
    %v3693 = vunpack.c.l.b16 %v3557
    %v3694 = vunpack.c.l.b16 %v3558
    %v3695 = vunpack.c.l.b16 %v3559
    %v3696 = vunpack.c.l.b16 %v3560
    %v3697 = vunpack.c.l.b16 %v3561
    %v3698 = vunpack.c.l.b16 %v3562
    %v3699 = vunpack.c.l.b16 %v3563
    %v3700 = vunpack.c.l.b16 %v3564
    %v3701 = vunpack.c.l.b16 %v3565
    %v3702 = vunpack.c.l.b16 %v3566
    %v3703 = vunpack.c.l.b16 %v3567
    %v3704 = vunpack.c.l.b16 %v3568
    %v3705 = vunpack.c.l.b16 %v3569
    %v3706 = vunpack.c.l.b16 %v3570
    %v3707 = vunpack.c.l.b16 %v3571
    %v3708 = vunpack.c.l.b16 %v3572
    %v3709 = vunpack.c.l.b16 %v3573
    %v3710 = vunpack.c.l.b16 %v3574
    %v3711 = vunpack.c.l.b16 %v3575
    %v3712 = vunpack.c.l.b16 %v3576
    %v3713 = vunpack.c.l.b16 %v3577
    %v3714 = vunpack.c.l.b16 %v3578
    %v3715 = vunpack.c.l.b16 %v3579
    %v3716 = vpack.c.b16 %v3653, %v3652
    %v3717 = vpack.c.b16 %v3655, %v3654
    %v3718 = vpack.c.b16 %v3657, %v3656
    %v3719 = vpack.c.b16 %v3659, %v3658
    %v3720 = vpack.c.b16 %v3661, %v3660
    %v3721 = vpack.c.b16 %v3663, %v3662
    %v3722 = vpack.c.b16 %v3665, %v3664
    %v3723 = vpack.c.b16 %v3667, %v3666
    %v3724 = vpack.c.b16 %v3669, %v3668
    %v3725 = vpack.c.b16 %v3671, %v3670
    %v3726 = vpack.c.b16 %v3673, %v3672
    %v3727 = vpack.c.b16 %v3675, %v3674
    %v3728 = vpack.c.b16 %v3677, %v3676
    %v3729 = vpack.c.b16 %v3679, %v3678
    %v3730 = vpack.c.b16 %v3681, %v3680
    %v3731 = vpack.c.b16 %v3683, %v3682
    %v3732 = vpack.c.b16 %v3685, %v3684
    %v3733 = vpack.c.b16 %v3687, %v3686
    %v3734 = vpack.c.b16 %v3689, %v3688
    %v3735 = vpack.c.b16 %v3691, %v3690
    %v3736 = vpack.c.b16 %v3693, %v3692
    %v3737 = vpack.c.b16 %v3695, %v3694
    %v3738 = vpack.c.b16 %v3697, %v3696
    %v3739 = vpack.c.b16 %v3699, %v3698
    %v3740 = vpack.c.b16 %v3701, %v3700
    %v3741 = vpack.c.b16 %v3703, %v3702
    %v3742 = vpack.c.b16 %v3705, %v3704
    %v3743 = vpack.c.b16 %v3707, %v3706
    %v3744 = vpack.c.b16 %v3709, %v3708
    %v3745 = vpack.c.b16 %v3711, %v3710
    %v3746 = vpack.c.b16 %v3713, %v3712
    %v3747 = vpack.c.b16 %v3715, %v3714
    %3780 = vmatprep.subr.bf16.mxu0 0
    %3781 = vmatpush1.bf16.msra.mxu0 %v3723
    %3782 = vmatprep.subr.bf16.mxu0 0
    %3783 = vmatpush1.bf16.msra.mxu0 %v3722
    %3784 = vmatprep.subr.bf16.mxu0 0
    %3785 = vmatpush1.bf16.msra.mxu0 %v3721
    %3786 = vmatprep.subr.bf16.mxu0 0
    %3787 = vmatpush1.bf16.msra.mxu0 %v3720
    %3788 = vmatprep.subr.bf16.mxu0 0
    %3789 = vmatpush1.bf16.msra.mxu0 %v3719
    %3790 = vmatprep.subr.bf16.mxu0 0
    %3791 = vmatpush1.bf16.msra.mxu0 %v3718
    %3792 = vmatprep.subr.bf16.mxu0 0
    %3793 = vmatpush1.bf16.msra.mxu0 %v3717
    %3794 = vmatprep.subr.bf16.mxu0 0
    %3795 = vmatpush1.bf16.msra.mxu0 %v3716
    %3796 = vmatprep.subr.bf16.mxu0 0
    %3797 = vmatpush2.bf16.msra.mxu0 %v3731
    %3798 = vmatprep.subr.bf16.mxu0 0
    %3799 = vmatpush2.bf16.msra.mxu0 %v3730
    %3800 = vmatprep.subr.bf16.mxu0 0
    %3801 = vmatpush2.bf16.msra.mxu0 %v3729
    %3802 = vmatprep.subr.bf16.mxu0 0
    %3803 = vmatpush2.bf16.msra.mxu0 %v3728
    %3804 = vmatprep.subr.bf16.mxu0 0
    %3805 = vmatpush2.bf16.msra.mxu0 %v3727
    %3806 = vmatprep.subr.bf16.mxu0 0
    %3807 = vmatpush2.bf16.msra.mxu0 %v3726
    %3808 = vmatprep.subr.bf16.mxu0 0
    %3809 = vmatpush2.bf16.msra.mxu0 %v3725
    %3810 = vmatprep.subr.bf16.mxu0 0
    %3811 = vmatpush2.bf16.msra.mxu0 %v3724
    %3812 = vmatprep.mubr.bf16.mxu0 %v3581
    %3813 = vmatmul.mubr.bf16.gmra.mxu0 %v3580
    %v3814 = vpop.f32.mrf.mxu0
    %v3815 = vadd.f32 %v3587, %v3814
    %v3816 = vpop.f32.mrf.mxu0
    %v3817 = vpop.f32.mrf.mxu0
    %v3818 = vadd.f32 %v3587, %v3817
    %v3819 = vpop.f32.mrf.mxu0
    %3820 = vdwg.mxu0
    %3821 = vmatprep.subr.bf16.mxu0 0
    %3822 = vmatpush1.bf16.msra.mxu0 %v3739
    %3823 = vmatprep.subr.bf16.mxu0 0
    %3824 = vmatpush1.bf16.msra.mxu0 %v3738
    %3825 = vmatprep.subr.bf16.mxu0 0
    %3826 = vmatpush1.bf16.msra.mxu0 %v3737
    %3827 = vmatprep.subr.bf16.mxu0 0
    %3828 = vmatpush1.bf16.msra.mxu0 %v3736
    %3829 = vmatprep.subr.bf16.mxu0 0
    %3830 = vmatpush1.bf16.msra.mxu0 %v3735
    %3831 = vmatprep.subr.bf16.mxu0 0
    %3832 = vmatpush1.bf16.msra.mxu0 %v3734
    %3833 = vmatprep.subr.bf16.mxu0 0
    %3834 = vmatpush1.bf16.msra.mxu0 %v3733
    %3835 = vmatprep.subr.bf16.mxu0 0
    %3836 = vmatpush1.bf16.msra.mxu0 %v3732
    %3837 = vmatprep.subr.bf16.mxu0 0
    %3838 = vmatpush2.bf16.msra.mxu0 %v3747
    %3839 = vmatprep.subr.bf16.mxu0 0
    %3840 = vmatpush2.bf16.msra.mxu0 %v3746
    %3841 = vmatprep.subr.bf16.mxu0 0
    %3842 = vmatpush2.bf16.msra.mxu0 %v3745
    %3843 = vmatprep.subr.bf16.mxu0 0
    %3844 = vmatpush2.bf16.msra.mxu0 %v3744
    %3845 = vmatprep.subr.bf16.mxu0 0
    %3846 = vmatpush2.bf16.msra.mxu0 %v3743
    %3847 = vmatprep.subr.bf16.mxu0 0
    %3848 = vmatpush2.bf16.msra.mxu0 %v3742
    %3849 = vmatprep.subr.bf16.mxu0 0
    %3850 = vmatpush2.bf16.msra.mxu0 %v3741
    %3851 = vmatprep.subr.bf16.mxu0 0
    %3852 = vmatpush2.bf16.msra.mxu0 %v3740
    %3853 = vmatprep.mubr.bf16.mxu0 %v3583
    %3854 = vmatmul.mubr.bf16.gmra.mxu0 %v3582
    %v3855 = vpop.f32.mrf.mxu0
    %v3856 = vadd.f32 %v3815, %v3855
    %v3857 = vpop.f32.mrf.mxu0
    %v3858 = vpop.f32.mrf.mxu0
    %v3859 = vadd.f32 %v3818, %v3858
    %v3860 = vpop.f32.mrf.mxu0
    %3861 = vdwg.mxu0
    %v3862 = vmax.f32 %v3856, 0.0
    %v3863 = vmax.f32 %v3859, 0.0
    %v3864 = vld [vmem:[#allocation5 + $0x110] sm:$0xff]
    %v3865 = vld [vmem:[#allocation5 + $0x118] sm:$0xff]
    %v3866 = vld [vmem:[#allocation5 + $0x120] sm:$0xff]
    %v3867 = vld [vmem:[#allocation5 + $0x128] sm:$0xff]
    %v3868 = vld [vmem:[#allocation5 + $0x130] sm:$0xff]
    %v3869 = vld [vmem:[#allocation5 + $0x138] sm:$0xff]
    %v3870 = vld [vmem:[#allocation5 + $0x140] sm:$0xff]
    %v3871 = vld [vmem:[#allocation5 + $0x148] sm:$0xff]
    %v3872 = vpack.c.bf16 %v3863, %v3862
    %v3881 = vunpack.c.l.b16 %v3864
    %v3882 = vunpack.c.h.b16 %v3864
    %v3883 = vunpack.c.l.b16 %v3865
    %v3884 = vunpack.c.h.b16 %v3865
    %v3885 = vunpack.c.l.b16 %v3866
    %v3886 = vunpack.c.h.b16 %v3866
    %v3887 = vunpack.c.l.b16 %v3867
    %v3888 = vunpack.c.h.b16 %v3867
    %v3889 = vunpack.c.l.b16 %v3868
    %v3890 = vunpack.c.h.b16 %v3868
    %v3891 = vunpack.c.l.b16 %v3869
    %v3892 = vunpack.c.h.b16 %v3869
    %v3893 = vunpack.c.l.b16 %v3870
    %v3894 = vunpack.c.h.b16 %v3870
    %v3895 = vunpack.c.l.b16 %v3871
    %v3896 = vunpack.c.h.b16 %v3871
    %v3897 = vpack.c.b16 %v3883, %v3881
    %v3898 = vpack.c.b16 %v3884, %v3882
    %v3899 = vpack.c.b16 %v3887, %v3885
    %v3900 = vpack.c.b16 %v3888, %v3886
    %v3901 = vpack.c.b16 %v3891, %v3889
    %v3902 = vpack.c.b16 %v3892, %v3890
    %v3903 = vpack.c.b16 %v3895, %v3893
    %v3904 = vpack.c.b16 %v3896, %v3894
    %v3914 = vsel %vm471, %v3872, 0
    %3916 = vmatprep.subr.bf16.mxu0 0
    %3917 = vmatpush1.bf16.msra.mxu0 0
    %3918 = vmatprep.subr.bf16.mxu0 0
    %3919 = vmatpush1.bf16.msra.mxu0 0
    %3920 = vmatprep.subr.bf16.mxu0 0
    %3921 = vmatpush1.bf16.msra.mxu0 0
    %3922 = vmatprep.subr.bf16.mxu0 0
    %3923 = vmatpush1.bf16.msra.mxu0 0
    %3924 = vmatprep.subr.bf16.mxu0 %v3904
    %3925 = vmatpush1.bf16.msra.mxu0 %v3903
    %3926 = vmatprep.subr.bf16.mxu0 %v3902
    %3927 = vmatpush1.bf16.msra.mxu0 %v3901
    %3928 = vmatprep.subr.bf16.mxu0 %v3900
    %3929 = vmatpush1.bf16.msra.mxu0 %v3899
    %3930 = vmatprep.subr.bf16.mxu0 %v3898
    %3931 = vmatpush1.bf16.msra.mxu0 %v3897
    %3932 = vmatprep.subr.bf16.mxu0 0
    %3933 = vmatpush2.bf16.msra.mxu0 0
    %3934 = vmatprep.subr.bf16.mxu0 0
    %3935 = vmatpush2.bf16.msra.mxu0 0
    %3936 = vmatprep.subr.bf16.mxu0 0
    %3937 = vmatpush2.bf16.msra.mxu0 0
    %3938 = vmatprep.subr.bf16.mxu0 0
    %3939 = vmatpush2.bf16.msra.mxu0 0
    %3940 = vmatprep.subr.bf16.mxu0 0
    %3941 = vmatpush2.bf16.msra.mxu0 0
    %3942 = vmatprep.subr.bf16.mxu0 0
    %3943 = vmatpush2.bf16.msra.mxu0 0
    %3944 = vmatprep.subr.bf16.mxu0 0
    %3945 = vmatpush2.bf16.msra.mxu0 0
    %3946 = vmatprep.subr.bf16.mxu0 0
    %3947 = vmatpush2.bf16.msra.mxu0 0
    %3948 = vmatprep.mubr.bf16.mxu0 0
    %3949 = vmatmul.mubr.bf16.gmra.mxu0 %v3914
    %v3950 = vpop.f32.mrf.mxu0
    %v3951 = vadd.f32 0.0, %v3950
    %v3952 = vpop.f32.mrf.mxu0
    %v3953 = vadd.f32 0.0, %v3952
    %v3954 = vpop.f32.mrf.mxu0
    %v3955 = vadd.f32 0.0, %v3954
    %v3956 = vpop.f32.mrf.mxu0
    %v3957 = vadd.f32 0.0, %v3956
    %3958 = vdwg.mxu0
    %v3959 = vld [vmem:[#allocation5 + $0x150] sm:$0xff]
    %v3960 = vld [vmem:[#allocation5 + $0x158] sm:$0xff]
    %v3961 = vld [vmem:[#allocation5 + $0x160] sm:$0xff]
    %v3962 = vld [vmem:[#allocation5 + $0x168] sm:$0xff]
    %v3963 = vld [vmem:[#allocation5 + $0x170] sm:$0xff]
    %v3964 = vld [vmem:[#allocation5 + $0x178] sm:$0xff]
    %v3965 = vld [vmem:[#allocation5 + $0x180] sm:$0xff]
    %v3966 = vld [vmem:[#allocation5 + $0x188] sm:$0xff]
    %v3975 = vunpack.c.l.b16 %v3959
    %v3976 = vunpack.c.h.b16 %v3959
    %v3977 = vunpack.c.l.b16 %v3960
    %v3978 = vunpack.c.h.b16 %v3960
    %v3979 = vunpack.c.l.b16 %v3961
    %v3980 = vunpack.c.h.b16 %v3961
    %v3981 = vunpack.c.l.b16 %v3962
    %v3982 = vunpack.c.h.b16 %v3962
    %v3983 = vunpack.c.l.b16 %v3963
    %v3984 = vunpack.c.h.b16 %v3963
    %v3985 = vunpack.c.l.b16 %v3964
    %v3986 = vunpack.c.h.b16 %v3964
    %v3987 = vunpack.c.l.b16 %v3965
    %v3988 = vunpack.c.h.b16 %v3965
    %v3989 = vunpack.c.l.b16 %v3966
    %v3990 = vunpack.c.h.b16 %v3966
    %v3991 = vpack.c.b16 %v3977, %v3975
    %v3992 = vpack.c.b16 %v3978, %v3976
    %v3993 = vpack.c.b16 %v3981, %v3979
    %v3994 = vpack.c.b16 %v3982, %v3980
    %v3995 = vpack.c.b16 %v3985, %v3983
    %v3996 = vpack.c.b16 %v3986, %v3984
    %v3997 = vpack.c.b16 %v3989, %v3987
    %v3998 = vpack.c.b16 %v3990, %v3988
    %4007 = vmatprep.subr.bf16.mxu0 0
    %4008 = vmatpush1.bf16.msra.mxu0 0
    %4009 = vmatprep.subr.bf16.mxu0 0
    %4010 = vmatpush1.bf16.msra.mxu0 0
    %4011 = vmatprep.subr.bf16.mxu0 0
    %4012 = vmatpush1.bf16.msra.mxu0 0
    %4013 = vmatprep.subr.bf16.mxu0 0
    %4014 = vmatpush1.bf16.msra.mxu0 0
    %4015 = vmatprep.subr.bf16.mxu0 %v3998
    %4016 = vmatpush1.bf16.msra.mxu0 %v3997
    %4017 = vmatprep.subr.bf16.mxu0 %v3996
    %4018 = vmatpush1.bf16.msra.mxu0 %v3995
    %4019 = vmatprep.subr.bf16.mxu0 %v3994
    %4020 = vmatpush1.bf16.msra.mxu0 %v3993
    %4021 = vmatprep.subr.bf16.mxu0 %v3992
    %4022 = vmatpush1.bf16.msra.mxu0 %v3991
    %4023 = vmatprep.subr.bf16.mxu0 0
    %4024 = vmatpush2.bf16.msra.mxu0 0
    %4025 = vmatprep.subr.bf16.mxu0 0
    %4026 = vmatpush2.bf16.msra.mxu0 0
    %4027 = vmatprep.subr.bf16.mxu0 0
    %4028 = vmatpush2.bf16.msra.mxu0 0
    %4029 = vmatprep.subr.bf16.mxu0 0
    %4030 = vmatpush2.bf16.msra.mxu0 0
    %4031 = vmatprep.subr.bf16.mxu0 0
    %4032 = vmatpush2.bf16.msra.mxu0 0
    %4033 = vmatprep.subr.bf16.mxu0 0
    %4034 = vmatpush2.bf16.msra.mxu0 0
    %4035 = vmatprep.subr.bf16.mxu0 0
    %4036 = vmatpush2.bf16.msra.mxu0 0
    %4037 = vmatprep.subr.bf16.mxu0 0
    %4038 = vmatpush2.bf16.msra.mxu0 0
    %4039 = vmatprep.mubr.bf16.mxu0 0
    %4040 = vmatmul.mubr.bf16.gmra.mxu0 %v3914
    %v4041 = vpop.f32.mrf.mxu0
    %v4042 = vadd.f32 0.0, %v4041
    %v4043 = vpop.f32.mrf.mxu0
    %v4044 = vadd.f32 0.0, %v4043
    %v4045 = vpop.f32.mrf.mxu0
    %v4046 = vadd.f32 0.0, %v4045
    %v4047 = vpop.f32.mrf.mxu0
    %v4048 = vadd.f32 0.0, %v4047
    %4049 = vdwg.mxu0
    %v4050 = vld [vmem:[#allocation5 + $0x190] sm:$0xff]
    %v4051 = vld [vmem:[#allocation5 + $0x198] sm:$0xff]
    %v4052 = vld [vmem:[#allocation5 + $0x1a0] sm:$0xff]
    %v4053 = vld [vmem:[#allocation5 + $0x1a8] sm:$0xff]
    %v4054 = vld [vmem:[#allocation5 + $0x1b0] sm:$0xff]
    %v4055 = vld [vmem:[#allocation5 + $0x1b8] sm:$0xff]
    %v4056 = vld [vmem:[#allocation5 + $0x1c0] sm:$0xff]
    %v4057 = vld [vmem:[#allocation5 + $0x1c8] sm:$0xff]
    %v4058 = vpack.c.bf16 %v412, %v409
    %v4059 = vpack.c.bf16 %v417, %v417
    %v4068 = vunpack.c.l.b16 %v4050
    %v4069 = vunpack.c.h.b16 %v4050
    %v4070 = vunpack.c.l.b16 %v4051
    %v4071 = vunpack.c.h.b16 %v4051
    %v4072 = vunpack.c.l.b16 %v4052
    %v4073 = vunpack.c.h.b16 %v4052
    %v4074 = vunpack.c.l.b16 %v4053
    %v4075 = vunpack.c.h.b16 %v4053
    %v4076 = vunpack.c.l.b16 %v4054
    %v4077 = vunpack.c.h.b16 %v4054
    %v4078 = vunpack.c.l.b16 %v4055
    %v4079 = vunpack.c.h.b16 %v4055
    %v4080 = vunpack.c.l.b16 %v4056
    %v4081 = vunpack.c.h.b16 %v4056
    %v4082 = vunpack.c.l.b16 %v4057
    %v4083 = vunpack.c.h.b16 %v4057
    %v4084 = vpack.c.b16 %v4070, %v4068
    %v4085 = vpack.c.b16 %v4071, %v4069
    %v4086 = vpack.c.b16 %v4074, %v4072
    %v4087 = vpack.c.b16 %v4075, %v4073
    %v4088 = vpack.c.b16 %v4078, %v4076
    %v4089 = vpack.c.b16 %v4079, %v4077
    %v4090 = vpack.c.b16 %v4082, %v4080
    %v4091 = vpack.c.b16 %v4083, %v4081
    %v4101 = vsel %vm471, %v4058, 0
    %v4104 = vsel %vm471, %v4059, 0
    %4106 = vmatprep.subr.bf16.mxu0 0
    %4107 = vmatpush1.bf16.msra.mxu0 0
    %4108 = vmatprep.subr.bf16.mxu0 0
    %4109 = vmatpush1.bf16.msra.mxu0 0
    %4110 = vmatprep.subr.bf16.mxu0 0
    %4111 = vmatpush1.bf16.msra.mxu0 0
    %4112 = vmatprep.subr.bf16.mxu0 0
    %4113 = vmatpush1.bf16.msra.mxu0 0
    %4114 = vmatprep.subr.bf16.mxu0 %v4091
    %4115 = vmatpush1.bf16.msra.mxu0 %v4090
    %4116 = vmatprep.subr.bf16.mxu0 %v4089
    %4117 = vmatpush1.bf16.msra.mxu0 %v4088
    %4118 = vmatprep.subr.bf16.mxu0 %v4087
    %4119 = vmatpush1.bf16.msra.mxu0 %v4086
    %4120 = vmatprep.subr.bf16.mxu0 %v4085
    %4121 = vmatpush1.bf16.msra.mxu0 %v4084
    %4122 = vmatprep.subr.bf16.mxu0 0
    %4123 = vmatpush2.bf16.msra.mxu0 0
    %4124 = vmatprep.subr.bf16.mxu0 0
    %4125 = vmatpush2.bf16.msra.mxu0 0
    %4126 = vmatprep.subr.bf16.mxu0 0
    %4127 = vmatpush2.bf16.msra.mxu0 0
    %4128 = vmatprep.subr.bf16.mxu0 0
    %4129 = vmatpush2.bf16.msra.mxu0 0
    %4130 = vmatprep.subr.bf16.mxu0 0
    %4131 = vmatpush2.bf16.msra.mxu0 0
    %4132 = vmatprep.subr.bf16.mxu0 0
    %4133 = vmatpush2.bf16.msra.mxu0 0
    %4134 = vmatprep.subr.bf16.mxu0 0
    %4135 = vmatpush2.bf16.msra.mxu0 0
    %4136 = vmatprep.subr.bf16.mxu0 0
    %4137 = vmatpush2.bf16.msra.mxu0 0
    %4138 = vmatprep.mubr.bf16.mxu0 0
    %4139 = vmatmul.mubr.bf16.gmra.mxu0 %v4101
    %v4140 = vpop.f32.mrf.mxu0
    %v4141 = vadd.f32 0.0, %v4140
    %v4142 = vpop.f32.mrf.mxu0
    %v4143 = vadd.f32 0.0, %v4142
    %v4144 = vpop.f32.mrf.mxu0
    %v4145 = vadd.f32 0.0, %v4144
    %v4146 = vpop.f32.mrf.mxu0
    %v4147 = vadd.f32 0.0, %v4146
    %4148 = vmatprep.mubr.bf16.mxu0 0
    %4149 = vmatmul.mubr.bf16.gmra.mxu0 %v4104
    %v4150 = vpop.f32.mrf.mxu0
    %v4151 = vadd.f32 0.0, %v4150
    %v4152 = vpop.f32.mrf.mxu0
    %v4153 = vadd.f32 0.0, %v4152
    %v4154 = vpop.f32.mrf.mxu0
    %v4155 = vpop.f32.mrf.mxu0
    %4156 = vdwg.mxu0
    %v4157 = vld [vmem:[#allocation5 + $0x1d0] sm:$0xff]
    %v4158 = vld [vmem:[#allocation5 + $0x1d8] sm:$0xff]
    %v4159 = vld [vmem:[#allocation5 + $0x1e0] sm:$0xff]
    %v4160 = vld [vmem:[#allocation5 + $0x1e8] sm:$0xff]
    %v4161 = vld [vmem:[#allocation5 + $0x1f0] sm:$0xff]
    %v4162 = vld [vmem:[#allocation5 + $0x1f8] sm:$0xff]
    %v4163 = vld [vmem:[#allocation5 + $0x200] sm:$0xff]
    %v4164 = vld [vmem:[#allocation5 + $0x208] sm:$0xff]
    %v4173 = vunpack.c.l.b16 %v4157
    %v4174 = vunpack.c.h.b16 %v4157
    %v4175 = vunpack.c.l.b16 %v4158
    %v4176 = vunpack.c.h.b16 %v4158
    %v4177 = vunpack.c.l.b16 %v4159
    %v4178 = vunpack.c.h.b16 %v4159
    %v4179 = vunpack.c.l.b16 %v4160
    %v4180 = vunpack.c.h.b16 %v4160
    %v4181 = vunpack.c.l.b16 %v4161
    %v4182 = vunpack.c.h.b16 %v4161
    %v4183 = vunpack.c.l.b16 %v4162
    %v4184 = vunpack.c.h.b16 %v4162
    %v4185 = vunpack.c.l.b16 %v4163
    %v4186 = vunpack.c.h.b16 %v4163
    %v4187 = vunpack.c.l.b16 %v4164
    %v4188 = vunpack.c.h.b16 %v4164
    %v4189 = vpack.c.b16 %v4175, %v4173
    %v4190 = vpack.c.b16 %v4176, %v4174
    %v4191 = vpack.c.b16 %v4179, %v4177
    %v4192 = vpack.c.b16 %v4180, %v4178
    %v4193 = vpack.c.b16 %v4183, %v4181
    %v4194 = vpack.c.b16 %v4184, %v4182
    %v4195 = vpack.c.b16 %v4187, %v4185
    %v4196 = vpack.c.b16 %v4188, %v4186
    %4205 = vmatprep.subr.bf16.mxu0 0
    %4206 = vmatpush1.bf16.msra.mxu0 0
    %4207 = vmatprep.subr.bf16.mxu0 0
    %4208 = vmatpush1.bf16.msra.mxu0 0
    %4209 = vmatprep.subr.bf16.mxu0 0
    %4210 = vmatpush1.bf16.msra.mxu0 0
    %4211 = vmatprep.subr.bf16.mxu0 0
    %4212 = vmatpush1.bf16.msra.mxu0 0
    %4213 = vmatprep.subr.bf16.mxu0 %v4196
    %4214 = vmatpush1.bf16.msra.mxu0 %v4195
    %4215 = vmatprep.subr.bf16.mxu0 %v4194
    %4216 = vmatpush1.bf16.msra.mxu0 %v4193
    %4217 = vmatprep.subr.bf16.mxu0 %v4192
    %4218 = vmatpush1.bf16.msra.mxu0 %v4191
    %4219 = vmatprep.subr.bf16.mxu0 %v4190
    %4220 = vmatpush1.bf16.msra.mxu0 %v4189
    %4221 = vmatprep.subr.bf16.mxu0 0
    %4222 = vmatpush2.bf16.msra.mxu0 0
    %4223 = vmatprep.subr.bf16.mxu0 0
    %4224 = vmatpush2.bf16.msra.mxu0 0
    %4225 = vmatprep.subr.bf16.mxu0 0
    %4226 = vmatpush2.bf16.msra.mxu0 0
    %4227 = vmatprep.subr.bf16.mxu0 0
    %4228 = vmatpush2.bf16.msra.mxu0 0
    %4229 = vmatprep.subr.bf16.mxu0 0
    %4230 = vmatpush2.bf16.msra.mxu0 0
    %4231 = vmatprep.subr.bf16.mxu0 0
    %4232 = vmatpush2.bf16.msra.mxu0 0
    %4233 = vmatprep.subr.bf16.mxu0 0
    %4234 = vmatpush2.bf16.msra.mxu0 0
    %4235 = vmatprep.subr.bf16.mxu0 0
    %4236 = vmatpush2.bf16.msra.mxu0 0
    %4237 = vmatprep.mubr.bf16.mxu0 0
    %4238 = vmatmul.mubr.bf16.gmra.mxu0 %v3914
    %v4239 = vpop.f32.mrf.mxu0
    %v4240 = vadd.f32 0.0, %v4239
    %v4241 = vpop.f32.mrf.mxu0
    %v4242 = vadd.f32 0.0, %v4241
    %v4243 = vpop.f32.mrf.mxu0
    %v4244 = vadd.f32 0.0, %v4243
    %v4245 = vpop.f32.mrf.mxu0
    %v4246 = vadd.f32 0.0, %v4245
    %4247 = vdwg.mxu0
    %v4248 = vpack.c.bf16 %v3955, %v3951
    %v4249 = vpack.c.bf16 %v3957, %v3953
    %v4250 = vpack.c.bf16 %v4046, %v4042
    %v4251 = vpack.c.bf16 %v4048, %v4044
    %v4255 = vunpack.c.l.b16 %v208
    %v4256 = vunpack.c.l.b16 %v209
    %v4257 = vunpack.c.l.b16 %v210
    %v4258 = vpack.c.b16 %v4256, %v4255
    %v4259 = vpack.c.b16 %v4257, %v4257
    %v4261 = vsel %vm823, %v4258, 0
    %v4264 = vsel %vm823, %v4259, 0
    %4266 = vmatprep.subr.bf16.mxu0 0
    %4267 = vmatpush1.bf16.msra.mxu0 0
    %4268 = vmatprep.subr.bf16.mxu0 0
    %4269 = vmatpush1.bf16.msra.mxu0 0
    %4270 = vmatprep.subr.bf16.mxu0 0
    %4271 = vmatpush1.bf16.msra.mxu0 0
    %4272 = vmatprep.subr.bf16.mxu0 0
    %4273 = vmatpush1.bf16.msra.mxu0 0
    %4274 = vmatprep.subr.bf16.mxu0 0
    %4275 = vmatpush1.bf16.msra.mxu0 0
    %4276 = vmatprep.subr.bf16.mxu0 0
    %4277 = vmatpush1.bf16.msra.mxu0 0
    %4278 = vmatprep.subr.bf16.mxu0 0
    %4279 = vmatpush1.bf16.msra.mxu0 0
    %4280 = vmatprep.subr.bf16.mxu0 %v4251
    %4281 = vmatpush1.bf16.msra.mxu0 %v4250
    %4282 = vmatprep.subr.bf16.mxu0 0
    %4283 = vmatpush2.bf16.msra.mxu0 0
    %4284 = vmatprep.subr.bf16.mxu0 0
    %4285 = vmatpush2.bf16.msra.mxu0 0
    %4286 = vmatprep.subr.bf16.mxu0 0
    %4287 = vmatpush2.bf16.msra.mxu0 0
    %4288 = vmatprep.subr.bf16.mxu0 0
    %4289 = vmatpush2.bf16.msra.mxu0 0
    %4290 = vmatprep.subr.bf16.mxu0 0
    %4291 = vmatpush2.bf16.msra.mxu0 0
    %4292 = vmatprep.subr.bf16.mxu0 0
    %4293 = vmatpush2.bf16.msra.mxu0 0
    %4294 = vmatprep.subr.bf16.mxu0 0
    %4295 = vmatpush2.bf16.msra.mxu0 0
    %4296 = vmatprep.subr.bf16.mxu0 0
    %4297 = vmatpush2.bf16.msra.mxu0 0
    %4298 = vmatprep.mubr.bf16.mxu0 0
    %4299 = vmatmul.mubr.bf16.gmra.mxu0 %v4261
    %v4300 = vpop.f32.mrf.mxu0
    %v4301 = vadd.f32 0.0, %v4300
    %v4302 = vpop.f32.mrf.mxu0
    %v4303 = vadd.f32 0.0, %v4302
    %v4304 = vpop.f32.mrf.mxu0
    %v4305 = vadd.f32 0.0, %v4304
    %v4306 = vpop.f32.mrf.mxu0
    %v4307 = vadd.f32 0.0, %v4306
    %4308 = vmatprep.mubr.bf16.mxu0 0
    %4309 = vmatmul.mubr.bf16.gmra.mxu0 %v4264
    %v4310 = vpop.f32.mrf.mxu0
    %v4311 = vadd.f32 0.0, %v4310
    %v4312 = vpop.f32.mrf.mxu0
    %v4313 = vadd.f32 0.0, %v4312
    %v4314 = vpop.f32.mrf.mxu0
    %v4315 = vpop.f32.mrf.mxu0
    %4316 = vdwg.mxu0
    %v4320 = vunpack.c.l.b16 %v205
    %v4321 = vunpack.c.l.b16 %v206
    %v4322 = vunpack.c.l.b16 %v207
    %v4323 = vpack.c.b16 %v4321, %v4320
    %v4324 = vpack.c.b16 %v4322, %v4322
    %v4326 = vsel %vm823, %v4323, 0
    %v4329 = vsel %vm823, %v4324, 0
    %4331 = vmatprep.subr.bf16.mxu0 0
    %4332 = vmatpush1.bf16.msra.mxu0 0
    %4333 = vmatprep.subr.bf16.mxu0 0
    %4334 = vmatpush1.bf16.msra.mxu0 0
    %4335 = vmatprep.subr.bf16.mxu0 0
    %4336 = vmatpush1.bf16.msra.mxu0 0
    %4337 = vmatprep.subr.bf16.mxu0 0
    %4338 = vmatpush1.bf16.msra.mxu0 0
    %4339 = vmatprep.subr.bf16.mxu0 0
    %4340 = vmatpush1.bf16.msra.mxu0 0
    %4341 = vmatprep.subr.bf16.mxu0 0
    %4342 = vmatpush1.bf16.msra.mxu0 0
    %4343 = vmatprep.subr.bf16.mxu0 0
    %4344 = vmatpush1.bf16.msra.mxu0 0
    %4345 = vmatprep.subr.bf16.mxu0 %v4249
    %4346 = vmatpush1.bf16.msra.mxu0 %v4248
    %4347 = vmatprep.subr.bf16.mxu0 0
    %4348 = vmatpush2.bf16.msra.mxu0 0
    %4349 = vmatprep.subr.bf16.mxu0 0
    %4350 = vmatpush2.bf16.msra.mxu0 0
    %4351 = vmatprep.subr.bf16.mxu0 0
    %4352 = vmatpush2.bf16.msra.mxu0 0
    %4353 = vmatprep.subr.bf16.mxu0 0
    %4354 = vmatpush2.bf16.msra.mxu0 0
    %4355 = vmatprep.subr.bf16.mxu0 0
    %4356 = vmatpush2.bf16.msra.mxu0 0
    %4357 = vmatprep.subr.bf16.mxu0 0
    %4358 = vmatpush2.bf16.msra.mxu0 0
    %4359 = vmatprep.subr.bf16.mxu0 0
    %4360 = vmatpush2.bf16.msra.mxu0 0
    %4361 = vmatprep.subr.bf16.mxu0 0
    %4362 = vmatpush2.bf16.msra.mxu0 0
    %4363 = vmatprep.mubr.bf16.mxu0 0
    %4364 = vmatmul.mubr.bf16.gmra.mxu0 %v4326
    %v4365 = vpop.f32.mrf.mxu0
    %v4366 = vadd.f32 %v4301, %v4365
    %v4367 = vpop.f32.mrf.mxu0
    %v4368 = vadd.f32 %v4303, %v4367
    %v4369 = vpop.f32.mrf.mxu0
    %v4370 = vadd.f32 %v4305, %v4369
    %v4371 = vpop.f32.mrf.mxu0
    %v4372 = vadd.f32 %v4307, %v4371
    %4373 = vmatprep.mubr.bf16.mxu0 0
    %4374 = vmatmul.mubr.bf16.gmra.mxu0 %v4329
    %v4375 = vpop.f32.mrf.mxu0
    %v4376 = vadd.f32 %v4311, %v4375
    %v4377 = vpop.f32.mrf.mxu0
    %v4378 = vadd.f32 %v4313, %v4377
    %v4379 = vpop.f32.mrf.mxu0
    %v4380 = vpop.f32.mrf.mxu0
    %4381 = vdwg.mxu0
    %v4382 = vadd.f32 %v4366, %v4141
    %v4383 = vadd.f32 %v4368, %v4143
    %v4384 = vadd.f32 %v4370, %v4145
    %v4385 = vadd.f32 %v4372, %v4147
    %v4386 = vadd.f32 %v4376, %v4151
    %v4387 = vadd.f32 %v4378, %v4153
    %v4389 = vlaneseq
    %v4390 = vshrl.u32 %v4389, 7
    %v4391 = vsub.s32 0, %v4390
    %v4392 = vrot.slane %v102, %v4391
    %v4393 = vlaneseq
    %v4394 = vshrl.u32 %v4393, 7
    %v4395 = vsub.s32 1, %v4394
    %v4396 = vrot.slane %v102, %v4395
    %v4399 = vadd.f32 %v4382, %v4392
    %v4400 = vadd.f32 %v4383, %v4396
    %v4401 = vadd.f32 %v4384, %v4392
    %v4402 = vadd.f32 %v4385, %v4396
    %v4403 = vadd.f32 %v4386, %v4392
    %v4404 = vadd.f32 %v4387, %v4396
    %vm4405 = vcmp.gt.f32.partialorder %v4399, 0.0
    %vm4406 = vcmp.gt.f32.partialorder %v4400, 0.0
    %vm4407 = vcmp.gt.f32.partialorder %v4401, 0.0
    %vm4408 = vcmp.gt.f32.partialorder %v4402, 0.0
    %vm4409 = vcmp.gt.f32.partialorder %v4403, 0.0
    %vm4410 = vcmp.gt.f32.partialorder %v4404, 0.0
    %v4411 = vmul.f32 %v4399, 0.01
    %v4412 = vmul.f32 %v4400, 0.01
    %v4413 = vmul.f32 %v4401, 0.01
    %v4414 = vmul.f32 %v4402, 0.01
    %v4415 = vmul.f32 %v4403, 0.01
    %v4416 = vmul.f32 %v4404, 0.01
    %v4417 = vsel %vm4405, %v4399, %v4411
    %v4418 = vsel %vm4406, %v4400, %v4412
    %v4419 = vsel %vm4407, %v4401, %v4413
    %v4420 = vsel %vm4408, %v4402, %v4414
    %v4421 = vsel %vm4409, %v4403, %v4415
    %v4422 = vsel %vm4410, %v4404, %v4416
    %v4423 = vpack.c.bf16 %v4419, %v4417
    %v4424 = vpack.c.bf16 %v4420, %v4418
    %v4425 = vpack.c.bf16 %v4421, %v4421
    %v4426 = vpack.c.bf16 %v4422, %v4422
    %v4459 = vunpack.c.l.b16 %v161
    %v4460 = vunpack.c.l.b16 %v162
    %v4461 = vunpack.c.l.b16 %v163
    %v4462 = vunpack.c.l.b16 %v164
    %v4463 = vunpack.c.l.b16 %v165
    %v4464 = vunpack.c.l.b16 %v166
    %v4465 = vunpack.c.l.b16 %v167
    %v4466 = vunpack.c.l.b16 %v168
    %v4467 = vunpack.c.l.b16 %v169
    %v4468 = vunpack.c.l.b16 %v170
    %v4469 = vunpack.c.l.b16 %v171
    %v4470 = vunpack.c.l.b16 %v172
    %v4471 = vunpack.c.l.b16 %v173
    %v4472 = vunpack.c.l.b16 %v174
    %v4473 = vunpack.c.l.b16 %v175
    %v4474 = vunpack.c.l.b16 %v176
    %v4475 = vunpack.c.l.b16 %v177
    %v4476 = vunpack.c.l.b16 %v178
    %v4477 = vunpack.c.l.b16 %v179
    %v4478 = vunpack.c.l.b16 %v180
    %v4479 = vunpack.c.l.b16 %v181
    %v4480 = vunpack.c.l.b16 %v182
    %v4481 = vunpack.c.l.b16 %v183
    %v4482 = vunpack.c.l.b16 %v184
    %v4483 = vunpack.c.l.b16 %v185
    %v4484 = vunpack.c.l.b16 %v186
    %v4485 = vunpack.c.l.b16 %v187
    %v4486 = vunpack.c.l.b16 %v188
    %v4487 = vunpack.c.l.b16 %v189
    %v4488 = vunpack.c.l.b16 %v190
    %v4489 = vunpack.c.l.b16 %v191
    %v4490 = vunpack.c.l.b16 %v192
    %v4491 = vpack.c.b16 %v4460, %v4459
    %v4492 = vpack.c.b16 %v4462, %v4461
    %v4493 = vpack.c.b16 %v4464, %v4463
    %v4494 = vpack.c.b16 %v4466, %v4465
    %v4495 = vpack.c.b16 %v4468, %v4467
    %v4496 = vpack.c.b16 %v4470, %v4469
    %v4497 = vpack.c.b16 %v4472, %v4471
    %v4498 = vpack.c.b16 %v4474, %v4473
    %v4499 = vpack.c.b16 %v4476, %v4475
    %v4500 = vpack.c.b16 %v4478, %v4477
    %v4501 = vpack.c.b16 %v4480, %v4479
    %v4502 = vpack.c.b16 %v4482, %v4481
    %v4503 = vpack.c.b16 %v4484, %v4483
    %v4504 = vpack.c.b16 %v4486, %v4485
    %v4505 = vpack.c.b16 %v4488, %v4487
    %v4506 = vpack.c.b16 %v4490, %v4489
    %4523 = vmatprep.subr.bf16.mxu0 0
    %4524 = vmatpush1.bf16.msra.mxu0 %v4498
    %4525 = vmatprep.subr.bf16.mxu0 0
    %4526 = vmatpush1.bf16.msra.mxu0 %v4497
    %4527 = vmatprep.subr.bf16.mxu0 0
    %4528 = vmatpush1.bf16.msra.mxu0 %v4496
    %4529 = vmatprep.subr.bf16.mxu0 0
    %4530 = vmatpush1.bf16.msra.mxu0 %v4495
    %4531 = vmatprep.subr.bf16.mxu0 0
    %4532 = vmatpush1.bf16.msra.mxu0 %v4494
    %4533 = vmatprep.subr.bf16.mxu0 0
    %4534 = vmatpush1.bf16.msra.mxu0 %v4493
    %4535 = vmatprep.subr.bf16.mxu0 0
    %4536 = vmatpush1.bf16.msra.mxu0 %v4492
    %4537 = vmatprep.subr.bf16.mxu0 0
    %4538 = vmatpush1.bf16.msra.mxu0 %v4491
    %4539 = vmatprep.subr.bf16.mxu0 0
    %4540 = vmatpush2.bf16.msra.mxu0 %v4506
    %4541 = vmatprep.subr.bf16.mxu0 0
    %4542 = vmatpush2.bf16.msra.mxu0 %v4505
    %4543 = vmatprep.subr.bf16.mxu0 0
    %4544 = vmatpush2.bf16.msra.mxu0 %v4504
    %4545 = vmatprep.subr.bf16.mxu0 0
    %4546 = vmatpush2.bf16.msra.mxu0 %v4503
    %4547 = vmatprep.subr.bf16.mxu0 0
    %4548 = vmatpush2.bf16.msra.mxu0 %v4502
    %4549 = vmatprep.subr.bf16.mxu0 0
    %4550 = vmatpush2.bf16.msra.mxu0 %v4501
    %4551 = vmatprep.subr.bf16.mxu0 0
    %4552 = vmatpush2.bf16.msra.mxu0 %v4500
    %4553 = vmatprep.subr.bf16.mxu0 0
    %4554 = vmatpush2.bf16.msra.mxu0 %v4499
    %4555 = vmatprep.mubr.bf16.mxu0 %v4424
    %4556 = vmatmul.mubr.bf16.gmra.mxu0 %v4423
    %v4557 = vpop.f32.mrf.mxu0
    %v4558 = vadd.f32 0.0, %v4557
    %v4559 = vpop.f32.mrf.mxu0
    %v4560 = vpop.f32.mrf.mxu0
    %v4561 = vadd.f32 0.0, %v4560
    %v4562 = vpop.f32.mrf.mxu0
    %4563 = vmatprep.mubr.bf16.mxu0 %v4426
    %4564 = vmatmul.mubr.bf16.gmra.mxu0 %v4425
    %v4565 = vpop.f32.mrf.mxu0
    %v4566 = vadd.f32 0.0, %v4565
    %v4567 = vpop.f32.mrf.mxu0
    %v4568 = vpop.f32.mrf.mxu0
    %v4569 = vpop.f32.mrf.mxu0
    %4570 = vdwg.mxu0
    %v4571 = vsel %vm303, %v4558, -inf
    %v4572 = vsel %vm303, %v4561, -inf
    %v4573 = vsel %vm303, %v4566, -inf
    %v4574 = vmax.f32 %v4571, %v4572
    %v4575 = vmax.f32 %v4574, %v4573
    %v4576 = vrot.slane %v4575, 4
    %v4577 = vmax.f32 %v4575, %v4576
    %v4578 = vrot.slane %v4577, 2
    %v4579 = vmax.f32 %v4577, %v4578
    %v4580 = vrot.slane %v4579, 1
    %v4581 = vmax.f32 %v4579, %v4580
    %v4582 = vsub.f32 %v4558, %v4581
    %v4583 = vsub.f32 %v4561, %v4581
    %v4584 = vsub.f32 %v4566, %v4581
    %v4585 = vmul.f32 %v4582, 1.442695
    %v4586 = vpow.pop %v4585
    %v4587 = vmul.f32 %v4583, 1.442695
    %v4588 = vpow.pop %v4587
    %v4589 = vmul.f32 %v4584, 1.442695
    %v4590 = vpow.pop %v4589
    %v4591 = vpack.c.bf16 %v4588, %v4586
    %v4592 = vpack.c.bf16 %v4590, %v4590
    %v4595 = vunpack.c.l.b16 %v211
    %v4596 = vunpack.c.l.b16 %v212
    %v4597 = vpack.c.b16 %v4596, %v4595
    %vm4598 = vcmask 195584
    %v4600 = vsel %vm4598, %v4597, 0
    %vm4602 = vcmask 1043456
    %v4604 = vsel %vm4602, %v4592, 0
    %4606 = vmatprep.subr.bf16.mxu0 0
    %4607 = vmatpush1.bf16.msra.mxu0 0
    %4608 = vmatprep.subr.bf16.mxu0 0
    %4609 = vmatpush1.bf16.msra.mxu0 0
    %4610 = vmatprep.subr.bf16.mxu0 0
    %4611 = vmatpush1.bf16.msra.mxu0 0
    %4612 = vmatprep.subr.bf16.mxu0 0
    %4613 = vmatpush1.bf16.msra.mxu0 0
    %4614 = vmatprep.subr.bf16.mxu0 0
    %4615 = vmatpush1.bf16.msra.mxu0 0
    %4616 = vmatprep.subr.bf16.mxu0 0
    %4617 = vmatpush1.bf16.msra.mxu0 0
    %4618 = vmatprep.subr.bf16.mxu0 0
    %4619 = vmatpush1.bf16.msra.mxu0 %v4604
    %4620 = vmatprep.subr.bf16.mxu0 0
    %4621 = vmatpush1.bf16.msra.mxu0 %v4591
    %4622 = vmatprep.subr.bf16.mxu0 0
    %4623 = vmatpush2.bf16.msra.mxu0 0
    %4624 = vmatprep.subr.bf16.mxu0 0
    %4625 = vmatpush2.bf16.msra.mxu0 0
    %4626 = vmatprep.subr.bf16.mxu0 0
    %4627 = vmatpush2.bf16.msra.mxu0 0
    %4628 = vmatprep.subr.bf16.mxu0 0
    %4629 = vmatpush2.bf16.msra.mxu0 0
    %4630 = vmatprep.subr.bf16.mxu0 0
    %4631 = vmatpush2.bf16.msra.mxu0 0
    %4632 = vmatprep.subr.bf16.mxu0 0
    %4633 = vmatpush2.bf16.msra.mxu0 0
    %4634 = vmatprep.subr.bf16.mxu0 0
    %4635 = vmatpush2.bf16.msra.mxu0 0
    %4636 = vmatprep.subr.bf16.mxu0 0
    %4637 = vmatpush2.bf16.msra.mxu0 0
    %4638 = vmatprep.mubr.bf16.mxu0 0
    %4639 = vmatmul.mubr.bf16.gmra.mxu0 %v4600
    %v4640 = vpop.f32.mrf.mxu0
    %v4641 = vadd.f32 0.0, %v4640
    %v4642 = vpop.f32.mrf.mxu0
    %v4643 = vpop.f32.mrf.mxu0
    %v4644 = vadd.f32 0.0, %v4643
    %v4645 = vpop.f32.mrf.mxu0
    %4646 = vdwg.mxu0
    %v4647 = vmax.f32 %v4641, 1e-30
    %v4648 = vmax.f32 %v4644, 1e-30
    %v4649 = vrcp.pop %v4647
    %v4650 = vmul.f32 1.0, %v4649
    %v4651 = vrcp.pop %v4648
    %v4652 = vmul.f32 1.0, %v4651
    %v4653 = vpack.c.bf16 %v4652, %v4650
    %v4655 = vunpack.c.l.b16 %v193
    %v4656 = vunpack.c.h.b16 %v193
    %v4657 = vpack.c.b16 %v4655, %v4655
    %v4658 = vpack.c.b16 %v4656, %v4656
    %v4660 = vsel %vm303, %v4653, 0
    %v4663 = vsel %vm310, %v4657, 0
    %v4666 = vsel %vm310, %v4658, 0
    %4668 = vmatprep.subr.bf16.mxu0 0
    %4669 = vmatpush1.bf16.msra.mxu0 0
    %4670 = vmatprep.subr.bf16.mxu0 0
    %4671 = vmatpush1.bf16.msra.mxu0 0
    %4672 = vmatprep.subr.bf16.mxu0 0
    %4673 = vmatpush1.bf16.msra.mxu0 0
    %4674 = vmatprep.subr.bf16.mxu0 0
    %4675 = vmatpush1.bf16.msra.mxu0 0
    %4676 = vmatprep.subr.bf16.mxu0 0
    %4677 = vmatpush1.bf16.msra.mxu0 0
    %4678 = vmatprep.subr.bf16.mxu0 0
    %4679 = vmatpush1.bf16.msra.mxu0 0
    %4680 = vmatprep.subr.bf16.mxu0 0
    %4681 = vmatpush1.bf16.msra.mxu0 0
    %4682 = vmatprep.subr.bf16.mxu0 %v4666
    %4683 = vmatpush1.bf16.msra.mxu0 %v4663
    %4684 = vmatprep.subr.bf16.mxu0 0
    %4685 = vmatpush2.bf16.msra.mxu0 0
    %4686 = vmatprep.subr.bf16.mxu0 0
    %4687 = vmatpush2.bf16.msra.mxu0 0
    %4688 = vmatprep.subr.bf16.mxu0 0
    %4689 = vmatpush2.bf16.msra.mxu0 0
    %4690 = vmatprep.subr.bf16.mxu0 0
    %4691 = vmatpush2.bf16.msra.mxu0 0
    %4692 = vmatprep.subr.bf16.mxu0 0
    %4693 = vmatpush2.bf16.msra.mxu0 0
    %4694 = vmatprep.subr.bf16.mxu0 0
    %4695 = vmatpush2.bf16.msra.mxu0 0
    %4696 = vmatprep.subr.bf16.mxu0 0
    %4697 = vmatpush2.bf16.msra.mxu0 0
    %4698 = vmatprep.subr.bf16.mxu0 0
    %4699 = vmatpush2.bf16.msra.mxu0 0
    %4700 = vmatprep.mubr.bf16.mxu0 0
    %4701 = vmatmul.mubr.bf16.gmra.mxu0 %v4660
    %v4702 = vpop.f32.mrf.mxu0
    %v4703 = vadd.f32 0.0, %v4702
    %v4704 = vpop.f32.mrf.mxu0
    %v4705 = vadd.f32 0.0, %v4704
    %v4706 = vpop.f32.mrf.mxu0
    %v4707 = vadd.f32 0.0, %v4706
    %v4708 = vpop.f32.mrf.mxu0
    %v4709 = vadd.f32 0.0, %v4708
    %4710 = vdwg.mxu0
    %v4711 = vpack.c.bf16 %v4707, %v4703
    %v4712 = vpack.c.bf16 %v4709, %v4705
    %4713 = vmatprep.subr.bf16.mxu0 0
    %4714 = vmatpush1.bf16.msra.mxu0 0
    %4715 = vmatprep.subr.bf16.mxu0 0
    %4716 = vmatpush1.bf16.msra.mxu0 0
    %4717 = vmatprep.subr.bf16.mxu0 0
    %4718 = vmatpush1.bf16.msra.mxu0 0
    %4719 = vmatprep.subr.bf16.mxu0 0
    %4720 = vmatpush1.bf16.msra.mxu0 0
    %4721 = vmatprep.subr.bf16.mxu0 0
    %4722 = vmatpush1.bf16.msra.mxu0 0
    %4723 = vmatprep.subr.bf16.mxu0 0
    %4724 = vmatpush1.bf16.msra.mxu0 0
    %4725 = vmatprep.subr.bf16.mxu0 0
    %4726 = vmatpush1.bf16.msra.mxu0 0
    %4727 = vmatprep.subr.bf16.mxu0 %v4712
    %4728 = vmatpush1.bf16.msra.mxu0 %v4711
    %4729 = vmatprep.subr.bf16.mxu0 0
    %4730 = vmatpush2.bf16.msra.mxu0 0
    %4731 = vmatprep.subr.bf16.mxu0 0
    %4732 = vmatpush2.bf16.msra.mxu0 0
    %4733 = vmatprep.subr.bf16.mxu0 0
    %4734 = vmatpush2.bf16.msra.mxu0 0
    %4735 = vmatprep.subr.bf16.mxu0 0
    %4736 = vmatpush2.bf16.msra.mxu0 0
    %4737 = vmatprep.subr.bf16.mxu0 0
    %4738 = vmatpush2.bf16.msra.mxu0 0
    %4739 = vmatprep.subr.bf16.mxu0 0
    %4740 = vmatpush2.bf16.msra.mxu0 0
    %4741 = vmatprep.subr.bf16.mxu0 0
    %4742 = vmatpush2.bf16.msra.mxu0 0
    %4743 = vmatprep.subr.bf16.mxu0 0
    %4744 = vmatpush2.bf16.msra.mxu0 0
    %4745 = vmatprep.mubr.bf16.mxu0 0
    %4746 = vmatmul.mubr.bf16.gmra.mxu0 %v4261
    %v4747 = vpop.f32.mrf.mxu0
    %v4748 = vadd.f32 0.0, %v4747
    %v4749 = vpop.f32.mrf.mxu0
    %v4750 = vadd.f32 0.0, %v4749
    %v4751 = vpop.f32.mrf.mxu0
    %v4752 = vadd.f32 0.0, %v4751
    %v4753 = vpop.f32.mrf.mxu0
    %v4754 = vadd.f32 0.0, %v4753
    %4755 = vmatprep.mubr.bf16.mxu0 0
    %4756 = vmatmul.mubr.bf16.gmra.mxu0 %v4264
    %v4757 = vpop.f32.mrf.mxu0
    %v4758 = vadd.f32 0.0, %v4757
    %v4759 = vpop.f32.mrf.mxu0
    %v4760 = vadd.f32 0.0, %v4759
    %v4761 = vpop.f32.mrf.mxu0
    %v4762 = vpop.f32.mrf.mxu0
    %4763 = vdwg.mxu0
    %v4765 = vsel %vm303, %v4591, 0
    %v4767 = vsel %vm303, %v4592, 0
    %4769 = vmatprep.subr.bf16.mxu0 0
    %4770 = vmatpush1.bf16.msra.mxu0 0
    %4771 = vmatprep.subr.bf16.mxu0 0
    %4772 = vmatpush1.bf16.msra.mxu0 0
    %4773 = vmatprep.subr.bf16.mxu0 0
    %4774 = vmatpush1.bf16.msra.mxu0 0
    %4775 = vmatprep.subr.bf16.mxu0 0
    %4776 = vmatpush1.bf16.msra.mxu0 0
    %4777 = vmatprep.subr.bf16.mxu0 0
    %4778 = vmatpush1.bf16.msra.mxu0 0
    %4779 = vmatprep.subr.bf16.mxu0 0
    %4780 = vmatpush1.bf16.msra.mxu0 0
    %4781 = vmatprep.subr.bf16.mxu0 0
    %4782 = vmatpush1.bf16.msra.mxu0 0
    %4783 = vmatprep.subr.bf16.mxu0 %v4666
    %4784 = vmatpush1.bf16.msra.mxu0 %v4663
    %4785 = vmatprep.subr.bf16.mxu0 0
    %4786 = vmatpush2.bf16.msra.mxu0 0
    %4787 = vmatprep.subr.bf16.mxu0 0
    %4788 = vmatpush2.bf16.msra.mxu0 0
    %4789 = vmatprep.subr.bf16.mxu0 0
    %4790 = vmatpush2.bf16.msra.mxu0 0
    %4791 = vmatprep.subr.bf16.mxu0 0
    %4792 = vmatpush2.bf16.msra.mxu0 0
    %4793 = vmatprep.subr.bf16.mxu0 0
    %4794 = vmatpush2.bf16.msra.mxu0 0
    %4795 = vmatprep.subr.bf16.mxu0 0
    %4796 = vmatpush2.bf16.msra.mxu0 0
    %4797 = vmatprep.subr.bf16.mxu0 0
    %4798 = vmatpush2.bf16.msra.mxu0 0
    %4799 = vmatprep.subr.bf16.mxu0 0
    %4800 = vmatpush2.bf16.msra.mxu0 0
    %4801 = vmatprep.mubr.bf16.mxu0 0
    %4802 = vmatmul.mubr.bf16.gmra.mxu0 %v4765
    %v4803 = vpop.f32.mrf.mxu0
    %v4804 = vadd.f32 0.0, %v4803
    %v4805 = vpop.f32.mrf.mxu0
    %v4806 = vadd.f32 0.0, %v4805
    %v4807 = vpop.f32.mrf.mxu0
    %v4808 = vadd.f32 0.0, %v4807
    %v4809 = vpop.f32.mrf.mxu0
    %v4810 = vadd.f32 0.0, %v4809
    %4811 = vmatprep.mubr.bf16.mxu0 0
    %4812 = vmatmul.mubr.bf16.gmra.mxu0 %v4767
    %v4813 = vpop.f32.mrf.mxu0
    %v4814 = vadd.f32 0.0, %v4813
    %v4815 = vpop.f32.mrf.mxu0
    %v4816 = vadd.f32 0.0, %v4815
    %v4817 = vpop.f32.mrf.mxu0
    %v4818 = vpop.f32.mrf.mxu0
    %4819 = vdwg.mxu0
    %v4820 = vpack.c.bf16 %v4244, %v4240
    %v4821 = vpack.c.bf16 %v4246, %v4242
    %4822 = vmatprep.subr.bf16.mxu0 0
    %4823 = vmatpush1.bf16.msra.mxu0 0
    %4824 = vmatprep.subr.bf16.mxu0 0
    %4825 = vmatpush1.bf16.msra.mxu0 0
    %4826 = vmatprep.subr.bf16.mxu0 0
    %4827 = vmatpush1.bf16.msra.mxu0 0
    %4828 = vmatprep.subr.bf16.mxu0 0
    %4829 = vmatpush1.bf16.msra.mxu0 0
    %4830 = vmatprep.subr.bf16.mxu0 0
    %4831 = vmatpush1.bf16.msra.mxu0 0
    %4832 = vmatprep.subr.bf16.mxu0 0
    %4833 = vmatpush1.bf16.msra.mxu0 0
    %4834 = vmatprep.subr.bf16.mxu0 0
    %4835 = vmatpush1.bf16.msra.mxu0 0
    %4836 = vmatprep.subr.bf16.mxu0 %v4821
    %4837 = vmatpush1.bf16.msra.mxu0 %v4820
    %4838 = vmatprep.subr.bf16.mxu0 0
    %4839 = vmatpush2.bf16.msra.mxu0 0
    %4840 = vmatprep.subr.bf16.mxu0 0
    %4841 = vmatpush2.bf16.msra.mxu0 0
    %4842 = vmatprep.subr.bf16.mxu0 0
    %4843 = vmatpush2.bf16.msra.mxu0 0
    %4844 = vmatprep.subr.bf16.mxu0 0
    %4845 = vmatpush2.bf16.msra.mxu0 0
    %4846 = vmatprep.subr.bf16.mxu0 0
    %4847 = vmatpush2.bf16.msra.mxu0 0
    %4848 = vmatprep.subr.bf16.mxu0 0
    %4849 = vmatpush2.bf16.msra.mxu0 0
    %4850 = vmatprep.subr.bf16.mxu0 0
    %4851 = vmatpush2.bf16.msra.mxu0 0
    %4852 = vmatprep.subr.bf16.mxu0 0
    %4853 = vmatpush2.bf16.msra.mxu0 0
    %4854 = vmatprep.mubr.bf16.mxu0 0
    %4855 = vmatmul.mubr.bf16.gmra.mxu0 %v4326
    %v4856 = vpop.f32.mrf.mxu0
    %v4857 = vadd.f32 0.0, %v4856
    %v4858 = vpop.f32.mrf.mxu0
    %v4859 = vadd.f32 0.0, %v4858
    %v4860 = vpop.f32.mrf.mxu0
    %v4861 = vadd.f32 0.0, %v4860
    %v4862 = vpop.f32.mrf.mxu0
    %v4863 = vadd.f32 0.0, %v4862
    %4864 = vmatprep.mubr.bf16.mxu0 0
    %4865 = vmatmul.mubr.bf16.gmra.mxu0 %v4329
    %v4866 = vpop.f32.mrf.mxu0
    %v4867 = vadd.f32 0.0, %v4866
    %v4868 = vpop.f32.mrf.mxu0
    %v4869 = vadd.f32 0.0, %v4868
    %v4870 = vpop.f32.mrf.mxu0
    %v4871 = vpop.f32.mrf.mxu0
    %4872 = vdwg.mxu0
    %v4873 = vmul.f32 %v4804, %v4748
    %v4874 = vmul.f32 %v4806, %v4750
    %v4875 = vmul.f32 %v4808, %v4752
    %v4876 = vmul.f32 %v4810, %v4754
    %v4877 = vmul.f32 %v4814, %v4758
    %v4878 = vmul.f32 %v4816, %v4760
    %v4879 = vmul.f32 %v4873, %v4857
    %v4880 = vmul.f32 %v4874, %v4859
    %v4881 = vmul.f32 %v4875, %v4861
    %v4882 = vmul.f32 %v4876, %v4863
    %v4883 = vmul.f32 %v4877, %v4867
    %v4884 = vmul.f32 %v4878, %v4869
    %v4885 = vpack.c.bf16 %v4881, %v4879
    %v4886 = vpack.c.bf16 %v4882, %v4880
    %v4887 = vpack.c.bf16 %v4883, %v4883
    %v4888 = vpack.c.bf16 %v4884, %v4884
    %v4890 = vsel %vm4602, %v4887, 0
    %v4893 = vsel %vm4602, %v4888, 0
    %4895 = vmatprep.subr.bf16.mxu0 0
    %4896 = vmatpush1.bf16.msra.mxu0 0
    %4897 = vmatprep.subr.bf16.mxu0 0
    %4898 = vmatpush1.bf16.msra.mxu0 0
    %4899 = vmatprep.subr.bf16.mxu0 0
    %4900 = vmatpush1.bf16.msra.mxu0 0
    %4901 = vmatprep.subr.bf16.mxu0 0
    %4902 = vmatpush1.bf16.msra.mxu0 0
    %4903 = vmatprep.subr.bf16.mxu0 0
    %4904 = vmatpush1.bf16.msra.mxu0 0
    %4905 = vmatprep.subr.bf16.mxu0 0
    %4906 = vmatpush1.bf16.msra.mxu0 0
    %4907 = vmatprep.subr.bf16.mxu0 %v4893
    %4908 = vmatpush1.bf16.msra.mxu0 %v4890
    %4909 = vmatprep.subr.bf16.mxu0 %v4886
    %4910 = vmatpush1.bf16.msra.mxu0 %v4885
    %4911 = vmatprep.subr.bf16.mxu0 0
    %4912 = vmatpush2.bf16.msra.mxu0 0
    %4913 = vmatprep.subr.bf16.mxu0 0
    %4914 = vmatpush2.bf16.msra.mxu0 0
    %4915 = vmatprep.subr.bf16.mxu0 0
    %4916 = vmatpush2.bf16.msra.mxu0 0
    %4917 = vmatprep.subr.bf16.mxu0 0
    %4918 = vmatpush2.bf16.msra.mxu0 0
    %4919 = vmatprep.subr.bf16.mxu0 0
    %4920 = vmatpush2.bf16.msra.mxu0 0
    %4921 = vmatprep.subr.bf16.mxu0 0
    %4922 = vmatpush2.bf16.msra.mxu0 0
    %4923 = vmatprep.subr.bf16.mxu0 0
    %4924 = vmatpush2.bf16.msra.mxu0 0
    %4925 = vmatprep.subr.bf16.mxu0 0
    %4926 = vmatpush2.bf16.msra.mxu0 0
    %4927 = vmatprep.mubr.bf16.mxu0 0
    %4928 = vmatmul.mubr.bf16.gmra.mxu0 %v4600
    %v4929 = vpop.f32.mrf.mxu0
    %v4930 = vadd.f32 0.0, %v4929
    %v4931 = vpop.f32.mrf.mxu0
    %v4932 = vadd.f32 0.0, %v4931
    %v4933 = vpop.f32.mrf.mxu0
    %v4934 = vadd.f32 0.0, %v4933
    %v4935 = vpop.f32.mrf.mxu0
    %v4936 = vadd.f32 0.0, %v4935
    %4937 = vdwg.mxu0
    %v4938 = vld [vmem:[#allocation2 + $0x230] sm:$0xf]
    %v4939 = vld [vmem:[#allocation2 + $0x234] sm:$0xf]
    %v4940 = vld [vmem:[#allocation2 + $0x238] sm:$0xf]
    %v4941 = vld [vmem:[#allocation2 + $0x23c] sm:$0xf]
    %v4942 = vld [vmem:[#allocation2 + $0x240] sm:$0xf]
    %v4943 = vld [vmem:[#allocation2 + $0x244] sm:$0xf]
    %v4944 = vld [vmem:[#allocation2 + $0x248] sm:$0xf]
    %v4945 = vld [vmem:[#allocation2 + $0x24c] sm:$0xf]
    %v4946 = vld [vmem:[#allocation2 + $0x250] sm:$0xf]
    %v4947 = vld [vmem:[#allocation2 + $0x254] sm:$0xf]
    %v4948 = vld [vmem:[#allocation2 + $0x258] sm:$0xf]
    %v4949 = vld [vmem:[#allocation2 + $0x25c] sm:$0xf]
    %v4950 = vld [vmem:[#allocation2 + $0x260] sm:$0xf]
    %v4951 = vld [vmem:[#allocation2 + $0x264] sm:$0xf]
    %v4952 = vld [vmem:[#allocation2 + $0x268] sm:$0xf]
    %v4953 = vld [vmem:[#allocation2 + $0x26c] sm:$0xf]
    %v4954 = vld [vmem:[#allocation2 + $0x270] sm:$0xf]
    %v4955 = vld [vmem:[#allocation2 + $0x274] sm:$0xf]
    %v4956 = vld [vmem:[#allocation2 + $0x278] sm:$0xf]
    %v4957 = vld [vmem:[#allocation2 + $0x27c] sm:$0xf]
    %v4958 = vld [vmem:[#allocation2 + $0x280] sm:$0xf]
    %v4959 = vld [vmem:[#allocation2 + $0x284] sm:$0xf]
    %v4960 = vld [vmem:[#allocation2 + $0x288] sm:$0xf]
    %v4961 = vld [vmem:[#allocation2 + $0x28c] sm:$0xf]
    %v4962 = vld [vmem:[#allocation2 + $0x290] sm:$0xf]
    %v4963 = vld [vmem:[#allocation2 + $0x294] sm:$0xf]
    %v4964 = vld [vmem:[#allocation2 + $0x298] sm:$0xf]
    %v4965 = vld [vmem:[#allocation2 + $0x29c] sm:$0xf]
    %v4966 = vld [vmem:[#allocation2 + $0x2a0] sm:$0xf]
    %v4967 = vld [vmem:[#allocation2 + $0x2a4] sm:$0xf]
    %v4968 = vld [vmem:[#allocation2 + $0x2a8] sm:$0xf]
    %v4969 = vld [vmem:[#allocation2 + $0x2ac] sm:$0xf]
    %v4970 = vlaneseq
    %v4971 = vshrl.u32 %v4970, 7
    %v4972 = vsub.s32 0, %v4971
    %v4973 = vrot.slane %v98, %v4972
    %v5006 = vunpack.c.l.b16 %v4938
    %v5007 = vunpack.c.l.b16 %v4939
    %v5008 = vunpack.c.l.b16 %v4940
    %v5009 = vunpack.c.l.b16 %v4941
    %v5010 = vunpack.c.l.b16 %v4942
    %v5011 = vunpack.c.l.b16 %v4943
    %v5012 = vunpack.c.l.b16 %v4944
    %v5013 = vunpack.c.l.b16 %v4945
    %v5014 = vunpack.c.l.b16 %v4946
    %v5015 = vunpack.c.l.b16 %v4947
    %v5016 = vunpack.c.l.b16 %v4948
    %v5017 = vunpack.c.l.b16 %v4949
    %v5018 = vunpack.c.l.b16 %v4950
    %v5019 = vunpack.c.l.b16 %v4951
    %v5020 = vunpack.c.l.b16 %v4952
    %v5021 = vunpack.c.l.b16 %v4953
    %v5022 = vunpack.c.l.b16 %v4954
    %v5023 = vunpack.c.l.b16 %v4955
    %v5024 = vunpack.c.l.b16 %v4956
    %v5025 = vunpack.c.l.b16 %v4957
    %v5026 = vunpack.c.l.b16 %v4958
    %v5027 = vunpack.c.l.b16 %v4959
    %v5028 = vunpack.c.l.b16 %v4960
    %v5029 = vunpack.c.l.b16 %v4961
    %v5030 = vunpack.c.l.b16 %v4962
    %v5031 = vunpack.c.l.b16 %v4963
    %v5032 = vunpack.c.l.b16 %v4964
    %v5033 = vunpack.c.l.b16 %v4965
    %v5034 = vunpack.c.l.b16 %v4966
    %v5035 = vunpack.c.l.b16 %v4967
    %v5036 = vunpack.c.l.b16 %v4968
    %v5037 = vunpack.c.l.b16 %v4969
    %v5038 = vpack.c.b16 %v5007, %v5006
    %v5039 = vpack.c.b16 %v5009, %v5008
    %v5040 = vpack.c.b16 %v5011, %v5010
    %v5041 = vpack.c.b16 %v5013, %v5012
    %v5042 = vpack.c.b16 %v5015, %v5014
    %v5043 = vpack.c.b16 %v5017, %v5016
    %v5044 = vpack.c.b16 %v5019, %v5018
    %v5045 = vpack.c.b16 %v5021, %v5020
    %v5046 = vpack.c.b16 %v5023, %v5022
    %v5047 = vpack.c.b16 %v5025, %v5024
    %v5048 = vpack.c.b16 %v5027, %v5026
    %v5049 = vpack.c.b16 %v5029, %v5028
    %v5050 = vpack.c.b16 %v5031, %v5030
    %v5051 = vpack.c.b16 %v5033, %v5032
    %v5052 = vpack.c.b16 %v5035, %v5034
    %v5053 = vpack.c.b16 %v5037, %v5036
    %5070 = vmatprep.subr.bf16.mxu0 0
    %5071 = vmatpush1.bf16.msra.mxu0 %v5045
    %5072 = vmatprep.subr.bf16.mxu0 0
    %5073 = vmatpush1.bf16.msra.mxu0 %v5044
    %5074 = vmatprep.subr.bf16.mxu0 0
    %5075 = vmatpush1.bf16.msra.mxu0 %v5043
    %5076 = vmatprep.subr.bf16.mxu0 0
    %5077 = vmatpush1.bf16.msra.mxu0 %v5042
    %5078 = vmatprep.subr.bf16.mxu0 0
    %5079 = vmatpush1.bf16.msra.mxu0 %v5041
    %5080 = vmatprep.subr.bf16.mxu0 0
    %5081 = vmatpush1.bf16.msra.mxu0 %v5040
    %5082 = vmatprep.subr.bf16.mxu0 0
    %5083 = vmatpush1.bf16.msra.mxu0 %v5039
    %5084 = vmatprep.subr.bf16.mxu0 0
    %5085 = vmatpush1.bf16.msra.mxu0 %v5038
    %5086 = vmatprep.subr.bf16.mxu0 0
    %5087 = vmatpush2.bf16.msra.mxu0 %v5053
    %5088 = vmatprep.subr.bf16.mxu0 0
    %5089 = vmatpush2.bf16.msra.mxu0 %v5052
    %5090 = vmatprep.subr.bf16.mxu0 0
    %5091 = vmatpush2.bf16.msra.mxu0 %v5051
    %5092 = vmatprep.subr.bf16.mxu0 0
    %5093 = vmatpush2.bf16.msra.mxu0 %v5050
    %5094 = vmatprep.subr.bf16.mxu0 0
    %5095 = vmatpush2.bf16.msra.mxu0 %v5049
    %5096 = vmatprep.subr.bf16.mxu0 0
    %5097 = vmatpush2.bf16.msra.mxu0 %v5048
    %5098 = vmatprep.subr.bf16.mxu0 0
    %5099 = vmatpush2.bf16.msra.mxu0 %v5047
    %5100 = vmatprep.subr.bf16.mxu0 0
    %5101 = vmatpush2.bf16.msra.mxu0 %v5046
    %5102 = vmatprep.mubr.bf16.mxu0 %v4424
    %5103 = vmatmul.mubr.bf16.gmra.mxu0 %v4423
    %v5104 = vpop.f32.mrf.mxu0
    %v5105 = vadd.f32 %v4973, %v5104
    %v5106 = vpop.f32.mrf.mxu0
    %v5107 = vpop.f32.mrf.mxu0
    %v5108 = vadd.f32 %v4973, %v5107
    %v5109 = vpop.f32.mrf.mxu0
    %5110 = vmatprep.mubr.bf16.mxu0 %v4426
    %5111 = vmatmul.mubr.bf16.gmra.mxu0 %v4425
    %v5112 = vpop.f32.mrf.mxu0
    %v5113 = vadd.f32 %v4973, %v5112
    %v5114 = vpop.f32.mrf.mxu0
    %v5115 = vpop.f32.mrf.mxu0
    %v5116 = vpop.f32.mrf.mxu0
    %5117 = vdwg.mxu0
    %v5118 = vmax.f32 %v5105, 0.0
    %v5119 = vmax.f32 %v5108, 0.0
    %v5120 = vmax.f32 %v5113, 0.0
    %v5121 = vld [vmem:[#allocation2 + $0x1b0] sm:$0xf]
    %v5122 = vld [vmem:[#allocation2 + $0x1b4] sm:$0xf]
    %v5123 = vld [vmem:[#allocation2 + $0x1b8] sm:$0xf]
    %v5124 = vld [vmem:[#allocation2 + $0x1bc] sm:$0xf]
    %v5125 = vld [vmem:[#allocation2 + $0x1c0] sm:$0xf]
    %v5126 = vld [vmem:[#allocation2 + $0x1c4] sm:$0xf]
    %v5127 = vld [vmem:[#allocation2 + $0x1c8] sm:$0xf]
    %v5128 = vld [vmem:[#allocation2 + $0x1cc] sm:$0xf]
    %v5129 = vld [vmem:[#allocation2 + $0x1d0] sm:$0xf]
    %v5130 = vld [vmem:[#allocation2 + $0x1d4] sm:$0xf]
    %v5131 = vld [vmem:[#allocation2 + $0x1d8] sm:$0xf]
    %v5132 = vld [vmem:[#allocation2 + $0x1dc] sm:$0xf]
    %v5133 = vld [vmem:[#allocation2 + $0x1e0] sm:$0xf]
    %v5134 = vld [vmem:[#allocation2 + $0x1e4] sm:$0xf]
    %v5135 = vld [vmem:[#allocation2 + $0x1e8] sm:$0xf]
    %v5136 = vld [vmem:[#allocation2 + $0x1ec] sm:$0xf]
    %v5137 = vld [vmem:[#allocation2 + $0x1f0] sm:$0xf]
    %v5138 = vld [vmem:[#allocation2 + $0x1f4] sm:$0xf]
    %v5139 = vld [vmem:[#allocation2 + $0x1f8] sm:$0xf]
    %v5140 = vld [vmem:[#allocation2 + $0x1fc] sm:$0xf]
    %v5141 = vld [vmem:[#allocation2 + $0x200] sm:$0xf]
    %v5142 = vld [vmem:[#allocation2 + $0x204] sm:$0xf]
    %v5143 = vld [vmem:[#allocation2 + $0x208] sm:$0xf]
    %v5144 = vld [vmem:[#allocation2 + $0x20c] sm:$0xf]
    %v5145 = vld [vmem:[#allocation2 + $0x210] sm:$0xf]
    %v5146 = vld [vmem:[#allocation2 + $0x214] sm:$0xf]
    %v5147 = vld [vmem:[#allocation2 + $0x218] sm:$0xf]
    %v5148 = vld [vmem:[#allocation2 + $0x21c] sm:$0xf]
    %v5149 = vld [vmem:[#allocation2 + $0x220] sm:$0xf]
    %v5150 = vld [vmem:[#allocation2 + $0x224] sm:$0xf]
    %v5151 = vld [vmem:[#allocation2 + $0x228] sm:$0xf]
    %v5152 = vld [vmem:[#allocation2 + $0x22c] sm:$0xf]
    %v5153 = vpack.c.bf16 %v4934, %v4930
    %v5154 = vpack.c.bf16 %v4936, %v4932
    %v5155 = vlaneseq
    %v5156 = vshrl.u32 %v5155, 7
    %v5157 = vsub.s32 0, %v5156
    %v5158 = vrot.slane %v97, %v5157
    %v5191 = vunpack.c.l.b16 %v5121
    %v5192 = vunpack.c.l.b16 %v5122
    %v5193 = vunpack.c.l.b16 %v5123
    %v5194 = vunpack.c.l.b16 %v5124
    %v5195 = vunpack.c.l.b16 %v5125
    %v5196 = vunpack.c.l.b16 %v5126
    %v5197 = vunpack.c.l.b16 %v5127
    %v5198 = vunpack.c.l.b16 %v5128
    %v5199 = vunpack.c.l.b16 %v5129
    %v5200 = vunpack.c.l.b16 %v5130
    %v5201 = vunpack.c.l.b16 %v5131
    %v5202 = vunpack.c.l.b16 %v5132
    %v5203 = vunpack.c.l.b16 %v5133
    %v5204 = vunpack.c.l.b16 %v5134
    %v5205 = vunpack.c.l.b16 %v5135
    %v5206 = vunpack.c.l.b16 %v5136
    %v5207 = vunpack.c.l.b16 %v5137
    %v5208 = vunpack.c.l.b16 %v5138
    %v5209 = vunpack.c.l.b16 %v5139
    %v5210 = vunpack.c.l.b16 %v5140
    %v5211 = vunpack.c.l.b16 %v5141
    %v5212 = vunpack.c.l.b16 %v5142
    %v5213 = vunpack.c.l.b16 %v5143
    %v5214 = vunpack.c.l.b16 %v5144
    %v5215 = vunpack.c.l.b16 %v5145
    %v5216 = vunpack.c.l.b16 %v5146
    %v5217 = vunpack.c.l.b16 %v5147
    %v5218 = vunpack.c.l.b16 %v5148
    %v5219 = vunpack.c.l.b16 %v5149
    %v5220 = vunpack.c.l.b16 %v5150
    %v5221 = vunpack.c.l.b16 %v5151
    %v5222 = vunpack.c.l.b16 %v5152
    %v5223 = vpack.c.b16 %v5192, %v5191
    %v5224 = vpack.c.b16 %v5194, %v5193
    %v5225 = vpack.c.b16 %v5196, %v5195
    %v5226 = vpack.c.b16 %v5198, %v5197
    %v5227 = vpack.c.b16 %v5200, %v5199
    %v5228 = vpack.c.b16 %v5202, %v5201
    %v5229 = vpack.c.b16 %v5204, %v5203
    %v5230 = vpack.c.b16 %v5206, %v5205
    %v5231 = vpack.c.b16 %v5208, %v5207
    %v5232 = vpack.c.b16 %v5210, %v5209
    %v5233 = vpack.c.b16 %v5212, %v5211
    %v5234 = vpack.c.b16 %v5214, %v5213
    %v5235 = vpack.c.b16 %v5216, %v5215
    %v5236 = vpack.c.b16 %v5218, %v5217
    %v5237 = vpack.c.b16 %v5220, %v5219
    %v5238 = vpack.c.b16 %v5222, %v5221
    %5255 = vmatprep.subr.bf16.mxu0 0
    %5256 = vmatpush1.bf16.msra.mxu0 %v5230
    %5257 = vmatprep.subr.bf16.mxu0 0
    %5258 = vmatpush1.bf16.msra.mxu0 %v5229
    %5259 = vmatprep.subr.bf16.mxu0 0
    %5260 = vmatpush1.bf16.msra.mxu0 %v5228
    %5261 = vmatprep.subr.bf16.mxu0 0
    %5262 = vmatpush1.bf16.msra.mxu0 %v5227
    %5263 = vmatprep.subr.bf16.mxu0 0
    %5264 = vmatpush1.bf16.msra.mxu0 %v5226
    %5265 = vmatprep.subr.bf16.mxu0 0
    %5266 = vmatpush1.bf16.msra.mxu0 %v5225
    %5267 = vmatprep.subr.bf16.mxu0 0
    %5268 = vmatpush1.bf16.msra.mxu0 %v5224
    %5269 = vmatprep.subr.bf16.mxu0 0
    %5270 = vmatpush1.bf16.msra.mxu0 %v5223
    %5271 = vmatprep.subr.bf16.mxu0 0
    %5272 = vmatpush2.bf16.msra.mxu0 %v5238
    %5273 = vmatprep.subr.bf16.mxu0 0
    %5274 = vmatpush2.bf16.msra.mxu0 %v5237
    %5275 = vmatprep.subr.bf16.mxu0 0
    %5276 = vmatpush2.bf16.msra.mxu0 %v5236
    %5277 = vmatprep.subr.bf16.mxu0 0
    %5278 = vmatpush2.bf16.msra.mxu0 %v5235
    %5279 = vmatprep.subr.bf16.mxu0 0
    %5280 = vmatpush2.bf16.msra.mxu0 %v5234
    %5281 = vmatprep.subr.bf16.mxu0 0
    %5282 = vmatpush2.bf16.msra.mxu0 %v5233
    %5283 = vmatprep.subr.bf16.mxu0 0
    %5284 = vmatpush2.bf16.msra.mxu0 %v5232
    %5285 = vmatprep.subr.bf16.mxu0 0
    %5286 = vmatpush2.bf16.msra.mxu0 %v5231
    %5287 = vmatprep.mubr.bf16.mxu0 %v5154
    %5288 = vmatmul.mubr.bf16.gmra.mxu0 %v5153
    %v5289 = vpop.f32.mrf.mxu0
    %v5290 = vadd.f32 %v5158, %v5289
    %v5291 = vpop.f32.mrf.mxu0
    %v5292 = vpop.f32.mrf.mxu0
    %v5293 = vadd.f32 %v5158, %v5292
    %v5294 = vpop.f32.mrf.mxu0
    %5295 = vdwg.mxu0
    %v5296 = vmax.f32 %v5290, 0.0
    %v5297 = vmax.f32 %v5293, 0.0
    %v5298 = vadd.f32 %v3862, %v5296
    %v5299 = vadd.f32 %v3863, %v5297
    %v5300 = vpack.c.bf16 %v5299, %v5298
    %v5302 = vsel %vm471, %v5300, 0
    %5304 = vmatprep.subr.bf16.mxu0 0
    %5305 = vmatpush1.bf16.msra.mxu0 0
    %5306 = vmatprep.subr.bf16.mxu0 0
    %5307 = vmatpush1.bf16.msra.mxu0 0
    %5308 = vmatprep.subr.bf16.mxu0 0
    %5309 = vmatpush1.bf16.msra.mxu0 0
    %5310 = vmatprep.subr.bf16.mxu0 0
    %5311 = vmatpush1.bf16.msra.mxu0 0
    %5312 = vmatprep.subr.bf16.mxu0 %v462
    %5313 = vmatpush1.bf16.msra.mxu0 %v461
    %5314 = vmatprep.subr.bf16.mxu0 %v460
    %5315 = vmatpush1.bf16.msra.mxu0 %v459
    %5316 = vmatprep.subr.bf16.mxu0 %v458
    %5317 = vmatpush1.bf16.msra.mxu0 %v457
    %5318 = vmatprep.subr.bf16.mxu0 %v456
    %5319 = vmatpush1.bf16.msra.mxu0 %v455
    %5320 = vmatprep.subr.bf16.mxu0 0
    %5321 = vmatpush2.bf16.msra.mxu0 0
    %5322 = vmatprep.subr.bf16.mxu0 0
    %5323 = vmatpush2.bf16.msra.mxu0 0
    %5324 = vmatprep.subr.bf16.mxu0 0
    %5325 = vmatpush2.bf16.msra.mxu0 0
    %5326 = vmatprep.subr.bf16.mxu0 0
    %5327 = vmatpush2.bf16.msra.mxu0 0
    %5328 = vmatprep.subr.bf16.mxu0 0
    %5329 = vmatpush2.bf16.msra.mxu0 0
    %5330 = vmatprep.subr.bf16.mxu0 0
    %5331 = vmatpush2.bf16.msra.mxu0 0
    %5332 = vmatprep.subr.bf16.mxu0 0
    %5333 = vmatpush2.bf16.msra.mxu0 0
    %5334 = vmatprep.subr.bf16.mxu0 0
    %5335 = vmatpush2.bf16.msra.mxu0 0
    %5336 = vmatprep.mubr.bf16.mxu0 0
    %5337 = vmatmul.mubr.bf16.gmra.mxu0 %v5302
    %v5338 = vpop.f32.mrf.mxu0
    %v5339 = vadd.f32 0.0, %v5338
    %v5340 = vpop.f32.mrf.mxu0
    %v5341 = vadd.f32 0.0, %v5340
    %v5342 = vpop.f32.mrf.mxu0
    %v5343 = vadd.f32 0.0, %v5342
    %v5344 = vpop.f32.mrf.mxu0
    %v5345 = vadd.f32 0.0, %v5344
    %5346 = vdwg.mxu0
    %5347 = vmatprep.subr.bf16.mxu0 0
    %5348 = vmatpush1.bf16.msra.mxu0 0
    %5349 = vmatprep.subr.bf16.mxu0 0
    %5350 = vmatpush1.bf16.msra.mxu0 0
    %5351 = vmatprep.subr.bf16.mxu0 0
    %5352 = vmatpush1.bf16.msra.mxu0 0
    %5353 = vmatprep.subr.bf16.mxu0 0
    %5354 = vmatpush1.bf16.msra.mxu0 0
    %5355 = vmatprep.subr.bf16.mxu0 %v557
    %5356 = vmatpush1.bf16.msra.mxu0 %v556
    %5357 = vmatprep.subr.bf16.mxu0 %v555
    %5358 = vmatpush1.bf16.msra.mxu0 %v554
    %5359 = vmatprep.subr.bf16.mxu0 %v553
    %5360 = vmatpush1.bf16.msra.mxu0 %v552
    %5361 = vmatprep.subr.bf16.mxu0 %v551
    %5362 = vmatpush1.bf16.msra.mxu0 %v550
    %5363 = vmatprep.subr.bf16.mxu0 0
    %5364 = vmatpush2.bf16.msra.mxu0 0
    %5365 = vmatprep.subr.bf16.mxu0 0
    %5366 = vmatpush2.bf16.msra.mxu0 0
    %5367 = vmatprep.subr.bf16.mxu0 0
    %5368 = vmatpush2.bf16.msra.mxu0 0
    %5369 = vmatprep.subr.bf16.mxu0 0
    %5370 = vmatpush2.bf16.msra.mxu0 0
    %5371 = vmatprep.subr.bf16.mxu0 0
    %5372 = vmatpush2.bf16.msra.mxu0 0
    %5373 = vmatprep.subr.bf16.mxu0 0
    %5374 = vmatpush2.bf16.msra.mxu0 0
    %5375 = vmatprep.subr.bf16.mxu0 0
    %5376 = vmatpush2.bf16.msra.mxu0 0
    %5377 = vmatprep.subr.bf16.mxu0 0
    %5378 = vmatpush2.bf16.msra.mxu0 0
    %5379 = vmatprep.mubr.bf16.mxu0 0
    %5380 = vmatmul.mubr.bf16.gmra.mxu0 %v5302
    %v5381 = vpop.f32.mrf.mxu0
    %v5382 = vadd.f32 0.0, %v5381
    %v5383 = vpop.f32.mrf.mxu0
    %v5384 = vadd.f32 0.0, %v5383
    %v5385 = vpop.f32.mrf.mxu0
    %v5386 = vadd.f32 0.0, %v5385
    %v5387 = vpop.f32.mrf.mxu0
    %v5388 = vadd.f32 0.0, %v5387
    %5389 = vdwg.mxu0
    %v5390 = vpack.c.bf16 %v3513, %v3512
    %v5391 = vpack.c.bf16 %v3515, %v3514
    %v5393 = vsel %vm471, %v5390, 0
    %v5396 = vsel %vm471, %v5391, 0
    %5398 = vmatprep.subr.bf16.mxu0 0
    %5399 = vmatpush1.bf16.msra.mxu0 0
    %5400 = vmatprep.subr.bf16.mxu0 0
    %5401 = vmatpush1.bf16.msra.mxu0 0
    %5402 = vmatprep.subr.bf16.mxu0 0
    %5403 = vmatpush1.bf16.msra.mxu0 0
    %5404 = vmatprep.subr.bf16.mxu0 0
    %5405 = vmatpush1.bf16.msra.mxu0 0
    %5406 = vmatprep.subr.bf16.mxu0 %v650
    %5407 = vmatpush1.bf16.msra.mxu0 %v649
    %5408 = vmatprep.subr.bf16.mxu0 %v648
    %5409 = vmatpush1.bf16.msra.mxu0 %v647
    %5410 = vmatprep.subr.bf16.mxu0 %v646
    %5411 = vmatpush1.bf16.msra.mxu0 %v645
    %5412 = vmatprep.subr.bf16.mxu0 %v644
    %5413 = vmatpush1.bf16.msra.mxu0 %v643
    %5414 = vmatprep.subr.bf16.mxu0 0
    %5415 = vmatpush2.bf16.msra.mxu0 0
    %5416 = vmatprep.subr.bf16.mxu0 0
    %5417 = vmatpush2.bf16.msra.mxu0 0
    %5418 = vmatprep.subr.bf16.mxu0 0
    %5419 = vmatpush2.bf16.msra.mxu0 0
    %5420 = vmatprep.subr.bf16.mxu0 0
    %5421 = vmatpush2.bf16.msra.mxu0 0
    %5422 = vmatprep.subr.bf16.mxu0 0
    %5423 = vmatpush2.bf16.msra.mxu0 0
    %5424 = vmatprep.subr.bf16.mxu0 0
    %5425 = vmatpush2.bf16.msra.mxu0 0
    %5426 = vmatprep.subr.bf16.mxu0 0
    %5427 = vmatpush2.bf16.msra.mxu0 0
    %5428 = vmatprep.subr.bf16.mxu0 0
    %5429 = vmatpush2.bf16.msra.mxu0 0
    %5430 = vmatprep.mubr.bf16.mxu0 0
    %5431 = vmatmul.mubr.bf16.gmra.mxu0 %v5393
    %v5432 = vpop.f32.mrf.mxu0
    %v5433 = vadd.f32 0.0, %v5432
    %v5434 = vpop.f32.mrf.mxu0
    %v5435 = vadd.f32 0.0, %v5434
    %v5436 = vpop.f32.mrf.mxu0
    %v5437 = vadd.f32 0.0, %v5436
    %v5438 = vpop.f32.mrf.mxu0
    %v5439 = vadd.f32 0.0, %v5438
    %5440 = vmatprep.mubr.bf16.mxu0 0
    %5441 = vmatmul.mubr.bf16.gmra.mxu0 %v5396
    %v5442 = vpop.f32.mrf.mxu0
    %v5443 = vadd.f32 0.0, %v5442
    %v5444 = vpop.f32.mrf.mxu0
    %v5445 = vadd.f32 0.0, %v5444
    %v5446 = vpop.f32.mrf.mxu0
    %v5447 = vadd.f32 0.0, %v5446
    %v5448 = vpop.f32.mrf.mxu0
    %v5449 = vadd.f32 0.0, %v5448
    %5450 = vdwg.mxu0
    %5451 = vmatprep.subr.bf16.mxu0 0
    %5452 = vmatpush1.bf16.msra.mxu0 0
    %5453 = vmatprep.subr.bf16.mxu0 0
    %5454 = vmatpush1.bf16.msra.mxu0 0
    %5455 = vmatprep.subr.bf16.mxu0 0
    %5456 = vmatpush1.bf16.msra.mxu0 0
    %5457 = vmatprep.subr.bf16.mxu0 0
    %5458 = vmatpush1.bf16.msra.mxu0 0
    %5459 = vmatprep.subr.bf16.mxu0 %v757
    %5460 = vmatpush1.bf16.msra.mxu0 %v756
    %5461 = vmatprep.subr.bf16.mxu0 %v755
    %5462 = vmatpush1.bf16.msra.mxu0 %v754
    %5463 = vmatprep.subr.bf16.mxu0 %v753
    %5464 = vmatpush1.bf16.msra.mxu0 %v752
    %5465 = vmatprep.subr.bf16.mxu0 %v751
    %5466 = vmatpush1.bf16.msra.mxu0 %v750
    %5467 = vmatprep.subr.bf16.mxu0 0
    %5468 = vmatpush2.bf16.msra.mxu0 0
    %5469 = vmatprep.subr.bf16.mxu0 0
    %5470 = vmatpush2.bf16.msra.mxu0 0
    %5471 = vmatprep.subr.bf16.mxu0 0
    %5472 = vmatpush2.bf16.msra.mxu0 0
    %5473 = vmatprep.subr.bf16.mxu0 0
    %5474 = vmatpush2.bf16.msra.mxu0 0
    %5475 = vmatprep.subr.bf16.mxu0 0
    %5476 = vmatpush2.bf16.msra.mxu0 0
    %5477 = vmatprep.subr.bf16.mxu0 0
    %5478 = vmatpush2.bf16.msra.mxu0 0
    %5479 = vmatprep.subr.bf16.mxu0 0
    %5480 = vmatpush2.bf16.msra.mxu0 0
    %5481 = vmatprep.subr.bf16.mxu0 0
    %5482 = vmatpush2.bf16.msra.mxu0 0
    %5483 = vmatprep.mubr.bf16.mxu0 0
    %5484 = vmatmul.mubr.bf16.gmra.mxu0 %v5302
    %v5485 = vpop.f32.mrf.mxu0
    %v5486 = vadd.f32 0.0, %v5485
    %v5487 = vpop.f32.mrf.mxu0
    %v5488 = vadd.f32 0.0, %v5487
    %v5489 = vpop.f32.mrf.mxu0
    %v5490 = vadd.f32 0.0, %v5489
    %v5491 = vpop.f32.mrf.mxu0
    %v5492 = vadd.f32 0.0, %v5491
    %5493 = vdwg.mxu0
    %v5494 = vpack.c.bf16 %v5343, %v5339
    %v5495 = vpack.c.bf16 %v5345, %v5341
    %v5496 = vpack.c.bf16 %v5386, %v5382
    %v5497 = vpack.c.bf16 %v5388, %v5384
    %5498 = vmatprep.subr.bf16.mxu0 0
    %5499 = vmatpush1.bf16.msra.mxu0 0
    %5500 = vmatprep.subr.bf16.mxu0 0
    %5501 = vmatpush1.bf16.msra.mxu0 0
    %5502 = vmatprep.subr.bf16.mxu0 0
    %5503 = vmatpush1.bf16.msra.mxu0 0
    %5504 = vmatprep.subr.bf16.mxu0 0
    %5505 = vmatpush1.bf16.msra.mxu0 0
    %5506 = vmatprep.subr.bf16.mxu0 0
    %5507 = vmatpush1.bf16.msra.mxu0 0
    %5508 = vmatprep.subr.bf16.mxu0 0
    %5509 = vmatpush1.bf16.msra.mxu0 0
    %5510 = vmatprep.subr.bf16.mxu0 0
    %5511 = vmatpush1.bf16.msra.mxu0 0
    %5512 = vmatprep.subr.bf16.mxu0 %v5497
    %5513 = vmatpush1.bf16.msra.mxu0 %v5496
    %5514 = vmatprep.subr.bf16.mxu0 0
    %5515 = vmatpush2.bf16.msra.mxu0 0
    %5516 = vmatprep.subr.bf16.mxu0 0
    %5517 = vmatpush2.bf16.msra.mxu0 0
    %5518 = vmatprep.subr.bf16.mxu0 0
    %5519 = vmatpush2.bf16.msra.mxu0 0
    %5520 = vmatprep.subr.bf16.mxu0 0
    %5521 = vmatpush2.bf16.msra.mxu0 0
    %5522 = vmatprep.subr.bf16.mxu0 0
    %5523 = vmatpush2.bf16.msra.mxu0 0
    %5524 = vmatprep.subr.bf16.mxu0 0
    %5525 = vmatpush2.bf16.msra.mxu0 0
    %5526 = vmatprep.subr.bf16.mxu0 0
    %5527 = vmatpush2.bf16.msra.mxu0 0
    %5528 = vmatprep.subr.bf16.mxu0 0
    %5529 = vmatpush2.bf16.msra.mxu0 0
    %5530 = vmatprep.mubr.bf16.mxu0 0
    %5531 = vmatmul.mubr.bf16.gmra.mxu0 %v825
    %v5532 = vpop.f32.mrf.mxu0
    %v5533 = vadd.f32 0.0, %v5532
    %v5534 = vpop.f32.mrf.mxu0
    %v5535 = vadd.f32 0.0, %v5534
    %v5536 = vpop.f32.mrf.mxu0
    %v5537 = vadd.f32 0.0, %v5536
    %v5538 = vpop.f32.mrf.mxu0
    %v5539 = vadd.f32 0.0, %v5538
    %5540 = vmatprep.mubr.bf16.mxu0 0
    %5541 = vmatmul.mubr.bf16.gmra.mxu0 %v828
    %v5542 = vpop.f32.mrf.mxu0
    %v5543 = vadd.f32 0.0, %v5542
    %v5544 = vpop.f32.mrf.mxu0
    %v5545 = vadd.f32 0.0, %v5544
    %v5546 = vpop.f32.mrf.mxu0
    %v5547 = vadd.f32 0.0, %v5546
    %v5548 = vpop.f32.mrf.mxu0
    %v5549 = vadd.f32 0.0, %v5548
    %5550 = vdwg.mxu0
    %5551 = vmatprep.subr.bf16.mxu0 0
    %5552 = vmatpush1.bf16.msra.mxu0 0
    %5553 = vmatprep.subr.bf16.mxu0 0
    %5554 = vmatpush1.bf16.msra.mxu0 0
    %5555 = vmatprep.subr.bf16.mxu0 0
    %5556 = vmatpush1.bf16.msra.mxu0 0
    %5557 = vmatprep.subr.bf16.mxu0 0
    %5558 = vmatpush1.bf16.msra.mxu0 0
    %5559 = vmatprep.subr.bf16.mxu0 0
    %5560 = vmatpush1.bf16.msra.mxu0 0
    %5561 = vmatprep.subr.bf16.mxu0 0
    %5562 = vmatpush1.bf16.msra.mxu0 0
    %5563 = vmatprep.subr.bf16.mxu0 0
    %5564 = vmatpush1.bf16.msra.mxu0 0
    %5565 = vmatprep.subr.bf16.mxu0 %v5495
    %5566 = vmatpush1.bf16.msra.mxu0 %v5494
    %5567 = vmatprep.subr.bf16.mxu0 0
    %5568 = vmatpush2.bf16.msra.mxu0 0
    %5569 = vmatprep.subr.bf16.mxu0 0
    %5570 = vmatpush2.bf16.msra.mxu0 0
    %5571 = vmatprep.subr.bf16.mxu0 0
    %5572 = vmatpush2.bf16.msra.mxu0 0
    %5573 = vmatprep.subr.bf16.mxu0 0
    %5574 = vmatpush2.bf16.msra.mxu0 0
    %5575 = vmatprep.subr.bf16.mxu0 0
    %5576 = vmatpush2.bf16.msra.mxu0 0
    %5577 = vmatprep.subr.bf16.mxu0 0
    %5578 = vmatpush2.bf16.msra.mxu0 0
    %5579 = vmatprep.subr.bf16.mxu0 0
    %5580 = vmatpush2.bf16.msra.mxu0 0
    %5581 = vmatprep.subr.bf16.mxu0 0
    %5582 = vmatpush2.bf16.msra.mxu0 0
    %5583 = vmatprep.mubr.bf16.mxu0 0
    %5584 = vmatmul.mubr.bf16.gmra.mxu0 %v894
    %v5585 = vpop.f32.mrf.mxu0
    %v5586 = vadd.f32 %v5533, %v5585
    %v5587 = vpop.f32.mrf.mxu0
    %v5588 = vadd.f32 %v5535, %v5587
    %v5589 = vpop.f32.mrf.mxu0
    %v5590 = vadd.f32 %v5537, %v5589
    %v5591 = vpop.f32.mrf.mxu0
    %v5592 = vadd.f32 %v5539, %v5591
    %5593 = vmatprep.mubr.bf16.mxu0 0
    %5594 = vmatmul.mubr.bf16.gmra.mxu0 %v897
    %v5595 = vpop.f32.mrf.mxu0
    %v5596 = vadd.f32 %v5543, %v5595
    %v5597 = vpop.f32.mrf.mxu0
    %v5598 = vadd.f32 %v5545, %v5597
    %v5599 = vpop.f32.mrf.mxu0
    %v5600 = vadd.f32 %v5547, %v5599
    %v5601 = vpop.f32.mrf.mxu0
    %v5602 = vadd.f32 %v5549, %v5601
    %5603 = vdwg.mxu0
    %v5604 = vadd.f32 %v5586, %v5433
    %v5605 = vadd.f32 %v5588, %v5435
    %v5606 = vadd.f32 %v5590, %v5437
    %v5607 = vadd.f32 %v5592, %v5439
    %v5608 = vadd.f32 %v5596, %v5443
    %v5609 = vadd.f32 %v5598, %v5445
    %v5610 = vadd.f32 %v5600, %v5447
    %v5611 = vadd.f32 %v5602, %v5449
    %v5612 = vadd.f32 %v5604, %v964
    %v5613 = vadd.f32 %v5605, %v968
    %v5614 = vadd.f32 %v5606, %v964
    %v5615 = vadd.f32 %v5607, %v968
    %v5616 = vadd.f32 %v5608, %v964
    %v5617 = vadd.f32 %v5609, %v968
    %v5618 = vadd.f32 %v5610, %v964
    %v5619 = vadd.f32 %v5611, %v968
    %vm5620 = vcmp.gt.f32.partialorder %v5612, 0.0
    %vm5621 = vcmp.gt.f32.partialorder %v5613, 0.0
    %vm5622 = vcmp.gt.f32.partialorder %v5614, 0.0
    %vm5623 = vcmp.gt.f32.partialorder %v5615, 0.0
    %vm5624 = vcmp.gt.f32.partialorder %v5616, 0.0
    %vm5625 = vcmp.gt.f32.partialorder %v5617, 0.0
    %vm5626 = vcmp.gt.f32.partialorder %v5618, 0.0
    %vm5627 = vcmp.gt.f32.partialorder %v5619, 0.0
    %v5628 = vmul.f32 %v5612, 0.01
    %v5629 = vmul.f32 %v5613, 0.01
    %v5630 = vmul.f32 %v5614, 0.01
    %v5631 = vmul.f32 %v5615, 0.01
    %v5632 = vmul.f32 %v5616, 0.01
    %v5633 = vmul.f32 %v5617, 0.01
    %v5634 = vmul.f32 %v5618, 0.01
    %v5635 = vmul.f32 %v5619, 0.01
    %v5636 = vsel %vm5620, %v5612, %v5628
    %v5637 = vsel %vm5621, %v5613, %v5629
    %v5638 = vsel %vm5622, %v5614, %v5630
    %v5639 = vsel %vm5623, %v5615, %v5631
    %v5640 = vsel %vm5624, %v5616, %v5632
    %v5641 = vsel %vm5625, %v5617, %v5633
    %v5642 = vsel %vm5626, %v5618, %v5634
    %v5643 = vsel %vm5627, %v5619, %v5635
    %v5644 = vpack.c.bf16 %v5638, %v5636
    %v5645 = vpack.c.bf16 %v5639, %v5637
    %v5646 = vpack.c.bf16 %v5642, %v5640
    %v5647 = vpack.c.bf16 %v5643, %v5641
    %5648 = vmatprep.subr.bf16.mxu0 0
    %5649 = vmatpush1.bf16.msra.mxu0 %v1078
    %5650 = vmatprep.subr.bf16.mxu0 0
    %5651 = vmatpush1.bf16.msra.mxu0 %v1077
    %5652 = vmatprep.subr.bf16.mxu0 0
    %5653 = vmatpush1.bf16.msra.mxu0 %v1076
    %5654 = vmatprep.subr.bf16.mxu0 0
    %5655 = vmatpush1.bf16.msra.mxu0 %v1075
    %5656 = vmatprep.subr.bf16.mxu0 0
    %5657 = vmatpush1.bf16.msra.mxu0 %v1074
    %5658 = vmatprep.subr.bf16.mxu0 0
    %5659 = vmatpush1.bf16.msra.mxu0 %v1073
    %5660 = vmatprep.subr.bf16.mxu0 0
    %5661 = vmatpush1.bf16.msra.mxu0 %v1072
    %5662 = vmatprep.subr.bf16.mxu0 0
    %5663 = vmatpush1.bf16.msra.mxu0 %v1071
    %5664 = vmatprep.subr.bf16.mxu0 0
    %5665 = vmatpush2.bf16.msra.mxu0 %v1086
    %5666 = vmatprep.subr.bf16.mxu0 0
    %5667 = vmatpush2.bf16.msra.mxu0 %v1085
    %5668 = vmatprep.subr.bf16.mxu0 0
    %5669 = vmatpush2.bf16.msra.mxu0 %v1084
    %5670 = vmatprep.subr.bf16.mxu0 0
    %5671 = vmatpush2.bf16.msra.mxu0 %v1083
    %5672 = vmatprep.subr.bf16.mxu0 0
    %5673 = vmatpush2.bf16.msra.mxu0 %v1082
    %5674 = vmatprep.subr.bf16.mxu0 0
    %5675 = vmatpush2.bf16.msra.mxu0 %v1081
    %5676 = vmatprep.subr.bf16.mxu0 0
    %5677 = vmatpush2.bf16.msra.mxu0 %v1080
    %5678 = vmatprep.subr.bf16.mxu0 0
    %5679 = vmatpush2.bf16.msra.mxu0 %v1079
    %5680 = vmatprep.mubr.bf16.mxu0 %v5645
    %5681 = vmatmul.mubr.bf16.gmra.mxu0 %v5644
    %v5682 = vpop.f32.mrf.mxu0
    %v5683 = vadd.f32 0.0, %v5682
    %v5684 = vpop.f32.mrf.mxu0
    %v5685 = vpop.f32.mrf.mxu0
    %v5686 = vadd.f32 0.0, %v5685
    %v5687 = vpop.f32.mrf.mxu0
    %5688 = vmatprep.mubr.bf16.mxu0 %v5647
    %5689 = vmatmul.mubr.bf16.gmra.mxu0 %v5646
    %v5690 = vpop.f32.mrf.mxu0
    %v5691 = vadd.f32 0.0, %v5690
    %v5692 = vpop.f32.mrf.mxu0
    %v5693 = vpop.f32.mrf.mxu0
    %v5694 = vadd.f32 0.0, %v5693
    %v5695 = vpop.f32.mrf.mxu0
    %5696 = vdwg.mxu0
    %v5697 = vsel %vm303, %v5683, -inf
    %v5698 = vsel %vm303, %v5686, -inf
    %v5699 = vsel %vm303, %v5691, -inf
    %v5700 = vsel %vm303, %v5694, -inf
    %v5701 = vmax.f32 %v5697, %v5698
    %v5702 = vmax.f32 %v5699, %v5700
    %v5703 = vmax.f32 %v5701, %v5702
    %v5704 = vrot.slane %v5703, 4
    %v5705 = vmax.f32 %v5703, %v5704
    %v5706 = vrot.slane %v5705, 2
    %v5707 = vmax.f32 %v5705, %v5706
    %v5708 = vrot.slane %v5707, 1
    %v5709 = vmax.f32 %v5707, %v5708
    %v5710 = vsub.f32 %v5683, %v5709
    %v5711 = vsub.f32 %v5686, %v5709
    %v5712 = vsub.f32 %v5691, %v5709
    %v5713 = vsub.f32 %v5694, %v5709
    %v5714 = vmul.f32 %v5710, 1.442695
    %v5715 = vpow.pop %v5714
    %v5716 = vmul.f32 %v5711, 1.442695
    %v5717 = vpow.pop %v5716
    %v5718 = vmul.f32 %v5712, 1.442695
    %v5719 = vpow.pop %v5718
    %v5720 = vmul.f32 %v5713, 1.442695
    %v5721 = vpow.pop %v5720
    %v5722 = vpack.c.bf16 %v5717, %v5715
    %v5723 = vpack.c.bf16 %v5721, %v5719
    %5724 = vmatprep.subr.bf16.mxu0 0
    %5725 = vmatpush1.bf16.msra.mxu0 0
    %5726 = vmatprep.subr.bf16.mxu0 0
    %5727 = vmatpush1.bf16.msra.mxu0 0
    %5728 = vmatprep.subr.bf16.mxu0 0
    %5729 = vmatpush1.bf16.msra.mxu0 0
    %5730 = vmatprep.subr.bf16.mxu0 0
    %5731 = vmatpush1.bf16.msra.mxu0 0
    %5732 = vmatprep.subr.bf16.mxu0 0
    %5733 = vmatpush1.bf16.msra.mxu0 0
    %5734 = vmatprep.subr.bf16.mxu0 0
    %5735 = vmatpush1.bf16.msra.mxu0 0
    %5736 = vmatprep.subr.bf16.mxu0 0
    %5737 = vmatpush1.bf16.msra.mxu0 %v5723
    %5738 = vmatprep.subr.bf16.mxu0 0
    %5739 = vmatpush1.bf16.msra.mxu0 %v5722
    %5740 = vmatprep.subr.bf16.mxu0 0
    %5741 = vmatpush2.bf16.msra.mxu0 0
    %5742 = vmatprep.subr.bf16.mxu0 0
    %5743 = vmatpush2.bf16.msra.mxu0 0
    %5744 = vmatprep.subr.bf16.mxu0 0
    %5745 = vmatpush2.bf16.msra.mxu0 0
    %5746 = vmatprep.subr.bf16.mxu0 0
    %5747 = vmatpush2.bf16.msra.mxu0 0
    %5748 = vmatprep.subr.bf16.mxu0 0
    %5749 = vmatpush2.bf16.msra.mxu0 0
    %5750 = vmatprep.subr.bf16.mxu0 0
    %5751 = vmatpush2.bf16.msra.mxu0 0
    %5752 = vmatprep.subr.bf16.mxu0 0
    %5753 = vmatpush2.bf16.msra.mxu0 0
    %5754 = vmatprep.subr.bf16.mxu0 0
    %5755 = vmatpush2.bf16.msra.mxu0 0
    %5756 = vmatprep.mubr.bf16.mxu0 0
    %5757 = vmatmul.mubr.bf16.gmra.mxu0 %v1186
    %v5758 = vpop.f32.mrf.mxu0
    %v5759 = vadd.f32 0.0, %v5758
    %v5760 = vpop.f32.mrf.mxu0
    %v5761 = vpop.f32.mrf.mxu0
    %v5762 = vadd.f32 0.0, %v5761
    %v5763 = vpop.f32.mrf.mxu0
    %5764 = vdwg.mxu0
    %v5765 = vmax.f32 %v5759, 1e-30
    %v5766 = vmax.f32 %v5762, 1e-30
    %v5767 = vrcp.pop %v5765
    %v5768 = vmul.f32 1.0, %v5767
    %v5769 = vrcp.pop %v5766
    %v5770 = vmul.f32 1.0, %v5769
    %v5771 = vpack.c.bf16 %v5770, %v5768
    %v5773 = vsel %vm303, %v5771, 0
    %5775 = vmatprep.subr.bf16.mxu0 0
    %5776 = vmatpush1.bf16.msra.mxu0 0
    %5777 = vmatprep.subr.bf16.mxu0 0
    %5778 = vmatpush1.bf16.msra.mxu0 0
    %5779 = vmatprep.subr.bf16.mxu0 0
    %5780 = vmatpush1.bf16.msra.mxu0 0
    %5781 = vmatprep.subr.bf16.mxu0 0
    %5782 = vmatpush1.bf16.msra.mxu0 0
    %5783 = vmatprep.subr.bf16.mxu0 0
    %5784 = vmatpush1.bf16.msra.mxu0 0
    %5785 = vmatprep.subr.bf16.mxu0 0
    %5786 = vmatpush1.bf16.msra.mxu0 0
    %5787 = vmatprep.subr.bf16.mxu0 0
    %5788 = vmatpush1.bf16.msra.mxu0 0
    %5789 = vmatprep.subr.bf16.mxu0 %v1248
    %5790 = vmatpush1.bf16.msra.mxu0 %v1245
    %5791 = vmatprep.subr.bf16.mxu0 0
    %5792 = vmatpush2.bf16.msra.mxu0 0
    %5793 = vmatprep.subr.bf16.mxu0 0
    %5794 = vmatpush2.bf16.msra.mxu0 0
    %5795 = vmatprep.subr.bf16.mxu0 0
    %5796 = vmatpush2.bf16.msra.mxu0 0
    %5797 = vmatprep.subr.bf16.mxu0 0
    %5798 = vmatpush2.bf16.msra.mxu0 0
    %5799 = vmatprep.subr.bf16.mxu0 0
    %5800 = vmatpush2.bf16.msra.mxu0 0
    %5801 = vmatprep.subr.bf16.mxu0 0
    %5802 = vmatpush2.bf16.msra.mxu0 0
    %5803 = vmatprep.subr.bf16.mxu0 0
    %5804 = vmatpush2.bf16.msra.mxu0 0
    %5805 = vmatprep.subr.bf16.mxu0 0
    %5806 = vmatpush2.bf16.msra.mxu0 0
    %5807 = vmatprep.mubr.bf16.mxu0 0
    %5808 = vmatmul.mubr.bf16.gmra.mxu0 %v5773
    %v5809 = vpop.f32.mrf.mxu0
    %v5810 = vadd.f32 0.0, %v5809
    %v5811 = vpop.f32.mrf.mxu0
    %v5812 = vadd.f32 0.0, %v5811
    %v5813 = vpop.f32.mrf.mxu0
    %v5814 = vadd.f32 0.0, %v5813
    %v5815 = vpop.f32.mrf.mxu0
    %v5816 = vadd.f32 0.0, %v5815
    %5817 = vdwg.mxu0
    %v5818 = vpack.c.bf16 %v5814, %v5810
    %v5819 = vpack.c.bf16 %v5816, %v5812
    %5820 = vmatprep.subr.bf16.mxu0 0
    %5821 = vmatpush1.bf16.msra.mxu0 0
    %5822 = vmatprep.subr.bf16.mxu0 0
    %5823 = vmatpush1.bf16.msra.mxu0 0
    %5824 = vmatprep.subr.bf16.mxu0 0
    %5825 = vmatpush1.bf16.msra.mxu0 0
    %5826 = vmatprep.subr.bf16.mxu0 0
    %5827 = vmatpush1.bf16.msra.mxu0 0
    %5828 = vmatprep.subr.bf16.mxu0 0
    %5829 = vmatpush1.bf16.msra.mxu0 0
    %5830 = vmatprep.subr.bf16.mxu0 0
    %5831 = vmatpush1.bf16.msra.mxu0 0
    %5832 = vmatprep.subr.bf16.mxu0 0
    %5833 = vmatpush1.bf16.msra.mxu0 0
    %5834 = vmatprep.subr.bf16.mxu0 %v5819
    %5835 = vmatpush1.bf16.msra.mxu0 %v5818
    %5836 = vmatprep.subr.bf16.mxu0 0
    %5837 = vmatpush2.bf16.msra.mxu0 0
    %5838 = vmatprep.subr.bf16.mxu0 0
    %5839 = vmatpush2.bf16.msra.mxu0 0
    %5840 = vmatprep.subr.bf16.mxu0 0
    %5841 = vmatpush2.bf16.msra.mxu0 0
    %5842 = vmatprep.subr.bf16.mxu0 0
    %5843 = vmatpush2.bf16.msra.mxu0 0
    %5844 = vmatprep.subr.bf16.mxu0 0
    %5845 = vmatpush2.bf16.msra.mxu0 0
    %5846 = vmatprep.subr.bf16.mxu0 0
    %5847 = vmatpush2.bf16.msra.mxu0 0
    %5848 = vmatprep.subr.bf16.mxu0 0
    %5849 = vmatpush2.bf16.msra.mxu0 0
    %5850 = vmatprep.subr.bf16.mxu0 0
    %5851 = vmatpush2.bf16.msra.mxu0 0
    %5852 = vmatprep.mubr.bf16.mxu0 0
    %5853 = vmatmul.mubr.bf16.gmra.mxu0 %v825
    %v5854 = vpop.f32.mrf.mxu0
    %v5855 = vadd.f32 0.0, %v5854
    %v5856 = vpop.f32.mrf.mxu0
    %v5857 = vadd.f32 0.0, %v5856
    %v5858 = vpop.f32.mrf.mxu0
    %v5859 = vadd.f32 0.0, %v5858
    %v5860 = vpop.f32.mrf.mxu0
    %v5861 = vadd.f32 0.0, %v5860
    %5862 = vmatprep.mubr.bf16.mxu0 0
    %5863 = vmatmul.mubr.bf16.gmra.mxu0 %v828
    %v5864 = vpop.f32.mrf.mxu0
    %v5865 = vadd.f32 0.0, %v5864
    %v5866 = vpop.f32.mrf.mxu0
    %v5867 = vadd.f32 0.0, %v5866
    %v5868 = vpop.f32.mrf.mxu0
    %v5869 = vadd.f32 0.0, %v5868
    %v5870 = vpop.f32.mrf.mxu0
    %v5871 = vadd.f32 0.0, %v5870
    %5872 = vdwg.mxu0
    %v5874 = vsel %vm303, %v5722, 0
    %v5877 = vsel %vm303, %v5723, 0
    %5879 = vmatprep.subr.bf16.mxu0 0
    %5880 = vmatpush1.bf16.msra.mxu0 0
    %5881 = vmatprep.subr.bf16.mxu0 0
    %5882 = vmatpush1.bf16.msra.mxu0 0
    %5883 = vmatprep.subr.bf16.mxu0 0
    %5884 = vmatpush1.bf16.msra.mxu0 0
    %5885 = vmatprep.subr.bf16.mxu0 0
    %5886 = vmatpush1.bf16.msra.mxu0 0
    %5887 = vmatprep.subr.bf16.mxu0 0
    %5888 = vmatpush1.bf16.msra.mxu0 0
    %5889 = vmatprep.subr.bf16.mxu0 0
    %5890 = vmatpush1.bf16.msra.mxu0 0
    %5891 = vmatprep.subr.bf16.mxu0 0
    %5892 = vmatpush1.bf16.msra.mxu0 0
    %5893 = vmatprep.subr.bf16.mxu0 %v1248
    %5894 = vmatpush1.bf16.msra.mxu0 %v1245
    %5895 = vmatprep.subr.bf16.mxu0 0
    %5896 = vmatpush2.bf16.msra.mxu0 0
    %5897 = vmatprep.subr.bf16.mxu0 0
    %5898 = vmatpush2.bf16.msra.mxu0 0
    %5899 = vmatprep.subr.bf16.mxu0 0
    %5900 = vmatpush2.bf16.msra.mxu0 0
    %5901 = vmatprep.subr.bf16.mxu0 0
    %5902 = vmatpush2.bf16.msra.mxu0 0
    %5903 = vmatprep.subr.bf16.mxu0 0
    %5904 = vmatpush2.bf16.msra.mxu0 0
    %5905 = vmatprep.subr.bf16.mxu0 0
    %5906 = vmatpush2.bf16.msra.mxu0 0
    %5907 = vmatprep.subr.bf16.mxu0 0
    %5908 = vmatpush2.bf16.msra.mxu0 0
    %5909 = vmatprep.subr.bf16.mxu0 0
    %5910 = vmatpush2.bf16.msra.mxu0 0
    %5911 = vmatprep.mubr.bf16.mxu0 0
    %5912 = vmatmul.mubr.bf16.gmra.mxu0 %v5874
    %v5913 = vpop.f32.mrf.mxu0
    %v5914 = vadd.f32 0.0, %v5913
    %v5915 = vpop.f32.mrf.mxu0
    %v5916 = vadd.f32 0.0, %v5915
    %v5917 = vpop.f32.mrf.mxu0
    %v5918 = vadd.f32 0.0, %v5917
    %v5919 = vpop.f32.mrf.mxu0
    %v5920 = vadd.f32 0.0, %v5919
    %5921 = vmatprep.mubr.bf16.mxu0 0
    %5922 = vmatmul.mubr.bf16.gmra.mxu0 %v5877
    %v5923 = vpop.f32.mrf.mxu0
    %v5924 = vadd.f32 0.0, %v5923
    %v5925 = vpop.f32.mrf.mxu0
    %v5926 = vadd.f32 0.0, %v5925
    %v5927 = vpop.f32.mrf.mxu0
    %v5928 = vadd.f32 0.0, %v5927
    %v5929 = vpop.f32.mrf.mxu0
    %v5930 = vadd.f32 0.0, %v5929
    %5931 = vdwg.mxu0
    %v5932 = vpack.c.bf16 %v5490, %v5486
    %v5933 = vpack.c.bf16 %v5492, %v5488
    %5934 = vmatprep.subr.bf16.mxu0 0
    %5935 = vmatpush1.bf16.msra.mxu0 0
    %5936 = vmatprep.subr.bf16.mxu0 0
    %5937 = vmatpush1.bf16.msra.mxu0 0
    %5938 = vmatprep.subr.bf16.mxu0 0
    %5939 = vmatpush1.bf16.msra.mxu0 0
    %5940 = vmatprep.subr.bf16.mxu0 0
    %5941 = vmatpush1.bf16.msra.mxu0 0
    %5942 = vmatprep.subr.bf16.mxu0 0
    %5943 = vmatpush1.bf16.msra.mxu0 0
    %5944 = vmatprep.subr.bf16.mxu0 0
    %5945 = vmatpush1.bf16.msra.mxu0 0
    %5946 = vmatprep.subr.bf16.mxu0 0
    %5947 = vmatpush1.bf16.msra.mxu0 0
    %5948 = vmatprep.subr.bf16.mxu0 %v5933
    %5949 = vmatpush1.bf16.msra.mxu0 %v5932
    %5950 = vmatprep.subr.bf16.mxu0 0
    %5951 = vmatpush2.bf16.msra.mxu0 0
    %5952 = vmatprep.subr.bf16.mxu0 0
    %5953 = vmatpush2.bf16.msra.mxu0 0
    %5954 = vmatprep.subr.bf16.mxu0 0
    %5955 = vmatpush2.bf16.msra.mxu0 0
    %5956 = vmatprep.subr.bf16.mxu0 0
    %5957 = vmatpush2.bf16.msra.mxu0 0
    %5958 = vmatprep.subr.bf16.mxu0 0
    %5959 = vmatpush2.bf16.msra.mxu0 0
    %5960 = vmatprep.subr.bf16.mxu0 0
    %5961 = vmatpush2.bf16.msra.mxu0 0
    %5962 = vmatprep.subr.bf16.mxu0 0
    %5963 = vmatpush2.bf16.msra.mxu0 0
    %5964 = vmatprep.subr.bf16.mxu0 0
    %5965 = vmatpush2.bf16.msra.mxu0 0
    %5966 = vmatprep.mubr.bf16.mxu0 0
    %5967 = vmatmul.mubr.bf16.gmra.mxu0 %v894
    %v5968 = vpop.f32.mrf.mxu0
    %v5969 = vadd.f32 0.0, %v5968
    %v5970 = vpop.f32.mrf.mxu0
    %v5971 = vadd.f32 0.0, %v5970
    %v5972 = vpop.f32.mrf.mxu0
    %v5973 = vadd.f32 0.0, %v5972
    %v5974 = vpop.f32.mrf.mxu0
    %v5975 = vadd.f32 0.0, %v5974
    %5976 = vmatprep.mubr.bf16.mxu0 0
    %5977 = vmatmul.mubr.bf16.gmra.mxu0 %v897
    %v5978 = vpop.f32.mrf.mxu0
    %v5979 = vadd.f32 0.0, %v5978
    %v5980 = vpop.f32.mrf.mxu0
    %v5981 = vadd.f32 0.0, %v5980
    %v5982 = vpop.f32.mrf.mxu0
    %v5983 = vadd.f32 0.0, %v5982
    %v5984 = vpop.f32.mrf.mxu0
    %v5985 = vadd.f32 0.0, %v5984
    %5986 = vdwg.mxu0
    %v5987 = vmul.f32 %v5914, %v5855
    %v5988 = vmul.f32 %v5916, %v5857
    %v5989 = vmul.f32 %v5918, %v5859
    %v5990 = vmul.f32 %v5920, %v5861
    %v5991 = vmul.f32 %v5924, %v5865
    %v5992 = vmul.f32 %v5926, %v5867
    %v5993 = vmul.f32 %v5928, %v5869
    %v5994 = vmul.f32 %v5930, %v5871
    %v5995 = vmul.f32 %v5987, %v5969
    %v5996 = vmul.f32 %v5988, %v5971
    %v5997 = vmul.f32 %v5989, %v5973
    %v5998 = vmul.f32 %v5990, %v5975
    %v5999 = vmul.f32 %v5991, %v5979
    %v6000 = vmul.f32 %v5992, %v5981
    %v6001 = vmul.f32 %v5993, %v5983
    %v6002 = vmul.f32 %v5994, %v5985
    %v6003 = vpack.c.bf16 %v5997, %v5995
    %v6004 = vpack.c.bf16 %v5998, %v5996
    %v6005 = vpack.c.bf16 %v6001, %v5999
    %v6006 = vpack.c.bf16 %v6002, %v6000
    %6007 = vmatprep.subr.bf16.mxu0 0
    %6008 = vmatpush1.bf16.msra.mxu0 0
    %6009 = vmatprep.subr.bf16.mxu0 0
    %6010 = vmatpush1.bf16.msra.mxu0 0
    %6011 = vmatprep.subr.bf16.mxu0 0
    %6012 = vmatpush1.bf16.msra.mxu0 0
    %6013 = vmatprep.subr.bf16.mxu0 0
    %6014 = vmatpush1.bf16.msra.mxu0 0
    %6015 = vmatprep.subr.bf16.mxu0 0
    %6016 = vmatpush1.bf16.msra.mxu0 0
    %6017 = vmatprep.subr.bf16.mxu0 0
    %6018 = vmatpush1.bf16.msra.mxu0 0
    %6019 = vmatprep.subr.bf16.mxu0 %v6006
    %6020 = vmatpush1.bf16.msra.mxu0 %v6005
    %6021 = vmatprep.subr.bf16.mxu0 %v6004
    %6022 = vmatpush1.bf16.msra.mxu0 %v6003
    %6023 = vmatprep.subr.bf16.mxu0 0
    %6024 = vmatpush2.bf16.msra.mxu0 0
    %6025 = vmatprep.subr.bf16.mxu0 0
    %6026 = vmatpush2.bf16.msra.mxu0 0
    %6027 = vmatprep.subr.bf16.mxu0 0
    %6028 = vmatpush2.bf16.msra.mxu0 0
    %6029 = vmatprep.subr.bf16.mxu0 0
    %6030 = vmatpush2.bf16.msra.mxu0 0
    %6031 = vmatprep.subr.bf16.mxu0 0
    %6032 = vmatpush2.bf16.msra.mxu0 0
    %6033 = vmatprep.subr.bf16.mxu0 0
    %6034 = vmatpush2.bf16.msra.mxu0 0
    %6035 = vmatprep.subr.bf16.mxu0 0
    %6036 = vmatpush2.bf16.msra.mxu0 0
    %6037 = vmatprep.subr.bf16.mxu0 0
    %6038 = vmatpush2.bf16.msra.mxu0 0
    %6039 = vmatprep.mubr.bf16.mxu0 0
    %6040 = vmatmul.mubr.bf16.gmra.mxu0 %v1186
    %v6041 = vpop.f32.mrf.mxu0
    %v6042 = vadd.f32 0.0, %v6041
    %v6043 = vpop.f32.mrf.mxu0
    %v6044 = vadd.f32 0.0, %v6043
    %v6045 = vpop.f32.mrf.mxu0
    %v6046 = vadd.f32 0.0, %v6045
    %v6047 = vpop.f32.mrf.mxu0
    %v6048 = vadd.f32 0.0, %v6047
    %6049 = vdwg.mxu0
    %v6050 = vmax.f32 %v6042, 0.0
    %v6051 = vmax.f32 %v6044, 0.0
    %v6052 = vmax.f32 %v6046, 0.0
    %v6053 = vmax.f32 %v6048, 0.0
    %v6054 = vmax.f32 %v5636, 0.0
    %v6055 = vmax.f32 %v5637, 0.0
    %v6056 = vmax.f32 %v5638, 0.0
    %v6057 = vmax.f32 %v5639, 0.0
    %v6058 = vmax.f32 %v5640, 0.0
    %v6059 = vmax.f32 %v5641, 0.0
    %v6060 = vmax.f32 %v5642, 0.0
    %v6061 = vmax.f32 %v5643, 0.0
    %v6062 = vpack.c.bf16 %v6052, %v6050
    %v6063 = vpack.c.bf16 %v6053, %v6051
    %6064 = vmatprep.subr.bf16.mxu0 0
    %6065 = vmatpush1.bf16.msra.mxu0 %v1642
    %6066 = vmatprep.subr.bf16.mxu0 0
    %6067 = vmatpush1.bf16.msra.mxu0 %v1641
    %6068 = vmatprep.subr.bf16.mxu0 0
    %6069 = vmatpush1.bf16.msra.mxu0 %v1640
    %6070 = vmatprep.subr.bf16.mxu0 0
    %6071 = vmatpush1.bf16.msra.mxu0 %v1639
    %6072 = vmatprep.subr.bf16.mxu0 0
    %6073 = vmatpush1.bf16.msra.mxu0 %v1638
    %6074 = vmatprep.subr.bf16.mxu0 0
    %6075 = vmatpush1.bf16.msra.mxu0 %v1637
    %6076 = vmatprep.subr.bf16.mxu0 0
    %6077 = vmatpush1.bf16.msra.mxu0 %v1636
    %6078 = vmatprep.subr.bf16.mxu0 0
    %6079 = vmatpush1.bf16.msra.mxu0 %v1635
    %6080 = vmatprep.subr.bf16.mxu0 0
    %6081 = vmatpush2.bf16.msra.mxu0 %v1650
    %6082 = vmatprep.subr.bf16.mxu0 0
    %6083 = vmatpush2.bf16.msra.mxu0 %v1649
    %6084 = vmatprep.subr.bf16.mxu0 0
    %6085 = vmatpush2.bf16.msra.mxu0 %v1648
    %6086 = vmatprep.subr.bf16.mxu0 0
    %6087 = vmatpush2.bf16.msra.mxu0 %v1647
    %6088 = vmatprep.subr.bf16.mxu0 0
    %6089 = vmatpush2.bf16.msra.mxu0 %v1646
    %6090 = vmatprep.subr.bf16.mxu0 0
    %6091 = vmatpush2.bf16.msra.mxu0 %v1645
    %6092 = vmatprep.subr.bf16.mxu0 0
    %6093 = vmatpush2.bf16.msra.mxu0 %v1644
    %6094 = vmatprep.subr.bf16.mxu0 0
    %6095 = vmatpush2.bf16.msra.mxu0 %v1643
    %6096 = vmatprep.mubr.bf16.mxu0 %v6063
    %6097 = vmatmul.mubr.bf16.gmra.mxu0 %v6062
    %v6098 = vpop.f32.mrf.mxu0
    %v6099 = vadd.f32 0.0, %v6098
    %v6100 = vpop.f32.mrf.mxu0
    %v6101 = vpop.f32.mrf.mxu0
    %v6102 = vadd.f32 0.0, %v6101
    %v6103 = vpop.f32.mrf.mxu0
    %6104 = vdwg.mxu0
    %6105 = vmatprep.subr.bf16.mxu0 0
    %6106 = vmatpush1.bf16.msra.mxu0 %v1811
    %6107 = vmatprep.subr.bf16.mxu0 0
    %6108 = vmatpush1.bf16.msra.mxu0 %v1810
    %6109 = vmatprep.subr.bf16.mxu0 0
    %6110 = vmatpush1.bf16.msra.mxu0 %v1809
    %6111 = vmatprep.subr.bf16.mxu0 0
    %6112 = vmatpush1.bf16.msra.mxu0 %v1808
    %6113 = vmatprep.subr.bf16.mxu0 0
    %6114 = vmatpush1.bf16.msra.mxu0 %v1807
    %6115 = vmatprep.subr.bf16.mxu0 0
    %6116 = vmatpush1.bf16.msra.mxu0 %v1806
    %6117 = vmatprep.subr.bf16.mxu0 0
    %6118 = vmatpush1.bf16.msra.mxu0 %v1805
    %6119 = vmatprep.subr.bf16.mxu0 0
    %6120 = vmatpush1.bf16.msra.mxu0 %v1804
    %6121 = vmatprep.subr.bf16.mxu0 0
    %6122 = vmatpush2.bf16.msra.mxu0 %v1819
    %6123 = vmatprep.subr.bf16.mxu0 0
    %6124 = vmatpush2.bf16.msra.mxu0 %v1818
    %6125 = vmatprep.subr.bf16.mxu0 0
    %6126 = vmatpush2.bf16.msra.mxu0 %v1817
    %6127 = vmatprep.subr.bf16.mxu0 0
    %6128 = vmatpush2.bf16.msra.mxu0 %v1816
    %6129 = vmatprep.subr.bf16.mxu0 0
    %6130 = vmatpush2.bf16.msra.mxu0 %v1815
    %6131 = vmatprep.subr.bf16.mxu0 0
    %6132 = vmatpush2.bf16.msra.mxu0 %v1814
    %6133 = vmatprep.subr.bf16.mxu0 0
    %6134 = vmatpush2.bf16.msra.mxu0 %v1813
    %6135 = vmatprep.subr.bf16.mxu0 0
    %6136 = vmatpush2.bf16.msra.mxu0 %v1812
    %6137 = vmatprep.mubr.bf16.mxu0 %v6063
    %6138 = vmatmul.mubr.bf16.gmra.mxu0 %v6062
    %v6139 = vpop.f32.mrf.mxu0
    %v6140 = vadd.f32 0.0, %v6139
    %v6141 = vpop.f32.mrf.mxu0
    %v6142 = vpop.f32.mrf.mxu0
    %v6143 = vadd.f32 0.0, %v6142
    %v6144 = vpop.f32.mrf.mxu0
    %6145 = vdwg.mxu0
    %v6146 = vpack.c.bf16 %v6056, %v6054
    %v6147 = vpack.c.bf16 %v6057, %v6055
    %v6148 = vpack.c.bf16 %v6060, %v6058
    %v6149 = vpack.c.bf16 %v6061, %v6059
    %6150 = vmatprep.subr.bf16.mxu0 0
    %6151 = vmatpush1.bf16.msra.mxu0 %v1984
    %6152 = vmatprep.subr.bf16.mxu0 0
    %6153 = vmatpush1.bf16.msra.mxu0 %v1983
    %6154 = vmatprep.subr.bf16.mxu0 0
    %6155 = vmatpush1.bf16.msra.mxu0 %v1982
    %6156 = vmatprep.subr.bf16.mxu0 0
    %6157 = vmatpush1.bf16.msra.mxu0 %v1981
    %6158 = vmatprep.subr.bf16.mxu0 0
    %6159 = vmatpush1.bf16.msra.mxu0 %v1980
    %6160 = vmatprep.subr.bf16.mxu0 0
    %6161 = vmatpush1.bf16.msra.mxu0 %v1979
    %6162 = vmatprep.subr.bf16.mxu0 0
    %6163 = vmatpush1.bf16.msra.mxu0 %v1978
    %6164 = vmatprep.subr.bf16.mxu0 0
    %6165 = vmatpush1.bf16.msra.mxu0 %v1977
    %6166 = vmatprep.subr.bf16.mxu0 0
    %6167 = vmatpush2.bf16.msra.mxu0 %v1992
    %6168 = vmatprep.subr.bf16.mxu0 0
    %6169 = vmatpush2.bf16.msra.mxu0 %v1991
    %6170 = vmatprep.subr.bf16.mxu0 0
    %6171 = vmatpush2.bf16.msra.mxu0 %v1990
    %6172 = vmatprep.subr.bf16.mxu0 0
    %6173 = vmatpush2.bf16.msra.mxu0 %v1989
    %6174 = vmatprep.subr.bf16.mxu0 0
    %6175 = vmatpush2.bf16.msra.mxu0 %v1988
    %6176 = vmatprep.subr.bf16.mxu0 0
    %6177 = vmatpush2.bf16.msra.mxu0 %v1987
    %6178 = vmatprep.subr.bf16.mxu0 0
    %6179 = vmatpush2.bf16.msra.mxu0 %v1986
    %6180 = vmatprep.subr.bf16.mxu0 0
    %6181 = vmatpush2.bf16.msra.mxu0 %v1985
    %6182 = vmatprep.mubr.bf16.mxu0 %v6147
    %6183 = vmatmul.mubr.bf16.gmra.mxu0 %v6146
    %v6184 = vpop.f32.mrf.mxu0
    %v6185 = vadd.f32 0.0, %v6184
    %v6186 = vpop.f32.mrf.mxu0
    %v6187 = vpop.f32.mrf.mxu0
    %v6188 = vadd.f32 0.0, %v6187
    %v6189 = vpop.f32.mrf.mxu0
    %6190 = vmatprep.mubr.bf16.mxu0 %v6149
    %6191 = vmatmul.mubr.bf16.gmra.mxu0 %v6148
    %v6192 = vpop.f32.mrf.mxu0
    %v6193 = vadd.f32 0.0, %v6192
    %v6194 = vpop.f32.mrf.mxu0
    %v6195 = vpop.f32.mrf.mxu0
    %v6196 = vadd.f32 0.0, %v6195
    %v6197 = vpop.f32.mrf.mxu0
    %6198 = vdwg.mxu0
    %6199 = vmatprep.subr.bf16.mxu0 %v2343
    %6200 = vmatpush1.bf16.msra.mxu0 %v2342
    %6201 = vmatprep.subr.bf16.mxu0 %v2339
    %6202 = vmatpush1.bf16.msra.mxu0 %v2338
    %6203 = vmatprep.subr.bf16.mxu0 %v2335
    %6204 = vmatpush1.bf16.msra.mxu0 %v2334
    %6205 = vmatprep.subr.bf16.mxu0 %v2331
    %6206 = vmatpush1.bf16.msra.mxu0 %v2330
    %6207 = vmatprep.subr.bf16.mxu0 %v2327
    %6208 = vmatpush1.bf16.msra.mxu0 %v2326
    %6209 = vmatprep.subr.bf16.mxu0 %v2323
    %6210 = vmatpush1.bf16.msra.mxu0 %v2322
    %6211 = vmatprep.subr.bf16.mxu0 %v2319
    %6212 = vmatpush1.bf16.msra.mxu0 %v2318
    %6213 = vmatprep.subr.bf16.mxu0 %v2315
    %6214 = vmatpush1.bf16.msra.mxu0 %v2314
    %6215 = vmatprep.subr.bf16.mxu0 %v2375
    %6216 = vmatpush2.bf16.msra.mxu0 %v2374
    %6217 = vmatprep.subr.bf16.mxu0 %v2371
    %6218 = vmatpush2.bf16.msra.mxu0 %v2370
    %6219 = vmatprep.subr.bf16.mxu0 %v2367
    %6220 = vmatpush2.bf16.msra.mxu0 %v2366
    %6221 = vmatprep.subr.bf16.mxu0 %v2363
    %6222 = vmatpush2.bf16.msra.mxu0 %v2362
    %6223 = vmatprep.subr.bf16.mxu0 %v2359
    %6224 = vmatpush2.bf16.msra.mxu0 %v2358
    %6225 = vmatprep.subr.bf16.mxu0 %v2355
    %6226 = vmatpush2.bf16.msra.mxu0 %v2354
    %6227 = vmatprep.subr.bf16.mxu0 %v2351
    %6228 = vmatpush2.bf16.msra.mxu0 %v2350
    %6229 = vmatprep.subr.bf16.mxu0 %v2347
    %6230 = vmatpush2.bf16.msra.mxu0 %v2346
    %6231 = vmatprep.mubr.bf16.mxu0 %v6063
    %6232 = vmatmul.mubr.bf16.gmra.mxu0 %v6062
    %v6233 = vpop.f32.mrf.mxu0
    %v6234 = vadd.f32 0.0, %v6233
    %v6235 = vpop.f32.mrf.mxu0
    %v6236 = vadd.f32 0.0, %v6235
    %v6237 = vpop.f32.mrf.mxu0
    %v6238 = vadd.f32 0.0, %v6237
    %v6239 = vpop.f32.mrf.mxu0
    %v6240 = vadd.f32 0.0, %v6239
    %6241 = vdwg.mxu0
    %6242 = vmatprep.subr.bf16.mxu0 %v2345
    %6243 = vmatpush1.bf16.msra.mxu0 %v2344
    %6244 = vmatprep.subr.bf16.mxu0 %v2341
    %6245 = vmatpush1.bf16.msra.mxu0 %v2340
    %6246 = vmatprep.subr.bf16.mxu0 %v2337
    %6247 = vmatpush1.bf16.msra.mxu0 %v2336
    %6248 = vmatprep.subr.bf16.mxu0 %v2333
    %6249 = vmatpush1.bf16.msra.mxu0 %v2332
    %6250 = vmatprep.subr.bf16.mxu0 %v2329
    %6251 = vmatpush1.bf16.msra.mxu0 %v2328
    %6252 = vmatprep.subr.bf16.mxu0 %v2325
    %6253 = vmatpush1.bf16.msra.mxu0 %v2324
    %6254 = vmatprep.subr.bf16.mxu0 %v2321
    %6255 = vmatpush1.bf16.msra.mxu0 %v2320
    %6256 = vmatprep.subr.bf16.mxu0 %v2317
    %6257 = vmatpush1.bf16.msra.mxu0 %v2316
    %6258 = vmatprep.subr.bf16.mxu0 %v2377
    %6259 = vmatpush2.bf16.msra.mxu0 %v2376
    %6260 = vmatprep.subr.bf16.mxu0 %v2373
    %6261 = vmatpush2.bf16.msra.mxu0 %v2372
    %6262 = vmatprep.subr.bf16.mxu0 %v2369
    %6263 = vmatpush2.bf16.msra.mxu0 %v2368
    %6264 = vmatprep.subr.bf16.mxu0 %v2365
    %6265 = vmatpush2.bf16.msra.mxu0 %v2364
    %6266 = vmatprep.subr.bf16.mxu0 %v2361
    %6267 = vmatpush2.bf16.msra.mxu0 %v2360
    %6268 = vmatprep.subr.bf16.mxu0 %v2357
    %6269 = vmatpush2.bf16.msra.mxu0 %v2356
    %6270 = vmatprep.subr.bf16.mxu0 %v2353
    %6271 = vmatpush2.bf16.msra.mxu0 %v2352
    %6272 = vmatprep.subr.bf16.mxu0 %v2349
    %6273 = vmatpush2.bf16.msra.mxu0 %v2348
    %6274 = vmatprep.mubr.bf16.mxu0 %v6063
    %6275 = vmatmul.mubr.bf16.gmra.mxu0 %v6062
    %v6276 = vpop.f32.mrf.mxu0
    %v6277 = vadd.f32 0.0, %v6276
    %v6278 = vpop.f32.mrf.mxu0
    %v6279 = vadd.f32 0.0, %v6278
    %v6280 = vpop.f32.mrf.mxu0
    %v6281 = vadd.f32 0.0, %v6280
    %v6282 = vpop.f32.mrf.mxu0
    %v6283 = vadd.f32 0.0, %v6282
    %6284 = vdwg.mxu0
    %v6285 = vpack.c.bf16 %v6102, %v6099
    %v6286 = vpack.c.bf16 %v6143, %v6140
    %6287 = vmatprep.subr.bf16.mxu0 0
    %6288 = vmatpush1.bf16.msra.mxu0 0
    %6289 = vmatprep.subr.bf16.mxu0 0
    %6290 = vmatpush1.bf16.msra.mxu0 0
    %6291 = vmatprep.subr.bf16.mxu0 0
    %6292 = vmatpush1.bf16.msra.mxu0 0
    %6293 = vmatprep.subr.bf16.mxu0 0
    %6294 = vmatpush1.bf16.msra.mxu0 0
    %6295 = vmatprep.subr.bf16.mxu0 0
    %6296 = vmatpush1.bf16.msra.mxu0 0
    %6297 = vmatprep.subr.bf16.mxu0 0
    %6298 = vmatpush1.bf16.msra.mxu0 0
    %6299 = vmatprep.subr.bf16.mxu0 0
    %6300 = vmatpush1.bf16.msra.mxu0 0
    %6301 = vmatprep.subr.bf16.mxu0 0
    %6302 = vmatpush1.bf16.msra.mxu0 %v6286
    %6303 = vmatprep.subr.bf16.mxu0 0
    %6304 = vmatpush2.bf16.msra.mxu0 0
    %6305 = vmatprep.subr.bf16.mxu0 0
    %6306 = vmatpush2.bf16.msra.mxu0 0
    %6307 = vmatprep.subr.bf16.mxu0 0
    %6308 = vmatpush2.bf16.msra.mxu0 0
    %6309 = vmatprep.subr.bf16.mxu0 0
    %6310 = vmatpush2.bf16.msra.mxu0 0
    %6311 = vmatprep.subr.bf16.mxu0 0
    %6312 = vmatpush2.bf16.msra.mxu0 0
    %6313 = vmatprep.subr.bf16.mxu0 0
    %6314 = vmatpush2.bf16.msra.mxu0 0
    %6315 = vmatprep.subr.bf16.mxu0 0
    %6316 = vmatpush2.bf16.msra.mxu0 0
    %6317 = vmatprep.subr.bf16.mxu0 0
    %6318 = vmatpush2.bf16.msra.mxu0 0
    %6319 = vmatprep.mubr.bf16.mxu0 0
    %6320 = vmatmul.mubr.bf16.gmra.mxu0 %v825
    %v6321 = vpop.f32.mrf.mxu0
    %v6322 = vadd.f32 0.0, %v6321
    %v6323 = vpop.f32.mrf.mxu0
    %v6324 = vpop.f32.mrf.mxu0
    %v6325 = vadd.f32 0.0, %v6324
    %v6326 = vpop.f32.mrf.mxu0
    %6327 = vmatprep.mubr.bf16.mxu0 0
    %6328 = vmatmul.mubr.bf16.gmra.mxu0 %v828
    %v6329 = vpop.f32.mrf.mxu0
    %v6330 = vadd.f32 0.0, %v6329
    %v6331 = vpop.f32.mrf.mxu0
    %v6332 = vpop.f32.mrf.mxu0
    %v6333 = vadd.f32 0.0, %v6332
    %v6334 = vpop.f32.mrf.mxu0
    %6335 = vdwg.mxu0
    %6336 = vmatprep.subr.bf16.mxu0 0
    %6337 = vmatpush1.bf16.msra.mxu0 0
    %6338 = vmatprep.subr.bf16.mxu0 0
    %6339 = vmatpush1.bf16.msra.mxu0 0
    %6340 = vmatprep.subr.bf16.mxu0 0
    %6341 = vmatpush1.bf16.msra.mxu0 0
    %6342 = vmatprep.subr.bf16.mxu0 0
    %6343 = vmatpush1.bf16.msra.mxu0 0
    %6344 = vmatprep.subr.bf16.mxu0 0
    %6345 = vmatpush1.bf16.msra.mxu0 0
    %6346 = vmatprep.subr.bf16.mxu0 0
    %6347 = vmatpush1.bf16.msra.mxu0 0
    %6348 = vmatprep.subr.bf16.mxu0 0
    %6349 = vmatpush1.bf16.msra.mxu0 0
    %6350 = vmatprep.subr.bf16.mxu0 0
    %6351 = vmatpush1.bf16.msra.mxu0 %v6285
    %6352 = vmatprep.subr.bf16.mxu0 0
    %6353 = vmatpush2.bf16.msra.mxu0 0
    %6354 = vmatprep.subr.bf16.mxu0 0
    %6355 = vmatpush2.bf16.msra.mxu0 0
    %6356 = vmatprep.subr.bf16.mxu0 0
    %6357 = vmatpush2.bf16.msra.mxu0 0
    %6358 = vmatprep.subr.bf16.mxu0 0
    %6359 = vmatpush2.bf16.msra.mxu0 0
    %6360 = vmatprep.subr.bf16.mxu0 0
    %6361 = vmatpush2.bf16.msra.mxu0 0
    %6362 = vmatprep.subr.bf16.mxu0 0
    %6363 = vmatpush2.bf16.msra.mxu0 0
    %6364 = vmatprep.subr.bf16.mxu0 0
    %6365 = vmatpush2.bf16.msra.mxu0 0
    %6366 = vmatprep.subr.bf16.mxu0 0
    %6367 = vmatpush2.bf16.msra.mxu0 0
    %6368 = vmatprep.mubr.bf16.mxu0 0
    %6369 = vmatmul.mubr.bf16.gmra.mxu0 %v894
    %v6370 = vpop.f32.mrf.mxu0
    %v6371 = vadd.f32 %v6322, %v6370
    %v6372 = vpop.f32.mrf.mxu0
    %v6373 = vpop.f32.mrf.mxu0
    %v6374 = vadd.f32 %v6325, %v6373
    %v6375 = vpop.f32.mrf.mxu0
    %6376 = vmatprep.mubr.bf16.mxu0 0
    %6377 = vmatmul.mubr.bf16.gmra.mxu0 %v897
    %v6378 = vpop.f32.mrf.mxu0
    %v6379 = vadd.f32 %v6330, %v6378
    %v6380 = vpop.f32.mrf.mxu0
    %v6381 = vpop.f32.mrf.mxu0
    %v6382 = vadd.f32 %v6333, %v6381
    %v6383 = vpop.f32.mrf.mxu0
    %6384 = vdwg.mxu0
    %v6385 = vadd.f32 %v6371, %v6185
    %v6386 = vadd.f32 %v6374, %v6188
    %v6387 = vadd.f32 %v6379, %v6193
    %v6388 = vadd.f32 %v6382, %v6196
    %v6389 = vadd.f32 %v6385, %v2635
    %v6390 = vadd.f32 %v6386, %v2635
    %v6391 = vadd.f32 %v6387, %v2635
    %v6392 = vadd.f32 %v6388, %v2635
    %vm6393 = vcmp.gt.f32.partialorder %v6389, 0.0
    %vm6394 = vcmp.gt.f32.partialorder %v6390, 0.0
    %vm6395 = vcmp.gt.f32.partialorder %v6391, 0.0
    %vm6396 = vcmp.gt.f32.partialorder %v6392, 0.0
    %v6397 = vmul.f32 %v6389, 0.01
    %v6398 = vmul.f32 %v6390, 0.01
    %v6399 = vmul.f32 %v6391, 0.01
    %v6400 = vmul.f32 %v6392, 0.01
    %v6401 = vsel %vm6393, %v6389, %v6397
    %v6402 = vsel %vm6394, %v6390, %v6398
    %v6403 = vsel %vm6395, %v6391, %v6399
    %v6404 = vsel %vm6396, %v6392, %v6400
    %v6405 = vpack.c.bf16 %v6402, %v6401
    %v6406 = vpack.c.bf16 %v6404, %v6403
    %6407 = vmatprep.subr.bf16.mxu0 0
    %6408 = vmatpush1.bf16.msra.mxu0 %v2693
    %6409 = vmatprep.subr.bf16.mxu0 0
    %6410 = vmatpush1.bf16.msra.mxu0 %v2692
    %6411 = vmatprep.subr.bf16.mxu0 0
    %6412 = vmatpush1.bf16.msra.mxu0 %v2691
    %6413 = vmatprep.subr.bf16.mxu0 0
    %6414 = vmatpush1.bf16.msra.mxu0 %v2690
    %6415 = vmatprep.subr.bf16.mxu0 0
    %6416 = vmatpush1.bf16.msra.mxu0 %v2689
    %6417 = vmatprep.subr.bf16.mxu0 0
    %6418 = vmatpush1.bf16.msra.mxu0 %v2688
    %6419 = vmatprep.subr.bf16.mxu0 0
    %6420 = vmatpush1.bf16.msra.mxu0 %v2687
    %6421 = vmatprep.subr.bf16.mxu0 0
    %6422 = vmatpush1.bf16.msra.mxu0 %v2686
    %6423 = vmatprep.subr.bf16.mxu0 0
    %6424 = vmatpush2.bf16.msra.mxu0 0
    %6425 = vmatprep.subr.bf16.mxu0 0
    %6426 = vmatpush2.bf16.msra.mxu0 0
    %6427 = vmatprep.subr.bf16.mxu0 0
    %6428 = vmatpush2.bf16.msra.mxu0 0
    %6429 = vmatprep.subr.bf16.mxu0 0
    %6430 = vmatpush2.bf16.msra.mxu0 0
    %6431 = vmatprep.subr.bf16.mxu0 0
    %6432 = vmatpush2.bf16.msra.mxu0 0
    %6433 = vmatprep.subr.bf16.mxu0 0
    %6434 = vmatpush2.bf16.msra.mxu0 0
    %6435 = vmatprep.subr.bf16.mxu0 0
    %6436 = vmatpush2.bf16.msra.mxu0 0
    %6437 = vmatprep.subr.bf16.mxu0 0
    %6438 = vmatpush2.bf16.msra.mxu0 0
    %6439 = vmatprep.mubr.bf16.mxu0 0
    %6440 = vmatmul.mubr.bf16.gmra.mxu0 %v6405
    %v6441 = vpop.f32.mrf.mxu0
    %v6442 = vadd.f32 0.0, %v6441
    %v6443 = vpop.f32.mrf.mxu0
    %v6444 = vpop.f32.mrf.mxu0
    %v6445 = vadd.f32 0.0, %v6444
    %v6446 = vpop.f32.mrf.mxu0
    %6447 = vmatprep.mubr.bf16.mxu0 0
    %6448 = vmatmul.mubr.bf16.gmra.mxu0 %v6406
    %v6449 = vpop.f32.mrf.mxu0
    %v6450 = vadd.f32 0.0, %v6449
    %v6451 = vpop.f32.mrf.mxu0
    %v6452 = vpop.f32.mrf.mxu0
    %v6453 = vadd.f32 0.0, %v6452
    %v6454 = vpop.f32.mrf.mxu0
    %6455 = vdwg.mxu0
    %v6456 = vsel %vm303, %v6442, -inf
    %v6457 = vsel %vm303, %v6445, -inf
    %v6458 = vsel %vm303, %v6450, -inf
    %v6459 = vsel %vm303, %v6453, -inf
    %v6460 = vmax.f32 %v6456, %v6457
    %v6461 = vmax.f32 %v6458, %v6459
    %v6462 = vmax.f32 %v6460, %v6461
    %v6463 = vrot.slane %v6462, 4
    %v6464 = vmax.f32 %v6462, %v6463
    %v6465 = vrot.slane %v6464, 2
    %v6466 = vmax.f32 %v6464, %v6465
    %v6467 = vrot.slane %v6466, 1
    %v6468 = vmax.f32 %v6466, %v6467
    %v6469 = vsub.f32 %v6442, %v6468
    %v6470 = vsub.f32 %v6445, %v6468
    %v6471 = vsub.f32 %v6450, %v6468
    %v6472 = vsub.f32 %v6453, %v6468
    %v6473 = vmul.f32 %v6469, 1.442695
    %v6474 = vpow.pop %v6473
    %v6475 = vmul.f32 %v6470, 1.442695
    %v6476 = vpow.pop %v6475
    %v6477 = vmul.f32 %v6471, 1.442695
    %v6478 = vpow.pop %v6477
    %v6479 = vmul.f32 %v6472, 1.442695
    %v6480 = vpow.pop %v6479
    %v6481 = vpack.c.bf16 %v6476, %v6474
    %v6482 = vpack.c.bf16 %v6480, %v6478
    %6483 = vmatprep.subr.bf16.mxu0 0
    %6484 = vmatpush1.bf16.msra.mxu0 0
    %6485 = vmatprep.subr.bf16.mxu0 0
    %6486 = vmatpush1.bf16.msra.mxu0 0
    %6487 = vmatprep.subr.bf16.mxu0 0
    %6488 = vmatpush1.bf16.msra.mxu0 0
    %6489 = vmatprep.subr.bf16.mxu0 0
    %6490 = vmatpush1.bf16.msra.mxu0 0
    %6491 = vmatprep.subr.bf16.mxu0 0
    %6492 = vmatpush1.bf16.msra.mxu0 0
    %6493 = vmatprep.subr.bf16.mxu0 0
    %6494 = vmatpush1.bf16.msra.mxu0 0
    %6495 = vmatprep.subr.bf16.mxu0 0
    %6496 = vmatpush1.bf16.msra.mxu0 %v6482
    %6497 = vmatprep.subr.bf16.mxu0 0
    %6498 = vmatpush1.bf16.msra.mxu0 %v6481
    %6499 = vmatprep.subr.bf16.mxu0 0
    %6500 = vmatpush2.bf16.msra.mxu0 0
    %6501 = vmatprep.subr.bf16.mxu0 0
    %6502 = vmatpush2.bf16.msra.mxu0 0
    %6503 = vmatprep.subr.bf16.mxu0 0
    %6504 = vmatpush2.bf16.msra.mxu0 0
    %6505 = vmatprep.subr.bf16.mxu0 0
    %6506 = vmatpush2.bf16.msra.mxu0 0
    %6507 = vmatprep.subr.bf16.mxu0 0
    %6508 = vmatpush2.bf16.msra.mxu0 0
    %6509 = vmatprep.subr.bf16.mxu0 0
    %6510 = vmatpush2.bf16.msra.mxu0 0
    %6511 = vmatprep.subr.bf16.mxu0 0
    %6512 = vmatpush2.bf16.msra.mxu0 0
    %6513 = vmatprep.subr.bf16.mxu0 0
    %6514 = vmatpush2.bf16.msra.mxu0 0
    %6515 = vmatprep.mubr.bf16.mxu0 0
    %6516 = vmatmul.mubr.bf16.gmra.mxu0 %v1186
    %v6517 = vpop.f32.mrf.mxu0
    %v6518 = vadd.f32 0.0, %v6517
    %v6519 = vpop.f32.mrf.mxu0
    %v6520 = vpop.f32.mrf.mxu0
    %v6521 = vadd.f32 0.0, %v6520
    %v6522 = vpop.f32.mrf.mxu0
    %6523 = vdwg.mxu0
    %v6524 = vmax.f32 %v6518, 1e-30
    %v6525 = vmax.f32 %v6521, 1e-30
    %v6526 = vrcp.pop %v6524
    %v6527 = vmul.f32 1.0, %v6526
    %v6528 = vrcp.pop %v6525
    %v6529 = vmul.f32 1.0, %v6528
    %v6530 = vpack.c.bf16 %v6529, %v6527
    %v6532 = vsel %vm303, %v6530, 0
    %6534 = vmatprep.subr.bf16.mxu0 0
    %6535 = vmatpush1.bf16.msra.mxu0 0
    %6536 = vmatprep.subr.bf16.mxu0 0
    %6537 = vmatpush1.bf16.msra.mxu0 0
    %6538 = vmatprep.subr.bf16.mxu0 0
    %6539 = vmatpush1.bf16.msra.mxu0 0
    %6540 = vmatprep.subr.bf16.mxu0 0
    %6541 = vmatpush1.bf16.msra.mxu0 0
    %6542 = vmatprep.subr.bf16.mxu0 0
    %6543 = vmatpush1.bf16.msra.mxu0 0
    %6544 = vmatprep.subr.bf16.mxu0 0
    %6545 = vmatpush1.bf16.msra.mxu0 0
    %6546 = vmatprep.subr.bf16.mxu0 0
    %6547 = vmatpush1.bf16.msra.mxu0 0
    %6548 = vmatprep.subr.bf16.mxu0 %v2843
    %6549 = vmatpush1.bf16.msra.mxu0 %v2840
    %6550 = vmatprep.subr.bf16.mxu0 0
    %6551 = vmatpush2.bf16.msra.mxu0 0
    %6552 = vmatprep.subr.bf16.mxu0 0
    %6553 = vmatpush2.bf16.msra.mxu0 0
    %6554 = vmatprep.subr.bf16.mxu0 0
    %6555 = vmatpush2.bf16.msra.mxu0 0
    %6556 = vmatprep.subr.bf16.mxu0 0
    %6557 = vmatpush2.bf16.msra.mxu0 0
    %6558 = vmatprep.subr.bf16.mxu0 0
    %6559 = vmatpush2.bf16.msra.mxu0 0
    %6560 = vmatprep.subr.bf16.mxu0 0
    %6561 = vmatpush2.bf16.msra.mxu0 0
    %6562 = vmatprep.subr.bf16.mxu0 0
    %6563 = vmatpush2.bf16.msra.mxu0 0
    %6564 = vmatprep.subr.bf16.mxu0 0
    %6565 = vmatpush2.bf16.msra.mxu0 0
    %6566 = vmatprep.mubr.bf16.mxu0 0
    %6567 = vmatmul.mubr.bf16.gmra.mxu0 %v6532
    %v6568 = vpop.f32.mrf.mxu0
    %v6569 = vadd.f32 0.0, %v6568
    %v6570 = vpop.f32.mrf.mxu0
    %v6571 = vadd.f32 0.0, %v6570
    %v6572 = vpop.f32.mrf.mxu0
    %v6573 = vadd.f32 0.0, %v6572
    %v6574 = vpop.f32.mrf.mxu0
    %v6575 = vadd.f32 0.0, %v6574
    %6576 = vdwg.mxu0
    %6577 = vmatprep.subr.bf16.mxu0 0
    %6578 = vmatpush1.bf16.msra.mxu0 0
    %6579 = vmatprep.subr.bf16.mxu0 0
    %6580 = vmatpush1.bf16.msra.mxu0 0
    %6581 = vmatprep.subr.bf16.mxu0 0
    %6582 = vmatpush1.bf16.msra.mxu0 0
    %6583 = vmatprep.subr.bf16.mxu0 0
    %6584 = vmatpush1.bf16.msra.mxu0 0
    %6585 = vmatprep.subr.bf16.mxu0 0
    %6586 = vmatpush1.bf16.msra.mxu0 0
    %6587 = vmatprep.subr.bf16.mxu0 0
    %6588 = vmatpush1.bf16.msra.mxu0 0
    %6589 = vmatprep.subr.bf16.mxu0 0
    %6590 = vmatpush1.bf16.msra.mxu0 0
    %6591 = vmatprep.subr.bf16.mxu0 %v2849
    %6592 = vmatpush1.bf16.msra.mxu0 %v2846
    %6593 = vmatprep.subr.bf16.mxu0 0
    %6594 = vmatpush2.bf16.msra.mxu0 0
    %6595 = vmatprep.subr.bf16.mxu0 0
    %6596 = vmatpush2.bf16.msra.mxu0 0
    %6597 = vmatprep.subr.bf16.mxu0 0
    %6598 = vmatpush2.bf16.msra.mxu0 0
    %6599 = vmatprep.subr.bf16.mxu0 0
    %6600 = vmatpush2.bf16.msra.mxu0 0
    %6601 = vmatprep.subr.bf16.mxu0 0
    %6602 = vmatpush2.bf16.msra.mxu0 0
    %6603 = vmatprep.subr.bf16.mxu0 0
    %6604 = vmatpush2.bf16.msra.mxu0 0
    %6605 = vmatprep.subr.bf16.mxu0 0
    %6606 = vmatpush2.bf16.msra.mxu0 0
    %6607 = vmatprep.subr.bf16.mxu0 0
    %6608 = vmatpush2.bf16.msra.mxu0 0
    %6609 = vmatprep.mubr.bf16.mxu0 0
    %6610 = vmatmul.mubr.bf16.gmra.mxu0 %v6532
    %v6611 = vpop.f32.mrf.mxu0
    %v6612 = vadd.f32 0.0, %v6611
    %v6613 = vpop.f32.mrf.mxu0
    %v6614 = vadd.f32 0.0, %v6613
    %v6615 = vpop.f32.mrf.mxu0
    %v6616 = vadd.f32 0.0, %v6615
    %v6617 = vpop.f32.mrf.mxu0
    %v6618 = vadd.f32 0.0, %v6617
    %6619 = vdwg.mxu0
    %v6620 = vpack.c.bf16 %v6573, %v6569
    %v6621 = vpack.c.bf16 %v6575, %v6571
    %v6622 = vpack.c.bf16 %v6616, %v6612
    %v6623 = vpack.c.bf16 %v6618, %v6614
    %6624 = vmatprep.subr.bf16.mxu0 0
    %6625 = vmatpush1.bf16.msra.mxu0 0
    %6626 = vmatprep.subr.bf16.mxu0 0
    %6627 = vmatpush1.bf16.msra.mxu0 0
    %6628 = vmatprep.subr.bf16.mxu0 0
    %6629 = vmatpush1.bf16.msra.mxu0 0
    %6630 = vmatprep.subr.bf16.mxu0 0
    %6631 = vmatpush1.bf16.msra.mxu0 0
    %6632 = vmatprep.subr.bf16.mxu0 0
    %6633 = vmatpush1.bf16.msra.mxu0 0
    %6634 = vmatprep.subr.bf16.mxu0 0
    %6635 = vmatpush1.bf16.msra.mxu0 0
    %6636 = vmatprep.subr.bf16.mxu0 0
    %6637 = vmatpush1.bf16.msra.mxu0 0
    %6638 = vmatprep.subr.bf16.mxu0 %v6621
    %6639 = vmatpush1.bf16.msra.mxu0 %v6620
    %6640 = vmatprep.subr.bf16.mxu0 0
    %6641 = vmatpush2.bf16.msra.mxu0 0
    %6642 = vmatprep.subr.bf16.mxu0 0
    %6643 = vmatpush2.bf16.msra.mxu0 0
    %6644 = vmatprep.subr.bf16.mxu0 0
    %6645 = vmatpush2.bf16.msra.mxu0 0
    %6646 = vmatprep.subr.bf16.mxu0 0
    %6647 = vmatpush2.bf16.msra.mxu0 0
    %6648 = vmatprep.subr.bf16.mxu0 0
    %6649 = vmatpush2.bf16.msra.mxu0 0
    %6650 = vmatprep.subr.bf16.mxu0 0
    %6651 = vmatpush2.bf16.msra.mxu0 0
    %6652 = vmatprep.subr.bf16.mxu0 0
    %6653 = vmatpush2.bf16.msra.mxu0 0
    %6654 = vmatprep.subr.bf16.mxu0 0
    %6655 = vmatpush2.bf16.msra.mxu0 0
    %6656 = vmatprep.mubr.bf16.mxu0 0
    %6657 = vmatmul.mubr.bf16.gmra.mxu0 %v825
    %v6658 = vpop.f32.mrf.mxu0
    %v6659 = vadd.f32 0.0, %v6658
    %v6660 = vpop.f32.mrf.mxu0
    %v6661 = vadd.f32 0.0, %v6660
    %v6662 = vpop.f32.mrf.mxu0
    %v6663 = vadd.f32 0.0, %v6662
    %v6664 = vpop.f32.mrf.mxu0
    %v6665 = vadd.f32 0.0, %v6664
    %6666 = vmatprep.mubr.bf16.mxu0 0
    %6667 = vmatmul.mubr.bf16.gmra.mxu0 %v828
    %v6668 = vpop.f32.mrf.mxu0
    %v6669 = vadd.f32 0.0, %v6668
    %v6670 = vpop.f32.mrf.mxu0
    %v6671 = vadd.f32 0.0, %v6670
    %v6672 = vpop.f32.mrf.mxu0
    %v6673 = vadd.f32 0.0, %v6672
    %v6674 = vpop.f32.mrf.mxu0
    %v6675 = vadd.f32 0.0, %v6674
    %6676 = vdwg.mxu0
    %6677 = vmatprep.subr.bf16.mxu0 0
    %6678 = vmatpush1.bf16.msra.mxu0 0
    %6679 = vmatprep.subr.bf16.mxu0 0
    %6680 = vmatpush1.bf16.msra.mxu0 0
    %6681 = vmatprep.subr.bf16.mxu0 0
    %6682 = vmatpush1.bf16.msra.mxu0 0
    %6683 = vmatprep.subr.bf16.mxu0 0
    %6684 = vmatpush1.bf16.msra.mxu0 0
    %6685 = vmatprep.subr.bf16.mxu0 0
    %6686 = vmatpush1.bf16.msra.mxu0 0
    %6687 = vmatprep.subr.bf16.mxu0 0
    %6688 = vmatpush1.bf16.msra.mxu0 0
    %6689 = vmatprep.subr.bf16.mxu0 0
    %6690 = vmatpush1.bf16.msra.mxu0 0
    %6691 = vmatprep.subr.bf16.mxu0 %v6623
    %6692 = vmatpush1.bf16.msra.mxu0 %v6622
    %6693 = vmatprep.subr.bf16.mxu0 0
    %6694 = vmatpush2.bf16.msra.mxu0 0
    %6695 = vmatprep.subr.bf16.mxu0 0
    %6696 = vmatpush2.bf16.msra.mxu0 0
    %6697 = vmatprep.subr.bf16.mxu0 0
    %6698 = vmatpush2.bf16.msra.mxu0 0
    %6699 = vmatprep.subr.bf16.mxu0 0
    %6700 = vmatpush2.bf16.msra.mxu0 0
    %6701 = vmatprep.subr.bf16.mxu0 0
    %6702 = vmatpush2.bf16.msra.mxu0 0
    %6703 = vmatprep.subr.bf16.mxu0 0
    %6704 = vmatpush2.bf16.msra.mxu0 0
    %6705 = vmatprep.subr.bf16.mxu0 0
    %6706 = vmatpush2.bf16.msra.mxu0 0
    %6707 = vmatprep.subr.bf16.mxu0 0
    %6708 = vmatpush2.bf16.msra.mxu0 0
    %6709 = vmatprep.mubr.bf16.mxu0 0
    %6710 = vmatmul.mubr.bf16.gmra.mxu0 %v825
    %v6711 = vpop.f32.mrf.mxu0
    %v6712 = vadd.f32 0.0, %v6711
    %v6713 = vpop.f32.mrf.mxu0
    %v6714 = vadd.f32 0.0, %v6713
    %v6715 = vpop.f32.mrf.mxu0
    %v6716 = vadd.f32 0.0, %v6715
    %v6717 = vpop.f32.mrf.mxu0
    %v6718 = vadd.f32 0.0, %v6717
    %6719 = vmatprep.mubr.bf16.mxu0 0
    %6720 = vmatmul.mubr.bf16.gmra.mxu0 %v828
    %v6721 = vpop.f32.mrf.mxu0
    %v6722 = vadd.f32 0.0, %v6721
    %v6723 = vpop.f32.mrf.mxu0
    %v6724 = vadd.f32 0.0, %v6723
    %v6725 = vpop.f32.mrf.mxu0
    %v6726 = vadd.f32 0.0, %v6725
    %v6727 = vpop.f32.mrf.mxu0
    %v6728 = vadd.f32 0.0, %v6727
    %6729 = vdwg.mxu0
    %v6731 = vsel %vm303, %v6481, 0
    %v6734 = vsel %vm303, %v6482, 0
    %6736 = vmatprep.subr.bf16.mxu0 0
    %6737 = vmatpush1.bf16.msra.mxu0 0
    %6738 = vmatprep.subr.bf16.mxu0 0
    %6739 = vmatpush1.bf16.msra.mxu0 0
    %6740 = vmatprep.subr.bf16.mxu0 0
    %6741 = vmatpush1.bf16.msra.mxu0 0
    %6742 = vmatprep.subr.bf16.mxu0 0
    %6743 = vmatpush1.bf16.msra.mxu0 0
    %6744 = vmatprep.subr.bf16.mxu0 0
    %6745 = vmatpush1.bf16.msra.mxu0 0
    %6746 = vmatprep.subr.bf16.mxu0 0
    %6747 = vmatpush1.bf16.msra.mxu0 0
    %6748 = vmatprep.subr.bf16.mxu0 0
    %6749 = vmatpush1.bf16.msra.mxu0 0
    %6750 = vmatprep.subr.bf16.mxu0 %v2843
    %6751 = vmatpush1.bf16.msra.mxu0 %v2840
    %6752 = vmatprep.subr.bf16.mxu0 0
    %6753 = vmatpush2.bf16.msra.mxu0 0
    %6754 = vmatprep.subr.bf16.mxu0 0
    %6755 = vmatpush2.bf16.msra.mxu0 0
    %6756 = vmatprep.subr.bf16.mxu0 0
    %6757 = vmatpush2.bf16.msra.mxu0 0
    %6758 = vmatprep.subr.bf16.mxu0 0
    %6759 = vmatpush2.bf16.msra.mxu0 0
    %6760 = vmatprep.subr.bf16.mxu0 0
    %6761 = vmatpush2.bf16.msra.mxu0 0
    %6762 = vmatprep.subr.bf16.mxu0 0
    %6763 = vmatpush2.bf16.msra.mxu0 0
    %6764 = vmatprep.subr.bf16.mxu0 0
    %6765 = vmatpush2.bf16.msra.mxu0 0
    %6766 = vmatprep.subr.bf16.mxu0 0
    %6767 = vmatpush2.bf16.msra.mxu0 0
    %6768 = vmatprep.mubr.bf16.mxu0 0
    %6769 = vmatmul.mubr.bf16.gmra.mxu0 %v6731
    %v6770 = vpop.f32.mrf.mxu0
    %v6771 = vadd.f32 0.0, %v6770
    %v6772 = vpop.f32.mrf.mxu0
    %v6773 = vadd.f32 0.0, %v6772
    %v6774 = vpop.f32.mrf.mxu0
    %v6775 = vadd.f32 0.0, %v6774
    %v6776 = vpop.f32.mrf.mxu0
    %v6777 = vadd.f32 0.0, %v6776
    %6778 = vmatprep.mubr.bf16.mxu0 0
    %6779 = vmatmul.mubr.bf16.gmra.mxu0 %v6734
    %v6780 = vpop.f32.mrf.mxu0
    %v6781 = vadd.f32 0.0, %v6780
    %v6782 = vpop.f32.mrf.mxu0
    %v6783 = vadd.f32 0.0, %v6782
    %v6784 = vpop.f32.mrf.mxu0
    %v6785 = vadd.f32 0.0, %v6784
    %v6786 = vpop.f32.mrf.mxu0
    %v6787 = vadd.f32 0.0, %v6786
    %6788 = vdwg.mxu0
    %6789 = vmatprep.subr.bf16.mxu0 0
    %6790 = vmatpush1.bf16.msra.mxu0 0
    %6791 = vmatprep.subr.bf16.mxu0 0
    %6792 = vmatpush1.bf16.msra.mxu0 0
    %6793 = vmatprep.subr.bf16.mxu0 0
    %6794 = vmatpush1.bf16.msra.mxu0 0
    %6795 = vmatprep.subr.bf16.mxu0 0
    %6796 = vmatpush1.bf16.msra.mxu0 0
    %6797 = vmatprep.subr.bf16.mxu0 0
    %6798 = vmatpush1.bf16.msra.mxu0 0
    %6799 = vmatprep.subr.bf16.mxu0 0
    %6800 = vmatpush1.bf16.msra.mxu0 0
    %6801 = vmatprep.subr.bf16.mxu0 0
    %6802 = vmatpush1.bf16.msra.mxu0 0
    %6803 = vmatprep.subr.bf16.mxu0 %v2849
    %6804 = vmatpush1.bf16.msra.mxu0 %v2846
    %6805 = vmatprep.subr.bf16.mxu0 0
    %6806 = vmatpush2.bf16.msra.mxu0 0
    %6807 = vmatprep.subr.bf16.mxu0 0
    %6808 = vmatpush2.bf16.msra.mxu0 0
    %6809 = vmatprep.subr.bf16.mxu0 0
    %6810 = vmatpush2.bf16.msra.mxu0 0
    %6811 = vmatprep.subr.bf16.mxu0 0
    %6812 = vmatpush2.bf16.msra.mxu0 0
    %6813 = vmatprep.subr.bf16.mxu0 0
    %6814 = vmatpush2.bf16.msra.mxu0 0
    %6815 = vmatprep.subr.bf16.mxu0 0
    %6816 = vmatpush2.bf16.msra.mxu0 0
    %6817 = vmatprep.subr.bf16.mxu0 0
    %6818 = vmatpush2.bf16.msra.mxu0 0
    %6819 = vmatprep.subr.bf16.mxu0 0
    %6820 = vmatpush2.bf16.msra.mxu0 0
    %6821 = vmatprep.mubr.bf16.mxu0 0
    %6822 = vmatmul.mubr.bf16.gmra.mxu0 %v6731
    %v6823 = vpop.f32.mrf.mxu0
    %v6824 = vadd.f32 0.0, %v6823
    %v6825 = vpop.f32.mrf.mxu0
    %v6826 = vadd.f32 0.0, %v6825
    %v6827 = vpop.f32.mrf.mxu0
    %v6828 = vadd.f32 0.0, %v6827
    %v6829 = vpop.f32.mrf.mxu0
    %v6830 = vadd.f32 0.0, %v6829
    %6831 = vmatprep.mubr.bf16.mxu0 0
    %6832 = vmatmul.mubr.bf16.gmra.mxu0 %v6734
    %v6833 = vpop.f32.mrf.mxu0
    %v6834 = vadd.f32 0.0, %v6833
    %v6835 = vpop.f32.mrf.mxu0
    %v6836 = vadd.f32 0.0, %v6835
    %v6837 = vpop.f32.mrf.mxu0
    %v6838 = vadd.f32 0.0, %v6837
    %v6839 = vpop.f32.mrf.mxu0
    %v6840 = vadd.f32 0.0, %v6839
    %6841 = vdwg.mxu0
    %v6842 = vpack.c.bf16 %v6238, %v6234
    %v6843 = vpack.c.bf16 %v6240, %v6236
    %v6844 = vpack.c.bf16 %v6281, %v6277
    %v6845 = vpack.c.bf16 %v6283, %v6279
    %6846 = vmatprep.subr.bf16.mxu0 0
    %6847 = vmatpush1.bf16.msra.mxu0 0
    %6848 = vmatprep.subr.bf16.mxu0 0
    %6849 = vmatpush1.bf16.msra.mxu0 0
    %6850 = vmatprep.subr.bf16.mxu0 0
    %6851 = vmatpush1.bf16.msra.mxu0 0
    %6852 = vmatprep.subr.bf16.mxu0 0
    %6853 = vmatpush1.bf16.msra.mxu0 0
    %6854 = vmatprep.subr.bf16.mxu0 0
    %6855 = vmatpush1.bf16.msra.mxu0 0
    %6856 = vmatprep.subr.bf16.mxu0 0
    %6857 = vmatpush1.bf16.msra.mxu0 0
    %6858 = vmatprep.subr.bf16.mxu0 0
    %6859 = vmatpush1.bf16.msra.mxu0 0
    %6860 = vmatprep.subr.bf16.mxu0 %v6843
    %6861 = vmatpush1.bf16.msra.mxu0 %v6842
    %6862 = vmatprep.subr.bf16.mxu0 0
    %6863 = vmatpush2.bf16.msra.mxu0 0
    %6864 = vmatprep.subr.bf16.mxu0 0
    %6865 = vmatpush2.bf16.msra.mxu0 0
    %6866 = vmatprep.subr.bf16.mxu0 0
    %6867 = vmatpush2.bf16.msra.mxu0 0
    %6868 = vmatprep.subr.bf16.mxu0 0
    %6869 = vmatpush2.bf16.msra.mxu0 0
    %6870 = vmatprep.subr.bf16.mxu0 0
    %6871 = vmatpush2.bf16.msra.mxu0 0
    %6872 = vmatprep.subr.bf16.mxu0 0
    %6873 = vmatpush2.bf16.msra.mxu0 0
    %6874 = vmatprep.subr.bf16.mxu0 0
    %6875 = vmatpush2.bf16.msra.mxu0 0
    %6876 = vmatprep.subr.bf16.mxu0 0
    %6877 = vmatpush2.bf16.msra.mxu0 0
    %6878 = vmatprep.mubr.bf16.mxu0 0
    %6879 = vmatmul.mubr.bf16.gmra.mxu0 %v894
    %v6880 = vpop.f32.mrf.mxu0
    %v6881 = vadd.f32 0.0, %v6880
    %v6882 = vpop.f32.mrf.mxu0
    %v6883 = vadd.f32 0.0, %v6882
    %v6884 = vpop.f32.mrf.mxu0
    %v6885 = vadd.f32 0.0, %v6884
    %v6886 = vpop.f32.mrf.mxu0
    %v6887 = vadd.f32 0.0, %v6886
    %6888 = vmatprep.mubr.bf16.mxu0 0
    %6889 = vmatmul.mubr.bf16.gmra.mxu0 %v897
    %v6890 = vpop.f32.mrf.mxu0
    %v6891 = vadd.f32 0.0, %v6890
    %v6892 = vpop.f32.mrf.mxu0
    %v6893 = vadd.f32 0.0, %v6892
    %v6894 = vpop.f32.mrf.mxu0
    %v6895 = vadd.f32 0.0, %v6894
    %v6896 = vpop.f32.mrf.mxu0
    %v6897 = vadd.f32 0.0, %v6896
    %6898 = vdwg.mxu0
    %6899 = vmatprep.subr.bf16.mxu0 0
    %6900 = vmatpush1.bf16.msra.mxu0 0
    %6901 = vmatprep.subr.bf16.mxu0 0
    %6902 = vmatpush1.bf16.msra.mxu0 0
    %6903 = vmatprep.subr.bf16.mxu0 0
    %6904 = vmatpush1.bf16.msra.mxu0 0
    %6905 = vmatprep.subr.bf16.mxu0 0
    %6906 = vmatpush1.bf16.msra.mxu0 0
    %6907 = vmatprep.subr.bf16.mxu0 0
    %6908 = vmatpush1.bf16.msra.mxu0 0
    %6909 = vmatprep.subr.bf16.mxu0 0
    %6910 = vmatpush1.bf16.msra.mxu0 0
    %6911 = vmatprep.subr.bf16.mxu0 0
    %6912 = vmatpush1.bf16.msra.mxu0 0
    %6913 = vmatprep.subr.bf16.mxu0 %v6845
    %6914 = vmatpush1.bf16.msra.mxu0 %v6844
    %6915 = vmatprep.subr.bf16.mxu0 0
    %6916 = vmatpush2.bf16.msra.mxu0 0
    %6917 = vmatprep.subr.bf16.mxu0 0
    %6918 = vmatpush2.bf16.msra.mxu0 0
    %6919 = vmatprep.subr.bf16.mxu0 0
    %6920 = vmatpush2.bf16.msra.mxu0 0
    %6921 = vmatprep.subr.bf16.mxu0 0
    %6922 = vmatpush2.bf16.msra.mxu0 0
    %6923 = vmatprep.subr.bf16.mxu0 0
    %6924 = vmatpush2.bf16.msra.mxu0 0
    %6925 = vmatprep.subr.bf16.mxu0 0
    %6926 = vmatpush2.bf16.msra.mxu0 0
    %6927 = vmatprep.subr.bf16.mxu0 0
    %6928 = vmatpush2.bf16.msra.mxu0 0
    %6929 = vmatprep.subr.bf16.mxu0 0
    %6930 = vmatpush2.bf16.msra.mxu0 0
    %6931 = vmatprep.mubr.bf16.mxu0 0
    %6932 = vmatmul.mubr.bf16.gmra.mxu0 %v894
    %v6933 = vpop.f32.mrf.mxu0
    %v6934 = vadd.f32 0.0, %v6933
    %v6935 = vpop.f32.mrf.mxu0
    %v6936 = vadd.f32 0.0, %v6935
    %v6937 = vpop.f32.mrf.mxu0
    %v6938 = vadd.f32 0.0, %v6937
    %v6939 = vpop.f32.mrf.mxu0
    %v6940 = vadd.f32 0.0, %v6939
    %6941 = vmatprep.mubr.bf16.mxu0 0
    %6942 = vmatmul.mubr.bf16.gmra.mxu0 %v897
    %v6943 = vpop.f32.mrf.mxu0
    %v6944 = vadd.f32 0.0, %v6943
    %v6945 = vpop.f32.mrf.mxu0
    %v6946 = vadd.f32 0.0, %v6945
    %v6947 = vpop.f32.mrf.mxu0
    %v6948 = vadd.f32 0.0, %v6947
    %v6949 = vpop.f32.mrf.mxu0
    %v6950 = vadd.f32 0.0, %v6949
    %6951 = vdwg.mxu0
    %v6952 = vmul.f32 %v6771, %v6659
    %v6953 = vmul.f32 %v6773, %v6661
    %v6954 = vmul.f32 %v6824, %v6712
    %v6955 = vmul.f32 %v6826, %v6714
    %v6956 = vmul.f32 %v6775, %v6663
    %v6957 = vmul.f32 %v6777, %v6665
    %v6958 = vmul.f32 %v6828, %v6716
    %v6959 = vmul.f32 %v6830, %v6718
    %v6960 = vmul.f32 %v6781, %v6669
    %v6961 = vmul.f32 %v6783, %v6671
    %v6962 = vmul.f32 %v6834, %v6722
    %v6963 = vmul.f32 %v6836, %v6724
    %v6964 = vmul.f32 %v6785, %v6673
    %v6965 = vmul.f32 %v6787, %v6675
    %v6966 = vmul.f32 %v6838, %v6726
    %v6967 = vmul.f32 %v6840, %v6728
    %v6968 = vmul.f32 %v6952, %v6881
    %v6969 = vmul.f32 %v6953, %v6883
    %v6970 = vmul.f32 %v6954, %v6934
    %v6971 = vmul.f32 %v6955, %v6936
    %v6972 = vmul.f32 %v6956, %v6885
    %v6973 = vmul.f32 %v6957, %v6887
    %v6974 = vmul.f32 %v6958, %v6938
    %v6975 = vmul.f32 %v6959, %v6940
    %v6976 = vmul.f32 %v6960, %v6891
    %v6977 = vmul.f32 %v6961, %v6893
    %v6978 = vmul.f32 %v6962, %v6944
    %v6979 = vmul.f32 %v6963, %v6946
    %v6980 = vmul.f32 %v6964, %v6895
    %v6981 = vmul.f32 %v6965, %v6897
    %v6982 = vmul.f32 %v6966, %v6948
    %v6983 = vmul.f32 %v6967, %v6950
    %v6984 = vpack.c.bf16 %v6972, %v6968
    %v6985 = vpack.c.bf16 %v6973, %v6969
    %v6986 = vpack.c.bf16 %v6974, %v6970
    %v6987 = vpack.c.bf16 %v6975, %v6971
    %v6988 = vpack.c.bf16 %v6980, %v6976
    %v6989 = vpack.c.bf16 %v6981, %v6977
    %v6990 = vpack.c.bf16 %v6982, %v6978
    %v6991 = vpack.c.bf16 %v6983, %v6979
    %6992 = vmatprep.subr.bf16.mxu0 0
    %6993 = vmatpush1.bf16.msra.mxu0 0
    %6994 = vmatprep.subr.bf16.mxu0 0
    %6995 = vmatpush1.bf16.msra.mxu0 0
    %6996 = vmatprep.subr.bf16.mxu0 0
    %6997 = vmatpush1.bf16.msra.mxu0 0
    %6998 = vmatprep.subr.bf16.mxu0 0
    %6999 = vmatpush1.bf16.msra.mxu0 0
    %7000 = vmatprep.subr.bf16.mxu0 0
    %7001 = vmatpush1.bf16.msra.mxu0 0
    %7002 = vmatprep.subr.bf16.mxu0 0
    %7003 = vmatpush1.bf16.msra.mxu0 0
    %7004 = vmatprep.subr.bf16.mxu0 %v6989
    %7005 = vmatpush1.bf16.msra.mxu0 %v6988
    %7006 = vmatprep.subr.bf16.mxu0 %v6985
    %7007 = vmatpush1.bf16.msra.mxu0 %v6984
    %7008 = vmatprep.subr.bf16.mxu0 0
    %7009 = vmatpush2.bf16.msra.mxu0 0
    %7010 = vmatprep.subr.bf16.mxu0 0
    %7011 = vmatpush2.bf16.msra.mxu0 0
    %7012 = vmatprep.subr.bf16.mxu0 0
    %7013 = vmatpush2.bf16.msra.mxu0 0
    %7014 = vmatprep.subr.bf16.mxu0 0
    %7015 = vmatpush2.bf16.msra.mxu0 0
    %7016 = vmatprep.subr.bf16.mxu0 0
    %7017 = vmatpush2.bf16.msra.mxu0 0
    %7018 = vmatprep.subr.bf16.mxu0 0
    %7019 = vmatpush2.bf16.msra.mxu0 0
    %7020 = vmatprep.subr.bf16.mxu0 0
    %7021 = vmatpush2.bf16.msra.mxu0 0
    %7022 = vmatprep.subr.bf16.mxu0 0
    %7023 = vmatpush2.bf16.msra.mxu0 0
    %7024 = vmatprep.mubr.bf16.mxu0 0
    %7025 = vmatmul.mubr.bf16.gmra.mxu0 %v1186
    %v7026 = vpop.f32.mrf.mxu0
    %v7027 = vadd.f32 0.0, %v7026
    %v7028 = vpop.f32.mrf.mxu0
    %v7029 = vadd.f32 0.0, %v7028
    %v7030 = vpop.f32.mrf.mxu0
    %v7031 = vadd.f32 0.0, %v7030
    %v7032 = vpop.f32.mrf.mxu0
    %v7033 = vadd.f32 0.0, %v7032
    %7034 = vdwg.mxu0
    %7035 = vmatprep.subr.bf16.mxu0 0
    %7036 = vmatpush1.bf16.msra.mxu0 0
    %7037 = vmatprep.subr.bf16.mxu0 0
    %7038 = vmatpush1.bf16.msra.mxu0 0
    %7039 = vmatprep.subr.bf16.mxu0 0
    %7040 = vmatpush1.bf16.msra.mxu0 0
    %7041 = vmatprep.subr.bf16.mxu0 0
    %7042 = vmatpush1.bf16.msra.mxu0 0
    %7043 = vmatprep.subr.bf16.mxu0 0
    %7044 = vmatpush1.bf16.msra.mxu0 0
    %7045 = vmatprep.subr.bf16.mxu0 0
    %7046 = vmatpush1.bf16.msra.mxu0 0
    %7047 = vmatprep.subr.bf16.mxu0 %v6991
    %7048 = vmatpush1.bf16.msra.mxu0 %v6990
    %7049 = vmatprep.subr.bf16.mxu0 %v6987
    %7050 = vmatpush1.bf16.msra.mxu0 %v6986
    %7051 = vmatprep.subr.bf16.mxu0 0
    %7052 = vmatpush2.bf16.msra.mxu0 0
    %7053 = vmatprep.subr.bf16.mxu0 0
    %7054 = vmatpush2.bf16.msra.mxu0 0
    %7055 = vmatprep.subr.bf16.mxu0 0
    %7056 = vmatpush2.bf16.msra.mxu0 0
    %7057 = vmatprep.subr.bf16.mxu0 0
    %7058 = vmatpush2.bf16.msra.mxu0 0
    %7059 = vmatprep.subr.bf16.mxu0 0
    %7060 = vmatpush2.bf16.msra.mxu0 0
    %7061 = vmatprep.subr.bf16.mxu0 0
    %7062 = vmatpush2.bf16.msra.mxu0 0
    %7063 = vmatprep.subr.bf16.mxu0 0
    %7064 = vmatpush2.bf16.msra.mxu0 0
    %7065 = vmatprep.subr.bf16.mxu0 0
    %7066 = vmatpush2.bf16.msra.mxu0 0
    %7067 = vmatprep.mubr.bf16.mxu0 0
    %7068 = vmatmul.mubr.bf16.gmra.mxu0 %v1186
    %v7069 = vpop.f32.mrf.mxu0
    %v7070 = vadd.f32 0.0, %v7069
    %v7071 = vpop.f32.mrf.mxu0
    %v7072 = vadd.f32 0.0, %v7071
    %v7073 = vpop.f32.mrf.mxu0
    %v7074 = vadd.f32 0.0, %v7073
    %v7075 = vpop.f32.mrf.mxu0
    %v7076 = vadd.f32 0.0, %v7075
    %7077 = vdwg.mxu0
    %7078 = vmatprep.subr.bf16.mxu0 0
    %7079 = vmatpush1.bf16.msra.mxu0 %v3454
    %7080 = vmatprep.subr.bf16.mxu0 0
    %7081 = vmatpush1.bf16.msra.mxu0 %v3453
    %7082 = vmatprep.subr.bf16.mxu0 0
    %7083 = vmatpush1.bf16.msra.mxu0 %v3452
    %7084 = vmatprep.subr.bf16.mxu0 0
    %7085 = vmatpush1.bf16.msra.mxu0 %v3451
    %7086 = vmatprep.subr.bf16.mxu0 0
    %7087 = vmatpush1.bf16.msra.mxu0 %v3450
    %7088 = vmatprep.subr.bf16.mxu0 0
    %7089 = vmatpush1.bf16.msra.mxu0 %v3449
    %7090 = vmatprep.subr.bf16.mxu0 0
    %7091 = vmatpush1.bf16.msra.mxu0 %v3448
    %7092 = vmatprep.subr.bf16.mxu0 0
    %7093 = vmatpush1.bf16.msra.mxu0 %v3447
    %7094 = vmatprep.subr.bf16.mxu0 0
    %7095 = vmatpush2.bf16.msra.mxu0 0
    %7096 = vmatprep.subr.bf16.mxu0 0
    %7097 = vmatpush2.bf16.msra.mxu0 0
    %7098 = vmatprep.subr.bf16.mxu0 0
    %7099 = vmatpush2.bf16.msra.mxu0 0
    %7100 = vmatprep.subr.bf16.mxu0 0
    %7101 = vmatpush2.bf16.msra.mxu0 0
    %7102 = vmatprep.subr.bf16.mxu0 0
    %7103 = vmatpush2.bf16.msra.mxu0 0
    %7104 = vmatprep.subr.bf16.mxu0 0
    %7105 = vmatpush2.bf16.msra.mxu0 0
    %7106 = vmatprep.subr.bf16.mxu0 0
    %7107 = vmatpush2.bf16.msra.mxu0 0
    %7108 = vmatprep.subr.bf16.mxu0 0
    %7109 = vmatpush2.bf16.msra.mxu0 0
    %7110 = vmatprep.mubr.bf16.mxu0 0
    %7111 = vmatmul.mubr.bf16.gmra.mxu0 %v6405
    %v7112 = vpop.f32.mrf.mxu0
    %v7113 = vadd.f32 %v3414, %v7112
    %v7114 = vpop.f32.mrf.mxu0
    %v7115 = vpop.f32.mrf.mxu0
    %v7116 = vadd.f32 %v3414, %v7115
    %v7117 = vpop.f32.mrf.mxu0
    %7118 = vmatprep.mubr.bf16.mxu0 0
    %7119 = vmatmul.mubr.bf16.gmra.mxu0 %v6406
    %v7120 = vpop.f32.mrf.mxu0
    %v7121 = vadd.f32 %v3414, %v7120
    %v7122 = vpop.f32.mrf.mxu0
    %v7123 = vpop.f32.mrf.mxu0
    %v7124 = vadd.f32 %v3414, %v7123
    %v7125 = vpop.f32.mrf.mxu0
    %7126 = vdwg.mxu0
    %v7127 = vmax.f32 %v7113, 0.0
    %v7128 = vmax.f32 %v7116, 0.0
    %v7129 = vmax.f32 %v7121, 0.0
    %v7130 = vmax.f32 %v7124, 0.0
    %v7131 = vpack.c.bf16 %v7031, %v7027
    %v7132 = vpack.c.bf16 %v7033, %v7029
    %v7133 = vpack.c.bf16 %v7074, %v7070
    %v7134 = vpack.c.bf16 %v7076, %v7072
    %7135 = vmatprep.subr.bf16.mxu0 0
    %7136 = vmatpush1.bf16.msra.mxu0 %v3723
    %7137 = vmatprep.subr.bf16.mxu0 0
    %7138 = vmatpush1.bf16.msra.mxu0 %v3722
    %7139 = vmatprep.subr.bf16.mxu0 0
    %7140 = vmatpush1.bf16.msra.mxu0 %v3721
    %7141 = vmatprep.subr.bf16.mxu0 0
    %7142 = vmatpush1.bf16.msra.mxu0 %v3720
    %7143 = vmatprep.subr.bf16.mxu0 0
    %7144 = vmatpush1.bf16.msra.mxu0 %v3719
    %7145 = vmatprep.subr.bf16.mxu0 0
    %7146 = vmatpush1.bf16.msra.mxu0 %v3718
    %7147 = vmatprep.subr.bf16.mxu0 0
    %7148 = vmatpush1.bf16.msra.mxu0 %v3717
    %7149 = vmatprep.subr.bf16.mxu0 0
    %7150 = vmatpush1.bf16.msra.mxu0 %v3716
    %7151 = vmatprep.subr.bf16.mxu0 0
    %7152 = vmatpush2.bf16.msra.mxu0 %v3731
    %7153 = vmatprep.subr.bf16.mxu0 0
    %7154 = vmatpush2.bf16.msra.mxu0 %v3730
    %7155 = vmatprep.subr.bf16.mxu0 0
    %7156 = vmatpush2.bf16.msra.mxu0 %v3729
    %7157 = vmatprep.subr.bf16.mxu0 0
    %7158 = vmatpush2.bf16.msra.mxu0 %v3728
    %7159 = vmatprep.subr.bf16.mxu0 0
    %7160 = vmatpush2.bf16.msra.mxu0 %v3727
    %7161 = vmatprep.subr.bf16.mxu0 0
    %7162 = vmatpush2.bf16.msra.mxu0 %v3726
    %7163 = vmatprep.subr.bf16.mxu0 0
    %7164 = vmatpush2.bf16.msra.mxu0 %v3725
    %7165 = vmatprep.subr.bf16.mxu0 0
    %7166 = vmatpush2.bf16.msra.mxu0 %v3724
    %7167 = vmatprep.mubr.bf16.mxu0 %v7132
    %7168 = vmatmul.mubr.bf16.gmra.mxu0 %v7131
    %v7169 = vpop.f32.mrf.mxu0
    %v7170 = vadd.f32 %v3587, %v7169
    %v7171 = vpop.f32.mrf.mxu0
    %v7172 = vpop.f32.mrf.mxu0
    %v7173 = vadd.f32 %v3587, %v7172
    %v7174 = vpop.f32.mrf.mxu0
    %7175 = vdwg.mxu0
    %7176 = vmatprep.subr.bf16.mxu0 0
    %7177 = vmatpush1.bf16.msra.mxu0 %v3739
    %7178 = vmatprep.subr.bf16.mxu0 0
    %7179 = vmatpush1.bf16.msra.mxu0 %v3738
    %7180 = vmatprep.subr.bf16.mxu0 0
    %7181 = vmatpush1.bf16.msra.mxu0 %v3737
    %7182 = vmatprep.subr.bf16.mxu0 0
    %7183 = vmatpush1.bf16.msra.mxu0 %v3736
    %7184 = vmatprep.subr.bf16.mxu0 0
    %7185 = vmatpush1.bf16.msra.mxu0 %v3735
    %7186 = vmatprep.subr.bf16.mxu0 0
    %7187 = vmatpush1.bf16.msra.mxu0 %v3734
    %7188 = vmatprep.subr.bf16.mxu0 0
    %7189 = vmatpush1.bf16.msra.mxu0 %v3733
    %7190 = vmatprep.subr.bf16.mxu0 0
    %7191 = vmatpush1.bf16.msra.mxu0 %v3732
    %7192 = vmatprep.subr.bf16.mxu0 0
    %7193 = vmatpush2.bf16.msra.mxu0 %v3747
    %7194 = vmatprep.subr.bf16.mxu0 0
    %7195 = vmatpush2.bf16.msra.mxu0 %v3746
    %7196 = vmatprep.subr.bf16.mxu0 0
    %7197 = vmatpush2.bf16.msra.mxu0 %v3745
    %7198 = vmatprep.subr.bf16.mxu0 0
    %7199 = vmatpush2.bf16.msra.mxu0 %v3744
    %7200 = vmatprep.subr.bf16.mxu0 0
    %7201 = vmatpush2.bf16.msra.mxu0 %v3743
    %7202 = vmatprep.subr.bf16.mxu0 0
    %7203 = vmatpush2.bf16.msra.mxu0 %v3742
    %7204 = vmatprep.subr.bf16.mxu0 0
    %7205 = vmatpush2.bf16.msra.mxu0 %v3741
    %7206 = vmatprep.subr.bf16.mxu0 0
    %7207 = vmatpush2.bf16.msra.mxu0 %v3740
    %7208 = vmatprep.mubr.bf16.mxu0 %v7134
    %7209 = vmatmul.mubr.bf16.gmra.mxu0 %v7133
    %v7210 = vpop.f32.mrf.mxu0
    %v7211 = vadd.f32 %v7170, %v7210
    %v7212 = vpop.f32.mrf.mxu0
    %v7213 = vpop.f32.mrf.mxu0
    %v7214 = vadd.f32 %v7173, %v7213
    %v7215 = vpop.f32.mrf.mxu0
    %7216 = vdwg.mxu0
    %v7217 = vmax.f32 %v7211, 0.0
    %v7218 = vmax.f32 %v7214, 0.0
    %v7219 = vpack.c.bf16 %v7218, %v7217
    %v7221 = vsel %vm471, %v7219, 0
    %7223 = vmatprep.subr.bf16.mxu0 0
    %7224 = vmatpush1.bf16.msra.mxu0 0
    %7225 = vmatprep.subr.bf16.mxu0 0
    %7226 = vmatpush1.bf16.msra.mxu0 0
    %7227 = vmatprep.subr.bf16.mxu0 0
    %7228 = vmatpush1.bf16.msra.mxu0 0
    %7229 = vmatprep.subr.bf16.mxu0 0
    %7230 = vmatpush1.bf16.msra.mxu0 0
    %7231 = vmatprep.subr.bf16.mxu0 %v3904
    %7232 = vmatpush1.bf16.msra.mxu0 %v3903
    %7233 = vmatprep.subr.bf16.mxu0 %v3902
    %7234 = vmatpush1.bf16.msra.mxu0 %v3901
    %7235 = vmatprep.subr.bf16.mxu0 %v3900
    %7236 = vmatpush1.bf16.msra.mxu0 %v3899
    %7237 = vmatprep.subr.bf16.mxu0 %v3898
    %7238 = vmatpush1.bf16.msra.mxu0 %v3897
    %7239 = vmatprep.subr.bf16.mxu0 0
    %7240 = vmatpush2.bf16.msra.mxu0 0
    %7241 = vmatprep.subr.bf16.mxu0 0
    %7242 = vmatpush2.bf16.msra.mxu0 0
    %7243 = vmatprep.subr.bf16.mxu0 0
    %7244 = vmatpush2.bf16.msra.mxu0 0
    %7245 = vmatprep.subr.bf16.mxu0 0
    %7246 = vmatpush2.bf16.msra.mxu0 0
    %7247 = vmatprep.subr.bf16.mxu0 0
    %7248 = vmatpush2.bf16.msra.mxu0 0
    %7249 = vmatprep.subr.bf16.mxu0 0
    %7250 = vmatpush2.bf16.msra.mxu0 0
    %7251 = vmatprep.subr.bf16.mxu0 0
    %7252 = vmatpush2.bf16.msra.mxu0 0
    %7253 = vmatprep.subr.bf16.mxu0 0
    %7254 = vmatpush2.bf16.msra.mxu0 0
    %7255 = vmatprep.mubr.bf16.mxu0 0
    %7256 = vmatmul.mubr.bf16.gmra.mxu0 %v7221
    %v7257 = vpop.f32.mrf.mxu0
    %v7258 = vadd.f32 0.0, %v7257
    %v7259 = vpop.f32.mrf.mxu0
    %v7260 = vadd.f32 0.0, %v7259
    %v7261 = vpop.f32.mrf.mxu0
    %v7262 = vadd.f32 0.0, %v7261
    %v7263 = vpop.f32.mrf.mxu0
    %v7264 = vadd.f32 0.0, %v7263
    %7265 = vdwg.mxu0
    %7266 = vmatprep.subr.bf16.mxu0 0
    %7267 = vmatpush1.bf16.msra.mxu0 0
    %7268 = vmatprep.subr.bf16.mxu0 0
    %7269 = vmatpush1.bf16.msra.mxu0 0
    %7270 = vmatprep.subr.bf16.mxu0 0
    %7271 = vmatpush1.bf16.msra.mxu0 0
    %7272 = vmatprep.subr.bf16.mxu0 0
    %7273 = vmatpush1.bf16.msra.mxu0 0
    %7274 = vmatprep.subr.bf16.mxu0 %v3998
    %7275 = vmatpush1.bf16.msra.mxu0 %v3997
    %7276 = vmatprep.subr.bf16.mxu0 %v3996
    %7277 = vmatpush1.bf16.msra.mxu0 %v3995
    %7278 = vmatprep.subr.bf16.mxu0 %v3994
    %7279 = vmatpush1.bf16.msra.mxu0 %v3993
    %7280 = vmatprep.subr.bf16.mxu0 %v3992
    %7281 = vmatpush1.bf16.msra.mxu0 %v3991
    %7282 = vmatprep.subr.bf16.mxu0 0
    %7283 = vmatpush2.bf16.msra.mxu0 0
    %7284 = vmatprep.subr.bf16.mxu0 0
    %7285 = vmatpush2.bf16.msra.mxu0 0
    %7286 = vmatprep.subr.bf16.mxu0 0
    %7287 = vmatpush2.bf16.msra.mxu0 0
    %7288 = vmatprep.subr.bf16.mxu0 0
    %7289 = vmatpush2.bf16.msra.mxu0 0
    %7290 = vmatprep.subr.bf16.mxu0 0
    %7291 = vmatpush2.bf16.msra.mxu0 0
    %7292 = vmatprep.subr.bf16.mxu0 0
    %7293 = vmatpush2.bf16.msra.mxu0 0
    %7294 = vmatprep.subr.bf16.mxu0 0
    %7295 = vmatpush2.bf16.msra.mxu0 0
    %7296 = vmatprep.subr.bf16.mxu0 0
    %7297 = vmatpush2.bf16.msra.mxu0 0
    %7298 = vmatprep.mubr.bf16.mxu0 0
    %7299 = vmatmul.mubr.bf16.gmra.mxu0 %v7221
    %v7300 = vpop.f32.mrf.mxu0
    %v7301 = vadd.f32 0.0, %v7300
    %v7302 = vpop.f32.mrf.mxu0
    %v7303 = vadd.f32 0.0, %v7302
    %v7304 = vpop.f32.mrf.mxu0
    %v7305 = vadd.f32 0.0, %v7304
    %v7306 = vpop.f32.mrf.mxu0
    %v7307 = vadd.f32 0.0, %v7306
    %7308 = vdwg.mxu0
    %v7309 = vpack.c.bf16 %v5119, %v5118
    %v7310 = vpack.c.bf16 %v5120, %v5120
    %v7312 = vsel %vm471, %v7309, 0
    %v7315 = vsel %vm471, %v7310, 0
    %7317 = vmatprep.subr.bf16.mxu0 0
    %7318 = vmatpush1.bf16.msra.mxu0 0
    %7319 = vmatprep.subr.bf16.mxu0 0
    %7320 = vmatpush1.bf16.msra.mxu0 0
    %7321 = vmatprep.subr.bf16.mxu0 0
    %7322 = vmatpush1.bf16.msra.mxu0 0
    %7323 = vmatprep.subr.bf16.mxu0 0
    %7324 = vmatpush1.bf16.msra.mxu0 0
    %7325 = vmatprep.subr.bf16.mxu0 %v4091
    %7326 = vmatpush1.bf16.msra.mxu0 %v4090
    %7327 = vmatprep.subr.bf16.mxu0 %v4089
    %7328 = vmatpush1.bf16.msra.mxu0 %v4088
    %7329 = vmatprep.subr.bf16.mxu0 %v4087
    %7330 = vmatpush1.bf16.msra.mxu0 %v4086
    %7331 = vmatprep.subr.bf16.mxu0 %v4085
    %7332 = vmatpush1.bf16.msra.mxu0 %v4084
    %7333 = vmatprep.subr.bf16.mxu0 0
    %7334 = vmatpush2.bf16.msra.mxu0 0
    %7335 = vmatprep.subr.bf16.mxu0 0
    %7336 = vmatpush2.bf16.msra.mxu0 0
    %7337 = vmatprep.subr.bf16.mxu0 0
    %7338 = vmatpush2.bf16.msra.mxu0 0
    %7339 = vmatprep.subr.bf16.mxu0 0
    %7340 = vmatpush2.bf16.msra.mxu0 0
    %7341 = vmatprep.subr.bf16.mxu0 0
    %7342 = vmatpush2.bf16.msra.mxu0 0
    %7343 = vmatprep.subr.bf16.mxu0 0
    %7344 = vmatpush2.bf16.msra.mxu0 0
    %7345 = vmatprep.subr.bf16.mxu0 0
    %7346 = vmatpush2.bf16.msra.mxu0 0
    %7347 = vmatprep.subr.bf16.mxu0 0
    %7348 = vmatpush2.bf16.msra.mxu0 0
    %7349 = vmatprep.mubr.bf16.mxu0 0
    %7350 = vmatmul.mubr.bf16.gmra.mxu0 %v7312
    %v7351 = vpop.f32.mrf.mxu0
    %v7352 = vadd.f32 0.0, %v7351
    %v7353 = vpop.f32.mrf.mxu0
    %v7354 = vadd.f32 0.0, %v7353
    %v7355 = vpop.f32.mrf.mxu0
    %v7356 = vadd.f32 0.0, %v7355
    %v7357 = vpop.f32.mrf.mxu0
    %v7358 = vadd.f32 0.0, %v7357
    %7359 = vmatprep.mubr.bf16.mxu0 0
    %7360 = vmatmul.mubr.bf16.gmra.mxu0 %v7315
    %v7361 = vpop.f32.mrf.mxu0
    %v7362 = vadd.f32 0.0, %v7361
    %v7363 = vpop.f32.mrf.mxu0
    %v7364 = vadd.f32 0.0, %v7363
    %v7365 = vpop.f32.mrf.mxu0
    %v7366 = vpop.f32.mrf.mxu0
    %7367 = vdwg.mxu0
    %7368 = vmatprep.subr.bf16.mxu0 0
    %7369 = vmatpush1.bf16.msra.mxu0 0
    %7370 = vmatprep.subr.bf16.mxu0 0
    %7371 = vmatpush1.bf16.msra.mxu0 0
    %7372 = vmatprep.subr.bf16.mxu0 0
    %7373 = vmatpush1.bf16.msra.mxu0 0
    %7374 = vmatprep.subr.bf16.mxu0 0
    %7375 = vmatpush1.bf16.msra.mxu0 0
    %7376 = vmatprep.subr.bf16.mxu0 %v4196
    %7377 = vmatpush1.bf16.msra.mxu0 %v4195
    %7378 = vmatprep.subr.bf16.mxu0 %v4194
    %7379 = vmatpush1.bf16.msra.mxu0 %v4193
    %7380 = vmatprep.subr.bf16.mxu0 %v4192
    %7381 = vmatpush1.bf16.msra.mxu0 %v4191
    %7382 = vmatprep.subr.bf16.mxu0 %v4190
    %7383 = vmatpush1.bf16.msra.mxu0 %v4189
    %7384 = vmatprep.subr.bf16.mxu0 0
    %7385 = vmatpush2.bf16.msra.mxu0 0
    %7386 = vmatprep.subr.bf16.mxu0 0
    %7387 = vmatpush2.bf16.msra.mxu0 0
    %7388 = vmatprep.subr.bf16.mxu0 0
    %7389 = vmatpush2.bf16.msra.mxu0 0
    %7390 = vmatprep.subr.bf16.mxu0 0
    %7391 = vmatpush2.bf16.msra.mxu0 0
    %7392 = vmatprep.subr.bf16.mxu0 0
    %7393 = vmatpush2.bf16.msra.mxu0 0
    %7394 = vmatprep.subr.bf16.mxu0 0
    %7395 = vmatpush2.bf16.msra.mxu0 0
    %7396 = vmatprep.subr.bf16.mxu0 0
    %7397 = vmatpush2.bf16.msra.mxu0 0
    %7398 = vmatprep.subr.bf16.mxu0 0
    %7399 = vmatpush2.bf16.msra.mxu0 0
    %7400 = vmatprep.mubr.bf16.mxu0 0
    %7401 = vmatmul.mubr.bf16.gmra.mxu0 %v7221
    %v7402 = vpop.f32.mrf.mxu0
    %v7403 = vadd.f32 0.0, %v7402
    %v7404 = vpop.f32.mrf.mxu0
    %v7405 = vadd.f32 0.0, %v7404
    %v7406 = vpop.f32.mrf.mxu0
    %v7407 = vadd.f32 0.0, %v7406
    %v7408 = vpop.f32.mrf.mxu0
    %v7409 = vadd.f32 0.0, %v7408
    %7410 = vdwg.mxu0
    %v7411 = vpack.c.bf16 %v7262, %v7258
    %v7412 = vpack.c.bf16 %v7264, %v7260
    %v7413 = vpack.c.bf16 %v7305, %v7301
    %v7414 = vpack.c.bf16 %v7307, %v7303
    %7415 = vmatprep.subr.bf16.mxu0 0
    %7416 = vmatpush1.bf16.msra.mxu0 0
    %7417 = vmatprep.subr.bf16.mxu0 0
    %7418 = vmatpush1.bf16.msra.mxu0 0
    %7419 = vmatprep.subr.bf16.mxu0 0
    %7420 = vmatpush1.bf16.msra.mxu0 0
    %7421 = vmatprep.subr.bf16.mxu0 0
    %7422 = vmatpush1.bf16.msra.mxu0 0
    %7423 = vmatprep.subr.bf16.mxu0 0
    %7424 = vmatpush1.bf16.msra.mxu0 0
    %7425 = vmatprep.subr.bf16.mxu0 0
    %7426 = vmatpush1.bf16.msra.mxu0 0
    %7427 = vmatprep.subr.bf16.mxu0 0
    %7428 = vmatpush1.bf16.msra.mxu0 0
    %7429 = vmatprep.subr.bf16.mxu0 %v7414
    %7430 = vmatpush1.bf16.msra.mxu0 %v7413
    %7431 = vmatprep.subr.bf16.mxu0 0
    %7432 = vmatpush2.bf16.msra.mxu0 0
    %7433 = vmatprep.subr.bf16.mxu0 0
    %7434 = vmatpush2.bf16.msra.mxu0 0
    %7435 = vmatprep.subr.bf16.mxu0 0
    %7436 = vmatpush2.bf16.msra.mxu0 0
    %7437 = vmatprep.subr.bf16.mxu0 0
    %7438 = vmatpush2.bf16.msra.mxu0 0
    %7439 = vmatprep.subr.bf16.mxu0 0
    %7440 = vmatpush2.bf16.msra.mxu0 0
    %7441 = vmatprep.subr.bf16.mxu0 0
    %7442 = vmatpush2.bf16.msra.mxu0 0
    %7443 = vmatprep.subr.bf16.mxu0 0
    %7444 = vmatpush2.bf16.msra.mxu0 0
    %7445 = vmatprep.subr.bf16.mxu0 0
    %7446 = vmatpush2.bf16.msra.mxu0 0
    %7447 = vmatprep.mubr.bf16.mxu0 0
    %7448 = vmatmul.mubr.bf16.gmra.mxu0 %v4261
    %v7449 = vpop.f32.mrf.mxu0
    %v7450 = vadd.f32 0.0, %v7449
    %v7451 = vpop.f32.mrf.mxu0
    %v7452 = vadd.f32 0.0, %v7451
    %v7453 = vpop.f32.mrf.mxu0
    %v7454 = vadd.f32 0.0, %v7453
    %v7455 = vpop.f32.mrf.mxu0
    %v7456 = vadd.f32 0.0, %v7455
    %7457 = vmatprep.mubr.bf16.mxu0 0
    %7458 = vmatmul.mubr.bf16.gmra.mxu0 %v4264
    %v7459 = vpop.f32.mrf.mxu0
    %v7460 = vadd.f32 0.0, %v7459
    %v7461 = vpop.f32.mrf.mxu0
    %v7462 = vadd.f32 0.0, %v7461
    %v7463 = vpop.f32.mrf.mxu0
    %v7464 = vpop.f32.mrf.mxu0
    %7465 = vdwg.mxu0
    %7466 = vmatprep.subr.bf16.mxu0 0
    %7467 = vmatpush1.bf16.msra.mxu0 0
    %7468 = vmatprep.subr.bf16.mxu0 0
    %7469 = vmatpush1.bf16.msra.mxu0 0
    %7470 = vmatprep.subr.bf16.mxu0 0
    %7471 = vmatpush1.bf16.msra.mxu0 0
    %7472 = vmatprep.subr.bf16.mxu0 0
    %7473 = vmatpush1.bf16.msra.mxu0 0
    %7474 = vmatprep.subr.bf16.mxu0 0
    %7475 = vmatpush1.bf16.msra.mxu0 0
    %7476 = vmatprep.subr.bf16.mxu0 0
    %7477 = vmatpush1.bf16.msra.mxu0 0
    %7478 = vmatprep.subr.bf16.mxu0 0
    %7479 = vmatpush1.bf16.msra.mxu0 0
    %7480 = vmatprep.subr.bf16.mxu0 %v7412
    %7481 = vmatpush1.bf16.msra.mxu0 %v7411
    %7482 = vmatprep.subr.bf16.mxu0 0
    %7483 = vmatpush2.bf16.msra.mxu0 0
    %7484 = vmatprep.subr.bf16.mxu0 0
    %7485 = vmatpush2.bf16.msra.mxu0 0
    %7486 = vmatprep.subr.bf16.mxu0 0
    %7487 = vmatpush2.bf16.msra.mxu0 0
    %7488 = vmatprep.subr.bf16.mxu0 0
    %7489 = vmatpush2.bf16.msra.mxu0 0
    %7490 = vmatprep.subr.bf16.mxu0 0
    %7491 = vmatpush2.bf16.msra.mxu0 0
    %7492 = vmatprep.subr.bf16.mxu0 0
    %7493 = vmatpush2.bf16.msra.mxu0 0
    %7494 = vmatprep.subr.bf16.mxu0 0
    %7495 = vmatpush2.bf16.msra.mxu0 0
    %7496 = vmatprep.subr.bf16.mxu0 0
    %7497 = vmatpush2.bf16.msra.mxu0 0
    %7498 = vmatprep.mubr.bf16.mxu0 0
    %7499 = vmatmul.mubr.bf16.gmra.mxu0 %v4326
    %v7500 = vpop.f32.mrf.mxu0
    %v7501 = vadd.f32 %v7450, %v7500
    %v7502 = vpop.f32.mrf.mxu0
    %v7503 = vadd.f32 %v7452, %v7502
    %v7504 = vpop.f32.mrf.mxu0
    %v7505 = vadd.f32 %v7454, %v7504
    %v7506 = vpop.f32.mrf.mxu0
    %v7507 = vadd.f32 %v7456, %v7506
    %7508 = vmatprep.mubr.bf16.mxu0 0
    %7509 = vmatmul.mubr.bf16.gmra.mxu0 %v4329
    %v7510 = vpop.f32.mrf.mxu0
    %v7511 = vadd.f32 %v7460, %v7510
    %v7512 = vpop.f32.mrf.mxu0
    %v7513 = vadd.f32 %v7462, %v7512
    %v7514 = vpop.f32.mrf.mxu0
    %v7515 = vpop.f32.mrf.mxu0
    %7516 = vdwg.mxu0
    %v7517 = vadd.f32 %v7501, %v7352
    %v7518 = vadd.f32 %v7503, %v7354
    %v7519 = vadd.f32 %v7505, %v7356
    %v7520 = vadd.f32 %v7507, %v7358
    %v7521 = vadd.f32 %v7511, %v7362
    %v7522 = vadd.f32 %v7513, %v7364
    %v7523 = vadd.f32 %v7517, %v4392
    %v7524 = vadd.f32 %v7518, %v4396
    %v7525 = vadd.f32 %v7519, %v4392
    %v7526 = vadd.f32 %v7520, %v4396
    %v7527 = vadd.f32 %v7521, %v4392
    %v7528 = vadd.f32 %v7522, %v4396
    %vm7529 = vcmp.gt.f32.partialorder %v7523, 0.0
    %vm7530 = vcmp.gt.f32.partialorder %v7524, 0.0
    %vm7531 = vcmp.gt.f32.partialorder %v7525, 0.0
    %vm7532 = vcmp.gt.f32.partialorder %v7526, 0.0
    %vm7533 = vcmp.gt.f32.partialorder %v7527, 0.0
    %vm7534 = vcmp.gt.f32.partialorder %v7528, 0.0
    %v7535 = vmul.f32 %v7523, 0.01
    %v7536 = vmul.f32 %v7524, 0.01
    %v7537 = vmul.f32 %v7525, 0.01
    %v7538 = vmul.f32 %v7526, 0.01
    %v7539 = vmul.f32 %v7527, 0.01
    %v7540 = vmul.f32 %v7528, 0.01
    %v7541 = vsel %vm7529, %v7523, %v7535
    %v7542 = vsel %vm7530, %v7524, %v7536
    %v7543 = vsel %vm7531, %v7525, %v7537
    %v7544 = vsel %vm7532, %v7526, %v7538
    %v7545 = vsel %vm7533, %v7527, %v7539
    %v7546 = vsel %vm7534, %v7528, %v7540
    %v7547 = vpack.c.bf16 %v7543, %v7541
    %v7548 = vpack.c.bf16 %v7544, %v7542
    %v7549 = vpack.c.bf16 %v7545, %v7545
    %v7550 = vpack.c.bf16 %v7546, %v7546
    %7551 = vmatprep.subr.bf16.mxu0 0
    %7552 = vmatpush1.bf16.msra.mxu0 %v4498
    %7553 = vmatprep.subr.bf16.mxu0 0
    %7554 = vmatpush1.bf16.msra.mxu0 %v4497
    %7555 = vmatprep.subr.bf16.mxu0 0
    %7556 = vmatpush1.bf16.msra.mxu0 %v4496
    %7557 = vmatprep.subr.bf16.mxu0 0
    %7558 = vmatpush1.bf16.msra.mxu0 %v4495
    %7559 = vmatprep.subr.bf16.mxu0 0
    %7560 = vmatpush1.bf16.msra.mxu0 %v4494
    %7561 = vmatprep.subr.bf16.mxu0 0
    %7562 = vmatpush1.bf16.msra.mxu0 %v4493
    %7563 = vmatprep.subr.bf16.mxu0 0
    %7564 = vmatpush1.bf16.msra.mxu0 %v4492
    %7565 = vmatprep.subr.bf16.mxu0 0
    %7566 = vmatpush1.bf16.msra.mxu0 %v4491
    %7567 = vmatprep.subr.bf16.mxu0 0
    %7568 = vmatpush2.bf16.msra.mxu0 %v4506
    %7569 = vmatprep.subr.bf16.mxu0 0
    %7570 = vmatpush2.bf16.msra.mxu0 %v4505
    %7571 = vmatprep.subr.bf16.mxu0 0
    %7572 = vmatpush2.bf16.msra.mxu0 %v4504
    %7573 = vmatprep.subr.bf16.mxu0 0
    %7574 = vmatpush2.bf16.msra.mxu0 %v4503
    %7575 = vmatprep.subr.bf16.mxu0 0
    %7576 = vmatpush2.bf16.msra.mxu0 %v4502
    %7577 = vmatprep.subr.bf16.mxu0 0
    %7578 = vmatpush2.bf16.msra.mxu0 %v4501
    %7579 = vmatprep.subr.bf16.mxu0 0
    %7580 = vmatpush2.bf16.msra.mxu0 %v4500
    %7581 = vmatprep.subr.bf16.mxu0 0
    %7582 = vmatpush2.bf16.msra.mxu0 %v4499
    %7583 = vmatprep.mubr.bf16.mxu0 %v7548
    %7584 = vmatmul.mubr.bf16.gmra.mxu0 %v7547
    %v7585 = vpop.f32.mrf.mxu0
    %v7586 = vadd.f32 0.0, %v7585
    %v7587 = vpop.f32.mrf.mxu0
    %v7588 = vpop.f32.mrf.mxu0
    %v7589 = vadd.f32 0.0, %v7588
    %v7590 = vpop.f32.mrf.mxu0
    %7591 = vmatprep.mubr.bf16.mxu0 %v7550
    %7592 = vmatmul.mubr.bf16.gmra.mxu0 %v7549
    %v7593 = vpop.f32.mrf.mxu0
    %v7594 = vadd.f32 0.0, %v7593
    %v7595 = vpop.f32.mrf.mxu0
    %v7596 = vpop.f32.mrf.mxu0
    %v7597 = vpop.f32.mrf.mxu0
    %7598 = vdwg.mxu0
    %v7599 = vsel %vm303, %v7586, -inf
    %v7600 = vsel %vm303, %v7589, -inf
    %v7601 = vsel %vm303, %v7594, -inf
    %v7602 = vmax.f32 %v7599, %v7600
    %v7603 = vmax.f32 %v7602, %v7601
    %v7604 = vrot.slane %v7603, 4
    %v7605 = vmax.f32 %v7603, %v7604
    %v7606 = vrot.slane %v7605, 2
    %v7607 = vmax.f32 %v7605, %v7606
    %v7608 = vrot.slane %v7607, 1
    %v7609 = vmax.f32 %v7607, %v7608
    %v7610 = vsub.f32 %v7586, %v7609
    %v7611 = vsub.f32 %v7589, %v7609
    %v7612 = vsub.f32 %v7594, %v7609
    %v7613 = vmul.f32 %v7610, 1.442695
    %v7614 = vpow.pop %v7613
    %v7615 = vmul.f32 %v7611, 1.442695
    %v7616 = vpow.pop %v7615
    %v7617 = vmul.f32 %v7612, 1.442695
    %v7618 = vpow.pop %v7617
    %v7619 = vpack.c.bf16 %v7616, %v7614
    %v7620 = vpack.c.bf16 %v7618, %v7618
    %v7622 = vsel %vm4602, %v7620, 0
    %7624 = vmatprep.subr.bf16.mxu0 0
    %7625 = vmatpush1.bf16.msra.mxu0 0
    %7626 = vmatprep.subr.bf16.mxu0 0
    %7627 = vmatpush1.bf16.msra.mxu0 0
    %7628 = vmatprep.subr.bf16.mxu0 0
    %7629 = vmatpush1.bf16.msra.mxu0 0
    %7630 = vmatprep.subr.bf16.mxu0 0
    %7631 = vmatpush1.bf16.msra.mxu0 0
    %7632 = vmatprep.subr.bf16.mxu0 0
    %7633 = vmatpush1.bf16.msra.mxu0 0
    %7634 = vmatprep.subr.bf16.mxu0 0
    %7635 = vmatpush1.bf16.msra.mxu0 0
    %7636 = vmatprep.subr.bf16.mxu0 0
    %7637 = vmatpush1.bf16.msra.mxu0 %v7622
    %7638 = vmatprep.subr.bf16.mxu0 0
    %7639 = vmatpush1.bf16.msra.mxu0 %v7619
    %7640 = vmatprep.subr.bf16.mxu0 0
    %7641 = vmatpush2.bf16.msra.mxu0 0
    %7642 = vmatprep.subr.bf16.mxu0 0
    %7643 = vmatpush2.bf16.msra.mxu0 0
    %7644 = vmatprep.subr.bf16.mxu0 0
    %7645 = vmatpush2.bf16.msra.mxu0 0
    %7646 = vmatprep.subr.bf16.mxu0 0
    %7647 = vmatpush2.bf16.msra.mxu0 0
    %7648 = vmatprep.subr.bf16.mxu0 0
    %7649 = vmatpush2.bf16.msra.mxu0 0
    %7650 = vmatprep.subr.bf16.mxu0 0
    %7651 = vmatpush2.bf16.msra.mxu0 0
    %7652 = vmatprep.subr.bf16.mxu0 0
    %7653 = vmatpush2.bf16.msra.mxu0 0
    %7654 = vmatprep.subr.bf16.mxu0 0
    %7655 = vmatpush2.bf16.msra.mxu0 0
    %7656 = vmatprep.mubr.bf16.mxu0 0
    %7657 = vmatmul.mubr.bf16.gmra.mxu0 %v4600
    %v7658 = vpop.f32.mrf.mxu0
    %v7659 = vadd.f32 0.0, %v7658
    %v7660 = vpop.f32.mrf.mxu0
    %v7661 = vpop.f32.mrf.mxu0
    %v7662 = vadd.f32 0.0, %v7661
    %v7663 = vpop.f32.mrf.mxu0
    %7664 = vdwg.mxu0
    %v7665 = vmax.f32 %v7659, 1e-30
    %v7666 = vmax.f32 %v7662, 1e-30
    %v7667 = vrcp.pop %v7665
    %v7668 = vmul.f32 1.0, %v7667
    %v7669 = vrcp.pop %v7666
    %v7670 = vmul.f32 1.0, %v7669
    %v7671 = vpack.c.bf16 %v7670, %v7668
    %v7673 = vsel %vm303, %v7671, 0
    %7675 = vmatprep.subr.bf16.mxu0 0
    %7676 = vmatpush1.bf16.msra.mxu0 0
    %7677 = vmatprep.subr.bf16.mxu0 0
    %7678 = vmatpush1.bf16.msra.mxu0 0
    %7679 = vmatprep.subr.bf16.mxu0 0
    %7680 = vmatpush1.bf16.msra.mxu0 0
    %7681 = vmatprep.subr.bf16.mxu0 0
    %7682 = vmatpush1.bf16.msra.mxu0 0
    %7683 = vmatprep.subr.bf16.mxu0 0
    %7684 = vmatpush1.bf16.msra.mxu0 0
    %7685 = vmatprep.subr.bf16.mxu0 0
    %7686 = vmatpush1.bf16.msra.mxu0 0
    %7687 = vmatprep.subr.bf16.mxu0 0
    %7688 = vmatpush1.bf16.msra.mxu0 0
    %7689 = vmatprep.subr.bf16.mxu0 %v4666
    %7690 = vmatpush1.bf16.msra.mxu0 %v4663
    %7691 = vmatprep.subr.bf16.mxu0 0
    %7692 = vmatpush2.bf16.msra.mxu0 0
    %7693 = vmatprep.subr.bf16.mxu0 0
    %7694 = vmatpush2.bf16.msra.mxu0 0
    %7695 = vmatprep.subr.bf16.mxu0 0
    %7696 = vmatpush2.bf16.msra.mxu0 0
    %7697 = vmatprep.subr.bf16.mxu0 0
    %7698 = vmatpush2.bf16.msra.mxu0 0
    %7699 = vmatprep.subr.bf16.mxu0 0
    %7700 = vmatpush2.bf16.msra.mxu0 0
    %7701 = vmatprep.subr.bf16.mxu0 0
    %7702 = vmatpush2.bf16.msra.mxu0 0
    %7703 = vmatprep.subr.bf16.mxu0 0
    %7704 = vmatpush2.bf16.msra.mxu0 0
    %7705 = vmatprep.subr.bf16.mxu0 0
    %7706 = vmatpush2.bf16.msra.mxu0 0
    %7707 = vmatprep.mubr.bf16.mxu0 0
    %7708 = vmatmul.mubr.bf16.gmra.mxu0 %v7673
    %v7709 = vpop.f32.mrf.mxu0
    %v7710 = vadd.f32 0.0, %v7709
    %v7711 = vpop.f32.mrf.mxu0
    %v7712 = vadd.f32 0.0, %v7711
    %v7713 = vpop.f32.mrf.mxu0
    %v7714 = vadd.f32 0.0, %v7713
    %v7715 = vpop.f32.mrf.mxu0
    %v7716 = vadd.f32 0.0, %v7715
    %7717 = vdwg.mxu0
    %v7718 = vpack.c.bf16 %v7714, %v7710
    %v7719 = vpack.c.bf16 %v7716, %v7712
    %7720 = vmatprep.subr.bf16.mxu0 0
    %7721 = vmatpush1.bf16.msra.mxu0 0
    %7722 = vmatprep.subr.bf16.mxu0 0
    %7723 = vmatpush1.bf16.msra.mxu0 0
    %7724 = vmatprep.subr.bf16.mxu0 0
    %7725 = vmatpush1.bf16.msra.mxu0 0
    %7726 = vmatprep.subr.bf16.mxu0 0
    %7727 = vmatpush1.bf16.msra.mxu0 0
    %7728 = vmatprep.subr.bf16.mxu0 0
    %7729 = vmatpush1.bf16.msra.mxu0 0
    %7730 = vmatprep.subr.bf16.mxu0 0
    %7731 = vmatpush1.bf16.msra.mxu0 0
    %7732 = vmatprep.subr.bf16.mxu0 0
    %7733 = vmatpush1.bf16.msra.mxu0 0
    %7734 = vmatprep.subr.bf16.mxu0 %v7719
    %7735 = vmatpush1.bf16.msra.mxu0 %v7718
    %7736 = vmatprep.subr.bf16.mxu0 0
    %7737 = vmatpush2.bf16.msra.mxu0 0
    %7738 = vmatprep.subr.bf16.mxu0 0
    %7739 = vmatpush2.bf16.msra.mxu0 0
    %7740 = vmatprep.subr.bf16.mxu0 0
    %7741 = vmatpush2.bf16.msra.mxu0 0
    %7742 = vmatprep.subr.bf16.mxu0 0
    %7743 = vmatpush2.bf16.msra.mxu0 0
    %7744 = vmatprep.subr.bf16.mxu0 0
    %7745 = vmatpush2.bf16.msra.mxu0 0
    %7746 = vmatprep.subr.bf16.mxu0 0
    %7747 = vmatpush2.bf16.msra.mxu0 0
    %7748 = vmatprep.subr.bf16.mxu0 0
    %7749 = vmatpush2.bf16.msra.mxu0 0
    %7750 = vmatprep.subr.bf16.mxu0 0
    %7751 = vmatpush2.bf16.msra.mxu0 0
    %7752 = vmatprep.mubr.bf16.mxu0 0
    %7753 = vmatmul.mubr.bf16.gmra.mxu0 %v4261
    %v7754 = vpop.f32.mrf.mxu0
    %v7755 = vadd.f32 0.0, %v7754
    %v7756 = vpop.f32.mrf.mxu0
    %v7757 = vadd.f32 0.0, %v7756
    %v7758 = vpop.f32.mrf.mxu0
    %v7759 = vadd.f32 0.0, %v7758
    %v7760 = vpop.f32.mrf.mxu0
    %v7761 = vadd.f32 0.0, %v7760
    %7762 = vmatprep.mubr.bf16.mxu0 0
    %7763 = vmatmul.mubr.bf16.gmra.mxu0 %v4264
    %v7764 = vpop.f32.mrf.mxu0
    %v7765 = vadd.f32 0.0, %v7764
    %v7766 = vpop.f32.mrf.mxu0
    %v7767 = vadd.f32 0.0, %v7766
    %v7768 = vpop.f32.mrf.mxu0
    %v7769 = vpop.f32.mrf.mxu0
    %7770 = vdwg.mxu0
    %v7772 = vsel %vm303, %v7619, 0
    %v7774 = vsel %vm303, %v7620, 0
    %7776 = vmatprep.subr.bf16.mxu0 0
    %7777 = vmatpush1.bf16.msra.mxu0 0
    %7778 = vmatprep.subr.bf16.mxu0 0
    %7779 = vmatpush1.bf16.msra.mxu0 0
    %7780 = vmatprep.subr.bf16.mxu0 0
    %7781 = vmatpush1.bf16.msra.mxu0 0
    %7782 = vmatprep.subr.bf16.mxu0 0
    %7783 = vmatpush1.bf16.msra.mxu0 0
    %7784 = vmatprep.subr.bf16.mxu0 0
    %7785 = vmatpush1.bf16.msra.mxu0 0
    %7786 = vmatprep.subr.bf16.mxu0 0
    %7787 = vmatpush1.bf16.msra.mxu0 0
    %7788 = vmatprep.subr.bf16.mxu0 0
    %7789 = vmatpush1.bf16.msra.mxu0 0
    %7790 = vmatprep.subr.bf16.mxu0 %v4666
    %7791 = vmatpush1.bf16.msra.mxu0 %v4663
    %7792 = vmatprep.subr.bf16.mxu0 0
    %7793 = vmatpush2.bf16.msra.mxu0 0
    %7794 = vmatprep.subr.bf16.mxu0 0
    %7795 = vmatpush2.bf16.msra.mxu0 0
    %7796 = vmatprep.subr.bf16.mxu0 0
    %7797 = vmatpush2.bf16.msra.mxu0 0
    %7798 = vmatprep.subr.bf16.mxu0 0
    %7799 = vmatpush2.bf16.msra.mxu0 0
    %7800 = vmatprep.subr.bf16.mxu0 0
    %7801 = vmatpush2.bf16.msra.mxu0 0
    %7802 = vmatprep.subr.bf16.mxu0 0
    %7803 = vmatpush2.bf16.msra.mxu0 0
    %7804 = vmatprep.subr.bf16.mxu0 0
    %7805 = vmatpush2.bf16.msra.mxu0 0
    %7806 = vmatprep.subr.bf16.mxu0 0
    %7807 = vmatpush2.bf16.msra.mxu0 0
    %7808 = vmatprep.mubr.bf16.mxu0 0
    %7809 = vmatmul.mubr.bf16.gmra.mxu0 %v7772
    %v7810 = vpop.f32.mrf.mxu0
    %v7811 = vadd.f32 0.0, %v7810
    %v7812 = vpop.f32.mrf.mxu0
    %v7813 = vadd.f32 0.0, %v7812
    %v7814 = vpop.f32.mrf.mxu0
    %v7815 = vadd.f32 0.0, %v7814
    %v7816 = vpop.f32.mrf.mxu0
    %v7817 = vadd.f32 0.0, %v7816
    %7818 = vmatprep.mubr.bf16.mxu0 0
    %7819 = vmatmul.mubr.bf16.gmra.mxu0 %v7774
    %v7820 = vpop.f32.mrf.mxu0
    %v7821 = vadd.f32 0.0, %v7820
    %v7822 = vpop.f32.mrf.mxu0
    %v7823 = vadd.f32 0.0, %v7822
    %v7824 = vpop.f32.mrf.mxu0
    %v7825 = vpop.f32.mrf.mxu0
    %7826 = vdwg.mxu0
    %v7827 = vpack.c.bf16 %v7407, %v7403
    %v7828 = vpack.c.bf16 %v7409, %v7405
    %7829 = vmatprep.subr.bf16.mxu0 0
    %7830 = vmatpush1.bf16.msra.mxu0 0
    %7831 = vmatprep.subr.bf16.mxu0 0
    %7832 = vmatpush1.bf16.msra.mxu0 0
    %7833 = vmatprep.subr.bf16.mxu0 0
    %7834 = vmatpush1.bf16.msra.mxu0 0
    %7835 = vmatprep.subr.bf16.mxu0 0
    %7836 = vmatpush1.bf16.msra.mxu0 0
    %7837 = vmatprep.subr.bf16.mxu0 0
    %7838 = vmatpush1.bf16.msra.mxu0 0
    %7839 = vmatprep.subr.bf16.mxu0 0
    %7840 = vmatpush1.bf16.msra.mxu0 0
    %7841 = vmatprep.subr.bf16.mxu0 0
    %7842 = vmatpush1.bf16.msra.mxu0 0
    %7843 = vmatprep.subr.bf16.mxu0 %v7828
    %7844 = vmatpush1.bf16.msra.mxu0 %v7827
    %7845 = vmatprep.subr.bf16.mxu0 0
    %7846 = vmatpush2.bf16.msra.mxu0 0
    %7847 = vmatprep.subr.bf16.mxu0 0
    %7848 = vmatpush2.bf16.msra.mxu0 0
    %7849 = vmatprep.subr.bf16.mxu0 0
    %7850 = vmatpush2.bf16.msra.mxu0 0
    %7851 = vmatprep.subr.bf16.mxu0 0
    %7852 = vmatpush2.bf16.msra.mxu0 0
    %7853 = vmatprep.subr.bf16.mxu0 0
    %7854 = vmatpush2.bf16.msra.mxu0 0
    %7855 = vmatprep.subr.bf16.mxu0 0
    %7856 = vmatpush2.bf16.msra.mxu0 0
    %7857 = vmatprep.subr.bf16.mxu0 0
    %7858 = vmatpush2.bf16.msra.mxu0 0
    %7859 = vmatprep.subr.bf16.mxu0 0
    %7860 = vmatpush2.bf16.msra.mxu0 0
    %7861 = vmatprep.mubr.bf16.mxu0 0
    %7862 = vmatmul.mubr.bf16.gmra.mxu0 %v4326
    %v7863 = vpop.f32.mrf.mxu0
    %v7864 = vadd.f32 0.0, %v7863
    %v7865 = vpop.f32.mrf.mxu0
    %v7866 = vadd.f32 0.0, %v7865
    %v7867 = vpop.f32.mrf.mxu0
    %v7868 = vadd.f32 0.0, %v7867
    %v7869 = vpop.f32.mrf.mxu0
    %v7870 = vadd.f32 0.0, %v7869
    %7871 = vmatprep.mubr.bf16.mxu0 0
    %7872 = vmatmul.mubr.bf16.gmra.mxu0 %v4329
    %v7873 = vpop.f32.mrf.mxu0
    %v7874 = vadd.f32 0.0, %v7873
    %v7875 = vpop.f32.mrf.mxu0
    %v7876 = vadd.f32 0.0, %v7875
    %v7877 = vpop.f32.mrf.mxu0
    %v7878 = vpop.f32.mrf.mxu0
    %7879 = vdwg.mxu0
    %v7880 = vmul.f32 %v7811, %v7755
    %v7881 = vmul.f32 %v7813, %v7757
    %v7882 = vmul.f32 %v7815, %v7759
    %v7883 = vmul.f32 %v7817, %v7761
    %v7884 = vmul.f32 %v7821, %v7765
    %v7885 = vmul.f32 %v7823, %v7767
    %v7886 = vmul.f32 %v7880, %v7864
    %v7887 = vmul.f32 %v7881, %v7866
    %v7888 = vmul.f32 %v7882, %v7868
    %v7889 = vmul.f32 %v7883, %v7870
    %v7890 = vmul.f32 %v7884, %v7874
    %v7891 = vmul.f32 %v7885, %v7876
    %v7892 = vpack.c.bf16 %v7888, %v7886
    %v7893 = vpack.c.bf16 %v7889, %v7887
    %v7894 = vpack.c.bf16 %v7890, %v7890
    %v7895 = vpack.c.bf16 %v7891, %v7891
    %v7897 = vsel %vm4602, %v7894, 0
    %v7900 = vsel %vm4602, %v7895, 0
    %7902 = vmatprep.subr.bf16.mxu0 0
    %7903 = vmatpush1.bf16.msra.mxu0 0
    %7904 = vmatprep.subr.bf16.mxu0 0
    %7905 = vmatpush1.bf16.msra.mxu0 0
    %7906 = vmatprep.subr.bf16.mxu0 0
    %7907 = vmatpush1.bf16.msra.mxu0 0
    %7908 = vmatprep.subr.bf16.mxu0 0
    %7909 = vmatpush1.bf16.msra.mxu0 0
    %7910 = vmatprep.subr.bf16.mxu0 0
    %7911 = vmatpush1.bf16.msra.mxu0 0
    %7912 = vmatprep.subr.bf16.mxu0 0
    %7913 = vmatpush1.bf16.msra.mxu0 0
    %7914 = vmatprep.subr.bf16.mxu0 %v7900
    %7915 = vmatpush1.bf16.msra.mxu0 %v7897
    %7916 = vmatprep.subr.bf16.mxu0 %v7893
    %7917 = vmatpush1.bf16.msra.mxu0 %v7892
    %7918 = vmatprep.subr.bf16.mxu0 0
    %7919 = vmatpush2.bf16.msra.mxu0 0
    %7920 = vmatprep.subr.bf16.mxu0 0
    %7921 = vmatpush2.bf16.msra.mxu0 0
    %7922 = vmatprep.subr.bf16.mxu0 0
    %7923 = vmatpush2.bf16.msra.mxu0 0
    %7924 = vmatprep.subr.bf16.mxu0 0
    %7925 = vmatpush2.bf16.msra.mxu0 0
    %7926 = vmatprep.subr.bf16.mxu0 0
    %7927 = vmatpush2.bf16.msra.mxu0 0
    %7928 = vmatprep.subr.bf16.mxu0 0
    %7929 = vmatpush2.bf16.msra.mxu0 0
    %7930 = vmatprep.subr.bf16.mxu0 0
    %7931 = vmatpush2.bf16.msra.mxu0 0
    %7932 = vmatprep.subr.bf16.mxu0 0
    %7933 = vmatpush2.bf16.msra.mxu0 0
    %7934 = vmatprep.mubr.bf16.mxu0 0
    %7935 = vmatmul.mubr.bf16.gmra.mxu0 %v4600
    %v7936 = vpop.f32.mrf.mxu0
    %v7937 = vadd.f32 0.0, %v7936
    %v7938 = vpop.f32.mrf.mxu0
    %v7939 = vadd.f32 0.0, %v7938
    %v7940 = vpop.f32.mrf.mxu0
    %v7941 = vadd.f32 0.0, %v7940
    %v7942 = vpop.f32.mrf.mxu0
    %v7943 = vadd.f32 0.0, %v7942
    %7944 = vdwg.mxu0
    %v7945 = vpack.c.bf16 %v7941, %v7937
    %v7946 = vpack.c.bf16 %v7943, %v7939
    %7947 = vmatprep.subr.bf16.mxu0 0
    %7948 = vmatpush1.bf16.msra.mxu0 %v5230
    %7949 = vmatprep.subr.bf16.mxu0 0
    %7950 = vmatpush1.bf16.msra.mxu0 %v5229
    %7951 = vmatprep.subr.bf16.mxu0 0
    %7952 = vmatpush1.bf16.msra.mxu0 %v5228
    %7953 = vmatprep.subr.bf16.mxu0 0
    %7954 = vmatpush1.bf16.msra.mxu0 %v5227
    %7955 = vmatprep.subr.bf16.mxu0 0
    %7956 = vmatpush1.bf16.msra.mxu0 %v5226
    %7957 = vmatprep.subr.bf16.mxu0 0
    %7958 = vmatpush1.bf16.msra.mxu0 %v5225
    %7959 = vmatprep.subr.bf16.mxu0 0
    %7960 = vmatpush1.bf16.msra.mxu0 %v5224
    %7961 = vmatprep.subr.bf16.mxu0 0
    %7962 = vmatpush1.bf16.msra.mxu0 %v5223
    %7963 = vmatprep.subr.bf16.mxu0 0
    %7964 = vmatpush2.bf16.msra.mxu0 %v5238
    %7965 = vmatprep.subr.bf16.mxu0 0
    %7966 = vmatpush2.bf16.msra.mxu0 %v5237
    %7967 = vmatprep.subr.bf16.mxu0 0
    %7968 = vmatpush2.bf16.msra.mxu0 %v5236
    %7969 = vmatprep.subr.bf16.mxu0 0
    %7970 = vmatpush2.bf16.msra.mxu0 %v5235
    %7971 = vmatprep.subr.bf16.mxu0 0
    %7972 = vmatpush2.bf16.msra.mxu0 %v5234
    %7973 = vmatprep.subr.bf16.mxu0 0
    %7974 = vmatpush2.bf16.msra.mxu0 %v5233
    %7975 = vmatprep.subr.bf16.mxu0 0
    %7976 = vmatpush2.bf16.msra.mxu0 %v5232
    %7977 = vmatprep.subr.bf16.mxu0 0
    %7978 = vmatpush2.bf16.msra.mxu0 %v5231
    %7979 = vmatprep.mubr.bf16.mxu0 %v7946
    %7980 = vmatmul.mubr.bf16.gmra.mxu0 %v7945
    %v7981 = vpop.f32.mrf.mxu0
    %v7982 = vadd.f32 %v5158, %v7981
    %v7983 = vpop.f32.mrf.mxu0
    %v7984 = vpop.f32.mrf.mxu0
    %v7985 = vadd.f32 %v5158, %v7984
    %v7986 = vpop.f32.mrf.mxu0
    %7987 = vdwg.mxu0
    %v7988 = vmax.f32 %v7982, 0.0
    %v7989 = vmax.f32 %v7985, 0.0
    %v7990 = vadd.f32 %v7217, %v7988
    %v7991 = vadd.f32 %v7218, %v7989
    %v7992 = vld [vmem:[#allocation2 + $0x570] sm:$0xf]
    %v7993 = vld [vmem:[#allocation2 + $0x574] sm:$0xf]
    %v7994 = vld [vmem:[#allocation2 + $0x578] sm:$0xf]
    %v7995 = vld [vmem:[#allocation2 + $0x57c] sm:$0xf]
    %v7996 = vld [vmem:[#allocation2 + $0x580] sm:$0xf]
    %v7997 = vld [vmem:[#allocation2 + $0x584] sm:$0xf]
    %v7998 = vld [vmem:[#allocation2 + $0x588] sm:$0xf]
    %v7999 = vld [vmem:[#allocation2 + $0x58c] sm:$0xf]
    %v8000 = vpack.c.bf16 %v7991, %v7990
    %v8001 = vlaneseq
    %v8002 = vshrl.u32 %v8001, 7
    %v8003 = vsub.s32 0, %v8002
    %v8004 = vrot.slane %v103, %v8003
    %v8013 = vunpack.c.l.b16 %v7992
    %v8014 = vunpack.c.l.b16 %v7993
    %v8015 = vunpack.c.l.b16 %v7994
    %v8016 = vunpack.c.l.b16 %v7995
    %v8017 = vunpack.c.l.b16 %v7996
    %v8018 = vunpack.c.l.b16 %v7997
    %v8019 = vunpack.c.l.b16 %v7998
    %v8020 = vunpack.c.l.b16 %v7999
    %v8021 = vpack.c.b16 %v8014, %v8013
    %v8022 = vpack.c.b16 %v8016, %v8015
    %v8023 = vpack.c.b16 %v8018, %v8017
    %v8024 = vpack.c.b16 %v8020, %v8019
    %v8030 = vsel %vm471, %v8000, 0
    %8032 = vmatprep.subr.bf16.mxu0 0
    %8033 = vmatpush1.bf16.msra.mxu0 0
    %8034 = vmatprep.subr.bf16.mxu0 0
    %8035 = vmatpush1.bf16.msra.mxu0 0
    %8036 = vmatprep.subr.bf16.mxu0 0
    %8037 = vmatpush1.bf16.msra.mxu0 0
    %8038 = vmatprep.subr.bf16.mxu0 0
    %8039 = vmatpush1.bf16.msra.mxu0 0
    %8040 = vmatprep.subr.bf16.mxu0 0
    %8041 = vmatpush1.bf16.msra.mxu0 %v8024
    %8042 = vmatprep.subr.bf16.mxu0 0
    %8043 = vmatpush1.bf16.msra.mxu0 %v8023
    %8044 = vmatprep.subr.bf16.mxu0 0
    %8045 = vmatpush1.bf16.msra.mxu0 %v8022
    %8046 = vmatprep.subr.bf16.mxu0 0
    %8047 = vmatpush1.bf16.msra.mxu0 %v8021
    %8048 = vmatprep.subr.bf16.mxu0 0
    %8049 = vmatpush2.bf16.msra.mxu0 0
    %8050 = vmatprep.subr.bf16.mxu0 0
    %8051 = vmatpush2.bf16.msra.mxu0 0
    %8052 = vmatprep.subr.bf16.mxu0 0
    %8053 = vmatpush2.bf16.msra.mxu0 0
    %8054 = vmatprep.subr.bf16.mxu0 0
    %8055 = vmatpush2.bf16.msra.mxu0 0
    %8056 = vmatprep.subr.bf16.mxu0 0
    %8057 = vmatpush2.bf16.msra.mxu0 0
    %8058 = vmatprep.subr.bf16.mxu0 0
    %8059 = vmatpush2.bf16.msra.mxu0 0
    %8060 = vmatprep.subr.bf16.mxu0 0
    %8061 = vmatpush2.bf16.msra.mxu0 0
    %8062 = vmatprep.subr.bf16.mxu0 0
    %8063 = vmatpush2.bf16.msra.mxu0 0
    %8064 = vmatprep.mubr.bf16.mxu0 0
    %8065 = vmatmul.mubr.bf16.gmra.mxu0 %v8030
    %v8066 = vpop.f32.mrf.mxu0
    %v8067 = vadd.f32 %v8004, %v8066
    %v8068 = vpop.f32.mrf.mxu0
    %v8069 = vpop.f32.mrf.mxu0
    %v8070 = vadd.f32 %v8004, %v8069
    %v8071 = vpop.f32.mrf.mxu0
    %8072 = vdwg.mxu0
    %v8073 = vld [vmem:[#allocation2 + $0x590] sm:$0xf]
    %v8074 = vld [vmem:[#allocation2 + $0x594] sm:$0xf]
    %v8075 = vld [vmem:[#allocation2 + $0x598] sm:$0xf]
    %v8076 = vld [vmem:[#allocation2 + $0x59c] sm:$0xf]
    %v8077 = vld [vmem:[#allocation2 + $0x5a0] sm:$0xf]
    %v8078 = vld [vmem:[#allocation2 + $0x5a4] sm:$0xf]
    %v8079 = vld [vmem:[#allocation2 + $0x5a8] sm:$0xf]
    %v8080 = vld [vmem:[#allocation2 + $0x5ac] sm:$0xf]
    %v8081 = vlaneseq
    %v8082 = vshrl.u32 %v8081, 7
    %v8083 = vsub.s32 0, %v8082
    %v8084 = vrot.slane %v104, %v8083
    %v8093 = vunpack.c.l.b16 %v8073
    %v8094 = vunpack.c.l.b16 %v8074
    %v8095 = vunpack.c.l.b16 %v8075
    %v8096 = vunpack.c.l.b16 %v8076
    %v8097 = vunpack.c.l.b16 %v8077
    %v8098 = vunpack.c.l.b16 %v8078
    %v8099 = vunpack.c.l.b16 %v8079
    %v8100 = vunpack.c.l.b16 %v8080
    %v8101 = vpack.c.b16 %v8094, %v8093
    %v8102 = vpack.c.b16 %v8096, %v8095
    %v8103 = vpack.c.b16 %v8098, %v8097
    %v8104 = vpack.c.b16 %v8100, %v8099
    %8109 = vmatprep.subr.bf16.mxu0 0
    %8110 = vmatpush1.bf16.msra.mxu0 0
    %8111 = vmatprep.subr.bf16.mxu0 0
    %8112 = vmatpush1.bf16.msra.mxu0 0
    %8113 = vmatprep.subr.bf16.mxu0 0
    %8114 = vmatpush1.bf16.msra.mxu0 0
    %8115 = vmatprep.subr.bf16.mxu0 0
    %8116 = vmatpush1.bf16.msra.mxu0 0
    %8117 = vmatprep.subr.bf16.mxu0 0
    %8118 = vmatpush1.bf16.msra.mxu0 %v8104
    %8119 = vmatprep.subr.bf16.mxu0 0
    %8120 = vmatpush1.bf16.msra.mxu0 %v8103
    %8121 = vmatprep.subr.bf16.mxu0 0
    %8122 = vmatpush1.bf16.msra.mxu0 %v8102
    %8123 = vmatprep.subr.bf16.mxu0 0
    %8124 = vmatpush1.bf16.msra.mxu0 %v8101
    %8125 = vmatprep.subr.bf16.mxu0 0
    %8126 = vmatpush2.bf16.msra.mxu0 0
    %8127 = vmatprep.subr.bf16.mxu0 0
    %8128 = vmatpush2.bf16.msra.mxu0 0
    %8129 = vmatprep.subr.bf16.mxu0 0
    %8130 = vmatpush2.bf16.msra.mxu0 0
    %8131 = vmatprep.subr.bf16.mxu0 0
    %8132 = vmatpush2.bf16.msra.mxu0 0
    %8133 = vmatprep.subr.bf16.mxu0 0
    %8134 = vmatpush2.bf16.msra.mxu0 0
    %8135 = vmatprep.subr.bf16.mxu0 0
    %8136 = vmatpush2.bf16.msra.mxu0 0
    %8137 = vmatprep.subr.bf16.mxu0 0
    %8138 = vmatpush2.bf16.msra.mxu0 0
    %8139 = vmatprep.subr.bf16.mxu0 0
    %8140 = vmatpush2.bf16.msra.mxu0 0
    %8141 = vmatprep.mubr.bf16.mxu0 0
    %8142 = vmatmul.mubr.bf16.gmra.mxu0 %v8030
    %v8143 = vpop.f32.mrf.mxu0
    %v8144 = vadd.f32 %v8084, %v8143
    %v8145 = vpop.f32.mrf.mxu0
    %v8146 = vpop.f32.mrf.mxu0
    %v8147 = vadd.f32 %v8084, %v8146
    %v8148 = vpop.f32.mrf.mxu0
    %8149 = vdwg.mxu0
    %v8150 = vld [vmem:[#allocation2 + $0x5b0] sm:$0xf]
    %v8151 = vld [vmem:[#allocation2 + $0x5b4] sm:$0xf]
    %v8152 = vld [vmem:[#allocation2 + $0x5b8] sm:$0xf]
    %v8153 = vld [vmem:[#allocation2 + $0x5bc] sm:$0xf]
    %v8154 = vld [vmem:[#allocation2 + $0x5c0] sm:$0xf]
    %v8155 = vld [vmem:[#allocation2 + $0x5c4] sm:$0xf]
    %v8156 = vld [vmem:[#allocation2 + $0x5c8] sm:$0xf]
    %v8157 = vld [vmem:[#allocation2 + $0x5cc] sm:$0xf]
    %v8158 = vlaneseq
    %v8159 = vshrl.u32 %v8158, 7
    %v8160 = vsub.s32 0, %v8159
    %v8161 = vrot.slane %v105, %v8160
    %v8170 = vunpack.c.l.b16 %v8150
    %v8171 = vunpack.c.l.b16 %v8151
    %v8172 = vunpack.c.l.b16 %v8152
    %v8173 = vunpack.c.l.b16 %v8153
    %v8174 = vunpack.c.l.b16 %v8154
    %v8175 = vunpack.c.l.b16 %v8155
    %v8176 = vunpack.c.l.b16 %v8156
    %v8177 = vunpack.c.l.b16 %v8157
    %v8178 = vpack.c.b16 %v8171, %v8170
    %v8179 = vpack.c.b16 %v8173, %v8172
    %v8180 = vpack.c.b16 %v8175, %v8174
    %v8181 = vpack.c.b16 %v8177, %v8176
    %8186 = vmatprep.subr.bf16.mxu0 0
    %8187 = vmatpush1.bf16.msra.mxu0 0
    %8188 = vmatprep.subr.bf16.mxu0 0
    %8189 = vmatpush1.bf16.msra.mxu0 0
    %8190 = vmatprep.subr.bf16.mxu0 0
    %8191 = vmatpush1.bf16.msra.mxu0 0
    %8192 = vmatprep.subr.bf16.mxu0 0
    %8193 = vmatpush1.bf16.msra.mxu0 0
    %8194 = vmatprep.subr.bf16.mxu0 0
    %8195 = vmatpush1.bf16.msra.mxu0 %v8181
    %8196 = vmatprep.subr.bf16.mxu0 0
    %8197 = vmatpush1.bf16.msra.mxu0 %v8180
    %8198 = vmatprep.subr.bf16.mxu0 0
    %8199 = vmatpush1.bf16.msra.mxu0 %v8179
    %8200 = vmatprep.subr.bf16.mxu0 0
    %8201 = vmatpush1.bf16.msra.mxu0 %v8178
    %8202 = vmatprep.subr.bf16.mxu0 0
    %8203 = vmatpush2.bf16.msra.mxu0 0
    %8204 = vmatprep.subr.bf16.mxu0 0
    %8205 = vmatpush2.bf16.msra.mxu0 0
    %8206 = vmatprep.subr.bf16.mxu0 0
    %8207 = vmatpush2.bf16.msra.mxu0 0
    %8208 = vmatprep.subr.bf16.mxu0 0
    %8209 = vmatpush2.bf16.msra.mxu0 0
    %8210 = vmatprep.subr.bf16.mxu0 0
    %8211 = vmatpush2.bf16.msra.mxu0 0
    %8212 = vmatprep.subr.bf16.mxu0 0
    %8213 = vmatpush2.bf16.msra.mxu0 0
    %8214 = vmatprep.subr.bf16.mxu0 0
    %8215 = vmatpush2.bf16.msra.mxu0 0
    %8216 = vmatprep.subr.bf16.mxu0 0
    %8217 = vmatpush2.bf16.msra.mxu0 0
    %8218 = vmatprep.mubr.bf16.mxu0 0
    %8219 = vmatmul.mubr.bf16.gmra.mxu0 %v8030
    %v8220 = vpop.f32.mrf.mxu0
    %v8221 = vadd.f32 %v8161, %v8220
    %v8222 = vpop.f32.mrf.mxu0
    %v8223 = vpop.f32.mrf.mxu0
    %v8224 = vadd.f32 %v8161, %v8223
    %v8225 = vpop.f32.mrf.mxu0
    %8226 = vdwg.mxu0
    %v8227 = vlaneseq
    %v8228 = vshrl.u32 %v8227, 7
    %v8229 = vsub.s32 0, %v8228
    %v8230 = vrot.slane %v194, %v8229
    %v8231 = vmul.f32 %v8067, %v8230
    %v8232 = vmul.f32 %v8070, %v8230
    %v8233 = vpack.c.bf16 %v8232, %v8231
    %v8234 = vpack.c.bf16 %v8147, %v8144
    %v8236 = vsel %vm471, %v8233, 0
    %v8239 = vsel %vm471, %v8234, 0
    %8241 = vmatprep.subr.bf16.mxu0 0
    %8242 = vmatpush1.bf16.xpose.msra.mxu0 0
    %8243 = vmatprep.subr.bf16.mxu0 0
    %8244 = vmatpush1.bf16.xpose.msra.mxu0 0
    %8245 = vmatprep.subr.bf16.mxu0 0
    %8246 = vmatpush1.bf16.xpose.msra.mxu0 0
    %8247 = vmatprep.subr.bf16.mxu0 0
    %8248 = vmatpush1.bf16.xpose.msra.mxu0 0
    %8249 = vmatprep.subr.bf16.mxu0 0
    %8250 = vmatpush1.bf16.xpose.msra.mxu0 0
    %8251 = vmatprep.subr.bf16.mxu0 0
    %8252 = vmatpush1.bf16.xpose.msra.mxu0 0
    %8253 = vmatprep.subr.bf16.mxu0 0
    %8254 = vmatpush1.bf16.xpose.msra.mxu0 0
    %8255 = vmatprep.subr.bf16.mxu0 0
    %8256 = vmatpush1.bf16.xpose.msra.mxu0 %v8239
    %8257 = vmatprep.subr.bf16.mxu0 0
    %8258 = vmatpush2.bf16.xpose.msra.mxu0 0
    %8259 = vmatprep.subr.bf16.mxu0 0
    %8260 = vmatpush2.bf16.xpose.msra.mxu0 0
    %8261 = vmatprep.subr.bf16.mxu0 0
    %8262 = vmatpush2.bf16.xpose.msra.mxu0 0
    %8263 = vmatprep.subr.bf16.mxu0 0
    %8264 = vmatpush2.bf16.xpose.msra.mxu0 0
    %8265 = vmatprep.subr.bf16.mxu0 0
    %8266 = vmatpush2.bf16.xpose.msra.mxu0 0
    %8267 = vmatprep.subr.bf16.mxu0 0
    %8268 = vmatpush2.bf16.xpose.msra.mxu0 0
    %8269 = vmatprep.subr.bf16.mxu0 0
    %8270 = vmatpush2.bf16.xpose.msra.mxu0 0
    %8271 = vmatprep.subr.bf16.mxu0 0
    %8272 = vmatpush2.bf16.xpose.msra.mxu0 0
    %8273 = vmatprep.mubr.bf16.mxu0 0
    %8274 = vmatmul.mubr.bf16.gmra.mxu0 %v8236
    %v8275 = vpop.f32.mrf.mxu0
    %v8276 = vadd.f32 0.0, %v8275
    %v8277 = vpop.f32.mrf.mxu0
    %v8278 = vpop.f32.mrf.mxu0
    %v8279 = vadd.f32 0.0, %v8278
    %v8280 = vpop.f32.mrf.mxu0
    %8281 = vdwg.mxu0
    %v8282 = vmul.f32 %v8276, 0.25
    %v8283 = vmul.f32 %v8279, 0.25
    %v8284 = vsel %vm823, %v8282, -inf
    %8285 = vmax.xlane.f32.xlu0 %v8284
    %v8286 = vpop.xlane.xlu0 %8285
    %v8287 = vsel %vm823, %v8283, -inf
    %8288 = vmax.xlane.f32.xlu0 %v8287
    %v8289 = vpop.xlane.xlu0 %8288
    %v8290 = vsub.f32 %v8282, %v8286
    %v8291 = vsub.f32 %v8283, %v8289
    %v8292 = vmul.f32 %v8290, 1.442695
    %v8293 = vpow.pop %v8292
    %v8294 = vmul.f32 %v8291, 1.442695
    %v8295 = vpow.pop %v8294
    %v8296 = vsel %vm823, %v8293, 0.0
    %8297 = vadd.xlane.f32.xlu0 %v8296
    %v8298 = vpop.xlane.xlu0 %8297
    %v8299 = vsel %vm823, %v8295, 0.0
    %8300 = vadd.xlane.f32.xlu0 %v8299
    %v8301 = vpop.xlane.xlu0 %8300
    %v8302 = vrcp.pop %v8298
    %v8303 = vmul.f32 %v8293, %v8302
    %v8304 = vrcp.pop %v8301
    %v8305 = vmul.f32 %v8295, %v8304
    %v8306 = vmul.f32 %v8221, %v8230
    %v8307 = vmul.f32 %v8224, %v8230
    %v8308 = vpack.c.bf16 %v8305, %v8303
    %v8309 = vpack.c.bf16 %v8307, %v8306
    %v8310 = vlaneseq
    %v8311 = vshrl.u32 %v8310, 7
    %v8312 = vsub.s32 1, %v8311
    %v8313 = vrot.slane %v194, %v8312
    %v8314 = vmul.f32 %v8067, %v8313
    %v8315 = vmul.f32 %v8070, %v8313
    %v8316 = vpack.c.bf16 %v8315, %v8314
    %v8318 = vsel %vm471, %v8316, 0
    %8320 = vmatprep.subr.bf16.mxu0 0
    %8321 = vmatpush1.bf16.xpose.msra.mxu0 0
    %8322 = vmatprep.subr.bf16.mxu0 0
    %8323 = vmatpush1.bf16.xpose.msra.mxu0 0
    %8324 = vmatprep.subr.bf16.mxu0 0
    %8325 = vmatpush1.bf16.xpose.msra.mxu0 0
    %8326 = vmatprep.subr.bf16.mxu0 0
    %8327 = vmatpush1.bf16.xpose.msra.mxu0 0
    %8328 = vmatprep.subr.bf16.mxu0 0
    %8329 = vmatpush1.bf16.xpose.msra.mxu0 0
    %8330 = vmatprep.subr.bf16.mxu0 0
    %8331 = vmatpush1.bf16.xpose.msra.mxu0 0
    %8332 = vmatprep.subr.bf16.mxu0 0
    %8333 = vmatpush1.bf16.xpose.msra.mxu0 0
    %8334 = vmatprep.subr.bf16.mxu0 0
    %8335 = vmatpush1.bf16.xpose.msra.mxu0 %v8239
    %8336 = vmatprep.subr.bf16.mxu0 0
    %8337 = vmatpush2.bf16.xpose.msra.mxu0 0
    %8338 = vmatprep.subr.bf16.mxu0 0
    %8339 = vmatpush2.bf16.xpose.msra.mxu0 0
    %8340 = vmatprep.subr.bf16.mxu0 0
    %8341 = vmatpush2.bf16.xpose.msra.mxu0 0
    %8342 = vmatprep.subr.bf16.mxu0 0
    %8343 = vmatpush2.bf16.xpose.msra.mxu0 0
    %8344 = vmatprep.subr.bf16.mxu0 0
    %8345 = vmatpush2.bf16.xpose.msra.mxu0 0
    %8346 = vmatprep.subr.bf16.mxu0 0
    %8347 = vmatpush2.bf16.xpose.msra.mxu0 0
    %8348 = vmatprep.subr.bf16.mxu0 0
    %8349 = vmatpush2.bf16.xpose.msra.mxu0 0
    %8350 = vmatprep.subr.bf16.mxu0 0
    %8351 = vmatpush2.bf16.xpose.msra.mxu0 0
    %8352 = vmatprep.mubr.bf16.mxu0 0
    %8353 = vmatmul.mubr.bf16.gmra.mxu0 %v8318
    %v8354 = vpop.f32.mrf.mxu0
    %v8355 = vadd.f32 0.0, %v8354
    %v8356 = vpop.f32.mrf.mxu0
    %v8357 = vpop.f32.mrf.mxu0
    %v8358 = vadd.f32 0.0, %v8357
    %v8359 = vpop.f32.mrf.mxu0
    %8360 = vdwg.mxu0
    %v8361 = vmul.f32 %v8355, 0.25
    %v8362 = vmul.f32 %v8358, 0.25
    %v8363 = vsel %vm823, %v8361, -inf
    %8364 = vmax.xlane.f32.xlu0 %v8363
    %v8365 = vpop.xlane.xlu0 %8364
    %v8366 = vsel %vm823, %v8362, -inf
    %8367 = vmax.xlane.f32.xlu0 %v8366
    %v8368 = vpop.xlane.xlu0 %8367
    %v8369 = vsub.f32 %v8361, %v8365
    %v8370 = vsub.f32 %v8362, %v8368
    %v8371 = vmul.f32 %v8369, 1.442695
    %v8372 = vpow.pop %v8371
    %v8373 = vmul.f32 %v8370, 1.442695
    %v8374 = vpow.pop %v8373
    %v8375 = vsel %vm823, %v8372, 0.0
    %8376 = vadd.xlane.f32.xlu0 %v8375
    %v8377 = vpop.xlane.xlu0 %8376
    %v8378 = vsel %vm823, %v8374, 0.0
    %8379 = vadd.xlane.f32.xlu0 %v8378
    %v8380 = vpop.xlane.xlu0 %8379
    %v8381 = vrcp.pop %v8377
    %v8382 = vmul.f32 %v8372, %v8381
    %v8383 = vrcp.pop %v8380
    %v8384 = vmul.f32 %v8374, %v8383
    %v8385 = vmul.f32 %v8221, %v8313
    %v8386 = vmul.f32 %v8224, %v8313
    %v8387 = vpack.c.bf16 %v8384, %v8382
    %v8388 = vpack.c.bf16 %v8386, %v8385
    %v8390 = vsel %vm823, %v8387, 0
    %8392 = vmatprep.subr.bf16.mxu0 0
    %8393 = vmatpush1.bf16.msra.mxu0 0
    %8394 = vmatprep.subr.bf16.mxu0 0
    %8395 = vmatpush1.bf16.msra.mxu0 0
    %8396 = vmatprep.subr.bf16.mxu0 0
    %8397 = vmatpush1.bf16.msra.mxu0 0
    %8398 = vmatprep.subr.bf16.mxu0 0
    %8399 = vmatpush1.bf16.msra.mxu0 0
    %8400 = vmatprep.subr.bf16.mxu0 0
    %8401 = vmatpush1.bf16.msra.mxu0 0
    %8402 = vmatprep.subr.bf16.mxu0 0
    %8403 = vmatpush1.bf16.msra.mxu0 0
    %8404 = vmatprep.subr.bf16.mxu0 0
    %8405 = vmatpush1.bf16.msra.mxu0 0
    %8406 = vmatprep.subr.bf16.mxu0 0
    %8407 = vmatpush1.bf16.msra.mxu0 %v8388
    %8408 = vmatprep.subr.bf16.mxu0 0
    %8409 = vmatpush2.bf16.msra.mxu0 0
    %8410 = vmatprep.subr.bf16.mxu0 0
    %8411 = vmatpush2.bf16.msra.mxu0 0
    %8412 = vmatprep.subr.bf16.mxu0 0
    %8413 = vmatpush2.bf16.msra.mxu0 0
    %8414 = vmatprep.subr.bf16.mxu0 0
    %8415 = vmatpush2.bf16.msra.mxu0 0
    %8416 = vmatprep.subr.bf16.mxu0 0
    %8417 = vmatpush2.bf16.msra.mxu0 0
    %8418 = vmatprep.subr.bf16.mxu0 0
    %8419 = vmatpush2.bf16.msra.mxu0 0
    %8420 = vmatprep.subr.bf16.mxu0 0
    %8421 = vmatpush2.bf16.msra.mxu0 0
    %8422 = vmatprep.subr.bf16.mxu0 0
    %8423 = vmatpush2.bf16.msra.mxu0 0
    %8424 = vmatprep.mubr.bf16.mxu0 0
    %8425 = vmatmul.mubr.bf16.gmra.mxu0 %v8390
    %v8426 = vpop.f32.mrf.mxu0
    %v8427 = vadd.f32 0.0, %v8426
    %v8428 = vpop.f32.mrf.mxu0
    %v8429 = vpop.f32.mrf.mxu0
    %v8430 = vadd.f32 0.0, %v8429
    %v8431 = vpop.f32.mrf.mxu0
    %8432 = vdwg.mxu0
    %v8434 = vsel %vm823, %v8308, 0
    %8436 = vmatprep.subr.bf16.mxu0 0
    %8437 = vmatpush1.bf16.msra.mxu0 0
    %8438 = vmatprep.subr.bf16.mxu0 0
    %8439 = vmatpush1.bf16.msra.mxu0 0
    %8440 = vmatprep.subr.bf16.mxu0 0
    %8441 = vmatpush1.bf16.msra.mxu0 0
    %8442 = vmatprep.subr.bf16.mxu0 0
    %8443 = vmatpush1.bf16.msra.mxu0 0
    %8444 = vmatprep.subr.bf16.mxu0 0
    %8445 = vmatpush1.bf16.msra.mxu0 0
    %8446 = vmatprep.subr.bf16.mxu0 0
    %8447 = vmatpush1.bf16.msra.mxu0 0
    %8448 = vmatprep.subr.bf16.mxu0 0
    %8449 = vmatpush1.bf16.msra.mxu0 0
    %8450 = vmatprep.subr.bf16.mxu0 0
    %8451 = vmatpush1.bf16.msra.mxu0 %v8309
    %8452 = vmatprep.subr.bf16.mxu0 0
    %8453 = vmatpush2.bf16.msra.mxu0 0
    %8454 = vmatprep.subr.bf16.mxu0 0
    %8455 = vmatpush2.bf16.msra.mxu0 0
    %8456 = vmatprep.subr.bf16.mxu0 0
    %8457 = vmatpush2.bf16.msra.mxu0 0
    %8458 = vmatprep.subr.bf16.mxu0 0
    %8459 = vmatpush2.bf16.msra.mxu0 0
    %8460 = vmatprep.subr.bf16.mxu0 0
    %8461 = vmatpush2.bf16.msra.mxu0 0
    %8462 = vmatprep.subr.bf16.mxu0 0
    %8463 = vmatpush2.bf16.msra.mxu0 0
    %8464 = vmatprep.subr.bf16.mxu0 0
    %8465 = vmatpush2.bf16.msra.mxu0 0
    %8466 = vmatprep.subr.bf16.mxu0 0
    %8467 = vmatpush2.bf16.msra.mxu0 0
    %8468 = vmatprep.mubr.bf16.mxu0 0
    %8469 = vmatmul.mubr.bf16.gmra.mxu0 %v8434
    %v8470 = vpop.f32.mrf.mxu0
    %v8471 = vadd.f32 %v8427, %v8470
    %v8472 = vpop.f32.mrf.mxu0
    %v8473 = vpop.f32.mrf.mxu0
    %v8474 = vadd.f32 %v8430, %v8473
    %v8475 = vpop.f32.mrf.mxu0
    %8476 = vdwg.mxu0
    %v8477 = vlaneseq
    %v8478 = vshrl.u32 %v8477, 7
    %v8479 = vsub.s32 2, %v8478
    %v8480 = vrot.slane %v194, %v8479
    %v8481 = vmul.f32 %v8067, %v8480
    %v8482 = vmul.f32 %v8070, %v8480
    %v8483 = vpack.c.bf16 %v8482, %v8481
    %v8485 = vsel %vm471, %v8483, 0
    %8487 = vmatprep.subr.bf16.mxu0 0
    %8488 = vmatpush1.bf16.xpose.msra.mxu0 0
    %8489 = vmatprep.subr.bf16.mxu0 0
    %8490 = vmatpush1.bf16.xpose.msra.mxu0 0
    %8491 = vmatprep.subr.bf16.mxu0 0
    %8492 = vmatpush1.bf16.xpose.msra.mxu0 0
    %8493 = vmatprep.subr.bf16.mxu0 0
    %8494 = vmatpush1.bf16.xpose.msra.mxu0 0
    %8495 = vmatprep.subr.bf16.mxu0 0
    %8496 = vmatpush1.bf16.xpose.msra.mxu0 0
    %8497 = vmatprep.subr.bf16.mxu0 0
    %8498 = vmatpush1.bf16.xpose.msra.mxu0 0
    %8499 = vmatprep.subr.bf16.mxu0 0
    %8500 = vmatpush1.bf16.xpose.msra.mxu0 0
    %8501 = vmatprep.subr.bf16.mxu0 0
    %8502 = vmatpush1.bf16.xpose.msra.mxu0 %v8239
    %8503 = vmatprep.subr.bf16.mxu0 0
    %8504 = vmatpush2.bf16.xpose.msra.mxu0 0
    %8505 = vmatprep.subr.bf16.mxu0 0
    %8506 = vmatpush2.bf16.xpose.msra.mxu0 0
    %8507 = vmatprep.subr.bf16.mxu0 0
    %8508 = vmatpush2.bf16.xpose.msra.mxu0 0
    %8509 = vmatprep.subr.bf16.mxu0 0
    %8510 = vmatpush2.bf16.xpose.msra.mxu0 0
    %8511 = vmatprep.subr.bf16.mxu0 0
    %8512 = vmatpush2.bf16.xpose.msra.mxu0 0
    %8513 = vmatprep.subr.bf16.mxu0 0
    %8514 = vmatpush2.bf16.xpose.msra.mxu0 0
    %8515 = vmatprep.subr.bf16.mxu0 0
    %8516 = vmatpush2.bf16.xpose.msra.mxu0 0
    %8517 = vmatprep.subr.bf16.mxu0 0
    %8518 = vmatpush2.bf16.xpose.msra.mxu0 0
    %8519 = vmatprep.mubr.bf16.mxu0 0
    %8520 = vmatmul.mubr.bf16.gmra.mxu0 %v8485
    %v8521 = vpop.f32.mrf.mxu0
    %v8522 = vadd.f32 0.0, %v8521
    %v8523 = vpop.f32.mrf.mxu0
    %v8524 = vpop.f32.mrf.mxu0
    %v8525 = vadd.f32 0.0, %v8524
    %v8526 = vpop.f32.mrf.mxu0
    %8527 = vdwg.mxu0
    %v8528 = vmul.f32 %v8522, 0.25
    %v8529 = vmul.f32 %v8525, 0.25
    %v8530 = vsel %vm823, %v8528, -inf
    %8531 = vmax.xlane.f32.xlu0 %v8530
    %v8532 = vpop.xlane.xlu0 %8531
    %v8533 = vsel %vm823, %v8529, -inf
    %8534 = vmax.xlane.f32.xlu0 %v8533
    %v8535 = vpop.xlane.xlu0 %8534
    %v8536 = vsub.f32 %v8528, %v8532
    %v8537 = vsub.f32 %v8529, %v8535
    %v8538 = vmul.f32 %v8536, 1.442695
    %v8539 = vpow.pop %v8538
    %v8540 = vmul.f32 %v8537, 1.442695
    %v8541 = vpow.pop %v8540
    %v8542 = vsel %vm823, %v8539, 0.0
    %8543 = vadd.xlane.f32.xlu0 %v8542
    %v8544 = vpop.xlane.xlu0 %8543
    %v8545 = vsel %vm823, %v8541, 0.0
    %8546 = vadd.xlane.f32.xlu0 %v8545
    %v8547 = vpop.xlane.xlu0 %8546
    %v8548 = vrcp.pop %v8544
    %v8549 = vmul.f32 %v8539, %v8548
    %v8550 = vrcp.pop %v8547
    %v8551 = vmul.f32 %v8541, %v8550
    %v8552 = vmul.f32 %v8221, %v8480
    %v8553 = vmul.f32 %v8224, %v8480
    %v8554 = vpack.c.bf16 %v8551, %v8549
    %v8555 = vpack.c.bf16 %v8553, %v8552
    %v8557 = vsel %vm823, %v8554, 0
    %8559 = vmatprep.subr.bf16.mxu0 0
    %8560 = vmatpush1.bf16.msra.mxu0 0
    %8561 = vmatprep.subr.bf16.mxu0 0
    %8562 = vmatpush1.bf16.msra.mxu0 0
    %8563 = vmatprep.subr.bf16.mxu0 0
    %8564 = vmatpush1.bf16.msra.mxu0 0
    %8565 = vmatprep.subr.bf16.mxu0 0
    %8566 = vmatpush1.bf16.msra.mxu0 0
    %8567 = vmatprep.subr.bf16.mxu0 0
    %8568 = vmatpush1.bf16.msra.mxu0 0
    %8569 = vmatprep.subr.bf16.mxu0 0
    %8570 = vmatpush1.bf16.msra.mxu0 0
    %8571 = vmatprep.subr.bf16.mxu0 0
    %8572 = vmatpush1.bf16.msra.mxu0 0
    %8573 = vmatprep.subr.bf16.mxu0 0
    %8574 = vmatpush1.bf16.msra.mxu0 %v8555
    %8575 = vmatprep.subr.bf16.mxu0 0
    %8576 = vmatpush2.bf16.msra.mxu0 0
    %8577 = vmatprep.subr.bf16.mxu0 0
    %8578 = vmatpush2.bf16.msra.mxu0 0
    %8579 = vmatprep.subr.bf16.mxu0 0
    %8580 = vmatpush2.bf16.msra.mxu0 0
    %8581 = vmatprep.subr.bf16.mxu0 0
    %8582 = vmatpush2.bf16.msra.mxu0 0
    %8583 = vmatprep.subr.bf16.mxu0 0
    %8584 = vmatpush2.bf16.msra.mxu0 0
    %8585 = vmatprep.subr.bf16.mxu0 0
    %8586 = vmatpush2.bf16.msra.mxu0 0
    %8587 = vmatprep.subr.bf16.mxu0 0
    %8588 = vmatpush2.bf16.msra.mxu0 0
    %8589 = vmatprep.subr.bf16.mxu0 0
    %8590 = vmatpush2.bf16.msra.mxu0 0
    %8591 = vmatprep.mubr.bf16.mxu0 0
    %8592 = vmatmul.mubr.bf16.gmra.mxu0 %v8557
    %v8593 = vpop.f32.mrf.mxu0
    %v8594 = vadd.f32 0.0, %v8593
    %v8595 = vpop.f32.mrf.mxu0
    %v8596 = vpop.f32.mrf.mxu0
    %v8597 = vadd.f32 0.0, %v8596
    %v8598 = vpop.f32.mrf.mxu0
    %8599 = vdwg.mxu0
    %v8600 = vadd.f32 %v8471, %v8594
    %v8601 = vadd.f32 %v8474, %v8597
    %v8602 = vlaneseq
    %v8603 = vshrl.u32 %v8602, 7
    %v8604 = vsub.s32 3, %v8603
    %v8605 = vrot.slane %v194, %v8604
    %v8606 = vmul.f32 %v8067, %v8605
    %v8607 = vmul.f32 %v8070, %v8605
    %v8608 = vpack.c.bf16 %v8607, %v8606
    %v8610 = vsel %vm471, %v8608, 0
    %8612 = vmatprep.subr.bf16.mxu0 0
    %8613 = vmatpush1.bf16.xpose.msra.mxu0 0
    %8614 = vmatprep.subr.bf16.mxu0 0
    %8615 = vmatpush1.bf16.xpose.msra.mxu0 0
    %8616 = vmatprep.subr.bf16.mxu0 0
    %8617 = vmatpush1.bf16.xpose.msra.mxu0 0
    %8618 = vmatprep.subr.bf16.mxu0 0
    %8619 = vmatpush1.bf16.xpose.msra.mxu0 0
    %8620 = vmatprep.subr.bf16.mxu0 0
    %8621 = vmatpush1.bf16.xpose.msra.mxu0 0
    %8622 = vmatprep.subr.bf16.mxu0 0
    %8623 = vmatpush1.bf16.xpose.msra.mxu0 0
    %8624 = vmatprep.subr.bf16.mxu0 0
    %8625 = vmatpush1.bf16.xpose.msra.mxu0 0
    %8626 = vmatprep.subr.bf16.mxu0 0
    %8627 = vmatpush1.bf16.xpose.msra.mxu0 %v8239
    %8628 = vmatprep.subr.bf16.mxu0 0
    %8629 = vmatpush2.bf16.xpose.msra.mxu0 0
    %8630 = vmatprep.subr.bf16.mxu0 0
    %8631 = vmatpush2.bf16.xpose.msra.mxu0 0
    %8632 = vmatprep.subr.bf16.mxu0 0
    %8633 = vmatpush2.bf16.xpose.msra.mxu0 0
    %8634 = vmatprep.subr.bf16.mxu0 0
    %8635 = vmatpush2.bf16.xpose.msra.mxu0 0
    %8636 = vmatprep.subr.bf16.mxu0 0
    %8637 = vmatpush2.bf16.xpose.msra.mxu0 0
    %8638 = vmatprep.subr.bf16.mxu0 0
    %8639 = vmatpush2.bf16.xpose.msra.mxu0 0
    %8640 = vmatprep.subr.bf16.mxu0 0
    %8641 = vmatpush2.bf16.xpose.msra.mxu0 0
    %8642 = vmatprep.subr.bf16.mxu0 0
    %8643 = vmatpush2.bf16.xpose.msra.mxu0 0
    %8644 = vmatprep.mubr.bf16.mxu0 0
    %8645 = vmatmul.mubr.bf16.gmra.mxu0 %v8610
    %v8646 = vpop.f32.mrf.mxu0
    %v8647 = vadd.f32 0.0, %v8646
    %v8648 = vpop.f32.mrf.mxu0
    %v8649 = vpop.f32.mrf.mxu0
    %v8650 = vadd.f32 0.0, %v8649
    %v8651 = vpop.f32.mrf.mxu0
    %8652 = vdwg.mxu0
    %v8653 = vmul.f32 %v8647, 0.25
    %v8654 = vmul.f32 %v8650, 0.25
    %v8655 = vsel %vm823, %v8653, -inf
    %8656 = vmax.xlane.f32.xlu0 %v8655
    %v8657 = vpop.xlane.xlu0 %8656
    %v8658 = vsel %vm823, %v8654, -inf
    %8659 = vmax.xlane.f32.xlu0 %v8658
    %v8660 = vpop.xlane.xlu0 %8659
    %v8661 = vsub.f32 %v8653, %v8657
    %v8662 = vsub.f32 %v8654, %v8660
    %v8663 = vmul.f32 %v8661, 1.442695
    %v8664 = vpow.pop %v8663
    %v8665 = vmul.f32 %v8662, 1.442695
    %v8666 = vpow.pop %v8665
    %v8667 = vsel %vm823, %v8664, 0.0
    %8668 = vadd.xlane.f32.xlu0 %v8667
    %v8669 = vpop.xlane.xlu0 %8668
    %v8670 = vsel %vm823, %v8666, 0.0
    %8671 = vadd.xlane.f32.xlu0 %v8670
    %v8672 = vpop.xlane.xlu0 %8671
    %v8673 = vrcp.pop %v8669
    %v8674 = vmul.f32 %v8664, %v8673
    %v8675 = vrcp.pop %v8672
    %v8676 = vmul.f32 %v8666, %v8675
    %v8677 = vmul.f32 %v8221, %v8605
    %v8678 = vmul.f32 %v8224, %v8605
    %v8679 = vpack.c.bf16 %v8676, %v8674
    %v8680 = vpack.c.bf16 %v8678, %v8677
    %v8682 = vsel %vm823, %v8679, 0
    %8684 = vmatprep.subr.bf16.mxu0 0
    %8685 = vmatpush1.bf16.msra.mxu0 0
    %8686 = vmatprep.subr.bf16.mxu0 0
    %8687 = vmatpush1.bf16.msra.mxu0 0
    %8688 = vmatprep.subr.bf16.mxu0 0
    %8689 = vmatpush1.bf16.msra.mxu0 0
    %8690 = vmatprep.subr.bf16.mxu0 0
    %8691 = vmatpush1.bf16.msra.mxu0 0
    %8692 = vmatprep.subr.bf16.mxu0 0
    %8693 = vmatpush1.bf16.msra.mxu0 0
    %8694 = vmatprep.subr.bf16.mxu0 0
    %8695 = vmatpush1.bf16.msra.mxu0 0
    %8696 = vmatprep.subr.bf16.mxu0 0
    %8697 = vmatpush1.bf16.msra.mxu0 0
    %8698 = vmatprep.subr.bf16.mxu0 0
    %8699 = vmatpush1.bf16.msra.mxu0 %v8680
    %8700 = vmatprep.subr.bf16.mxu0 0
    %8701 = vmatpush2.bf16.msra.mxu0 0
    %8702 = vmatprep.subr.bf16.mxu0 0
    %8703 = vmatpush2.bf16.msra.mxu0 0
    %8704 = vmatprep.subr.bf16.mxu0 0
    %8705 = vmatpush2.bf16.msra.mxu0 0
    %8706 = vmatprep.subr.bf16.mxu0 0
    %8707 = vmatpush2.bf16.msra.mxu0 0
    %8708 = vmatprep.subr.bf16.mxu0 0
    %8709 = vmatpush2.bf16.msra.mxu0 0
    %8710 = vmatprep.subr.bf16.mxu0 0
    %8711 = vmatpush2.bf16.msra.mxu0 0
    %8712 = vmatprep.subr.bf16.mxu0 0
    %8713 = vmatpush2.bf16.msra.mxu0 0
    %8714 = vmatprep.subr.bf16.mxu0 0
    %8715 = vmatpush2.bf16.msra.mxu0 0
    %8716 = vmatprep.mubr.bf16.mxu0 0
    %8717 = vmatmul.mubr.bf16.gmra.mxu0 %v8682
    %v8718 = vpop.f32.mrf.mxu0
    %v8719 = vadd.f32 0.0, %v8718
    %v8720 = vpop.f32.mrf.mxu0
    %v8721 = vpop.f32.mrf.mxu0
    %v8722 = vadd.f32 0.0, %v8721
    %v8723 = vpop.f32.mrf.mxu0
    %8724 = vdwg.mxu0
    %v8725 = vadd.f32 %v8600, %v8719
    %v8726 = vadd.f32 %v8601, %v8722
    %v8727 = vld [vmem:[#allocation2 + $0x5d0] sm:$0xf]
    %v8728 = vld [vmem:[#allocation2 + $0x5d4] sm:$0xf]
    %v8729 = vld [vmem:[#allocation2 + $0x5d8] sm:$0xf]
    %v8730 = vld [vmem:[#allocation2 + $0x5dc] sm:$0xf]
    %v8731 = vld [vmem:[#allocation2 + $0x5e0] sm:$0xf]
    %v8732 = vld [vmem:[#allocation2 + $0x5e4] sm:$0xf]
    %v8733 = vld [vmem:[#allocation2 + $0x5e8] sm:$0xf]
    %v8734 = vld [vmem:[#allocation2 + $0x5ec] sm:$0xf]
    %v8735 = vpack.c.bf16 %v8726, %v8725
    %v8736 = vlaneseq
    %v8737 = vshrl.u32 %v8736, 7
    %v8738 = vsub.s32 0, %v8737
    %v8739 = vrot.slane %v106, %v8738
    %v8748 = vunpack.c.l.b16 %v8727
    %v8749 = vunpack.c.l.b16 %v8728
    %v8750 = vunpack.c.l.b16 %v8729
    %v8751 = vunpack.c.l.b16 %v8730
    %v8752 = vunpack.c.l.b16 %v8731
    %v8753 = vunpack.c.l.b16 %v8732
    %v8754 = vunpack.c.l.b16 %v8733
    %v8755 = vunpack.c.l.b16 %v8734
    %v8756 = vpack.c.b16 %v8749, %v8748
    %v8757 = vpack.c.b16 %v8751, %v8750
    %v8758 = vpack.c.b16 %v8753, %v8752
    %v8759 = vpack.c.b16 %v8755, %v8754
    %v8765 = vsel %vm471, %v8735, 0
    %8767 = vmatprep.subr.bf16.mxu0 0
    %8768 = vmatpush1.bf16.msra.mxu0 0
    %8769 = vmatprep.subr.bf16.mxu0 0
    %8770 = vmatpush1.bf16.msra.mxu0 0
    %8771 = vmatprep.subr.bf16.mxu0 0
    %8772 = vmatpush1.bf16.msra.mxu0 0
    %8773 = vmatprep.subr.bf16.mxu0 0
    %8774 = vmatpush1.bf16.msra.mxu0 0
    %8775 = vmatprep.subr.bf16.mxu0 0
    %8776 = vmatpush1.bf16.msra.mxu0 %v8759
    %8777 = vmatprep.subr.bf16.mxu0 0
    %8778 = vmatpush1.bf16.msra.mxu0 %v8758
    %8779 = vmatprep.subr.bf16.mxu0 0
    %8780 = vmatpush1.bf16.msra.mxu0 %v8757
    %8781 = vmatprep.subr.bf16.mxu0 0
    %8782 = vmatpush1.bf16.msra.mxu0 %v8756
    %8783 = vmatprep.subr.bf16.mxu0 0
    %8784 = vmatpush2.bf16.msra.mxu0 0
    %8785 = vmatprep.subr.bf16.mxu0 0
    %8786 = vmatpush2.bf16.msra.mxu0 0
    %8787 = vmatprep.subr.bf16.mxu0 0
    %8788 = vmatpush2.bf16.msra.mxu0 0
    %8789 = vmatprep.subr.bf16.mxu0 0
    %8790 = vmatpush2.bf16.msra.mxu0 0
    %8791 = vmatprep.subr.bf16.mxu0 0
    %8792 = vmatpush2.bf16.msra.mxu0 0
    %8793 = vmatprep.subr.bf16.mxu0 0
    %8794 = vmatpush2.bf16.msra.mxu0 0
    %8795 = vmatprep.subr.bf16.mxu0 0
    %8796 = vmatpush2.bf16.msra.mxu0 0
    %8797 = vmatprep.subr.bf16.mxu0 0
    %8798 = vmatpush2.bf16.msra.mxu0 0
    %8799 = vmatprep.mubr.bf16.mxu0 0
    %8800 = vmatmul.mubr.bf16.gmra.mxu0 %v8765
    %v8801 = vpop.f32.mrf.mxu0
    %v8802 = vadd.f32 %v8739, %v8801
    %v8803 = vpop.f32.mrf.mxu0
    %v8804 = vpop.f32.mrf.mxu0
    %v8805 = vadd.f32 %v8739, %v8804
    %v8806 = vpop.f32.mrf.mxu0
    %8807 = vdwg.mxu0
    %v8808 = vsel %vm471, %v8802, -inf
    %v8809 = vsel %vm471, %v8805, -inf
    %v8810 = vmax.f32 %v8808, %v8809
    %v8811 = vrot.slane %v8810, 4
    %v8812 = vmax.f32 %v8810, %v8811
    %v8813 = vrot.slane %v8812, 2
    %v8814 = vmax.f32 %v8812, %v8813
    %v8815 = vrot.slane %v8814, 1
    %v8816 = vmax.f32 %v8814, %v8815
    %v8817 = vld [vmem:[#allocation2 + $0x5f0] sm:$0xf]
    %v8818 = vld [vmem:[#allocation2 + $0x5f4] sm:$0xf]
    %v8819 = vld [vmem:[#allocation2 + $0x5f8] sm:$0xf]
    %v8820 = vld [vmem:[#allocation2 + $0x5fc] sm:$0xf]
    %v8821 = vld [vmem:[#allocation2 + $0x600] sm:$0xf]
    %v8822 = vld [vmem:[#allocation2 + $0x604] sm:$0xf]
    %v8823 = vld [vmem:[#allocation2 + $0x608] sm:$0xf]
    %v8824 = vld [vmem:[#allocation2 + $0x60c] sm:$0xf]
    %v8825 = vpack.c.bf16 %v8816, %v8816
    %v8834 = vunpack.c.l.b16 %v8817
    %v8835 = vunpack.c.l.b16 %v8818
    %v8836 = vunpack.c.l.b16 %v8819
    %v8837 = vunpack.c.l.b16 %v8820
    %v8838 = vunpack.c.l.b16 %v8821
    %v8839 = vunpack.c.l.b16 %v8822
    %v8840 = vunpack.c.l.b16 %v8823
    %v8841 = vunpack.c.l.b16 %v8824
    %v8842 = vpack.c.b16 %v8835, %v8834
    %v8843 = vpack.c.b16 %v8837, %v8836
    %v8844 = vpack.c.b16 %v8839, %v8838
    %v8845 = vpack.c.b16 %v8841, %v8840
    %v8851 = vsel %vm471, %v8825, 0
    %8853 = vmatprep.subr.bf16.mxu0 0
    %8854 = vmatpush1.bf16.msra.mxu0 0
    %8855 = vmatprep.subr.bf16.mxu0 0
    %8856 = vmatpush1.bf16.msra.mxu0 0
    %8857 = vmatprep.subr.bf16.mxu0 0
    %8858 = vmatpush1.bf16.msra.mxu0 0
    %8859 = vmatprep.subr.bf16.mxu0 0
    %8860 = vmatpush1.bf16.msra.mxu0 0
    %8861 = vmatprep.subr.bf16.mxu0 0
    %8862 = vmatpush1.bf16.msra.mxu0 %v8845
    %8863 = vmatprep.subr.bf16.mxu0 0
    %8864 = vmatpush1.bf16.msra.mxu0 %v8844
    %8865 = vmatprep.subr.bf16.mxu0 0
    %8866 = vmatpush1.bf16.msra.mxu0 %v8843
    %8867 = vmatprep.subr.bf16.mxu0 0
    %8868 = vmatpush1.bf16.msra.mxu0 %v8842
    %8869 = vmatprep.subr.bf16.mxu0 0
    %8870 = vmatpush2.bf16.msra.mxu0 0
    %8871 = vmatprep.subr.bf16.mxu0 0
    %8872 = vmatpush2.bf16.msra.mxu0 0
    %8873 = vmatprep.subr.bf16.mxu0 0
    %8874 = vmatpush2.bf16.msra.mxu0 0
    %8875 = vmatprep.subr.bf16.mxu0 0
    %8876 = vmatpush2.bf16.msra.mxu0 0
    %8877 = vmatprep.subr.bf16.mxu0 0
    %8878 = vmatpush2.bf16.msra.mxu0 0
    %8879 = vmatprep.subr.bf16.mxu0 0
    %8880 = vmatpush2.bf16.msra.mxu0 0
    %8881 = vmatprep.subr.bf16.mxu0 0
    %8882 = vmatpush2.bf16.msra.mxu0 0
    %8883 = vmatprep.subr.bf16.mxu0 0
    %8884 = vmatpush2.bf16.msra.mxu0 0
    %8885 = vmatprep.mubr.bf16.mxu0 0
    %8886 = vmatmul.mubr.bf16.gmra.mxu0 %v8851
    %v8887 = vpop.f32.mrf.mxu0
    %v8888 = vadd.f32 %v107, %v8887
    %v8889 = vpop.f32.mrf.mxu0
    %v8890 = vpop.f32.mrf.mxu0
    %v8891 = vpop.f32.mrf.mxu0
    %8892 = vdwg.mxu0
    %v8893 = vmax.f32 %v8888, 0.0
    %v8894 = vld [vmem:[#allocation2 + $0x610] sm:$0xf]
    %v8895 = vld [vmem:[#allocation2 + $0x614] sm:$0xf]
    %v8896 = vld [vmem:[#allocation2 + $0x618] sm:$0xf]
    %v8897 = vld [vmem:[#allocation2 + $0x61c] sm:$0xf]
    %v8898 = vld [vmem:[#allocation2 + $0x620] sm:$0xf]
    %v8899 = vld [vmem:[#allocation2 + $0x624] sm:$0xf]
    %v8900 = vld [vmem:[#allocation2 + $0x628] sm:$0xf]
    %v8901 = vld [vmem:[#allocation2 + $0x62c] sm:$0xf]
    %v8902 = vpack.c.bf16 %v8893, %v8893
    %v8911 = vunpack.c.l.b16 %v8894
    %v8912 = vunpack.c.l.b16 %v8895
    %v8913 = vunpack.c.l.b16 %v8896
    %v8914 = vunpack.c.l.b16 %v8897
    %v8915 = vunpack.c.l.b16 %v8898
    %v8916 = vunpack.c.l.b16 %v8899
    %v8917 = vunpack.c.l.b16 %v8900
    %v8918 = vunpack.c.l.b16 %v8901
    %v8919 = vpack.c.b16 %v8912, %v8911
    %v8920 = vpack.c.b16 %v8914, %v8913
    %v8921 = vpack.c.b16 %v8916, %v8915
    %v8922 = vpack.c.b16 %v8918, %v8917
    %v8928 = vsel %vm471, %v8902, 0
    %8930 = vmatprep.subr.bf16.mxu0 0
    %8931 = vmatpush1.bf16.msra.mxu0 0
    %8932 = vmatprep.subr.bf16.mxu0 0
    %8933 = vmatpush1.bf16.msra.mxu0 0
    %8934 = vmatprep.subr.bf16.mxu0 0
    %8935 = vmatpush1.bf16.msra.mxu0 0
    %8936 = vmatprep.subr.bf16.mxu0 0
    %8937 = vmatpush1.bf16.msra.mxu0 0
    %8938 = vmatprep.subr.bf16.mxu0 0
    %8939 = vmatpush1.bf16.msra.mxu0 %v8922
    %8940 = vmatprep.subr.bf16.mxu0 0
    %8941 = vmatpush1.bf16.msra.mxu0 %v8921
    %8942 = vmatprep.subr.bf16.mxu0 0
    %8943 = vmatpush1.bf16.msra.mxu0 %v8920
    %8944 = vmatprep.subr.bf16.mxu0 0
    %8945 = vmatpush1.bf16.msra.mxu0 %v8919
    %8946 = vmatprep.subr.bf16.mxu0 0
    %8947 = vmatpush2.bf16.msra.mxu0 0
    %8948 = vmatprep.subr.bf16.mxu0 0
    %8949 = vmatpush2.bf16.msra.mxu0 0
    %8950 = vmatprep.subr.bf16.mxu0 0
    %8951 = vmatpush2.bf16.msra.mxu0 0
    %8952 = vmatprep.subr.bf16.mxu0 0
    %8953 = vmatpush2.bf16.msra.mxu0 0
    %8954 = vmatprep.subr.bf16.mxu0 0
    %8955 = vmatpush2.bf16.msra.mxu0 0
    %8956 = vmatprep.subr.bf16.mxu0 0
    %8957 = vmatpush2.bf16.msra.mxu0 0
    %8958 = vmatprep.subr.bf16.mxu0 0
    %8959 = vmatpush2.bf16.msra.mxu0 0
    %8960 = vmatprep.subr.bf16.mxu0 0
    %8961 = vmatpush2.bf16.msra.mxu0 0
    %8962 = vmatprep.mubr.bf16.mxu0 0
    %8963 = vmatmul.mubr.bf16.gmra.mxu0 %v8928
    %v8964 = vpop.f32.mrf.mxu0
    %v8965 = vadd.f32 %v108, %v8964
    %v8966 = vpop.f32.mrf.mxu0
    %v8967 = vpop.f32.mrf.mxu0
    %v8968 = vpop.f32.mrf.mxu0
    %8969 = vdwg.mxu0
    %v8970 = vmax.f32 %v8965, 0.0
    %v8971 = vld [vmem:[#allocation2 + $0x630] sm:$0xf]
    %v8972 = vld [vmem:[#allocation2 + $0x634] sm:$0xf]
    %v8973 = vld [vmem:[#allocation2 + $0x638] sm:$0xf]
    %v8974 = vld [vmem:[#allocation2 + $0x63c] sm:$0xf]
    %v8975 = vld [vmem:[#allocation2 + $0x640] sm:$0xf]
    %v8976 = vld [vmem:[#allocation2 + $0x644] sm:$0xf]
    %v8977 = vld [vmem:[#allocation2 + $0x648] sm:$0xf]
    %v8978 = vld [vmem:[#allocation2 + $0x64c] sm:$0xf]
    %v8979 = vpack.c.bf16 %v8970, %v8970
    %v8988 = vunpack.c.l.b16 %v8971
    %v8989 = vunpack.c.l.b16 %v8972
    %v8990 = vunpack.c.l.b16 %v8973
    %v8991 = vunpack.c.l.b16 %v8974
    %v8992 = vunpack.c.l.b16 %v8975
    %v8993 = vunpack.c.l.b16 %v8976
    %v8994 = vunpack.c.l.b16 %v8977
    %v8995 = vunpack.c.l.b16 %v8978
    %v8996 = vpack.c.b16 %v8989, %v8988
    %v8997 = vpack.c.b16 %v8991, %v8990
    %v8998 = vpack.c.b16 %v8993, %v8992
    %v8999 = vpack.c.b16 %v8995, %v8994
    %v9005 = vsel %vm471, %v8979, 0
    %9007 = vmatprep.subr.bf16.mxu0 0
    %9008 = vmatpush1.bf16.msra.mxu0 0
    %9009 = vmatprep.subr.bf16.mxu0 0
    %9010 = vmatpush1.bf16.msra.mxu0 0
    %9011 = vmatprep.subr.bf16.mxu0 0
    %9012 = vmatpush1.bf16.msra.mxu0 0
    %9013 = vmatprep.subr.bf16.mxu0 0
    %9014 = vmatpush1.bf16.msra.mxu0 0
    %9015 = vmatprep.subr.bf16.mxu0 0
    %9016 = vmatpush1.bf16.msra.mxu0 %v8999
    %9017 = vmatprep.subr.bf16.mxu0 0
    %9018 = vmatpush1.bf16.msra.mxu0 %v8998
    %9019 = vmatprep.subr.bf16.mxu0 0
    %9020 = vmatpush1.bf16.msra.mxu0 %v8997
    %9021 = vmatprep.subr.bf16.mxu0 0
    %9022 = vmatpush1.bf16.msra.mxu0 %v8996
    %9023 = vmatprep.subr.bf16.mxu0 0
    %9024 = vmatpush2.bf16.msra.mxu0 0
    %9025 = vmatprep.subr.bf16.mxu0 0
    %9026 = vmatpush2.bf16.msra.mxu0 0
    %9027 = vmatprep.subr.bf16.mxu0 0
    %9028 = vmatpush2.bf16.msra.mxu0 0
    %9029 = vmatprep.subr.bf16.mxu0 0
    %9030 = vmatpush2.bf16.msra.mxu0 0
    %9031 = vmatprep.subr.bf16.mxu0 0
    %9032 = vmatpush2.bf16.msra.mxu0 0
    %9033 = vmatprep.subr.bf16.mxu0 0
    %9034 = vmatpush2.bf16.msra.mxu0 0
    %9035 = vmatprep.subr.bf16.mxu0 0
    %9036 = vmatpush2.bf16.msra.mxu0 0
    %9037 = vmatprep.subr.bf16.mxu0 0
    %9038 = vmatpush2.bf16.msra.mxu0 0
    %9039 = vmatprep.mubr.bf16.mxu0 0
    %9040 = vmatmul.mubr.bf16.gmra.mxu0 %v9005
    %v9041 = vpop.f32.mrf.mxu0
    %v9042 = vadd.f32 %v109, %v9041
    %v9043 = vpop.f32.mrf.mxu0
    %v9044 = vpop.f32.mrf.mxu0
    %v9045 = vpop.f32.mrf.mxu0
    %9046 = vdwg.mxu0
    %v9047 = vsel %vm471, %v7127, 0.0
    %v9048 = vsel %vm471, %v7128, 0.0
    %v9049 = vsel %vm471, %v7129, 0.0
    %v9050 = vsel %vm471, %v7130, 0.0
    %9051 = vst [vmem:[#allocation11] sm:$0xff] %v9047
    %9052 = vst [vmem:[#allocation11 + $0x8] sm:$0xff] %v9048
    %9053 = vst [vmem:[#allocation11 + $0x10] sm:$0xff] %v9049
    %9054 = vst [vmem:[#allocation11 + $0x18] sm:$0xff] %v9050
    %v9055 = vsel %vm471, %v8802, 0.0
    %v9056 = vsel %vm471, %v8805, 0.0
    %9057 = vst [vmem:[#allocation11 + $0x20] sm:$0xff] %v9055
    %9058 = vst [vmem:[#allocation11 + $0x28] sm:$0xff] %v9056
    %vm9059 = vcmask 16384
    %9060 = vst.msk [vmem:[#allocation12] sm:$0x1] %vm9059, %v9042
    // Predicated region
    $region42: #{tpu_custom_call.1} parent=1 // pred_check
      _
    $region43: #{tpu_custom_call.1} parent=1 // pred_check_branch
      %9062 = sbr.rel (0) target = $region45
    $region44: #{tpu_custom_call.1} parent=1 // pred_region
      %s9064 = ssub.s32 768, 768
      %9065 = vsyncadd [#allocation4], %s9064
      %s9066 = sshll.u32 [#allocation11], 4
      %s9067 = int_to_ptr.vmem [resolvable:$true] %s9066
      %9072 = dma.vmem_to_hbm [thread:$0]  %s9067, 768, %s5, [#allocation4], 128, 128, 8
    $region45: #{tpu_custom_call.1} parent=1 // pred_fallthru
      _
    // Predicated region
    $region46: #{tpu_custom_call.1} parent=1 // pred_check
      _
    $region47: #{tpu_custom_call.1} parent=1 // pred_check_branch
      %9074 = sbr.rel (0) target = $region49
    $region48: #{tpu_custom_call.1} parent=1 // pred_region
      %s9076 = ssub.s32 16, 16
      %9077 = vsyncadd [#allocation13], %s9076
      %s9079 = sshll.u32 [#allocation12], 4
      %s9080 = int_to_ptr.vmem [resolvable:$true] %s9079
      %9082 = dma.vmem_to_hbm [thread:$0]  %s9080, 16, %s6, [#allocation13]
    $region49: #{tpu_custom_call.1} parent=1 // pred_fallthru
      _
    // Predicated region
    $region50: #{tpu_custom_call.1} parent=1 // pred_check
      _
    $region51: #{tpu_custom_call.1} parent=1 // pred_check_branch
      %9084 = sbr.rel (0) target = $region53
    $region52: #{tpu_custom_call.1} parent=1 // pred_region
      %9085 = dma.done [#allocation4], 768
    $region53: #{tpu_custom_call.1} parent=1 // pred_fallthru
      _
    // Predicated region
    $region54: #{tpu_custom_call.1} parent=1 // pred_check
      _
    $region55: #{tpu_custom_call.1} parent=1 // pred_check_branch
      %9087 = sbr.rel (0) target = $region57
    $region56: #{tpu_custom_call.1} parent=1 // pred_region
      %9088 = dma.done [#allocation13], 16
    $region57: #{tpu_custom_call.1} parent=1 // pred_fallthru
      _
    %9089 = vsyncpa [#allocation3], 1
    %9090 = vsyncpa [#allocation6], 1
    %9091 = vsyncpa [#allocation9], 1
    %9092 = vsyncpa [#allocation4], 1
    %9093 = vsyncpa [#allocation13], 1

</llo_original>
